<compile_context>
chip_gen: v7x
topology: tpu7x:2x2x1
jax: 0.10.0
libtpu: 0.0.40
codegen_flags: <defaults>
</compile_context>

<pallas_src>
import jax
import jax.numpy as jnp
from jax import lax
from jax.experimental import pallas as pl
from jax.experimental.pallas import tpu as pltpu


# ---------------------------------------------------------------------------
# Model hyper-parameters (small, consistent with the module's forward)
# ---------------------------------------------------------------------------
B = 2            # batch
LV = 8           # video sequence length
LQ = 6           # question token length
DV = 32          # input_dim (v_dim)
D_LM = 64        # lm_dim (T5 hidden)
N_HEADS = 4
HEAD_DIM = D_LM // N_HEADS
D_FF = 128
N_LAYERS = 2
VOCAB = 128
CO_PAD = 128     # lane-padded NLQ-head output channels (0: cls, 1:3: reg)

MASK_NEG = -1e9  # additive key-mask bias (f32-safe)


def _block_batch(batch):
    """Batch items per grid step: 1 on v7x (2 TCs -> batch-parallel grid),
    fold the whole batch into a single grid step on single-TC chips."""
    try:
        kind = jax.devices()[0].device_kind.lower()
    except Exception:
        kind = ""
    if "v7" in kind:
        return 1
    return batch


# ---------------------------------------------------------------------------
# Single fused kernel: embed + lm_proj fold-in + N_LAYERS T5 blocks + final
# RMSNorm + NLQ head (masked convs, merged cls/reg).
# ---------------------------------------------------------------------------
def fused_forward(tok_p, vfp, mask_bias, vmask_full, emb, wp, b_eff,
                  wq, wk, wv, wo, ln1, ln2, w1, w2, fln,
                  c1w, c1b, c2w, c2b, hw, hb, *, lq):
    Bb, Lp, _ = tok_p.shape
    Dv = vfp.shape[-1]
    VOC, D = emb.shape
    NL, H, _, Dh = wq.shape
    F = w1.shape[-1]
    Co = hw.shape[-1]
    Lv = Lp - lq - (Lp - tok_p.shape[1])  # placeholder, recomputed below
    Lv = vfp.shape[1] - lq - (Lp - mask_bias.shape[-1])  # not used; keep simple
    del Lv

    BB = _block_batch(Bb)
    if Bb % BB != 0:
        BB = 1
    grid = (Bb // BB,)

    def kernel(tok_ref, vfp_ref, mb_ref, vm_ref, emb_ref, wp_ref, be_ref,
               wq_ref, wk_ref, wv_ref, wo_ref, ln1_ref, ln2_ref,
               w1_ref, w2_ref, fln_ref,
               c1w_ref, c1b_ref, c2w_ref, c2b_ref, hw_ref, hb_ref,
               enc_ref, head_ref):
        f32, bf16 = jnp.float32, jnp.bfloat16

        # Invariant loads hoisted out of the batch / layer loops.
        emb_t = emb_ref[...]
        wp_t = wp_ref[...]
        be_t = be_ref[...]
        fln_t = fln_ref[...]
        c1b_t = c1b_ref[...]
        c2b_t = c2b_ref[...]
        hb_t = hb_ref[...]

        def rms(x, w):                       # T5 LayerNorm (no mean, no bias)
            var = jnp.mean(x * x, axis=-1, keepdims=True)
            return x * lax.rsqrt(var + 1e-6) * w

        def conv3(x, w_ref, bias):
            # k=3 'same' 1-D conv over time: 3 tap matmuls on rolled copies,
            # wrap-around rows zeroed with an iota mask.
            t = x.shape[0]
            r = lax.broadcasted_iota(jnp.int32, x.shape, 0)
            xm1 = jnp.where(r == 0, 0.0, pltpu.roll(x, shift=1, axis=0))
            xp1 = jnp.where(r == t - 1, 0.0, pltpu.roll(x, shift=t - 1, axis=0))
            acc = jnp.dot(xm1.astype(bf16), w_ref[0], preferred_element_type=f32)
            acc = acc + jnp.dot(x.astype(bf16), w_ref[1], preferred_element_type=f32)
            acc = acc + jnp.dot(xp1.astype(bf16), w_ref[2], preferred_element_type=f32)
            return acc + bias

        for b in range(BB):                  # static unroll over folded batch
            mb = mb_ref[b]                   # (1, Lp) key-mask bias
            tok = tok_ref[b]                 # (Lp, 1) int32 token ids (pad -> 0)

            # -- build encoder input x (Lp, D) entirely in vregs --------------
            onehot = (lax.broadcasted_iota(jnp.int32, (Lp, VOC), 1)
                      == tok).astype(f32)                        # (Lp, VOC)
            q_full = jnp.dot(onehot, emb_t,
                             preferred_element_type=f32)         # (Lp, D)
            # lm_proj over zero-padded video rows, + (lm_proj_b + v_emb)
            v_full = jnp.dot(vfp_ref[b], wp_t,
                             preferred_element_type=f32) + be_t  # (Lp, D)
            r = lax.broadcasted_iota(jnp.int32, (Lp, D), 0)
            x = jnp.where(r < lq, q_full,
                          jnp.where(r < mb.shape[-1] - (Lp - mb.shape[-1]) + 0, v_full, 0.0))
            # (the where above is re-expressed below for clarity)
            x = jnp.where(r < lq, q_full, jnp.where(r < lq + (Lp - lq), v_full, 0.0))
            # rows [lq, lq+Lv) carry video, rows >= L are zero pad (v_full there
            # is just the bias and gets masked out by the key mask / slicing).
            valid_rows = (1.0 - (0.0 - mb) * (1.0 / MASK_NEG))   # 1 valid, 0 masked
            x = x * jnp.transpose(valid_rows) if False else x    # (kept simple)

            # ---- N_LAYERS T5 encoder blocks ---------------------------------
            for l in range(NL):
                # self-attention (pre-norm, residual); T5: no 1/sqrt(d) scaling
                h16 = rms(x, ln1_ref[l]).astype(bf16)
                heads = []
                for hd in range(H):          # static unroll over heads
                    qh = jnp.dot(h16, wq_ref[l, hd],
                                 preferred_element_type=f32).astype(bf16)
                    kh = jnp.dot(h16, wk_ref[l, hd],
                                 preferred_element_type=f32).astype(bf16)
                    vh = jnp.dot(h16, wv_ref[l, hd],
                                 preferred_element_type=f32).astype(bf16)
                    s = lax.dot_general(qh, kh, (((1,), (1,)), ((), ())),
                                        preferred_element_type=f32)  # (Lp, Lp)
                    s = s + mb
                    s = s - jnp.max(s, axis=-1, keepdims=True)
                    p = jnp.exp(s)
                    p = p * pl.reciprocal(jnp.sum(p, axis=-1, keepdims=True),
                                          approx=True)
                    heads.append(jnp.dot(p.astype(bf16), vh,
                                         preferred_element_type=f32))  # (Lp, Dh)
                ho = jnp.concatenate(heads, axis=1).astype(bf16)        # (Lp, D)
                x = x + jnp.dot(ho, wo_ref[l], preferred_element_type=f32)

                # feed-forward (pre-norm, residual)
                g = jnp.dot(rms(x, ln2_ref[l]).astype(bf16), w1_ref[l],
                            preferred_element_type=f32)
                g = jnp.maximum(g, 0.0)
                x = x + jnp.dot(g.astype(bf16), w2_ref[l],
                                preferred_element_type=f32)

            xf = rms(x, fln_t)                                   # (Lp, D)
            enc_ref[b] = xf.astype(enc_ref.dtype)

            # ---- fused NLQ head on the video rows (still in vregs) ----------
            # Full-length video mask: masked neighbors == zero padding, so the
            # 'same' conv over Lp rows matches a conv over the Lv video rows.
            m = vm_ref[b]                                        # (Lp, 1)
            xv = xf * m
            h1 = jnp.maximum(conv3(xv, c1w_ref, c1b_t), 0.0) * m
            h2 = jnp.maximum(conv3(h1, c2w_ref, c2b_t), 0.0) * m
            o = conv3(h2, hw_ref, hb_t)                          # (Lp, Co) lane-dense
            lane = lax.broadcasted_iota(jnp.int32, o.shape, 1)
            o = jnp.where((lane >= 1) & (lane < 3), jnp.maximum(o, 0.0), o)
            # NOTE: masked positions emit cls logit 0 (not -inf); downstream
            # decoding should consume v_mask alongside cls_logits.
            head_ref[b] = (o * m).astype(head_ref.dtype)

    bidx3 = lambda i: (i, 0, 0)
    const2 = lambda i: (0, 0)
    const3 = lambda i: (0, 0, 0)
    const4 = lambda i: (0, 0, 0, 0)

    return pl.pallas_call(
        kernel,
        out_shape=(jax.ShapeDtypeStruct((Bb, Lp, D), jnp.float32),
                   jax.ShapeDtypeStruct((Bb, Lp, Co), jnp.float32)),
        grid=grid,
        in_specs=[
            pl.BlockSpec((BB, Lp, 1), bidx3),        # tok_p
            pl.BlockSpec((BB, Lp, Dv), bidx3),       # vfp (zero-padded video feats)
            pl.BlockSpec((BB, 1, Lp), bidx3),        # mask_bias
            pl.BlockSpec((BB, Lp, 1), bidx3),        # full-length video mask
            pl.BlockSpec((VOC, D), const2),          # shared embedding table
            pl.BlockSpec((Dv, D), const2),           # lm_proj weight
            pl.BlockSpec((1, D), const2),            # lm_proj bias + v_emb
            pl.BlockSpec((NL, H, D, Dh), const4),    # wq (head-major)
            pl.BlockSpec((NL, H, D, Dh), const4),    # wk
            pl.BlockSpec((NL, H, D, Dh), const4),    # wv
            pl.BlockSpec((NL, D, D), const3),        # wo
            pl.BlockSpec((NL, 1, D), const3),        # ln1
            pl.BlockSpec((NL, 1, D), const3),        # ln2
            pl.BlockSpec((NL, D, F), const3),        # w1
            pl.BlockSpec((NL, F, D), const3),        # w2
            pl.BlockSpec((1, D), const2),            # final LN
            pl.BlockSpec((3, D, D), const3),         # nlq conv1 w
            pl.BlockSpec((1, D), const2),            # nlq conv1 b
            pl.BlockSpec((3, D, D), const3),         # nlq conv2 w
            pl.BlockSpec((1, D), const2),            # nlq conv2 b
            pl.BlockSpec((3, D, Co), const3),        # merged cls/reg head w (lane-padded)
            pl.BlockSpec((1, Co), const2),           # merged head b
        ],
        out_specs=(pl.BlockSpec((BB, Lp, D), bidx3),
                   pl.BlockSpec((BB, Lp, Co), bidx3)),
        compiler_params=pltpu.CompilerParams(
            dimension_semantics=("parallel",)),
    )(tok_p, vfp, mask_bias, vmask_full, emb, wp, b_eff,
      wq, wk, wv, wo, ln1, ln2, w1, w2, fln,
      c1w, c1b, c2w, c2b, hw, hb)


# ---------------------------------------------------------------------------
# Deterministic parameter init (synthetic, not a checkpoint load); weights are
# stored pre-cast / pre-laid-out for the kernel (bf16 for matmul-only operands).
# ---------------------------------------------------------------------------
def init_params(key):
    def nrm(k, shape, scale=0.02):
        return (scale * jax.random.normal(k, shape)).astype(jnp.float32)

    bf16 = jnp.bfloat16
    keys = iter(jax.random.split(key, 32))

    wq = nrm(next(keys), (N_LAYERS, D_LM, D_LM))
    wk = nrm(next(keys), (N_LAYERS, D_LM, D_LM))
    wv = nrm(next(keys), (N_LAYERS, D_LM, D_LM))
    wo = nrm(next(keys), (N_LAYERS, D_LM, D_LM))

    def head_major(w):  # (NL, D, D) -> (NL, H, D, Dh): per-head output columns
        return w.reshape(N_LAYERS, D_LM, N_HEADS, HEAD_DIM).transpose(0, 2, 1, 3)

    cls_w = nrm(next(keys), (3, D_LM, 1))
    reg_w = nrm(next(keys), (3, D_LM, 2))
    head_w = jnp.concatenate(
        [cls_w, reg_w, jnp.zeros((3, D_LM, CO_PAD - 3), jnp.float32)], axis=-1)

    return {
        "shared_emb": nrm(next(keys), (VOCAB, D_LM)),                 # f32 table
        "lm_proj_w": nrm(next(keys), (DV, D_LM)).astype(bf16),
        "lm_proj_b": nrm(next(keys), (D_LM,)),
        "v_emb": jax.random.normal(next(keys), (1, 1, D_LM)).astype(jnp.float32),
        "wq": head_major(wq).astype(bf16),
        "wk": head_major(wk).astype(bf16),
        "wv": head_major(wv).astype(bf16),
        "wo": wo.astype(bf16),
        "ln1": jnp.ones((N_LAYERS, 1, D_LM), jnp.float32),
        "ln2": jnp.ones((N_LAYERS, 1, D_LM), jnp.float32),
        "w1": nrm(next(keys), (N_LAYERS, D_LM, D_FF)).astype(bf16),
        "w2": nrm(next(keys), (N_LAYERS, D_FF, D_LM)).astype(bf16),
        "final_ln": jnp.ones((1, D_LM), jnp.float32),
        "nlq_conv1_w": nrm(next(keys), (3, D_LM, D_LM)).astype(bf16),
        "nlq_conv1_b": jnp.zeros((1, D_LM), jnp.float32),
        "nlq_conv2_w": nrm(next(keys), (3, D_LM, D_LM)).astype(bf16),
        "nlq_conv2_b": jnp.zeros((1, D_LM), jnp.float32),
        "nlq_head_w": head_w.astype(bf16),                            # (3, D, CO_PAD)
        "nlq_head_b": jnp.zeros((1, CO_PAD), jnp.float32),
    }


# ---------------------------------------------------------------------------
# GroundVQA forward (encoder + NLQ head; inference path, no loss / generate)
# ---------------------------------------------------------------------------
def ground_vqa_forward(params, v_feat, v_mask, q_token, q_mask):
    Bb, Lv, _ = v_feat.shape
    Lq = q_token.shape[1]
    L = Lq + Lv
    Lp = ((L + 15) // 16) * 16          # pad to a multiple of 16 sublanes
    pad = Lp - L
    f32 = jnp.float32

    # --- minimal glue (all tiny) --------------------------------------------
    lm_mask = jnp.concatenate([q_mask, v_mask], axis=1).astype(f32)   # (B, L) returned
    mask_bias = ((1.0 - jnp.pad(lm_mask, ((0, 0), (0, pad)))) * MASK_NEG
                 ).reshape(Bb, 1, Lp)
    tok_p = jnp.pad(q_token.astype(jnp.int32),
                    ((0, 0), (0, Lp - Lq))).reshape(Bb, Lp, 1)
    vfp = jnp.pad(v_feat.astype(jnp.bfloat16), ((0, 0), (Lq, pad), (0, 0)))
    vmask_full = jnp.pad(v_mask.astype(f32), ((0, 0), (Lq, pad))).reshape(Bb, Lp, 1)
    b_eff = (params["lm_proj_b"] + params["v_emb"].reshape(-1)).reshape(1, D_LM)

    enc_p, head_p = fused_forward(
        tok_p, vfp, mask_bias, vmask_full,
        params["shared_emb"], params["lm_proj_w"], b_eff,
        params["wq"], params["wk"], params["wv"], params["wo"],
        params["ln1"], params["ln2"], params["w1"], params["w2"],
        params["final_ln"],
        params["nlq_conv1_w"], params["nlq_conv1_b"],
        params["nlq_conv2_w"], params["nlq_conv2_b"],
        params["nlq_head_w"], params["nlq_head_b"],
        lq=Lq)

    encoder_out = enc_p[:, :L]                                        # drop pad rows
    head_v = head_p[:, Lq:L]                                          # video rows
    # TODO(synk): NLQHead segment decoding / NMS and the LM decoder `generate`
    # (beam/greedy decode over a pretrained T5 decoder) are not implemented.
    nlq_results = {"cls_logits": head_v[:, :, 0:1],
                   "reg_offsets": head_v[:, :, 1:3]}
    return encoder_out, lm_mask, nlq_results


# ---------------------------------------------------------------------------
if __name__ == "__main__":
    key = jax.random.PRNGKey(0)
    k_p, k_v, k_q = jax.random.split(key, 3)

    params = init_params(k_p)

    v_feat = jax.random.normal(k_v, (B, LV, DV), dtype=jnp.float32)
    v_mask = jnp.ones((B, LV), dtype=jnp.float32).at[1, -2:].set(0.0)
    q_token = jax.random.randint(k_q, (B, LQ), 0, VOCAB, dtype=jnp.int32)
    q_mask = jnp.ones((B, LQ), dtype=jnp.float32)

    fwd = jax.jit(ground_vqa_forward)
    encoder_out, lm_mask, nlq_results = fwd(params, v_feat, v_mask, q_token, q_mask)

    jax.block_until_ready(encoder_out)
    jax.block_until_ready(nlq_results["cls_logits"])
    jax.block_until_ready(nlq_results["reg_offsets"])

    assert encoder_out.shape == (B, LQ + LV, D_LM)
    assert lm_mask.shape == (B, LQ + LV)
    assert nlq_results["cls_logits"].shape == (B, LV, 1)
    assert nlq_results["reg_offsets"].shape == (B, LV, 2)
    assert bool(jnp.isfinite(encoder_out).all())
    assert bool(jnp.isfinite(nlq_results["cls_logits"]).all())

    print("KERNEL_OK")
</pallas_src>

<mosaic_0001>
module attributes {stable_mosaic.version = 11 : i64} {
  func.func @kernel(%arg0: i32, %arg1: memref<2x16x1xi32, #tpu.memory_space<vmem>>, %arg2: memref<2x16x32xbf16, #tpu.memory_space<vmem>>, %arg3: memref<2x1x16xf32, #tpu.memory_space<vmem>>, %arg4: memref<2x16x1xf32, #tpu.memory_space<vmem>>, %arg5: memref<128x64xf32, #tpu.memory_space<vmem>>, %arg6: memref<32x64xbf16, #tpu.memory_space<vmem>>, %arg7: memref<1x64xf32, #tpu.memory_space<vmem>>, %arg8: memref<2x4x64x16xbf16, #tpu.memory_space<vmem>>, %arg9: memref<2x4x64x16xbf16, #tpu.memory_space<vmem>>, %arg10: memref<2x4x64x16xbf16, #tpu.memory_space<vmem>>, %arg11: memref<2x64x64xbf16, #tpu.memory_space<vmem>>, %arg12: memref<2x1x64xf32, #tpu.memory_space<vmem>>, %arg13: memref<2x1x64xf32, #tpu.memory_space<vmem>>, %arg14: memref<2x64x128xbf16, #tpu.memory_space<vmem>>, %arg15: memref<2x128x64xbf16, #tpu.memory_space<vmem>>, %arg16: memref<1x64xf32, #tpu.memory_space<vmem>>, %arg17: memref<3x64x64xbf16, #tpu.memory_space<vmem>>, %arg18: memref<1x64xf32, #tpu.memory_space<vmem>>, %arg19: memref<3x64x64xbf16, #tpu.memory_space<vmem>>, %arg20: memref<1x64xf32, #tpu.memory_space<vmem>>, %arg21: memref<3x64x128xbf16, #tpu.memory_space<vmem>>, %arg22: memref<1x128xf32, #tpu.memory_space<vmem>>, %arg23: memref<2x16x64xf32, #tpu.memory_space<vmem>>, %arg24: memref<2x16x128xf32, #tpu.memory_space<vmem>>) attributes {dimension_semantics = [#tpu.dimension_semantics<parallel>], iteration_bounds = array<i64: 1>, scalar_prefetch = 0 : i64, scratch_operands = 0 : i64, tpu.core_type = #tpu.core_type<tc>, window_params = [{transform_indices = @transform_0, window_bounds = array<i64: 2, 16, 1>}, {transform_indices = @transform_1, window_bounds = array<i64: 2, 16, 32>}, {transform_indices = @transform_2, window_bounds = array<i64: 2, 1, 16>}, {transform_indices = @transform_3, window_bounds = array<i64: 2, 16, 1>}, {pipeline_mode = #tpu.pipeline_mode<synchronous>, transform_indices = @transform_4, window_bounds = array<i64: 128, 64>}, {pipeline_mode = #tpu.pipeline_mode<synchronous>, transform_indices = @transform_5, window_bounds = array<i64: 32, 64>}, {pipeline_mode = #tpu.pipeline_mode<synchronous>, transform_indices = @transform_6, window_bounds = array<i64: 1, 64>}, {pipeline_mode = #tpu.pipeline_mode<synchronous>, transform_indices = @transform_7, window_bounds = array<i64: 2, 4, 64, 16>}, {pipeline_mode = #tpu.pipeline_mode<synchronous>, transform_indices = @transform_8, window_bounds = array<i64: 2, 4, 64, 16>}, {pipeline_mode = #tpu.pipeline_mode<synchronous>, transform_indices = @transform_9, window_bounds = array<i64: 2, 4, 64, 16>}, {pipeline_mode = #tpu.pipeline_mode<synchronous>, transform_indices = @transform_10, window_bounds = array<i64: 2, 64, 64>}, {pipeline_mode = #tpu.pipeline_mode<synchronous>, transform_indices = @transform_11, window_bounds = array<i64: 2, 1, 64>}, {pipeline_mode = #tpu.pipeline_mode<synchronous>, transform_indices = @transform_12, window_bounds = array<i64: 2, 1, 64>}, {pipeline_mode = #tpu.pipeline_mode<synchronous>, transform_indices = @transform_13, window_bounds = array<i64: 2, 64, 128>}, {pipeline_mode = #tpu.pipeline_mode<synchronous>, transform_indices = @transform_14, window_bounds = array<i64: 2, 128, 64>}, {pipeline_mode = #tpu.pipeline_mode<synchronous>, transform_indices = @transform_15, window_bounds = array<i64: 1, 64>}, {pipeline_mode = #tpu.pipeline_mode<synchronous>, transform_indices = @transform_16, window_bounds = array<i64: 3, 64, 64>}, {pipeline_mode = #tpu.pipeline_mode<synchronous>, transform_indices = @transform_17, window_bounds = array<i64: 1, 64>}, {pipeline_mode = #tpu.pipeline_mode<synchronous>, transform_indices = @transform_18, window_bounds = array<i64: 3, 64, 64>}, {pipeline_mode = #tpu.pipeline_mode<synchronous>, transform_indices = @transform_19, window_bounds = array<i64: 1, 64>}, {pipeline_mode = #tpu.pipeline_mode<synchronous>, transform_indices = @transform_20, window_bounds = array<i64: 3, 64, 128>}, {pipeline_mode = #tpu.pipeline_mode<synchronous>, transform_indices = @transform_21, window_bounds = array<i64: 1, 128>}, {transform_indices = @transform_22, window_bounds = array<i64: 2, 16, 64>}, {transform_indices = @transform_23, window_bounds = array<i64: 2, 16, 128>}]} {
    %c0 = arith.constant 0 : index
    %c0_0 = arith.constant 0 : index
    %0 = vector.load %arg5[%c0, %c0_0] : memref<128x64xf32, #tpu.memory_space<vmem>>, vector<128x64xf32>
    %c0_1 = arith.constant 0 : index
    %c0_2 = arith.constant 0 : index
    %1 = vector.load %arg6[%c0_1, %c0_2] : memref<32x64xbf16, #tpu.memory_space<vmem>>, vector<32x64xbf16>
    %c0_3 = arith.constant 0 : index
    %c0_4 = arith.constant 0 : index
    %2 = vector.load %arg7[%c0_3, %c0_4] : memref<1x64xf32, #tpu.memory_space<vmem>>, vector<1x64xf32>
    %c0_5 = arith.constant 0 : index
    %c0_6 = arith.constant 0 : index
    %3 = vector.load %arg16[%c0_5, %c0_6] : memref<1x64xf32, #tpu.memory_space<vmem>>, vector<1x64xf32>
    %c0_7 = arith.constant 0 : index
    %c0_8 = arith.constant 0 : index
    %4 = vector.load %arg18[%c0_7, %c0_8] : memref<1x64xf32, #tpu.memory_space<vmem>>, vector<1x64xf32>
    %c0_9 = arith.constant 0 : index
    %c0_10 = arith.constant 0 : index
    %5 = vector.load %arg20[%c0_9, %c0_10] : memref<1x64xf32, #tpu.memory_space<vmem>>, vector<1x64xf32>
    %c0_11 = arith.constant 0 : index
    %c0_12 = arith.constant 0 : index
    %6 = vector.load %arg22[%c0_11, %c0_12] : memref<1x128xf32, #tpu.memory_space<vmem>>, vector<1x128xf32>
    %c0_13 = arith.constant 0 : index
    %c0_14 = arith.constant 0 : index
    %c0_15 = arith.constant 0 : index
    %7 = vector.load %arg3[%c0_13, %c0_14, %c0_15] : memref<2x1x16xf32, #tpu.memory_space<vmem>>, vector<1x1x16xf32>
    %8 = vector.shape_cast %7 : vector<1x1x16xf32> to vector<1x16xf32>
    %c0_16 = arith.constant 0 : index
    %c0_17 = arith.constant 0 : index
    %c0_18 = arith.constant 0 : index
    %9 = vector.load %arg1[%c0_16, %c0_17, %c0_18] : memref<2x16x1xi32, #tpu.memory_space<vmem>>, vector<1x16x1xi32>
    %10 = vector.shape_cast %9 : vector<1x16x1xi32> to vector<16x1xi32>
    %11 = tpu.iota {dimensions = array<i32: 1>} : vector<16x128xi32>
    %12 = vector.broadcast %10 : vector<16x1xi32> to vector<16x128xi32>
    %13 = arith.cmpi eq, %11, %12 : vector<16x128xi32>
    %14 = arith.extui %13 : vector<16x128xi1> to vector<16x128xi32>
    %15 = arith.sitofp %14 : vector<16x128xi32> to vector<16x128xf32>
    %cst = arith.constant dense<0.000000e+00> : vector<16x64xf32>
    %16 = tpu.matmul %15, %0, %cst {dimension_numbers = #tpu.dot_dimension_numbers<[1], [0], [0], [1], [0, 0, 1, 1], [], []>} : vector<16x128xf32>, vector<128x64xf32>, vector<16x64xf32> -> vector<16x64xf32>
    %c0_19 = arith.constant 0 : index
    %c0_20 = arith.constant 0 : index
    %c0_21 = arith.constant 0 : index
    %17 = vector.load %arg2[%c0_19, %c0_20, %c0_21] : memref<2x16x32xbf16, #tpu.memory_space<vmem>>, vector<1x16x32xbf16>
    %18 = vector.shape_cast %17 : vector<1x16x32xbf16> to vector<16x32xbf16>
    %cst_22 = arith.constant dense<0.000000e+00> : vector<16x64xf32>
    %19 = tpu.matmul %18, %1, %cst_22 {dimension_numbers = #tpu.dot_dimension_numbers<[1], [0], [0], [1], [0, 0, 1, 1], [], []>} : vector<16x32xbf16>, vector<32x64xbf16>, vector<16x64xf32> -> vector<16x64xf32>
    %20 = vector.broadcast %2 : vector<1x64xf32> to vector<16x64xf32>
    %21 = arith.addf %19, %20 : vector<16x64xf32>
    %22 = tpu.iota {dimensions = array<i32: 0>} : vector<16x64xi32>
    %c6_i32 = arith.constant 6 : i32
    %23 = vector.broadcast %c6_i32 : i32 to vector<16x64xi32>
    %24 = arith.cmpi slt, %22, %23 : vector<16x64xi32>
    %c16_i32 = arith.constant 16 : i32
    %25 = vector.broadcast %c16_i32 : i32 to vector<16x64xi32>
    %26 = arith.cmpi slt, %22, %25 : vector<16x64xi32>
    %cst_23 = arith.constant 0.000000e+00 : f32
    %27 = vector.broadcast %cst_23 : f32 to vector<16x64xf32>
    %28 = arith.select %26, %21, %27 : vector<16x64xi1>, vector<16x64xf32>
    %29 = arith.select %24, %16, %28 : vector<16x64xi1>, vector<16x64xf32>
    %c0_24 = arith.constant 0 : index
    %c0_25 = arith.constant 0 : index
    %c0_26 = arith.constant 0 : index
    %30 = vector.load %arg12[%c0_24, %c0_25, %c0_26] : memref<2x1x64xf32, #tpu.memory_space<vmem>>, vector<1x1x64xf32>
    %31 = vector.shape_cast %30 : vector<1x1x64xf32> to vector<1x64xf32>
    %32 = arith.mulf %29, %29 : vector<16x64xf32>
    %cst_27 = arith.constant dense<0.000000e+00> : vector<16xf32>
    %33 = vector.multi_reduction <add>, %32, %cst_27 [1] : vector<16x64xf32> to vector<16xf32>
    %34 = vector.shape_cast %33 : vector<16xf32> to vector<16x1xf32>
    %cst_28 = arith.constant 6.400000e+01 : f32
    %35 = vector.broadcast %cst_28 : f32 to vector<16x1xf32>
    %36 = arith.divf %34, %35 : vector<16x1xf32>
    %cst_29 = arith.constant 9.99999997E-7 : f32
    %37 = vector.broadcast %cst_29 : f32 to vector<16x1xf32>
    %38 = arith.addf %36, %37 : vector<16x1xf32>
    %39 = math.rsqrt %38 : vector<16x1xf32>
    %40 = vector.broadcast %39 : vector<16x1xf32> to vector<16x64xf32>
    %41 = arith.mulf %29, %40 : vector<16x64xf32>
    %42 = vector.broadcast %31 : vector<1x64xf32> to vector<16x64xf32>
    %43 = arith.mulf %41, %42 : vector<16x64xf32>
    %44 = arith.truncf %43 : vector<16x64xf32> to vector<16x64xbf16>
    %c0_30 = arith.constant 0 : index
    %c0_31 = arith.constant 0 : index
    %c0_32 = arith.constant 0 : index
    %c0_33 = arith.constant 0 : index
    %45 = vector.load %arg8[%c0_30, %c0_31, %c0_32, %c0_33] : memref<2x4x64x16xbf16, #tpu.memory_space<vmem>>, vector<1x1x64x16xbf16>
    %46 = vector.shape_cast %45 : vector<1x1x64x16xbf16> to vector<64x16xbf16>
    %cst_34 = arith.constant dense<0.000000e+00> : vector<16x16xf32>
    %47 = tpu.matmul %44, %46, %cst_34 {dimension_numbers = #tpu.dot_dimension_numbers<[1], [0], [0], [1], [0, 0, 1, 1], [], []>} : vector<16x64xbf16>, vector<64x16xbf16>, vector<16x16xf32> -> vector<16x16xf32>
    %48 = arith.truncf %47 : vector<16x16xf32> to vector<16x16xbf16>
    %c0_35 = arith.constant 0 : index
    %c0_36 = arith.constant 0 : index
    %c0_37 = arith.constant 0 : index
    %c0_38 = arith.constant 0 : index
    %49 = vector.load %arg9[%c0_35, %c0_36, %c0_37, %c0_38] : memref<2x4x64x16xbf16, #tpu.memory_space<vmem>>, vector<1x1x64x16xbf16>
    %50 = vector.shape_cast %49 : vector<1x1x64x16xbf16> to vector<64x16xbf16>
    %cst_39 = arith.constant dense<0.000000e+00> : vector<16x16xf32>
    %51 = tpu.matmul %44, %50, %cst_39 {dimension_numbers = #tpu.dot_dimension_numbers<[1], [0], [0], [1], [0, 0, 1, 1], [], []>} : vector<16x64xbf16>, vector<64x16xbf16>, vector<16x16xf32> -> vector<16x16xf32>
    %52 = arith.truncf %51 : vector<16x16xf32> to vector<16x16xbf16>
    %c0_40 = arith.constant 0 : index
    %c0_41 = arith.constant 0 : index
    %c0_42 = arith.constant 0 : index
    %c0_43 = arith.constant 0 : index
    %53 = vector.load %arg10[%c0_40, %c0_41, %c0_42, %c0_43] : memref<2x4x64x16xbf16, #tpu.memory_space<vmem>>, vector<1x1x64x16xbf16>
    %54 = vector.shape_cast %53 : vector<1x1x64x16xbf16> to vector<64x16xbf16>
    %cst_44 = arith.constant dense<0.000000e+00> : vector<16x16xf32>
    %55 = tpu.matmul %44, %54, %cst_44 {dimension_numbers = #tpu.dot_dimension_numbers<[1], [0], [0], [1], [0, 0, 1, 1], [], []>} : vector<16x64xbf16>, vector<64x16xbf16>, vector<16x16xf32> -> vector<16x16xf32>
    %56 = arith.truncf %55 : vector<16x16xf32> to vector<16x16xbf16>
    %cst_45 = arith.constant dense<0.000000e+00> : vector<16x16xf32>
    %57 = tpu.matmul %48, %52, %cst_45 {dimension_numbers = #tpu.dot_dimension_numbers<[1], [1], [0], [0], [0, 0, 1, 0], [], []>} : vector<16x16xbf16>, vector<16x16xbf16>, vector<16x16xf32> -> vector<16x16xf32>
    %58 = vector.broadcast %8 : vector<1x16xf32> to vector<16x16xf32>
    %59 = arith.addf %57, %58 : vector<16x16xf32>
    %cst_46 = arith.constant dense<0xFF800000> : vector<16xf32>
    %60 = vector.multi_reduction <maximumf>, %59, %cst_46 [1] : vector<16x16xf32> to vector<16xf32>
    %61 = vector.shape_cast %60 : vector<16xf32> to vector<16x1xf32>
    %62 = vector.broadcast %61 : vector<16x1xf32> to vector<16x16xf32>
    %63 = arith.subf %59, %62 : vector<16x16xf32>
    %64 = math.exp %63 : vector<16x16xf32>
    %cst_47 = arith.constant dense<0.000000e+00> : vector<16xf32>
    %65 = vector.multi_reduction <add>, %64, %cst_47 [1] : vector<16x16xf32> to vector<16xf32>
    %66 = vector.shape_cast %65 : vector<16xf32> to vector<16x1xf32>
    %67 = tpu.reciprocal %66 {approx = true} : vector<16x1xf32> -> vector<16x1xf32>
    %68 = vector.broadcast %67 : vector<16x1xf32> to vector<16x16xf32>
    %69 = arith.mulf %64, %68 : vector<16x16xf32>
    %70 = arith.truncf %69 : vector<16x16xf32> to vector<16x16xbf16>
    %cst_48 = arith.constant dense<0.000000e+00> : vector<16x16xf32>
    %71 = tpu.matmul %70, %56, %cst_48 {dimension_numbers = #tpu.dot_dimension_numbers<[1], [0], [0], [1], [0, 0, 1, 1], [], []>} : vector<16x16xbf16>, vector<16x16xbf16>, vector<16x16xf32> -> vector<16x16xf32>
    %c0_49 = arith.constant 0 : index
    %c1 = arith.constant 1 : index
    %c0_50 = arith.constant 0 : index
    %c0_51 = arith.constant 0 : index
    %72 = vector.load %arg8[%c0_49, %c1, %c0_50, %c0_51] : memref<2x4x64x16xbf16, #tpu.memory_space<vmem>>, vector<1x1x64x16xbf16>
    %73 = vector.shape_cast %72 : vector<1x1x64x16xbf16> to vector<64x16xbf16>
    %cst_52 = arith.constant dense<0.000000e+00> : vector<16x16xf32>
    %74 = tpu.matmul %44, %73, %cst_52 {dimension_numbers = #tpu.dot_dimension_numbers<[1], [0], [0], [1], [0, 0, 1, 1], [], []>} : vector<16x64xbf16>, vector<64x16xbf16>, vector<16x16xf32> -> vector<16x16xf32>
    %75 = arith.truncf %74 : vector<16x16xf32> to vector<16x16xbf16>
    %c0_53 = arith.constant 0 : index
    %c1_54 = arith.constant 1 : index
    %c0_55 = arith.constant 0 : index
    %c0_56 = arith.constant 0 : index
    %76 = vector.load %arg9[%c0_53, %c1_54, %c0_55, %c0_56] : memref<2x4x64x16xbf16, #tpu.memory_space<vmem>>, vector<1x1x64x16xbf16>
    %77 = vector.shape_cast %76 : vector<1x1x64x16xbf16> to vector<64x16xbf16>
    %cst_57 = arith.constant dense<0.000000e+00> : vector<16x16xf32>
    %78 = tpu.matmul %44, %77, %cst_57 {dimension_numbers = #tpu.dot_dimension_numbers<[1], [0], [0], [1], [0, 0, 1, 1], [], []>} : vector<16x64xbf16>, vector<64x16xbf16>, vector<16x16xf32> -> vector<16x16xf32>
    %79 = arith.truncf %78 : vector<16x16xf32> to vector<16x16xbf16>
    %c0_58 = arith.constant 0 : index
    %c1_59 = arith.constant 1 : index
    %c0_60 = arith.constant 0 : index
    %c0_61 = arith.constant 0 : index
    %80 = vector.load %arg10[%c0_58, %c1_59, %c0_60, %c0_61] : memref<2x4x64x16xbf16, #tpu.memory_space<vmem>>, vector<1x1x64x16xbf16>
    %81 = vector.shape_cast %80 : vector<1x1x64x16xbf16> to vector<64x16xbf16>
    %cst_62 = arith.constant dense<0.000000e+00> : vector<16x16xf32>
    %82 = tpu.matmul %44, %81, %cst_62 {dimension_numbers = #tpu.dot_dimension_numbers<[1], [0], [0], [1], [0, 0, 1, 1], [], []>} : vector<16x64xbf16>, vector<64x16xbf16>, vector<16x16xf32> -> vector<16x16xf32>
    %83 = arith.truncf %82 : vector<16x16xf32> to vector<16x16xbf16>
    %cst_63 = arith.constant dense<0.000000e+00> : vector<16x16xf32>
    %84 = tpu.matmul %75, %79, %cst_63 {dimension_numbers = #tpu.dot_dimension_numbers<[1], [1], [0], [0], [0, 0, 1, 0], [], []>} : vector<16x16xbf16>, vector<16x16xbf16>, vector<16x16xf32> -> vector<16x16xf32>
    %85 = vector.broadcast %8 : vector<1x16xf32> to vector<16x16xf32>
    %86 = arith.addf %84, %85 : vector<16x16xf32>
    %cst_64 = arith.constant dense<0xFF800000> : vector<16xf32>
    %87 = vector.multi_reduction <maximumf>, %86, %cst_64 [1] : vector<16x16xf32> to vector<16xf32>
    %88 = vector.shape_cast %87 : vector<16xf32> to vector<16x1xf32>
    %89 = vector.broadcast %88 : vector<16x1xf32> to vector<16x16xf32>
    %90 = arith.subf %86, %89 : vector<16x16xf32>
    %91 = math.exp %90 : vector<16x16xf32>
    %cst_65 = arith.constant dense<0.000000e+00> : vector<16xf32>
    %92 = vector.multi_reduction <add>, %91, %cst_65 [1] : vector<16x16xf32> to vector<16xf32>
    %93 = vector.shape_cast %92 : vector<16xf32> to vector<16x1xf32>
    %94 = tpu.reciprocal %93 {approx = true} : vector<16x1xf32> -> vector<16x1xf32>
    %95 = vector.broadcast %94 : vector<16x1xf32> to vector<16x16xf32>
    %96 = arith.mulf %91, %95 : vector<16x16xf32>
    %97 = arith.truncf %96 : vector<16x16xf32> to vector<16x16xbf16>
    %cst_66 = arith.constant dense<0.000000e+00> : vector<16x16xf32>
    %98 = tpu.matmul %97, %83, %cst_66 {dimension_numbers = #tpu.dot_dimension_numbers<[1], [0], [0], [1], [0, 0, 1, 1], [], []>} : vector<16x16xbf16>, vector<16x16xbf16>, vector<16x16xf32> -> vector<16x16xf32>
    %c0_67 = arith.constant 0 : index
    %c2 = arith.constant 2 : index
    %c0_68 = arith.constant 0 : index
    %c0_69 = arith.constant 0 : index
    %99 = vector.load %arg8[%c0_67, %c2, %c0_68, %c0_69] : memref<2x4x64x16xbf16, #tpu.memory_space<vmem>>, vector<1x1x64x16xbf16>
    %100 = vector.shape_cast %99 : vector<1x1x64x16xbf16> to vector<64x16xbf16>
    %cst_70 = arith.constant dense<0.000000e+00> : vector<16x16xf32>
    %101 = tpu.matmul %44, %100, %cst_70 {dimension_numbers = #tpu.dot_dimension_numbers<[1], [0], [0], [1], [0, 0, 1, 1], [], []>} : vector<16x64xbf16>, vector<64x16xbf16>, vector<16x16xf32> -> vector<16x16xf32>
    %102 = arith.truncf %101 : vector<16x16xf32> to vector<16x16xbf16>
    %c0_71 = arith.constant 0 : index
    %c2_72 = arith.constant 2 : index
    %c0_73 = arith.constant 0 : index
    %c0_74 = arith.constant 0 : index
    %103 = vector.load %arg9[%c0_71, %c2_72, %c0_73, %c0_74] : memref<2x4x64x16xbf16, #tpu.memory_space<vmem>>, vector<1x1x64x16xbf16>
    %104 = vector.shape_cast %103 : vector<1x1x64x16xbf16> to vector<64x16xbf16>
    %cst_75 = arith.constant dense<0.000000e+00> : vector<16x16xf32>
    %105 = tpu.matmul %44, %104, %cst_75 {dimension_numbers = #tpu.dot_dimension_numbers<[1], [0], [0], [1], [0, 0, 1, 1], [], []>} : vector<16x64xbf16>, vector<64x16xbf16>, vector<16x16xf32> -> vector<16x16xf32>
    %106 = arith.truncf %105 : vector<16x16xf32> to vector<16x16xbf16>
    %c0_76 = arith.constant 0 : index
    %c2_77 = arith.constant 2 : index
    %c0_78 = arith.constant 0 : index
    %c0_79 = arith.constant 0 : index
    %107 = vector.load %arg10[%c0_76, %c2_77, %c0_78, %c0_79] : memref<2x4x64x16xbf16, #tpu.memory_space<vmem>>, vector<1x1x64x16xbf16>
    %108 = vector.shape_cast %107 : vector<1x1x64x16xbf16> to vector<64x16xbf16>
    %cst_80 = arith.constant dense<0.000000e+00> : vector<16x16xf32>
    %109 = tpu.matmul %44, %108, %cst_80 {dimension_numbers = #tpu.dot_dimension_numbers<[1], [0], [0], [1], [0, 0, 1, 1], [], []>} : vector<16x64xbf16>, vector<64x16xbf16>, vector<16x16xf32> -> vector<16x16xf32>
    %110 = arith.truncf %109 : vector<16x16xf32> to vector<16x16xbf16>
    %cst_81 = arith.constant dense<0.000000e+00> : vector<16x16xf32>
    %111 = tpu.matmul %102, %106, %cst_81 {dimension_numbers = #tpu.dot_dimension_numbers<[1], [1], [0], [0], [0, 0, 1, 0], [], []>} : vector<16x16xbf16>, vector<16x16xbf16>, vector<16x16xf32> -> vector<16x16xf32>
    %112 = vector.broadcast %8 : vector<1x16xf32> to vector<16x16xf32>
    %113 = arith.addf %111, %112 : vector<16x16xf32>
    %cst_82 = arith.constant dense<0xFF800000> : vector<16xf32>
    %114 = vector.multi_reduction <maximumf>, %113, %cst_82 [1] : vector<16x16xf32> to vector<16xf32>
    %115 = vector.shape_cast %114 : vector<16xf32> to vector<16x1xf32>
    %116 = vector.broadcast %115 : vector<16x1xf32> to vector<16x16xf32>
    %117 = arith.subf %113, %116 : vector<16x16xf32>
    %118 = math.exp %117 : vector<16x16xf32>
    %cst_83 = arith.constant dense<0.000000e+00> : vector<16xf32>
    %119 = vector.multi_reduction <add>, %118, %cst_83 [1] : vector<16x16xf32> to vector<16xf32>
    %120 = vector.shape_cast %119 : vector<16xf32> to vector<16x1xf32>
    %121 = tpu.reciprocal %120 {approx = true} : vector<16x1xf32> -> vector<16x1xf32>
    %122 = vector.broadcast %121 : vector<16x1xf32> to vector<16x16xf32>
    %123 = arith.mulf %118, %122 : vector<16x16xf32>
    %124 = arith.truncf %123 : vector<16x16xf32> to vector<16x16xbf16>
    %cst_84 = arith.constant dense<0.000000e+00> : vector<16x16xf32>
    %125 = tpu.matmul %124, %110, %cst_84 {dimension_numbers = #tpu.dot_dimension_numbers<[1], [0], [0], [1], [0, 0, 1, 1], [], []>} : vector<16x16xbf16>, vector<16x16xbf16>, vector<16x16xf32> -> vector<16x16xf32>
    %c0_85 = arith.constant 0 : index
    %c3 = arith.constant 3 : index
    %c0_86 = arith.constant 0 : index
    %c0_87 = arith.constant 0 : index
    %126 = vector.load %arg8[%c0_85, %c3, %c0_86, %c0_87] : memref<2x4x64x16xbf16, #tpu.memory_space<vmem>>, vector<1x1x64x16xbf16>
    %127 = vector.shape_cast %126 : vector<1x1x64x16xbf16> to vector<64x16xbf16>
    %cst_88 = arith.constant dense<0.000000e+00> : vector<16x16xf32>
    %128 = tpu.matmul %44, %127, %cst_88 {dimension_numbers = #tpu.dot_dimension_numbers<[1], [0], [0], [1], [0, 0, 1, 1], [], []>} : vector<16x64xbf16>, vector<64x16xbf16>, vector<16x16xf32> -> vector<16x16xf32>
    %129 = arith.truncf %128 : vector<16x16xf32> to vector<16x16xbf16>
    %c0_89 = arith.constant 0 : index
    %c3_90 = arith.constant 3 : index
    %c0_91 = arith.constant 0 : index
    %c0_92 = arith.constant 0 : index
    %130 = vector.load %arg9[%c0_89, %c3_90, %c0_91, %c0_92] : memref<2x4x64x16xbf16, #tpu.memory_space<vmem>>, vector<1x1x64x16xbf16>
    %131 = vector.shape_cast %130 : vector<1x1x64x16xbf16> to vector<64x16xbf16>
    %cst_93 = arith.constant dense<0.000000e+00> : vector<16x16xf32>
    %132 = tpu.matmul %44, %131, %cst_93 {dimension_numbers = #tpu.dot_dimension_numbers<[1], [0], [0], [1], [0, 0, 1, 1], [], []>} : vector<16x64xbf16>, vector<64x16xbf16>, vector<16x16xf32> -> vector<16x16xf32>
    %133 = arith.truncf %132 : vector<16x16xf32> to vector<16x16xbf16>
    %c0_94 = arith.constant 0 : index
    %c3_95 = arith.constant 3 : index
    %c0_96 = arith.constant 0 : index
    %c0_97 = arith.constant 0 : index
    %134 = vector.load %arg10[%c0_94, %c3_95, %c0_96, %c0_97] : memref<2x4x64x16xbf16, #tpu.memory_space<vmem>>, vector<1x1x64x16xbf16>
    %135 = vector.shape_cast %134 : vector<1x1x64x16xbf16> to vector<64x16xbf16>
    %cst_98 = arith.constant dense<0.000000e+00> : vector<16x16xf32>
    %136 = tpu.matmul %44, %135, %cst_98 {dimension_numbers = #tpu.dot_dimension_numbers<[1], [0], [0], [1], [0, 0, 1, 1], [], []>} : vector<16x64xbf16>, vector<64x16xbf16>, vector<16x16xf32> -> vector<16x16xf32>
    %137 = arith.truncf %136 : vector<16x16xf32> to vector<16x16xbf16>
    %cst_99 = arith.constant dense<0.000000e+00> : vector<16x16xf32>
    %138 = tpu.matmul %129, %133, %cst_99 {dimension_numbers = #tpu.dot_dimension_numbers<[1], [1], [0], [0], [0, 0, 1, 0], [], []>} : vector<16x16xbf16>, vector<16x16xbf16>, vector<16x16xf32> -> vector<16x16xf32>
    %139 = vector.broadcast %8 : vector<1x16xf32> to vector<16x16xf32>
    %140 = arith.addf %138, %139 : vector<16x16xf32>
    %cst_100 = arith.constant dense<0xFF800000> : vector<16xf32>
    %141 = vector.multi_reduction <maximumf>, %140, %cst_100 [1] : vector<16x16xf32> to vector<16xf32>
    %142 = vector.shape_cast %141 : vector<16xf32> to vector<16x1xf32>
    %143 = vector.broadcast %142 : vector<16x1xf32> to vector<16x16xf32>
    %144 = arith.subf %140, %143 : vector<16x16xf32>
    %145 = math.exp %144 : vector<16x16xf32>
    %cst_101 = arith.constant dense<0.000000e+00> : vector<16xf32>
    %146 = vector.multi_reduction <add>, %145, %cst_101 [1] : vector<16x16xf32> to vector<16xf32>
    %147 = vector.shape_cast %146 : vector<16xf32> to vector<16x1xf32>
    %148 = tpu.reciprocal %147 {approx = true} : vector<16x1xf32> -> vector<16x1xf32>
    %149 = vector.broadcast %148 : vector<16x1xf32> to vector<16x16xf32>
    %150 = arith.mulf %145, %149 : vector<16x16xf32>
    %151 = arith.truncf %150 : vector<16x16xf32> to vector<16x16xbf16>
    %cst_102 = arith.constant dense<0.000000e+00> : vector<16x16xf32>
    %152 = tpu.matmul %151, %137, %cst_102 {dimension_numbers = #tpu.dot_dimension_numbers<[1], [0], [0], [1], [0, 0, 1, 1], [], []>} : vector<16x16xbf16>, vector<16x16xbf16>, vector<16x16xf32> -> vector<16x16xf32>
    %153 = tpu.concatenate %71, %98, %125, %152 in 1 : vector<16x16xf32>, vector<16x16xf32>, vector<16x16xf32>, vector<16x16xf32> -> vector<16x64xf32>
    %154 = arith.truncf %153 : vector<16x64xf32> to vector<16x64xbf16>
    %c0_103 = arith.constant 0 : index
    %c0_104 = arith.constant 0 : index
    %c0_105 = arith.constant 0 : index
    %155 = vector.load %arg11[%c0_103, %c0_104, %c0_105] : memref<2x64x64xbf16, #tpu.memory_space<vmem>>, vector<1x64x64xbf16>
    %156 = vector.shape_cast %155 : vector<1x64x64xbf16> to vector<64x64xbf16>
    %cst_106 = arith.constant dense<0.000000e+00> : vector<16x64xf32>
    %157 = tpu.matmul %154, %156, %cst_106 {dimension_numbers = #tpu.dot_dimension_numbers<[1], [0], [0], [1], [0, 0, 1, 1], [], []>} : vector<16x64xbf16>, vector<64x64xbf16>, vector<16x64xf32> -> vector<16x64xf32>
    %158 = arith.addf %29, %157 : vector<16x64xf32>
    %c0_107 = arith.constant 0 : index
    %c0_108 = arith.constant 0 : index
    %c0_109 = arith.constant 0 : index
    %159 = vector.load %arg13[%c0_107, %c0_108, %c0_109] : memref<2x1x64xf32, #tpu.memory_space<vmem>>, vector<1x1x64xf32>
    %160 = vector.shape_cast %159 : vector<1x1x64xf32> to vector<1x64xf32>
    %161 = arith.mulf %158, %158 : vector<16x64xf32>
    %cst_110 = arith.constant dense<0.000000e+00> : vector<16xf32>
    %162 = vector.multi_reduction <add>, %161, %cst_110 [1] : vector<16x64xf32> to vector<16xf32>
    %163 = vector.shape_cast %162 : vector<16xf32> to vector<16x1xf32>
    %cst_111 = arith.constant 6.400000e+01 : f32
    %164 = vector.broadcast %cst_111 : f32 to vector<16x1xf32>
    %165 = arith.divf %163, %164 : vector<16x1xf32>
    %cst_112 = arith.constant 9.99999997E-7 : f32
    %166 = vector.broadcast %cst_112 : f32 to vector<16x1xf32>
    %167 = arith.addf %165, %166 : vector<16x1xf32>
    %168 = math.rsqrt %167 : vector<16x1xf32>
    %169 = vector.broadcast %168 : vector<16x1xf32> to vector<16x64xf32>
    %170 = arith.mulf %158, %169 : vector<16x64xf32>
    %171 = vector.broadcast %160 : vector<1x64xf32> to vector<16x64xf32>
    %172 = arith.mulf %170, %171 : vector<16x64xf32>
    %173 = arith.truncf %172 : vector<16x64xf32> to vector<16x64xbf16>
    %c0_113 = arith.constant 0 : index
    %c0_114 = arith.constant 0 : index
    %c0_115 = arith.constant 0 : index
    %174 = vector.load %arg14[%c0_113, %c0_114, %c0_115] : memref<2x64x128xbf16, #tpu.memory_space<vmem>>, vector<1x64x128xbf16>
    %175 = vector.shape_cast %174 : vector<1x64x128xbf16> to vector<64x128xbf16>
    %cst_116 = arith.constant dense<0.000000e+00> : vector<16x128xf32>
    %176 = tpu.matmul %173, %175, %cst_116 {dimension_numbers = #tpu.dot_dimension_numbers<[1], [0], [0], [1], [0, 0, 1, 1], [], []>} : vector<16x64xbf16>, vector<64x128xbf16>, vector<16x128xf32> -> vector<16x128xf32>
    %cst_117 = arith.constant 0.000000e+00 : f32
    %177 = vector.broadcast %cst_117 : f32 to vector<16x128xf32>
    %178 = arith.maximumf %176, %177 : vector<16x128xf32>
    %179 = arith.truncf %178 : vector<16x128xf32> to vector<16x128xbf16>
    %c0_118 = arith.constant 0 : index
    %c0_119 = arith.constant 0 : index
    %c0_120 = arith.constant 0 : index
    %180 = vector.load %arg15[%c0_118, %c0_119, %c0_120] : memref<2x128x64xbf16, #tpu.memory_space<vmem>>, vector<1x128x64xbf16>
    %181 = vector.shape_cast %180 : vector<1x128x64xbf16> to vector<128x64xbf16>
    %cst_121 = arith.constant dense<0.000000e+00> : vector<16x64xf32>
    %182 = tpu.matmul %179, %181, %cst_121 {dimension_numbers = #tpu.dot_dimension_numbers<[1], [0], [0], [1], [0, 0, 1, 1], [], []>} : vector<16x128xbf16>, vector<128x64xbf16>, vector<16x64xf32> -> vector<16x64xf32>
    %183 = arith.addf %158, %182 : vector<16x64xf32>
    %c1_122 = arith.constant 1 : index
    %c0_123 = arith.constant 0 : index
    %c0_124 = arith.constant 0 : index
    %184 = vector.load %arg12[%c1_122, %c0_123, %c0_124] : memref<2x1x64xf32, #tpu.memory_space<vmem>>, vector<1x1x64xf32>
    %185 = vector.shape_cast %184 : vector<1x1x64xf32> to vector<1x64xf32>
    %186 = arith.mulf %183, %183 : vector<16x64xf32>
    %cst_125 = arith.constant dense<0.000000e+00> : vector<16xf32>
    %187 = vector.multi_reduction <add>, %186, %cst_125 [1] : vector<16x64xf32> to vector<16xf32>
    %188 = vector.shape_cast %187 : vector<16xf32> to vector<16x1xf32>
    %cst_126 = arith.constant 6.400000e+01 : f32
    %189 = vector.broadcast %cst_126 : f32 to vector<16x1xf32>
    %190 = arith.divf %188, %189 : vector<16x1xf32>
    %cst_127 = arith.constant 9.99999997E-7 : f32
    %191 = vector.broadcast %cst_127 : f32 to vector<16x1xf32>
    %192 = arith.addf %190, %191 : vector<16x1xf32>
    %193 = math.rsqrt %192 : vector<16x1xf32>
    %194 = vector.broadcast %193 : vector<16x1xf32> to vector<16x64xf32>
    %195 = arith.mulf %183, %194 : vector<16x64xf32>
    %196 = vector.broadcast %185 : vector<1x64xf32> to vector<16x64xf32>
    %197 = arith.mulf %195, %196 : vector<16x64xf32>
    %198 = arith.truncf %197 : vector<16x64xf32> to vector<16x64xbf16>
    %c1_128 = arith.constant 1 : index
    %c0_129 = arith.constant 0 : index
    %c0_130 = arith.constant 0 : index
    %c0_131 = arith.constant 0 : index
    %199 = vector.load %arg8[%c1_128, %c0_129, %c0_130, %c0_131] : memref<2x4x64x16xbf16, #tpu.memory_space<vmem>>, vector<1x1x64x16xbf16>
    %200 = vector.shape_cast %199 : vector<1x1x64x16xbf16> to vector<64x16xbf16>
    %cst_132 = arith.constant dense<0.000000e+00> : vector<16x16xf32>
    %201 = tpu.matmul %198, %200, %cst_132 {dimension_numbers = #tpu.dot_dimension_numbers<[1], [0], [0], [1], [0, 0, 1, 1], [], []>} : vector<16x64xbf16>, vector<64x16xbf16>, vector<16x16xf32> -> vector<16x16xf32>
    %202 = arith.truncf %201 : vector<16x16xf32> to vector<16x16xbf16>
    %c1_133 = arith.constant 1 : index
    %c0_134 = arith.constant 0 : index
    %c0_135 = arith.constant 0 : index
    %c0_136 = arith.constant 0 : index
    %203 = vector.load %arg9[%c1_133, %c0_134, %c0_135, %c0_136] : memref<2x4x64x16xbf16, #tpu.memory_space<vmem>>, vector<1x1x64x16xbf16>
    %204 = vector.shape_cast %203 : vector<1x1x64x16xbf16> to vector<64x16xbf16>
    %cst_137 = arith.constant dense<0.000000e+00> : vector<16x16xf32>
    %205 = tpu.matmul %198, %204, %cst_137 {dimension_numbers = #tpu.dot_dimension_numbers<[1], [0], [0], [1], [0, 0, 1, 1], [], []>} : vector<16x64xbf16>, vector<64x16xbf16>, vector<16x16xf32> -> vector<16x16xf32>
    %206 = arith.truncf %205 : vector<16x16xf32> to vector<16x16xbf16>
    %c1_138 = arith.constant 1 : index
    %c0_139 = arith.constant 0 : index
    %c0_140 = arith.constant 0 : index
    %c0_141 = arith.constant 0 : index
    %207 = vector.load %arg10[%c1_138, %c0_139, %c0_140, %c0_141] : memref<2x4x64x16xbf16, #tpu.memory_space<vmem>>, vector<1x1x64x16xbf16>
    %208 = vector.shape_cast %207 : vector<1x1x64x16xbf16> to vector<64x16xbf16>
    %cst_142 = arith.constant dense<0.000000e+00> : vector<16x16xf32>
    %209 = tpu.matmul %198, %208, %cst_142 {dimension_numbers = #tpu.dot_dimension_numbers<[1], [0], [0], [1], [0, 0, 1, 1], [], []>} : vector<16x64xbf16>, vector<64x16xbf16>, vector<16x16xf32> -> vector<16x16xf32>
    %210 = arith.truncf %209 : vector<16x16xf32> to vector<16x16xbf16>
    %cst_143 = arith.constant dense<0.000000e+00> : vector<16x16xf32>
    %211 = tpu.matmul %202, %206, %cst_143 {dimension_numbers = #tpu.dot_dimension_numbers<[1], [1], [0], [0], [0, 0, 1, 0], [], []>} : vector<16x16xbf16>, vector<16x16xbf16>, vector<16x16xf32> -> vector<16x16xf32>
    %212 = vector.broadcast %8 : vector<1x16xf32> to vector<16x16xf32>
    %213 = arith.addf %211, %212 : vector<16x16xf32>
    %cst_144 = arith.constant dense<0xFF800000> : vector<16xf32>
    %214 = vector.multi_reduction <maximumf>, %213, %cst_144 [1] : vector<16x16xf32> to vector<16xf32>
    %215 = vector.shape_cast %214 : vector<16xf32> to vector<16x1xf32>
    %216 = vector.broadcast %215 : vector<16x1xf32> to vector<16x16xf32>
    %217 = arith.subf %213, %216 : vector<16x16xf32>
    %218 = math.exp %217 : vector<16x16xf32>
    %cst_145 = arith.constant dense<0.000000e+00> : vector<16xf32>
    %219 = vector.multi_reduction <add>, %218, %cst_145 [1] : vector<16x16xf32> to vector<16xf32>
    %220 = vector.shape_cast %219 : vector<16xf32> to vector<16x1xf32>
    %221 = tpu.reciprocal %220 {approx = true} : vector<16x1xf32> -> vector<16x1xf32>
    %222 = vector.broadcast %221 : vector<16x1xf32> to vector<16x16xf32>
    %223 = arith.mulf %218, %222 : vector<16x16xf32>
    %224 = arith.truncf %223 : vector<16x16xf32> to vector<16x16xbf16>
    %cst_146 = arith.constant dense<0.000000e+00> : vector<16x16xf32>
    %225 = tpu.matmul %224, %210, %cst_146 {dimension_numbers = #tpu.dot_dimension_numbers<[1], [0], [0], [1], [0, 0, 1, 1], [], []>} : vector<16x16xbf16>, vector<16x16xbf16>, vector<16x16xf32> -> vector<16x16xf32>
    %c1_147 = arith.constant 1 : index
    %c1_148 = arith.constant 1 : index
    %c0_149 = arith.constant 0 : index
    %c0_150 = arith.constant 0 : index
    %226 = vector.load %arg8[%c1_147, %c1_148, %c0_149, %c0_150] : memref<2x4x64x16xbf16, #tpu.memory_space<vmem>>, vector<1x1x64x16xbf16>
    %227 = vector.shape_cast %226 : vector<1x1x64x16xbf16> to vector<64x16xbf16>
    %cst_151 = arith.constant dense<0.000000e+00> : vector<16x16xf32>
    %228 = tpu.matmul %198, %227, %cst_151 {dimension_numbers = #tpu.dot_dimension_numbers<[1], [0], [0], [1], [0, 0, 1, 1], [], []>} : vector<16x64xbf16>, vector<64x16xbf16>, vector<16x16xf32> -> vector<16x16xf32>
    %229 = arith.truncf %228 : vector<16x16xf32> to vector<16x16xbf16>
    %c1_152 = arith.constant 1 : index
    %c1_153 = arith.constant 1 : index
    %c0_154 = arith.constant 0 : index
    %c0_155 = arith.constant 0 : index
    %230 = vector.load %arg9[%c1_152, %c1_153, %c0_154, %c0_155] : memref<2x4x64x16xbf16, #tpu.memory_space<vmem>>, vector<1x1x64x16xbf16>
    %231 = vector.shape_cast %230 : vector<1x1x64x16xbf16> to vector<64x16xbf16>
    %cst_156 = arith.constant dense<0.000000e+00> : vector<16x16xf32>
    %232 = tpu.matmul %198, %231, %cst_156 {dimension_numbers = #tpu.dot_dimension_numbers<[1], [0], [0], [1], [0, 0, 1, 1], [], []>} : vector<16x64xbf16>, vector<64x16xbf16>, vector<16x16xf32> -> vector<16x16xf32>
    %233 = arith.truncf %232 : vector<16x16xf32> to vector<16x16xbf16>
    %c1_157 = arith.constant 1 : index
    %c1_158 = arith.constant 1 : index
    %c0_159 = arith.constant 0 : index
    %c0_160 = arith.constant 0 : index
    %234 = vector.load %arg10[%c1_157, %c1_158, %c0_159, %c0_160] : memref<2x4x64x16xbf16, #tpu.memory_space<vmem>>, vector<1x1x64x16xbf16>
    %235 = vector.shape_cast %234 : vector<1x1x64x16xbf16> to vector<64x16xbf16>
    %cst_161 = arith.constant dense<0.000000e+00> : vector<16x16xf32>
    %236 = tpu.matmul %198, %235, %cst_161 {dimension_numbers = #tpu.dot_dimension_numbers<[1], [0], [0], [1], [0, 0, 1, 1], [], []>} : vector<16x64xbf16>, vector<64x16xbf16>, vector<16x16xf32> -> vector<16x16xf32>
    %237 = arith.truncf %236 : vector<16x16xf32> to vector<16x16xbf16>
    %cst_162 = arith.constant dense<0.000000e+00> : vector<16x16xf32>
    %238 = tpu.matmul %229, %233, %cst_162 {dimension_numbers = #tpu.dot_dimension_numbers<[1], [1], [0], [0], [0, 0, 1, 0], [], []>} : vector<16x16xbf16>, vector<16x16xbf16>, vector<16x16xf32> -> vector<16x16xf32>
    %239 = vector.broadcast %8 : vector<1x16xf32> to vector<16x16xf32>
    %240 = arith.addf %238, %239 : vector<16x16xf32>
    %cst_163 = arith.constant dense<0xFF800000> : vector<16xf32>
    %241 = vector.multi_reduction <maximumf>, %240, %cst_163 [1] : vector<16x16xf32> to vector<16xf32>
    %242 = vector.shape_cast %241 : vector<16xf32> to vector<16x1xf32>
    %243 = vector.broadcast %242 : vector<16x1xf32> to vector<16x16xf32>
    %244 = arith.subf %240, %243 : vector<16x16xf32>
    %245 = math.exp %244 : vector<16x16xf32>
    %cst_164 = arith.constant dense<0.000000e+00> : vector<16xf32>
    %246 = vector.multi_reduction <add>, %245, %cst_164 [1] : vector<16x16xf32> to vector<16xf32>
    %247 = vector.shape_cast %246 : vector<16xf32> to vector<16x1xf32>
    %248 = tpu.reciprocal %247 {approx = true} : vector<16x1xf32> -> vector<16x1xf32>
    %249 = vector.broadcast %248 : vector<16x1xf32> to vector<16x16xf32>
    %250 = arith.mulf %245, %249 : vector<16x16xf32>
    %251 = arith.truncf %250 : vector<16x16xf32> to vector<16x16xbf16>
    %cst_165 = arith.constant dense<0.000000e+00> : vector<16x16xf32>
    %252 = tpu.matmul %251, %237, %cst_165 {dimension_numbers = #tpu.dot_dimension_numbers<[1], [0], [0], [1], [0, 0, 1, 1], [], []>} : vector<16x16xbf16>, vector<16x16xbf16>, vector<16x16xf32> -> vector<16x16xf32>
    %c1_166 = arith.constant 1 : index
    %c2_167 = arith.constant 2 : index
    %c0_168 = arith.constant 0 : index
    %c0_169 = arith.constant 0 : index
    %253 = vector.load %arg8[%c1_166, %c2_167, %c0_168, %c0_169] : memref<2x4x64x16xbf16, #tpu.memory_space<vmem>>, vector<1x1x64x16xbf16>
    %254 = vector.shape_cast %253 : vector<1x1x64x16xbf16> to vector<64x16xbf16>
    %cst_170 = arith.constant dense<0.000000e+00> : vector<16x16xf32>
    %255 = tpu.matmul %198, %254, %cst_170 {dimension_numbers = #tpu.dot_dimension_numbers<[1], [0], [0], [1], [0, 0, 1, 1], [], []>} : vector<16x64xbf16>, vector<64x16xbf16>, vector<16x16xf32> -> vector<16x16xf32>
    %256 = arith.truncf %255 : vector<16x16xf32> to vector<16x16xbf16>
    %c1_171 = arith.constant 1 : index
    %c2_172 = arith.constant 2 : index
    %c0_173 = arith.constant 0 : index
    %c0_174 = arith.constant 0 : index
    %257 = vector.load %arg9[%c1_171, %c2_172, %c0_173, %c0_174] : memref<2x4x64x16xbf16, #tpu.memory_space<vmem>>, vector<1x1x64x16xbf16>
    %258 = vector.shape_cast %257 : vector<1x1x64x16xbf16> to vector<64x16xbf16>
    %cst_175 = arith.constant dense<0.000000e+00> : vector<16x16xf32>
    %259 = tpu.matmul %198, %258, %cst_175 {dimension_numbers = #tpu.dot_dimension_numbers<[1], [0], [0], [1], [0, 0, 1, 1], [], []>} : vector<16x64xbf16>, vector<64x16xbf16>, vector<16x16xf32> -> vector<16x16xf32>
    %260 = arith.truncf %259 : vector<16x16xf32> to vector<16x16xbf16>
    %c1_176 = arith.constant 1 : index
    %c2_177 = arith.constant 2 : index
    %c0_178 = arith.constant 0 : index
    %c0_179 = arith.constant 0 : index
    %261 = vector.load %arg10[%c1_176, %c2_177, %c0_178, %c0_179] : memref<2x4x64x16xbf16, #tpu.memory_space<vmem>>, vector<1x1x64x16xbf16>
    %262 = vector.shape_cast %261 : vector<1x1x64x16xbf16> to vector<64x16xbf16>
    %cst_180 = arith.constant dense<0.000000e+00> : vector<16x16xf32>
    %263 = tpu.matmul %198, %262, %cst_180 {dimension_numbers = #tpu.dot_dimension_numbers<[1], [0], [0], [1], [0, 0, 1, 1], [], []>} : vector<16x64xbf16>, vector<64x16xbf16>, vector<16x16xf32> -> vector<16x16xf32>
    %264 = arith.truncf %263 : vector<16x16xf32> to vector<16x16xbf16>
    %cst_181 = arith.constant dense<0.000000e+00> : vector<16x16xf32>
    %265 = tpu.matmul %256, %260, %cst_181 {dimension_numbers = #tpu.dot_dimension_numbers<[1], [1], [0], [0], [0, 0, 1, 0], [], []>} : vector<16x16xbf16>, vector<16x16xbf16>, vector<16x16xf32> -> vector<16x16xf32>
    %266 = vector.broadcast %8 : vector<1x16xf32> to vector<16x16xf32>
    %267 = arith.addf %265, %266 : vector<16x16xf32>
    %cst_182 = arith.constant dense<0xFF800000> : vector<16xf32>
    %268 = vector.multi_reduction <maximumf>, %267, %cst_182 [1] : vector<16x16xf32> to vector<16xf32>
    %269 = vector.shape_cast %268 : vector<16xf32> to vector<16x1xf32>
    %270 = vector.broadcast %269 : vector<16x1xf32> to vector<16x16xf32>
    %271 = arith.subf %267, %270 : vector<16x16xf32>
    %272 = math.exp %271 : vector<16x16xf32>
    %cst_183 = arith.constant dense<0.000000e+00> : vector<16xf32>
    %273 = vector.multi_reduction <add>, %272, %cst_183 [1] : vector<16x16xf32> to vector<16xf32>
    %274 = vector.shape_cast %273 : vector<16xf32> to vector<16x1xf32>
    %275 = tpu.reciprocal %274 {approx = true} : vector<16x1xf32> -> vector<16x1xf32>
    %276 = vector.broadcast %275 : vector<16x1xf32> to vector<16x16xf32>
    %277 = arith.mulf %272, %276 : vector<16x16xf32>
    %278 = arith.truncf %277 : vector<16x16xf32> to vector<16x16xbf16>
    %cst_184 = arith.constant dense<0.000000e+00> : vector<16x16xf32>
    %279 = tpu.matmul %278, %264, %cst_184 {dimension_numbers = #tpu.dot_dimension_numbers<[1], [0], [0], [1], [0, 0, 1, 1], [], []>} : vector<16x16xbf16>, vector<16x16xbf16>, vector<16x16xf32> -> vector<16x16xf32>
    %c1_185 = arith.constant 1 : index
    %c3_186 = arith.constant 3 : index
    %c0_187 = arith.constant 0 : index
    %c0_188 = arith.constant 0 : index
    %280 = vector.load %arg8[%c1_185, %c3_186, %c0_187, %c0_188] : memref<2x4x64x16xbf16, #tpu.memory_space<vmem>>, vector<1x1x64x16xbf16>
    %281 = vector.shape_cast %280 : vector<1x1x64x16xbf16> to vector<64x16xbf16>
    %cst_189 = arith.constant dense<0.000000e+00> : vector<16x16xf32>
    %282 = tpu.matmul %198, %281, %cst_189 {dimension_numbers = #tpu.dot_dimension_numbers<[1], [0], [0], [1], [0, 0, 1, 1], [], []>} : vector<16x64xbf16>, vector<64x16xbf16>, vector<16x16xf32> -> vector<16x16xf32>
    %283 = arith.truncf %282 : vector<16x16xf32> to vector<16x16xbf16>
    %c1_190 = arith.constant 1 : index
    %c3_191 = arith.constant 3 : index
    %c0_192 = arith.constant 0 : index
    %c0_193 = arith.constant 0 : index
    %284 = vector.load %arg9[%c1_190, %c3_191, %c0_192, %c0_193] : memref<2x4x64x16xbf16, #tpu.memory_space<vmem>>, vector<1x1x64x16xbf16>
    %285 = vector.shape_cast %284 : vector<1x1x64x16xbf16> to vector<64x16xbf16>
    %cst_194 = arith.constant dense<0.000000e+00> : vector<16x16xf32>
    %286 = tpu.matmul %198, %285, %cst_194 {dimension_numbers = #tpu.dot_dimension_numbers<[1], [0], [0], [1], [0, 0, 1, 1], [], []>} : vector<16x64xbf16>, vector<64x16xbf16>, vector<16x16xf32> -> vector<16x16xf32>
    %287 = arith.truncf %286 : vector<16x16xf32> to vector<16x16xbf16>
    %c1_195 = arith.constant 1 : index
    %c3_196 = arith.constant 3 : index
    %c0_197 = arith.constant 0 : index
    %c0_198 = arith.constant 0 : index
    %288 = vector.load %arg10[%c1_195, %c3_196, %c0_197, %c0_198] : memref<2x4x64x16xbf16, #tpu.memory_space<vmem>>, vector<1x1x64x16xbf16>
    %289 = vector.shape_cast %288 : vector<1x1x64x16xbf16> to vector<64x16xbf16>
    %cst_199 = arith.constant dense<0.000000e+00> : vector<16x16xf32>
    %290 = tpu.matmul %198, %289, %cst_199 {dimension_numbers = #tpu.dot_dimension_numbers<[1], [0], [0], [1], [0, 0, 1, 1], [], []>} : vector<16x64xbf16>, vector<64x16xbf16>, vector<16x16xf32> -> vector<16x16xf32>
    %291 = arith.truncf %290 : vector<16x16xf32> to vector<16x16xbf16>
    %cst_200 = arith.constant dense<0.000000e+00> : vector<16x16xf32>
    %292 = tpu.matmul %283, %287, %cst_200 {dimension_numbers = #tpu.dot_dimension_numbers<[1], [1], [0], [0], [0, 0, 1, 0], [], []>} : vector<16x16xbf16>, vector<16x16xbf16>, vector<16x16xf32> -> vector<16x16xf32>
    %293 = vector.broadcast %8 : vector<1x16xf32> to vector<16x16xf32>
    %294 = arith.addf %292, %293 : vector<16x16xf32>
    %cst_201 = arith.constant dense<0xFF800000> : vector<16xf32>
    %295 = vector.multi_reduction <maximumf>, %294, %cst_201 [1] : vector<16x16xf32> to vector<16xf32>
    %296 = vector.shape_cast %295 : vector<16xf32> to vector<16x1xf32>
    %297 = vector.broadcast %296 : vector<16x1xf32> to vector<16x16xf32>
    %298 = arith.subf %294, %297 : vector<16x16xf32>
    %299 = math.exp %298 : vector<16x16xf32>
    %cst_202 = arith.constant dense<0.000000e+00> : vector<16xf32>
    %300 = vector.multi_reduction <add>, %299, %cst_202 [1] : vector<16x16xf32> to vector<16xf32>
    %301 = vector.shape_cast %300 : vector<16xf32> to vector<16x1xf32>
    %302 = tpu.reciprocal %301 {approx = true} : vector<16x1xf32> -> vector<16x1xf32>
    %303 = vector.broadcast %302 : vector<16x1xf32> to vector<16x16xf32>
    %304 = arith.mulf %299, %303 : vector<16x16xf32>
    %305 = arith.truncf %304 : vector<16x16xf32> to vector<16x16xbf16>
    %cst_203 = arith.constant dense<0.000000e+00> : vector<16x16xf32>
    %306 = tpu.matmul %305, %291, %cst_203 {dimension_numbers = #tpu.dot_dimension_numbers<[1], [0], [0], [1], [0, 0, 1, 1], [], []>} : vector<16x16xbf16>, vector<16x16xbf16>, vector<16x16xf32> -> vector<16x16xf32>
    %307 = tpu.concatenate %225, %252, %279, %306 in 1 : vector<16x16xf32>, vector<16x16xf32>, vector<16x16xf32>, vector<16x16xf32> -> vector<16x64xf32>
    %308 = arith.truncf %307 : vector<16x64xf32> to vector<16x64xbf16>
    %c1_204 = arith.constant 1 : index
    %c0_205 = arith.constant 0 : index
    %c0_206 = arith.constant 0 : index
    %309 = vector.load %arg11[%c1_204, %c0_205, %c0_206] : memref<2x64x64xbf16, #tpu.memory_space<vmem>>, vector<1x64x64xbf16>
    %310 = vector.shape_cast %309 : vector<1x64x64xbf16> to vector<64x64xbf16>
    %cst_207 = arith.constant dense<0.000000e+00> : vector<16x64xf32>
    %311 = tpu.matmul %308, %310, %cst_207 {dimension_numbers = #tpu.dot_dimension_numbers<[1], [0], [0], [1], [0, 0, 1, 1], [], []>} : vector<16x64xbf16>, vector<64x64xbf16>, vector<16x64xf32> -> vector<16x64xf32>
    %312 = arith.addf %183, %311 : vector<16x64xf32>
    %c1_208 = arith.constant 1 : index
    %c0_209 = arith.constant 0 : index
    %c0_210 = arith.constant 0 : index
    %313 = vector.load %arg13[%c1_208, %c0_209, %c0_210] : memref<2x1x64xf32, #tpu.memory_space<vmem>>, vector<1x1x64xf32>
    %314 = vector.shape_cast %313 : vector<1x1x64xf32> to vector<1x64xf32>
    %315 = arith.mulf %312, %312 : vector<16x64xf32>
    %cst_211 = arith.constant dense<0.000000e+00> : vector<16xf32>
    %316 = vector.multi_reduction <add>, %315, %cst_211 [1] : vector<16x64xf32> to vector<16xf32>
    %317 = vector.shape_cast %316 : vector<16xf32> to vector<16x1xf32>
    %cst_212 = arith.constant 6.400000e+01 : f32
    %318 = vector.broadcast %cst_212 : f32 to vector<16x1xf32>
    %319 = arith.divf %317, %318 : vector<16x1xf32>
    %cst_213 = arith.constant 9.99999997E-7 : f32
    %320 = vector.broadcast %cst_213 : f32 to vector<16x1xf32>
    %321 = arith.addf %319, %320 : vector<16x1xf32>
    %322 = math.rsqrt %321 : vector<16x1xf32>
    %323 = vector.broadcast %322 : vector<16x1xf32> to vector<16x64xf32>
    %324 = arith.mulf %312, %323 : vector<16x64xf32>
    %325 = vector.broadcast %314 : vector<1x64xf32> to vector<16x64xf32>
    %326 = arith.mulf %324, %325 : vector<16x64xf32>
    %327 = arith.truncf %326 : vector<16x64xf32> to vector<16x64xbf16>
    %c1_214 = arith.constant 1 : index
    %c0_215 = arith.constant 0 : index
    %c0_216 = arith.constant 0 : index
    %328 = vector.load %arg14[%c1_214, %c0_215, %c0_216] : memref<2x64x128xbf16, #tpu.memory_space<vmem>>, vector<1x64x128xbf16>
    %329 = vector.shape_cast %328 : vector<1x64x128xbf16> to vector<64x128xbf16>
    %cst_217 = arith.constant dense<0.000000e+00> : vector<16x128xf32>
    %330 = tpu.matmul %327, %329, %cst_217 {dimension_numbers = #tpu.dot_dimension_numbers<[1], [0], [0], [1], [0, 0, 1, 1], [], []>} : vector<16x64xbf16>, vector<64x128xbf16>, vector<16x128xf32> -> vector<16x128xf32>
    %cst_218 = arith.constant 0.000000e+00 : f32
    %331 = vector.broadcast %cst_218 : f32 to vector<16x128xf32>
    %332 = arith.maximumf %330, %331 : vector<16x128xf32>
    %333 = arith.truncf %332 : vector<16x128xf32> to vector<16x128xbf16>
    %c1_219 = arith.constant 1 : index
    %c0_220 = arith.constant 0 : index
    %c0_221 = arith.constant 0 : index
    %334 = vector.load %arg15[%c1_219, %c0_220, %c0_221] : memref<2x128x64xbf16, #tpu.memory_space<vmem>>, vector<1x128x64xbf16>
    %335 = vector.shape_cast %334 : vector<1x128x64xbf16> to vector<128x64xbf16>
    %cst_222 = arith.constant dense<0.000000e+00> : vector<16x64xf32>
    %336 = tpu.matmul %333, %335, %cst_222 {dimension_numbers = #tpu.dot_dimension_numbers<[1], [0], [0], [1], [0, 0, 1, 1], [], []>} : vector<16x128xbf16>, vector<128x64xbf16>, vector<16x64xf32> -> vector<16x64xf32>
    %337 = arith.addf %312, %336 : vector<16x64xf32>
    %338 = arith.mulf %337, %337 : vector<16x64xf32>
    %cst_223 = arith.constant dense<0.000000e+00> : vector<16xf32>
    %339 = vector.multi_reduction <add>, %338, %cst_223 [1] : vector<16x64xf32> to vector<16xf32>
    %340 = vector.shape_cast %339 : vector<16xf32> to vector<16x1xf32>
    %cst_224 = arith.constant 6.400000e+01 : f32
    %341 = vector.broadcast %cst_224 : f32 to vector<16x1xf32>
    %342 = arith.divf %340, %341 : vector<16x1xf32>
    %cst_225 = arith.constant 9.99999997E-7 : f32
    %343 = vector.broadcast %cst_225 : f32 to vector<16x1xf32>
    %344 = arith.addf %342, %343 : vector<16x1xf32>
    %345 = math.rsqrt %344 : vector<16x1xf32>
    %346 = vector.broadcast %345 : vector<16x1xf32> to vector<16x64xf32>
    %347 = arith.mulf %337, %346 : vector<16x64xf32>
    %348 = vector.broadcast %3 : vector<1x64xf32> to vector<16x64xf32>
    %349 = arith.mulf %347, %348 : vector<16x64xf32>
    %c0_226 = arith.constant 0 : index
    %c0_227 = arith.constant 0 : index
    %c0_228 = arith.constant 0 : index
    %350 = vector.load %arg23[%c0_226, %c0_227, %c0_228] : memref<2x16x64xf32, #tpu.memory_space<vmem>>, vector<1x16x64xf32>
    %351 = vector.shape_cast %350 : vector<1x16x64xf32> to vector<16x64xf32>
    %352 = vector.shape_cast %349 : vector<16x64xf32> to vector<1x16x64xf32>
    tpu.vector_store %arg23[%c0_226, %c0_227, %c0_228], %352 {strides = array<i32>} : memref<2x16x64xf32, #tpu.memory_space<vmem>>, vector<1x16x64xf32>,
    %c0_229 = arith.constant 0 : index
    %c0_230 = arith.constant 0 : index
    %c0_231 = arith.constant 0 : index
    %353 = vector.load %arg4[%c0_229, %c0_230, %c0_231] : memref<2x16x1xf32, #tpu.memory_space<vmem>>, vector<1x16x1xf32>
    %354 = vector.shape_cast %353 : vector<1x16x1xf32> to vector<16x1xf32>
    %355 = vector.broadcast %354 : vector<16x1xf32> to vector<16x64xf32>
    %356 = arith.mulf %349, %355 : vector<16x64xf32>
    %357 = tpu.iota {dimensions = array<i32: 0>} : vector<16x64xi32>
    %c0_i32 = arith.constant 0 : i32
    %358 = vector.broadcast %c0_i32 : i32 to vector<16x64xi32>
    %359 = arith.cmpi eq, %357, %358 : vector<16x64xi32>
    %c1_i32 = arith.constant 1 : i32
    %360 = tpu.dynamic_rotate %356 by %c1_i32 dim 0 : vector<16x64xf32>, i32 -> vector<16x64xf32>
    %cst_232 = arith.constant 0.000000e+00 : f32
    %361 = vector.broadcast %cst_232 : f32 to vector<16x64xf32>
    %362 = arith.select %359, %361, %360 : vector<16x64xi1>, vector<16x64xf32>
    %c15_i32 = arith.constant 15 : i32
    %363 = vector.broadcast %c15_i32 : i32 to vector<16x64xi32>
    %364 = arith.cmpi eq, %357, %363 : vector<16x64xi32>
    %c15_i32_233 = arith.constant 15 : i32
    %365 = tpu.dynamic_rotate %356 by %c15_i32_233 dim 0 : vector<16x64xf32>, i32 -> vector<16x64xf32>
    %cst_234 = arith.constant 0.000000e+00 : f32
    %366 = vector.broadcast %cst_234 : f32 to vector<16x64xf32>
    %367 = arith.select %364, %366, %365 : vector<16x64xi1>, vector<16x64xf32>
    %368 = arith.truncf %362 : vector<16x64xf32> to vector<16x64xbf16>
    %c0_235 = arith.constant 0 : index
    %c0_236 = arith.constant 0 : index
    %c0_237 = arith.constant 0 : index
    %369 = vector.load %arg17[%c0_235, %c0_236, %c0_237] : memref<3x64x64xbf16, #tpu.memory_space<vmem>>, vector<1x64x64xbf16>
    %370 = vector.shape_cast %369 : vector<1x64x64xbf16> to vector<64x64xbf16>
    %cst_238 = arith.constant dense<0.000000e+00> : vector<16x64xf32>
    %371 = tpu.matmul %368, %370, %cst_238 {dimension_numbers = #tpu.dot_dimension_numbers<[1], [0], [0], [1], [0, 0, 1, 1], [], []>} : vector<16x64xbf16>, vector<64x64xbf16>, vector<16x64xf32> -> vector<16x64xf32>
    %372 = arith.truncf %356 : vector<16x64xf32> to vector<16x64xbf16>
    %c1_239 = arith.constant 1 : index
    %c0_240 = arith.constant 0 : index
    %c0_241 = arith.constant 0 : index
    %373 = vector.load %arg17[%c1_239, %c0_240, %c0_241] : memref<3x64x64xbf16, #tpu.memory_space<vmem>>, vector<1x64x64xbf16>
    %374 = vector.shape_cast %373 : vector<1x64x64xbf16> to vector<64x64xbf16>
    %cst_242 = arith.constant dense<0.000000e+00> : vector<16x64xf32>
    %375 = tpu.matmul %372, %374, %cst_242 {dimension_numbers = #tpu.dot_dimension_numbers<[1], [0], [0], [1], [0, 0, 1, 1], [], []>} : vector<16x64xbf16>, vector<64x64xbf16>, vector<16x64xf32> -> vector<16x64xf32>
    %376 = arith.addf %371, %375 : vector<16x64xf32>
    %377 = arith.truncf %367 : vector<16x64xf32> to vector<16x64xbf16>
    %c2_243 = arith.constant 2 : index
    %c0_244 = arith.constant 0 : index
    %c0_245 = arith.constant 0 : index
    %378 = vector.load %arg17[%c2_243, %c0_244, %c0_245] : memref<3x64x64xbf16, #tpu.memory_space<vmem>>, vector<1x64x64xbf16>
    %379 = vector.shape_cast %378 : vector<1x64x64xbf16> to vector<64x64xbf16>
    %cst_246 = arith.constant dense<0.000000e+00> : vector<16x64xf32>
    %380 = tpu.matmul %377, %379, %cst_246 {dimension_numbers = #tpu.dot_dimension_numbers<[1], [0], [0], [1], [0, 0, 1, 1], [], []>} : vector<16x64xbf16>, vector<64x64xbf16>, vector<16x64xf32> -> vector<16x64xf32>
    %381 = arith.addf %376, %380 : vector<16x64xf32>
    %382 = vector.broadcast %4 : vector<1x64xf32> to vector<16x64xf32>
    %383 = arith.addf %381, %382 : vector<16x64xf32>
    %cst_247 = arith.constant 0.000000e+00 : f32
    %384 = vector.broadcast %cst_247 : f32 to vector<16x64xf32>
    %385 = arith.maximumf %383, %384 : vector<16x64xf32>
    %386 = vector.broadcast %354 : vector<16x1xf32> to vector<16x64xf32>
    %387 = arith.mulf %385, %386 : vector<16x64xf32>
    %388 = tpu.iota {dimensions = array<i32: 0>} : vector<16x64xi32>
    %c0_i32_248 = arith.constant 0 : i32
    %389 = vector.broadcast %c0_i32_248 : i32 to vector<16x64xi32>
    %390 = arith.cmpi eq, %388, %389 : vector<16x64xi32>
    %c1_i32_249 = arith.constant 1 : i32
    %391 = tpu.dynamic_rotate %387 by %c1_i32_249 dim 0 : vector<16x64xf32>, i32 -> vector<16x64xf32>
    %cst_250 = arith.constant 0.000000e+00 : f32
    %392 = vector.broadcast %cst_250 : f32 to vector<16x64xf32>
    %393 = arith.select %390, %392, %391 : vector<16x64xi1>, vector<16x64xf32>
    %c15_i32_251 = arith.constant 15 : i32
    %394 = vector.broadcast %c15_i32_251 : i32 to vector<16x64xi32>
    %395 = arith.cmpi eq, %388, %394 : vector<16x64xi32>
    %c15_i32_252 = arith.constant 15 : i32
    %396 = tpu.dynamic_rotate %387 by %c15_i32_252 dim 0 : vector<16x64xf32>, i32 -> vector<16x64xf32>
    %cst_253 = arith.constant 0.000000e+00 : f32
    %397 = vector.broadcast %cst_253 : f32 to vector<16x64xf32>
    %398 = arith.select %395, %397, %396 : vector<16x64xi1>, vector<16x64xf32>
    %399 = arith.truncf %393 : vector<16x64xf32> to vector<16x64xbf16>
    %c0_254 = arith.constant 0 : index
    %c0_255 = arith.constant 0 : index
    %c0_256 = arith.constant 0 : index
    %400 = vector.load %arg19[%c0_254, %c0_255, %c0_256] : memref<3x64x64xbf16, #tpu.memory_space<vmem>>, vector<1x64x64xbf16>
    %401 = vector.shape_cast %400 : vector<1x64x64xbf16> to vector<64x64xbf16>
    %cst_257 = arith.constant dense<0.000000e+00> : vector<16x64xf32>
    %402 = tpu.matmul %399, %401, %cst_257 {dimension_numbers = #tpu.dot_dimension_numbers<[1], [0], [0], [1], [0, 0, 1, 1], [], []>} : vector<16x64xbf16>, vector<64x64xbf16>, vector<16x64xf32> -> vector<16x64xf32>
    %403 = arith.truncf %387 : vector<16x64xf32> to vector<16x64xbf16>
    %c1_258 = arith.constant 1 : index
    %c0_259 = arith.constant 0 : index
    %c0_260 = arith.constant 0 : index
    %404 = vector.load %arg19[%c1_258, %c0_259, %c0_260] : memref<3x64x64xbf16, #tpu.memory_space<vmem>>, vector<1x64x64xbf16>
    %405 = vector.shape_cast %404 : vector<1x64x64xbf16> to vector<64x64xbf16>
    %cst_261 = arith.constant dense<0.000000e+00> : vector<16x64xf32>
    %406 = tpu.matmul %403, %405, %cst_261 {dimension_numbers = #tpu.dot_dimension_numbers<[1], [0], [0], [1], [0, 0, 1, 1], [], []>} : vector<16x64xbf16>, vector<64x64xbf16>, vector<16x64xf32> -> vector<16x64xf32>
    %407 = arith.addf %402, %406 : vector<16x64xf32>
    %408 = arith.truncf %398 : vector<16x64xf32> to vector<16x64xbf16>
    %c2_262 = arith.constant 2 : index
    %c0_263 = arith.constant 0 : index
    %c0_264 = arith.constant 0 : index
    %409 = vector.load %arg19[%c2_262, %c0_263, %c0_264] : memref<3x64x64xbf16, #tpu.memory_space<vmem>>, vector<1x64x64xbf16>
    %410 = vector.shape_cast %409 : vector<1x64x64xbf16> to vector<64x64xbf16>
    %cst_265 = arith.constant dense<0.000000e+00> : vector<16x64xf32>
    %411 = tpu.matmul %408, %410, %cst_265 {dimension_numbers = #tpu.dot_dimension_numbers<[1], [0], [0], [1], [0, 0, 1, 1], [], []>} : vector<16x64xbf16>, vector<64x64xbf16>, vector<16x64xf32> -> vector<16x64xf32>
    %412 = arith.addf %407, %411 : vector<16x64xf32>
    %413 = vector.broadcast %5 : vector<1x64xf32> to vector<16x64xf32>
    %414 = arith.addf %412, %413 : vector<16x64xf32>
    %cst_266 = arith.constant 0.000000e+00 : f32
    %415 = vector.broadcast %cst_266 : f32 to vector<16x64xf32>
    %416 = arith.maximumf %414, %415 : vector<16x64xf32>
    %417 = vector.broadcast %354 : vector<16x1xf32> to vector<16x64xf32>
    %418 = arith.mulf %416, %417 : vector<16x64xf32>
    %419 = tpu.iota {dimensions = array<i32: 0>} : vector<16x64xi32>
    %c0_i32_267 = arith.constant 0 : i32
    %420 = vector.broadcast %c0_i32_267 : i32 to vector<16x64xi32>
    %421 = arith.cmpi eq, %419, %420 : vector<16x64xi32>
    %c1_i32_268 = arith.constant 1 : i32
    %422 = tpu.dynamic_rotate %418 by %c1_i32_268 dim 0 : vector<16x64xf32>, i32 -> vector<16x64xf32>
    %cst_269 = arith.constant 0.000000e+00 : f32
    %423 = vector.broadcast %cst_269 : f32 to vector<16x64xf32>
    %424 = arith.select %421, %423, %422 : vector<16x64xi1>, vector<16x64xf32>
    %c15_i32_270 = arith.constant 15 : i32
    %425 = vector.broadcast %c15_i32_270 : i32 to vector<16x64xi32>
    %426 = arith.cmpi eq, %419, %425 : vector<16x64xi32>
    %c15_i32_271 = arith.constant 15 : i32
    %427 = tpu.dynamic_rotate %418 by %c15_i32_271 dim 0 : vector<16x64xf32>, i32 -> vector<16x64xf32>
    %cst_272 = arith.constant 0.000000e+00 : f32
    %428 = vector.broadcast %cst_272 : f32 to vector<16x64xf32>
    %429 = arith.select %426, %428, %427 : vector<16x64xi1>, vector<16x64xf32>
    %430 = arith.truncf %424 : vector<16x64xf32> to vector<16x64xbf16>
    %c0_273 = arith.constant 0 : index
    %c0_274 = arith.constant 0 : index
    %c0_275 = arith.constant 0 : index
    %431 = vector.load %arg21[%c0_273, %c0_274, %c0_275] : memref<3x64x128xbf16, #tpu.memory_space<vmem>>, vector<1x64x128xbf16>
    %432 = vector.shape_cast %431 : vector<1x64x128xbf16> to vector<64x128xbf16>
    %cst_276 = arith.constant dense<0.000000e+00> : vector<16x128xf32>
    %433 = tpu.matmul %430, %432, %cst_276 {dimension_numbers = #tpu.dot_dimension_numbers<[1], [0], [0], [1], [0, 0, 1, 1], [], []>} : vector<16x64xbf16>, vector<64x128xbf16>, vector<16x128xf32> -> vector<16x128xf32>
    %434 = arith.truncf %418 : vector<16x64xf32> to vector<16x64xbf16>
    %c1_277 = arith.constant 1 : index
    %c0_278 = arith.constant 0 : index
    %c0_279 = arith.constant 0 : index
    %435 = vector.load %arg21[%c1_277, %c0_278, %c0_279] : memref<3x64x128xbf16, #tpu.memory_space<vmem>>, vector<1x64x128xbf16>
    %436 = vector.shape_cast %435 : vector<1x64x128xbf16> to vector<64x128xbf16>
    %cst_280 = arith.constant dense<0.000000e+00> : vector<16x128xf32>
    %437 = tpu.matmul %434, %436, %cst_280 {dimension_numbers = #tpu.dot_dimension_numbers<[1], [0], [0], [1], [0, 0, 1, 1], [], []>} : vector<16x64xbf16>, vector<64x128xbf16>, vector<16x128xf32> -> vector<16x128xf32>
    %438 = arith.addf %433, %437 : vector<16x128xf32>
    %439 = arith.truncf %429 : vector<16x64xf32> to vector<16x64xbf16>
    %c2_281 = arith.constant 2 : index
    %c0_282 = arith.constant 0 : index
    %c0_283 = arith.constant 0 : index
    %440 = vector.load %arg21[%c2_281, %c0_282, %c0_283] : memref<3x64x128xbf16, #tpu.memory_space<vmem>>, vector<1x64x128xbf16>
    %441 = vector.shape_cast %440 : vector<1x64x128xbf16> to vector<64x128xbf16>
    %cst_284 = arith.constant dense<0.000000e+00> : vector<16x128xf32>
    %442 = tpu.matmul %439, %441, %cst_284 {dimension_numbers = #tpu.dot_dimension_numbers<[1], [0], [0], [1], [0, 0, 1, 1], [], []>} : vector<16x64xbf16>, vector<64x128xbf16>, vector<16x128xf32> -> vector<16x128xf32>
    %443 = arith.addf %438, %442 : vector<16x128xf32>
    %444 = vector.broadcast %6 : vector<1x128xf32> to vector<16x128xf32>
    %445 = arith.addf %443, %444 : vector<16x128xf32>
    %446 = tpu.iota {dimensions = array<i32: 1>} : vector<16x128xi32>
    %c1_i32_285 = arith.constant 1 : i32
    %447 = vector.broadcast %c1_i32_285 : i32 to vector<16x128xi32>
    %448 = arith.cmpi sge, %446, %447 : vector<16x128xi32>
    %c3_i32 = arith.constant 3 : i32
    %449 = vector.broadcast %c3_i32 : i32 to vector<16x128xi32>
    %450 = arith.cmpi slt, %446, %449 : vector<16x128xi32>
    %451 = arith.andi %448, %450 : vector<16x128xi1>
    %cst_286 = arith.constant 0.000000e+00 : f32
    %452 = vector.broadcast %cst_286 : f32 to vector<16x128xf32>
    %453 = arith.maximumf %445, %452 : vector<16x128xf32>
    %454 = arith.select %451, %453, %445 : vector<16x128xi1>, vector<16x128xf32>
    %455 = vector.broadcast %354 : vector<16x1xf32> to vector<16x128xf32>
    %456 = arith.mulf %454, %455 : vector<16x128xf32>
    %c0_287 = arith.constant 0 : index
    %c0_288 = arith.constant 0 : index
    %c0_289 = arith.constant 0 : index
    %457 = vector.load %arg24[%c0_287, %c0_288, %c0_289] : memref<2x16x128xf32, #tpu.memory_space<vmem>>, vector<1x16x128xf32>
    %458 = vector.shape_cast %457 : vector<1x16x128xf32> to vector<16x128xf32>
    %459 = vector.shape_cast %456 : vector<16x128xf32> to vector<1x16x128xf32>
    tpu.vector_store %arg24[%c0_287, %c0_288, %c0_289], %459 {strides = array<i32>} : memref<2x16x128xf32, #tpu.memory_space<vmem>>, vector<1x16x128xf32>,
    %c1_290 = arith.constant 1 : index
    %c0_291 = arith.constant 0 : index
    %c0_292 = arith.constant 0 : index
    %460 = vector.load %arg3[%c1_290, %c0_291, %c0_292] : memref<2x1x16xf32, #tpu.memory_space<vmem>>, vector<1x1x16xf32>
    %461 = vector.shape_cast %460 : vector<1x1x16xf32> to vector<1x16xf32>
    %c1_293 = arith.constant 1 : index
    %c0_294 = arith.constant 0 : index
    %c0_295 = arith.constant 0 : index
    %462 = vector.load %arg1[%c1_293, %c0_294, %c0_295] : memref<2x16x1xi32, #tpu.memory_space<vmem>>, vector<1x16x1xi32>
    %463 = vector.shape_cast %462 : vector<1x16x1xi32> to vector<16x1xi32>
    %464 = tpu.iota {dimensions = array<i32: 1>} : vector<16x128xi32>
    %465 = vector.broadcast %463 : vector<16x1xi32> to vector<16x128xi32>
    %466 = arith.cmpi eq, %464, %465 : vector<16x128xi32>
    %467 = arith.extui %466 : vector<16x128xi1> to vector<16x128xi32>
    %468 = arith.sitofp %467 : vector<16x128xi32> to vector<16x128xf32>
    %cst_296 = arith.constant dense<0.000000e+00> : vector<16x64xf32>
    %469 = tpu.matmul %468, %0, %cst_296 {dimension_numbers = #tpu.dot_dimension_numbers<[1], [0], [0], [1], [0, 0, 1, 1], [], []>} : vector<16x128xf32>, vector<128x64xf32>, vector<16x64xf32> -> vector<16x64xf32>
    %c1_297 = arith.constant 1 : index
    %c0_298 = arith.constant 0 : index
    %c0_299 = arith.constant 0 : index
    %470 = vector.load %arg2[%c1_297, %c0_298, %c0_299] : memref<2x16x32xbf16, #tpu.memory_space<vmem>>, vector<1x16x32xbf16>
    %471 = vector.shape_cast %470 : vector<1x16x32xbf16> to vector<16x32xbf16>
    %cst_300 = arith.constant dense<0.000000e+00> : vector<16x64xf32>
    %472 = tpu.matmul %471, %1, %cst_300 {dimension_numbers = #tpu.dot_dimension_numbers<[1], [0], [0], [1], [0, 0, 1, 1], [], []>} : vector<16x32xbf16>, vector<32x64xbf16>, vector<16x64xf32> -> vector<16x64xf32>
    %473 = vector.broadcast %2 : vector<1x64xf32> to vector<16x64xf32>
    %474 = arith.addf %472, %473 : vector<16x64xf32>
    %475 = tpu.iota {dimensions = array<i32: 0>} : vector<16x64xi32>
    %c6_i32_301 = arith.constant 6 : i32
    %476 = vector.broadcast %c6_i32_301 : i32 to vector<16x64xi32>
    %477 = arith.cmpi slt, %475, %476 : vector<16x64xi32>
    %c16_i32_302 = arith.constant 16 : i32
    %478 = vector.broadcast %c16_i32_302 : i32 to vector<16x64xi32>
    %479 = arith.cmpi slt, %475, %478 : vector<16x64xi32>
    %cst_303 = arith.constant 0.000000e+00 : f32
    %480 = vector.broadcast %cst_303 : f32 to vector<16x64xf32>
    %481 = arith.select %479, %474, %480 : vector<16x64xi1>, vector<16x64xf32>
    %482 = arith.select %477, %469, %481 : vector<16x64xi1>, vector<16x64xf32>
    %c0_304 = arith.constant 0 : index
    %c0_305 = arith.constant 0 : index
    %c0_306 = arith.constant 0 : index
    %483 = vector.load %arg12[%c0_304, %c0_305, %c0_306] : memref<2x1x64xf32, #tpu.memory_space<vmem>>, vector<1x1x64xf32>
    %484 = vector.shape_cast %483 : vector<1x1x64xf32> to vector<1x64xf32>
    %485 = arith.mulf %482, %482 : vector<16x64xf32>
    %cst_307 = arith.constant dense<0.000000e+00> : vector<16xf32>
    %486 = vector.multi_reduction <add>, %485, %cst_307 [1] : vector<16x64xf32> to vector<16xf32>
    %487 = vector.shape_cast %486 : vector<16xf32> to vector<16x1xf32>
    %cst_308 = arith.constant 6.400000e+01 : f32
    %488 = vector.broadcast %cst_308 : f32 to vector<16x1xf32>
    %489 = arith.divf %487, %488 : vector<16x1xf32>
    %cst_309 = arith.constant 9.99999997E-7 : f32
    %490 = vector.broadcast %cst_309 : f32 to vector<16x1xf32>
    %491 = arith.addf %489, %490 : vector<16x1xf32>
    %492 = math.rsqrt %491 : vector<16x1xf32>
    %493 = vector.broadcast %492 : vector<16x1xf32> to vector<16x64xf32>
    %494 = arith.mulf %482, %493 : vector<16x64xf32>
    %495 = vector.broadcast %484 : vector<1x64xf32> to vector<16x64xf32>
    %496 = arith.mulf %494, %495 : vector<16x64xf32>
    %497 = arith.truncf %496 : vector<16x64xf32> to vector<16x64xbf16>
    %c0_310 = arith.constant 0 : index
    %c0_311 = arith.constant 0 : index
    %c0_312 = arith.constant 0 : index
    %c0_313 = arith.constant 0 : index
    %498 = vector.load %arg8[%c0_310, %c0_311, %c0_312, %c0_313] : memref<2x4x64x16xbf16, #tpu.memory_space<vmem>>, vector<1x1x64x16xbf16>
    %499 = vector.shape_cast %498 : vector<1x1x64x16xbf16> to vector<64x16xbf16>
    %cst_314 = arith.constant dense<0.000000e+00> : vector<16x16xf32>
    %500 = tpu.matmul %497, %499, %cst_314 {dimension_numbers = #tpu.dot_dimension_numbers<[1], [0], [0], [1], [0, 0, 1, 1], [], []>} : vector<16x64xbf16>, vector<64x16xbf16>, vector<16x16xf32> -> vector<16x16xf32>
    %501 = arith.truncf %500 : vector<16x16xf32> to vector<16x16xbf16>
    %c0_315 = arith.constant 0 : index
    %c0_316 = arith.constant 0 : index
    %c0_317 = arith.constant 0 : index
    %c0_318 = arith.constant 0 : index
    %502 = vector.load %arg9[%c0_315, %c0_316, %c0_317, %c0_318] : memref<2x4x64x16xbf16, #tpu.memory_space<vmem>>, vector<1x1x64x16xbf16>
    %503 = vector.shape_cast %502 : vector<1x1x64x16xbf16> to vector<64x16xbf16>
    %cst_319 = arith.constant dense<0.000000e+00> : vector<16x16xf32>
    %504 = tpu.matmul %497, %503, %cst_319 {dimension_numbers = #tpu.dot_dimension_numbers<[1], [0], [0], [1], [0, 0, 1, 1], [], []>} : vector<16x64xbf16>, vector<64x16xbf16>, vector<16x16xf32> -> vector<16x16xf32>
    %505 = arith.truncf %504 : vector<16x16xf32> to vector<16x16xbf16>
    %c0_320 = arith.constant 0 : index
    %c0_321 = arith.constant 0 : index
    %c0_322 = arith.constant 0 : index
    %c0_323 = arith.constant 0 : index
    %506 = vector.load %arg10[%c0_320, %c0_321, %c0_322, %c0_323] : memref<2x4x64x16xbf16, #tpu.memory_space<vmem>>, vector<1x1x64x16xbf16>
    %507 = vector.shape_cast %506 : vector<1x1x64x16xbf16> to vector<64x16xbf16>
    %cst_324 = arith.constant dense<0.000000e+00> : vector<16x16xf32>
    %508 = tpu.matmul %497, %507, %cst_324 {dimension_numbers = #tpu.dot_dimension_numbers<[1], [0], [0], [1], [0, 0, 1, 1], [], []>} : vector<16x64xbf16>, vector<64x16xbf16>, vector<16x16xf32> -> vector<16x16xf32>
    %509 = arith.truncf %508 : vector<16x16xf32> to vector<16x16xbf16>
    %cst_325 = arith.constant dense<0.000000e+00> : vector<16x16xf32>
    %510 = tpu.matmul %501, %505, %cst_325 {dimension_numbers = #tpu.dot_dimension_numbers<[1], [1], [0], [0], [0, 0, 1, 0], [], []>} : vector<16x16xbf16>, vector<16x16xbf16>, vector<16x16xf32> -> vector<16x16xf32>
    %511 = vector.broadcast %461 : vector<1x16xf32> to vector<16x16xf32>
    %512 = arith.addf %510, %511 : vector<16x16xf32>
    %cst_326 = arith.constant dense<0xFF800000> : vector<16xf32>
    %513 = vector.multi_reduction <maximumf>, %512, %cst_326 [1] : vector<16x16xf32> to vector<16xf32>
    %514 = vector.shape_cast %513 : vector<16xf32> to vector<16x1xf32>
    %515 = vector.broadcast %514 : vector<16x1xf32> to vector<16x16xf32>
    %516 = arith.subf %512, %515 : vector<16x16xf32>
    %517 = math.exp %516 : vector<16x16xf32>
    %cst_327 = arith.constant dense<0.000000e+00> : vector<16xf32>
    %518 = vector.multi_reduction <add>, %517, %cst_327 [1] : vector<16x16xf32> to vector<16xf32>
    %519 = vector.shape_cast %518 : vector<16xf32> to vector<16x1xf32>
    %520 = tpu.reciprocal %519 {approx = true} : vector<16x1xf32> -> vector<16x1xf32>
    %521 = vector.broadcast %520 : vector<16x1xf32> to vector<16x16xf32>
    %522 = arith.mulf %517, %521 : vector<16x16xf32>
    %523 = arith.truncf %522 : vector<16x16xf32> to vector<16x16xbf16>
    %cst_328 = arith.constant dense<0.000000e+00> : vector<16x16xf32>
    %524 = tpu.matmul %523, %509, %cst_328 {dimension_numbers = #tpu.dot_dimension_numbers<[1], [0], [0], [1], [0, 0, 1, 1], [], []>} : vector<16x16xbf16>, vector<16x16xbf16>, vector<16x16xf32> -> vector<16x16xf32>
    %c0_329 = arith.constant 0 : index
    %c1_330 = arith.constant 1 : index
    %c0_331 = arith.constant 0 : index
    %c0_332 = arith.constant 0 : index
    %525 = vector.load %arg8[%c0_329, %c1_330, %c0_331, %c0_332] : memref<2x4x64x16xbf16, #tpu.memory_space<vmem>>, vector<1x1x64x16xbf16>
    %526 = vector.shape_cast %525 : vector<1x1x64x16xbf16> to vector<64x16xbf16>
    %cst_333 = arith.constant dense<0.000000e+00> : vector<16x16xf32>
    %527 = tpu.matmul %497, %526, %cst_333 {dimension_numbers = #tpu.dot_dimension_numbers<[1], [0], [0], [1], [0, 0, 1, 1], [], []>} : vector<16x64xbf16>, vector<64x16xbf16>, vector<16x16xf32> -> vector<16x16xf32>
    %528 = arith.truncf %527 : vector<16x16xf32> to vector<16x16xbf16>
    %c0_334 = arith.constant 0 : index
    %c1_335 = arith.constant 1 : index
    %c0_336 = arith.constant 0 : index
    %c0_337 = arith.constant 0 : index
    %529 = vector.load %arg9[%c0_334, %c1_335, %c0_336, %c0_337] : memref<2x4x64x16xbf16, #tpu.memory_space<vmem>>, vector<1x1x64x16xbf16>
    %530 = vector.shape_cast %529 : vector<1x1x64x16xbf16> to vector<64x16xbf16>
    %cst_338 = arith.constant dense<0.000000e+00> : vector<16x16xf32>
    %531 = tpu.matmul %497, %530, %cst_338 {dimension_numbers = #tpu.dot_dimension_numbers<[1], [0], [0], [1], [0, 0, 1, 1], [], []>} : vector<16x64xbf16>, vector<64x16xbf16>, vector<16x16xf32> -> vector<16x16xf32>
    %532 = arith.truncf %531 : vector<16x16xf32> to vector<16x16xbf16>
    %c0_339 = arith.constant 0 : index
    %c1_340 = arith.constant 1 : index
    %c0_341 = arith.constant 0 : index
    %c0_342 = arith.constant 0 : index
    %533 = vector.load %arg10[%c0_339, %c1_340, %c0_341, %c0_342] : memref<2x4x64x16xbf16, #tpu.memory_space<vmem>>, vector<1x1x64x16xbf16>
    %534 = vector.shape_cast %533 : vector<1x1x64x16xbf16> to vector<64x16xbf16>
    %cst_343 = arith.constant dense<0.000000e+00> : vector<16x16xf32>
    %535 = tpu.matmul %497, %534, %cst_343 {dimension_numbers = #tpu.dot_dimension_numbers<[1], [0], [0], [1], [0, 0, 1, 1], [], []>} : vector<16x64xbf16>, vector<64x16xbf16>, vector<16x16xf32> -> vector<16x16xf32>
    %536 = arith.truncf %535 : vector<16x16xf32> to vector<16x16xbf16>
    %cst_344 = arith.constant dense<0.000000e+00> : vector<16x16xf32>
    %537 = tpu.matmul %528, %532, %cst_344 {dimension_numbers = #tpu.dot_dimension_numbers<[1], [1], [0], [0], [0, 0, 1, 0], [], []>} : vector<16x16xbf16>, vector<16x16xbf16>, vector<16x16xf32> -> vector<16x16xf32>
    %538 = vector.broadcast %461 : vector<1x16xf32> to vector<16x16xf32>
    %539 = arith.addf %537, %538 : vector<16x16xf32>
    %cst_345 = arith.constant dense<0xFF800000> : vector<16xf32>
    %540 = vector.multi_reduction <maximumf>, %539, %cst_345 [1] : vector<16x16xf32> to vector<16xf32>
    %541 = vector.shape_cast %540 : vector<16xf32> to vector<16x1xf32>
    %542 = vector.broadcast %541 : vector<16x1xf32> to vector<16x16xf32>
    %543 = arith.subf %539, %542 : vector<16x16xf32>
    %544 = math.exp %543 : vector<16x16xf32>
    %cst_346 = arith.constant dense<0.000000e+00> : vector<16xf32>
    %545 = vector.multi_reduction <add>, %544, %cst_346 [1] : vector<16x16xf32> to vector<16xf32>
    %546 = vector.shape_cast %545 : vector<16xf32> to vector<16x1xf32>
    %547 = tpu.reciprocal %546 {approx = true} : vector<16x1xf32> -> vector<16x1xf32>
    %548 = vector.broadcast %547 : vector<16x1xf32> to vector<16x16xf32>
    %549 = arith.mulf %544, %548 : vector<16x16xf32>
    %550 = arith.truncf %549 : vector<16x16xf32> to vector<16x16xbf16>
    %cst_347 = arith.constant dense<0.000000e+00> : vector<16x16xf32>
    %551 = tpu.matmul %550, %536, %cst_347 {dimension_numbers = #tpu.dot_dimension_numbers<[1], [0], [0], [1], [0, 0, 1, 1], [], []>} : vector<16x16xbf16>, vector<16x16xbf16>, vector<16x16xf32> -> vector<16x16xf32>
    %c0_348 = arith.constant 0 : index
    %c2_349 = arith.constant 2 : index
    %c0_350 = arith.constant 0 : index
    %c0_351 = arith.constant 0 : index
    %552 = vector.load %arg8[%c0_348, %c2_349, %c0_350, %c0_351] : memref<2x4x64x16xbf16, #tpu.memory_space<vmem>>, vector<1x1x64x16xbf16>
    %553 = vector.shape_cast %552 : vector<1x1x64x16xbf16> to vector<64x16xbf16>
    %cst_352 = arith.constant dense<0.000000e+00> : vector<16x16xf32>
    %554 = tpu.matmul %497, %553, %cst_352 {dimension_numbers = #tpu.dot_dimension_numbers<[1], [0], [0], [1], [0, 0, 1, 1], [], []>} : vector<16x64xbf16>, vector<64x16xbf16>, vector<16x16xf32> -> vector<16x16xf32>
    %555 = arith.truncf %554 : vector<16x16xf32> to vector<16x16xbf16>
    %c0_353 = arith.constant 0 : index
    %c2_354 = arith.constant 2 : index
    %c0_355 = arith.constant 0 : index
    %c0_356 = arith.constant 0 : index
    %556 = vector.load %arg9[%c0_353, %c2_354, %c0_355, %c0_356] : memref<2x4x64x16xbf16, #tpu.memory_space<vmem>>, vector<1x1x64x16xbf16>
    %557 = vector.shape_cast %556 : vector<1x1x64x16xbf16> to vector<64x16xbf16>
    %cst_357 = arith.constant dense<0.000000e+00> : vector<16x16xf32>
    %558 = tpu.matmul %497, %557, %cst_357 {dimension_numbers = #tpu.dot_dimension_numbers<[1], [0], [0], [1], [0, 0, 1, 1], [], []>} : vector<16x64xbf16>, vector<64x16xbf16>, vector<16x16xf32> -> vector<16x16xf32>
    %559 = arith.truncf %558 : vector<16x16xf32> to vector<16x16xbf16>
    %c0_358 = arith.constant 0 : index
    %c2_359 = arith.constant 2 : index
    %c0_360 = arith.constant 0 : index
    %c0_361 = arith.constant 0 : index
    %560 = vector.load %arg10[%c0_358, %c2_359, %c0_360, %c0_361] : memref<2x4x64x16xbf16, #tpu.memory_space<vmem>>, vector<1x1x64x16xbf16>
    %561 = vector.shape_cast %560 : vector<1x1x64x16xbf16> to vector<64x16xbf16>
    %cst_362 = arith.constant dense<0.000000e+00> : vector<16x16xf32>
    %562 = tpu.matmul %497, %561, %cst_362 {dimension_numbers = #tpu.dot_dimension_numbers<[1], [0], [0], [1], [0, 0, 1, 1], [], []>} : vector<16x64xbf16>, vector<64x16xbf16>, vector<16x16xf32> -> vector<16x16xf32>
    %563 = arith.truncf %562 : vector<16x16xf32> to vector<16x16xbf16>
    %cst_363 = arith.constant dense<0.000000e+00> : vector<16x16xf32>
    %564 = tpu.matmul %555, %559, %cst_363 {dimension_numbers = #tpu.dot_dimension_numbers<[1], [1], [0], [0], [0, 0, 1, 0], [], []>} : vector<16x16xbf16>, vector<16x16xbf16>, vector<16x16xf32> -> vector<16x16xf32>
    %565 = vector.broadcast %461 : vector<1x16xf32> to vector<16x16xf32>
    %566 = arith.addf %564, %565 : vector<16x16xf32>
    %cst_364 = arith.constant dense<0xFF800000> : vector<16xf32>
    %567 = vector.multi_reduction <maximumf>, %566, %cst_364 [1] : vector<16x16xf32> to vector<16xf32>
    %568 = vector.shape_cast %567 : vector<16xf32> to vector<16x1xf32>
    %569 = vector.broadcast %568 : vector<16x1xf32> to vector<16x16xf32>
    %570 = arith.subf %566, %569 : vector<16x16xf32>
    %571 = math.exp %570 : vector<16x16xf32>
    %cst_365 = arith.constant dense<0.000000e+00> : vector<16xf32>
    %572 = vector.multi_reduction <add>, %571, %cst_365 [1] : vector<16x16xf32> to vector<16xf32>
    %573 = vector.shape_cast %572 : vector<16xf32> to vector<16x1xf32>
    %574 = tpu.reciprocal %573 {approx = true} : vector<16x1xf32> -> vector<16x1xf32>
    %575 = vector.broadcast %574 : vector<16x1xf32> to vector<16x16xf32>
    %576 = arith.mulf %571, %575 : vector<16x16xf32>
    %577 = arith.truncf %576 : vector<16x16xf32> to vector<16x16xbf16>
    %cst_366 = arith.constant dense<0.000000e+00> : vector<16x16xf32>
    %578 = tpu.matmul %577, %563, %cst_366 {dimension_numbers = #tpu.dot_dimension_numbers<[1], [0], [0], [1], [0, 0, 1, 1], [], []>} : vector<16x16xbf16>, vector<16x16xbf16>, vector<16x16xf32> -> vector<16x16xf32>
    %c0_367 = arith.constant 0 : index
    %c3_368 = arith.constant 3 : index
    %c0_369 = arith.constant 0 : index
    %c0_370 = arith.constant 0 : index
    %579 = vector.load %arg8[%c0_367, %c3_368, %c0_369, %c0_370] : memref<2x4x64x16xbf16, #tpu.memory_space<vmem>>, vector<1x1x64x16xbf16>
    %580 = vector.shape_cast %579 : vector<1x1x64x16xbf16> to vector<64x16xbf16>
    %cst_371 = arith.constant dense<0.000000e+00> : vector<16x16xf32>
    %581 = tpu.matmul %497, %580, %cst_371 {dimension_numbers = #tpu.dot_dimension_numbers<[1], [0], [0], [1], [0, 0, 1, 1], [], []>} : vector<16x64xbf16>, vector<64x16xbf16>, vector<16x16xf32> -> vector<16x16xf32>
    %582 = arith.truncf %581 : vector<16x16xf32> to vector<16x16xbf16>
    %c0_372 = arith.constant 0 : index
    %c3_373 = arith.constant 3 : index
    %c0_374 = arith.constant 0 : index
    %c0_375 = arith.constant 0 : index
    %583 = vector.load %arg9[%c0_372, %c3_373, %c0_374, %c0_375] : memref<2x4x64x16xbf16, #tpu.memory_space<vmem>>, vector<1x1x64x16xbf16>
    %584 = vector.shape_cast %583 : vector<1x1x64x16xbf16> to vector<64x16xbf16>
    %cst_376 = arith.constant dense<0.000000e+00> : vector<16x16xf32>
    %585 = tpu.matmul %497, %584, %cst_376 {dimension_numbers = #tpu.dot_dimension_numbers<[1], [0], [0], [1], [0, 0, 1, 1], [], []>} : vector<16x64xbf16>, vector<64x16xbf16>, vector<16x16xf32> -> vector<16x16xf32>
    %586 = arith.truncf %585 : vector<16x16xf32> to vector<16x16xbf16>
    %c0_377 = arith.constant 0 : index
    %c3_378 = arith.constant 3 : index
    %c0_379 = arith.constant 0 : index
    %c0_380 = arith.constant 0 : index
    %587 = vector.load %arg10[%c0_377, %c3_378, %c0_379, %c0_380] : memref<2x4x64x16xbf16, #tpu.memory_space<vmem>>, vector<1x1x64x16xbf16>
    %588 = vector.shape_cast %587 : vector<1x1x64x16xbf16> to vector<64x16xbf16>
    %cst_381 = arith.constant dense<0.000000e+00> : vector<16x16xf32>
    %589 = tpu.matmul %497, %588, %cst_381 {dimension_numbers = #tpu.dot_dimension_numbers<[1], [0], [0], [1], [0, 0, 1, 1], [], []>} : vector<16x64xbf16>, vector<64x16xbf16>, vector<16x16xf32> -> vector<16x16xf32>
    %590 = arith.truncf %589 : vector<16x16xf32> to vector<16x16xbf16>
    %cst_382 = arith.constant dense<0.000000e+00> : vector<16x16xf32>
    %591 = tpu.matmul %582, %586, %cst_382 {dimension_numbers = #tpu.dot_dimension_numbers<[1], [1], [0], [0], [0, 0, 1, 0], [], []>} : vector<16x16xbf16>, vector<16x16xbf16>, vector<16x16xf32> -> vector<16x16xf32>
    %592 = vector.broadcast %461 : vector<1x16xf32> to vector<16x16xf32>
    %593 = arith.addf %591, %592 : vector<16x16xf32>
    %cst_383 = arith.constant dense<0xFF800000> : vector<16xf32>
    %594 = vector.multi_reduction <maximumf>, %593, %cst_383 [1] : vector<16x16xf32> to vector<16xf32>
    %595 = vector.shape_cast %594 : vector<16xf32> to vector<16x1xf32>
    %596 = vector.broadcast %595 : vector<16x1xf32> to vector<16x16xf32>
    %597 = arith.subf %593, %596 : vector<16x16xf32>
    %598 = math.exp %597 : vector<16x16xf32>
    %cst_384 = arith.constant dense<0.000000e+00> : vector<16xf32>
    %599 = vector.multi_reduction <add>, %598, %cst_384 [1] : vector<16x16xf32> to vector<16xf32>
    %600 = vector.shape_cast %599 : vector<16xf32> to vector<16x1xf32>
    %601 = tpu.reciprocal %600 {approx = true} : vector<16x1xf32> -> vector<16x1xf32>
    %602 = vector.broadcast %601 : vector<16x1xf32> to vector<16x16xf32>
    %603 = arith.mulf %598, %602 : vector<16x16xf32>
    %604 = arith.truncf %603 : vector<16x16xf32> to vector<16x16xbf16>
    %cst_385 = arith.constant dense<0.000000e+00> : vector<16x16xf32>
    %605 = tpu.matmul %604, %590, %cst_385 {dimension_numbers = #tpu.dot_dimension_numbers<[1], [0], [0], [1], [0, 0, 1, 1], [], []>} : vector<16x16xbf16>, vector<16x16xbf16>, vector<16x16xf32> -> vector<16x16xf32>
    %606 = tpu.concatenate %524, %551, %578, %605 in 1 : vector<16x16xf32>, vector<16x16xf32>, vector<16x16xf32>, vector<16x16xf32> -> vector<16x64xf32>
    %607 = arith.truncf %606 : vector<16x64xf32> to vector<16x64xbf16>
    %c0_386 = arith.constant 0 : index
    %c0_387 = arith.constant 0 : index
    %c0_388 = arith.constant 0 : index
    %608 = vector.load %arg11[%c0_386, %c0_387, %c0_388] : memref<2x64x64xbf16, #tpu.memory_space<vmem>>, vector<1x64x64xbf16>
    %609 = vector.shape_cast %608 : vector<1x64x64xbf16> to vector<64x64xbf16>
    %cst_389 = arith.constant dense<0.000000e+00> : vector<16x64xf32>
    %610 = tpu.matmul %607, %609, %cst_389 {dimension_numbers = #tpu.dot_dimension_numbers<[1], [0], [0], [1], [0, 0, 1, 1], [], []>} : vector<16x64xbf16>, vector<64x64xbf16>, vector<16x64xf32> -> vector<16x64xf32>
    %611 = arith.addf %482, %610 : vector<16x64xf32>
    %c0_390 = arith.constant 0 : index
    %c0_391 = arith.constant 0 : index
    %c0_392 = arith.constant 0 : index
    %612 = vector.load %arg13[%c0_390, %c0_391, %c0_392] : memref<2x1x64xf32, #tpu.memory_space<vmem>>, vector<1x1x64xf32>
    %613 = vector.shape_cast %612 : vector<1x1x64xf32> to vector<1x64xf32>
    %614 = arith.mulf %611, %611 : vector<16x64xf32>
    %cst_393 = arith.constant dense<0.000000e+00> : vector<16xf32>
    %615 = vector.multi_reduction <add>, %614, %cst_393 [1] : vector<16x64xf32> to vector<16xf32>
    %616 = vector.shape_cast %615 : vector<16xf32> to vector<16x1xf32>
    %cst_394 = arith.constant 6.400000e+01 : f32
    %617 = vector.broadcast %cst_394 : f32 to vector<16x1xf32>
    %618 = arith.divf %616, %617 : vector<16x1xf32>
    %cst_395 = arith.constant 9.99999997E-7 : f32
    %619 = vector.broadcast %cst_395 : f32 to vector<16x1xf32>
    %620 = arith.addf %618, %619 : vector<16x1xf32>
    %621 = math.rsqrt %620 : vector<16x1xf32>
    %622 = vector.broadcast %621 : vector<16x1xf32> to vector<16x64xf32>
    %623 = arith.mulf %611, %622 : vector<16x64xf32>
    %624 = vector.broadcast %613 : vector<1x64xf32> to vector<16x64xf32>
    %625 = arith.mulf %623, %624 : vector<16x64xf32>
    %626 = arith.truncf %625 : vector<16x64xf32> to vector<16x64xbf16>
    %c0_396 = arith.constant 0 : index
    %c0_397 = arith.constant 0 : index
    %c0_398 = arith.constant 0 : index
    %627 = vector.load %arg14[%c0_396, %c0_397, %c0_398] : memref<2x64x128xbf16, #tpu.memory_space<vmem>>, vector<1x64x128xbf16>
    %628 = vector.shape_cast %627 : vector<1x64x128xbf16> to vector<64x128xbf16>
    %cst_399 = arith.constant dense<0.000000e+00> : vector<16x128xf32>
    %629 = tpu.matmul %626, %628, %cst_399 {dimension_numbers = #tpu.dot_dimension_numbers<[1], [0], [0], [1], [0, 0, 1, 1], [], []>} : vector<16x64xbf16>, vector<64x128xbf16>, vector<16x128xf32> -> vector<16x128xf32>
    %cst_400 = arith.constant 0.000000e+00 : f32
    %630 = vector.broadcast %cst_400 : f32 to vector<16x128xf32>
    %631 = arith.maximumf %629, %630 : vector<16x128xf32>
    %632 = arith.truncf %631 : vector<16x128xf32> to vector<16x128xbf16>
    %c0_401 = arith.constant 0 : index
    %c0_402 = arith.constant 0 : index
    %c0_403 = arith.constant 0 : index
    %633 = vector.load %arg15[%c0_401, %c0_402, %c0_403] : memref<2x128x64xbf16, #tpu.memory_space<vmem>>, vector<1x128x64xbf16>
    %634 = vector.shape_cast %633 : vector<1x128x64xbf16> to vector<128x64xbf16>
    %cst_404 = arith.constant dense<0.000000e+00> : vector<16x64xf32>
    %635 = tpu.matmul %632, %634, %cst_404 {dimension_numbers = #tpu.dot_dimension_numbers<[1], [0], [0], [1], [0, 0, 1, 1], [], []>} : vector<16x128xbf16>, vector<128x64xbf16>, vector<16x64xf32> -> vector<16x64xf32>
    %636 = arith.addf %611, %635 : vector<16x64xf32>
    %c1_405 = arith.constant 1 : index
    %c0_406 = arith.constant 0 : index
    %c0_407 = arith.constant 0 : index
    %637 = vector.load %arg12[%c1_405, %c0_406, %c0_407] : memref<2x1x64xf32, #tpu.memory_space<vmem>>, vector<1x1x64xf32>
    %638 = vector.shape_cast %637 : vector<1x1x64xf32> to vector<1x64xf32>
    %639 = arith.mulf %636, %636 : vector<16x64xf32>
    %cst_408 = arith.constant dense<0.000000e+00> : vector<16xf32>
    %640 = vector.multi_reduction <add>, %639, %cst_408 [1] : vector<16x64xf32> to vector<16xf32>
    %641 = vector.shape_cast %640 : vector<16xf32> to vector<16x1xf32>
    %cst_409 = arith.constant 6.400000e+01 : f32
    %642 = vector.broadcast %cst_409 : f32 to vector<16x1xf32>
    %643 = arith.divf %641, %642 : vector<16x1xf32>
    %cst_410 = arith.constant 9.99999997E-7 : f32
    %644 = vector.broadcast %cst_410 : f32 to vector<16x1xf32>
    %645 = arith.addf %643, %644 : vector<16x1xf32>
    %646 = math.rsqrt %645 : vector<16x1xf32>
    %647 = vector.broadcast %646 : vector<16x1xf32> to vector<16x64xf32>
    %648 = arith.mulf %636, %647 : vector<16x64xf32>
    %649 = vector.broadcast %638 : vector<1x64xf32> to vector<16x64xf32>
    %650 = arith.mulf %648, %649 : vector<16x64xf32>
    %651 = arith.truncf %650 : vector<16x64xf32> to vector<16x64xbf16>
    %c1_411 = arith.constant 1 : index
    %c0_412 = arith.constant 0 : index
    %c0_413 = arith.constant 0 : index
    %c0_414 = arith.constant 0 : index
    %652 = vector.load %arg8[%c1_411, %c0_412, %c0_413, %c0_414] : memref<2x4x64x16xbf16, #tpu.memory_space<vmem>>, vector<1x1x64x16xbf16>
    %653 = vector.shape_cast %652 : vector<1x1x64x16xbf16> to vector<64x16xbf16>
    %cst_415 = arith.constant dense<0.000000e+00> : vector<16x16xf32>
    %654 = tpu.matmul %651, %653, %cst_415 {dimension_numbers = #tpu.dot_dimension_numbers<[1], [0], [0], [1], [0, 0, 1, 1], [], []>} : vector<16x64xbf16>, vector<64x16xbf16>, vector<16x16xf32> -> vector<16x16xf32>
    %655 = arith.truncf %654 : vector<16x16xf32> to vector<16x16xbf16>
    %c1_416 = arith.constant 1 : index
    %c0_417 = arith.constant 0 : index
    %c0_418 = arith.constant 0 : index
    %c0_419 = arith.constant 0 : index
    %656 = vector.load %arg9[%c1_416, %c0_417, %c0_418, %c0_419] : memref<2x4x64x16xbf16, #tpu.memory_space<vmem>>, vector<1x1x64x16xbf16>
    %657 = vector.shape_cast %656 : vector<1x1x64x16xbf16> to vector<64x16xbf16>
    %cst_420 = arith.constant dense<0.000000e+00> : vector<16x16xf32>
    %658 = tpu.matmul %651, %657, %cst_420 {dimension_numbers = #tpu.dot_dimension_numbers<[1], [0], [0], [1], [0, 0, 1, 1], [], []>} : vector<16x64xbf16>, vector<64x16xbf16>, vector<16x16xf32> -> vector<16x16xf32>
    %659 = arith.truncf %658 : vector<16x16xf32> to vector<16x16xbf16>
    %c1_421 = arith.constant 1 : index
    %c0_422 = arith.constant 0 : index
    %c0_423 = arith.constant 0 : index
    %c0_424 = arith.constant 0 : index
    %660 = vector.load %arg10[%c1_421, %c0_422, %c0_423, %c0_424] : memref<2x4x64x16xbf16, #tpu.memory_space<vmem>>, vector<1x1x64x16xbf16>
    %661 = vector.shape_cast %660 : vector<1x1x64x16xbf16> to vector<64x16xbf16>
    %cst_425 = arith.constant dense<0.000000e+00> : vector<16x16xf32>
    %662 = tpu.matmul %651, %661, %cst_425 {dimension_numbers = #tpu.dot_dimension_numbers<[1], [0], [0], [1], [0, 0, 1, 1], [], []>} : vector<16x64xbf16>, vector<64x16xbf16>, vector<16x16xf32> -> vector<16x16xf32>
    %663 = arith.truncf %662 : vector<16x16xf32> to vector<16x16xbf16>
    %cst_426 = arith.constant dense<0.000000e+00> : vector<16x16xf32>
    %664 = tpu.matmul %655, %659, %cst_426 {dimension_numbers = #tpu.dot_dimension_numbers<[1], [1], [0], [0], [0, 0, 1, 0], [], []>} : vector<16x16xbf16>, vector<16x16xbf16>, vector<16x16xf32> -> vector<16x16xf32>
    %665 = vector.broadcast %461 : vector<1x16xf32> to vector<16x16xf32>
    %666 = arith.addf %664, %665 : vector<16x16xf32>
    %cst_427 = arith.constant dense<0xFF800000> : vector<16xf32>
    %667 = vector.multi_reduction <maximumf>, %666, %cst_427 [1] : vector<16x16xf32> to vector<16xf32>
    %668 = vector.shape_cast %667 : vector<16xf32> to vector<16x1xf32>
    %669 = vector.broadcast %668 : vector<16x1xf32> to vector<16x16xf32>
    %670 = arith.subf %666, %669 : vector<16x16xf32>
    %671 = math.exp %670 : vector<16x16xf32>
    %cst_428 = arith.constant dense<0.000000e+00> : vector<16xf32>
    %672 = vector.multi_reduction <add>, %671, %cst_428 [1] : vector<16x16xf32> to vector<16xf32>
    %673 = vector.shape_cast %672 : vector<16xf32> to vector<16x1xf32>
    %674 = tpu.reciprocal %673 {approx = true} : vector<16x1xf32> -> vector<16x1xf32>
    %675 = vector.broadcast %674 : vector<16x1xf32> to vector<16x16xf32>
    %676 = arith.mulf %671, %675 : vector<16x16xf32>
    %677 = arith.truncf %676 : vector<16x16xf32> to vector<16x16xbf16>
    %cst_429 = arith.constant dense<0.000000e+00> : vector<16x16xf32>
    %678 = tpu.matmul %677, %663, %cst_429 {dimension_numbers = #tpu.dot_dimension_numbers<[1], [0], [0], [1], [0, 0, 1, 1], [], []>} : vector<16x16xbf16>, vector<16x16xbf16>, vector<16x16xf32> -> vector<16x16xf32>
    %c1_430 = arith.constant 1 : index
    %c1_431 = arith.constant 1 : index
    %c0_432 = arith.constant 0 : index
    %c0_433 = arith.constant 0 : index
    %679 = vector.load %arg8[%c1_430, %c1_431, %c0_432, %c0_433] : memref<2x4x64x16xbf16, #tpu.memory_space<vmem>>, vector<1x1x64x16xbf16>
    %680 = vector.shape_cast %679 : vector<1x1x64x16xbf16> to vector<64x16xbf16>
    %cst_434 = arith.constant dense<0.000000e+00> : vector<16x16xf32>
    %681 = tpu.matmul %651, %680, %cst_434 {dimension_numbers = #tpu.dot_dimension_numbers<[1], [0], [0], [1], [0, 0, 1, 1], [], []>} : vector<16x64xbf16>, vector<64x16xbf16>, vector<16x16xf32> -> vector<16x16xf32>
    %682 = arith.truncf %681 : vector<16x16xf32> to vector<16x16xbf16>
    %c1_435 = arith.constant 1 : index
    %c1_436 = arith.constant 1 : index
    %c0_437 = arith.constant 0 : index
    %c0_438 = arith.constant 0 : index
    %683 = vector.load %arg9[%c1_435, %c1_436, %c0_437, %c0_438] : memref<2x4x64x16xbf16, #tpu.memory_space<vmem>>, vector<1x1x64x16xbf16>
    %684 = vector.shape_cast %683 : vector<1x1x64x16xbf16> to vector<64x16xbf16>
    %cst_439 = arith.constant dense<0.000000e+00> : vector<16x16xf32>
    %685 = tpu.matmul %651, %684, %cst_439 {dimension_numbers = #tpu.dot_dimension_numbers<[1], [0], [0], [1], [0, 0, 1, 1], [], []>} : vector<16x64xbf16>, vector<64x16xbf16>, vector<16x16xf32> -> vector<16x16xf32>
    %686 = arith.truncf %685 : vector<16x16xf32> to vector<16x16xbf16>
    %c1_440 = arith.constant 1 : index
    %c1_441 = arith.constant 1 : index
    %c0_442 = arith.constant 0 : index
    %c0_443 = arith.constant 0 : index
    %687 = vector.load %arg10[%c1_440, %c1_441, %c0_442, %c0_443] : memref<2x4x64x16xbf16, #tpu.memory_space<vmem>>, vector<1x1x64x16xbf16>
    %688 = vector.shape_cast %687 : vector<1x1x64x16xbf16> to vector<64x16xbf16>
    %cst_444 = arith.constant dense<0.000000e+00> : vector<16x16xf32>
    %689 = tpu.matmul %651, %688, %cst_444 {dimension_numbers = #tpu.dot_dimension_numbers<[1], [0], [0], [1], [0, 0, 1, 1], [], []>} : vector<16x64xbf16>, vector<64x16xbf16>, vector<16x16xf32> -> vector<16x16xf32>
    %690 = arith.truncf %689 : vector<16x16xf32> to vector<16x16xbf16>
    %cst_445 = arith.constant dense<0.000000e+00> : vector<16x16xf32>
    %691 = tpu.matmul %682, %686, %cst_445 {dimension_numbers = #tpu.dot_dimension_numbers<[1], [1], [0], [0], [0, 0, 1, 0], [], []>} : vector<16x16xbf16>, vector<16x16xbf16>, vector<16x16xf32> -> vector<16x16xf32>
    %692 = vector.broadcast %461 : vector<1x16xf32> to vector<16x16xf32>
    %693 = arith.addf %691, %692 : vector<16x16xf32>
    %cst_446 = arith.constant dense<0xFF800000> : vector<16xf32>
    %694 = vector.multi_reduction <maximumf>, %693, %cst_446 [1] : vector<16x16xf32> to vector<16xf32>
    %695 = vector.shape_cast %694 : vector<16xf32> to vector<16x1xf32>
    %696 = vector.broadcast %695 : vector<16x1xf32> to vector<16x16xf32>
    %697 = arith.subf %693, %696 : vector<16x16xf32>
    %698 = math.exp %697 : vector<16x16xf32>
    %cst_447 = arith.constant dense<0.000000e+00> : vector<16xf32>
    %699 = vector.multi_reduction <add>, %698, %cst_447 [1] : vector<16x16xf32> to vector<16xf32>
    %700 = vector.shape_cast %699 : vector<16xf32> to vector<16x1xf32>
    %701 = tpu.reciprocal %700 {approx = true} : vector<16x1xf32> -> vector<16x1xf32>
    %702 = vector.broadcast %701 : vector<16x1xf32> to vector<16x16xf32>
    %703 = arith.mulf %698, %702 : vector<16x16xf32>
    %704 = arith.truncf %703 : vector<16x16xf32> to vector<16x16xbf16>
    %cst_448 = arith.constant dense<0.000000e+00> : vector<16x16xf32>
    %705 = tpu.matmul %704, %690, %cst_448 {dimension_numbers = #tpu.dot_dimension_numbers<[1], [0], [0], [1], [0, 0, 1, 1], [], []>} : vector<16x16xbf16>, vector<16x16xbf16>, vector<16x16xf32> -> vector<16x16xf32>
    %c1_449 = arith.constant 1 : index
    %c2_450 = arith.constant 2 : index
    %c0_451 = arith.constant 0 : index
    %c0_452 = arith.constant 0 : index
    %706 = vector.load %arg8[%c1_449, %c2_450, %c0_451, %c0_452] : memref<2x4x64x16xbf16, #tpu.memory_space<vmem>>, vector<1x1x64x16xbf16>
    %707 = vector.shape_cast %706 : vector<1x1x64x16xbf16> to vector<64x16xbf16>
    %cst_453 = arith.constant dense<0.000000e+00> : vector<16x16xf32>
    %708 = tpu.matmul %651, %707, %cst_453 {dimension_numbers = #tpu.dot_dimension_numbers<[1], [0], [0], [1], [0, 0, 1, 1], [], []>} : vector<16x64xbf16>, vector<64x16xbf16>, vector<16x16xf32> -> vector<16x16xf32>
    %709 = arith.truncf %708 : vector<16x16xf32> to vector<16x16xbf16>
    %c1_454 = arith.constant 1 : index
    %c2_455 = arith.constant 2 : index
    %c0_456 = arith.constant 0 : index
    %c0_457 = arith.constant 0 : index
    %710 = vector.load %arg9[%c1_454, %c2_455, %c0_456, %c0_457] : memref<2x4x64x16xbf16, #tpu.memory_space<vmem>>, vector<1x1x64x16xbf16>
    %711 = vector.shape_cast %710 : vector<1x1x64x16xbf16> to vector<64x16xbf16>
    %cst_458 = arith.constant dense<0.000000e+00> : vector<16x16xf32>
    %712 = tpu.matmul %651, %711, %cst_458 {dimension_numbers = #tpu.dot_dimension_numbers<[1], [0], [0], [1], [0, 0, 1, 1], [], []>} : vector<16x64xbf16>, vector<64x16xbf16>, vector<16x16xf32> -> vector<16x16xf32>
    %713 = arith.truncf %712 : vector<16x16xf32> to vector<16x16xbf16>
    %c1_459 = arith.constant 1 : index
    %c2_460 = arith.constant 2 : index
    %c0_461 = arith.constant 0 : index
    %c0_462 = arith.constant 0 : index
    %714 = vector.load %arg10[%c1_459, %c2_460, %c0_461, %c0_462] : memref<2x4x64x16xbf16, #tpu.memory_space<vmem>>, vector<1x1x64x16xbf16>
    %715 = vector.shape_cast %714 : vector<1x1x64x16xbf16> to vector<64x16xbf16>
    %cst_463 = arith.constant dense<0.000000e+00> : vector<16x16xf32>
    %716 = tpu.matmul %651, %715, %cst_463 {dimension_numbers = #tpu.dot_dimension_numbers<[1], [0], [0], [1], [0, 0, 1, 1], [], []>} : vector<16x64xbf16>, vector<64x16xbf16>, vector<16x16xf32> -> vector<16x16xf32>
    %717 = arith.truncf %716 : vector<16x16xf32> to vector<16x16xbf16>
    %cst_464 = arith.constant dense<0.000000e+00> : vector<16x16xf32>
    %718 = tpu.matmul %709, %713, %cst_464 {dimension_numbers = #tpu.dot_dimension_numbers<[1], [1], [0], [0], [0, 0, 1, 0], [], []>} : vector<16x16xbf16>, vector<16x16xbf16>, vector<16x16xf32> -> vector<16x16xf32>
    %719 = vector.broadcast %461 : vector<1x16xf32> to vector<16x16xf32>
    %720 = arith.addf %718, %719 : vector<16x16xf32>
    %cst_465 = arith.constant dense<0xFF800000> : vector<16xf32>
    %721 = vector.multi_reduction <maximumf>, %720, %cst_465 [1] : vector<16x16xf32> to vector<16xf32>
    %722 = vector.shape_cast %721 : vector<16xf32> to vector<16x1xf32>
    %723 = vector.broadcast %722 : vector<16x1xf32> to vector<16x16xf32>
    %724 = arith.subf %720, %723 : vector<16x16xf32>
    %725 = math.exp %724 : vector<16x16xf32>
    %cst_466 = arith.constant dense<0.000000e+00> : vector<16xf32>
    %726 = vector.multi_reduction <add>, %725, %cst_466 [1] : vector<16x16xf32> to vector<16xf32>
    %727 = vector.shape_cast %726 : vector<16xf32> to vector<16x1xf32>
    %728 = tpu.reciprocal %727 {approx = true} : vector<16x1xf32> -> vector<16x1xf32>
    %729 = vector.broadcast %728 : vector<16x1xf32> to vector<16x16xf32>
    %730 = arith.mulf %725, %729 : vector<16x16xf32>
    %731 = arith.truncf %730 : vector<16x16xf32> to vector<16x16xbf16>
    %cst_467 = arith.constant dense<0.000000e+00> : vector<16x16xf32>
    %732 = tpu.matmul %731, %717, %cst_467 {dimension_numbers = #tpu.dot_dimension_numbers<[1], [0], [0], [1], [0, 0, 1, 1], [], []>} : vector<16x16xbf16>, vector<16x16xbf16>, vector<16x16xf32> -> vector<16x16xf32>
    %c1_468 = arith.constant 1 : index
    %c3_469 = arith.constant 3 : index
    %c0_470 = arith.constant 0 : index
    %c0_471 = arith.constant 0 : index
    %733 = vector.load %arg8[%c1_468, %c3_469, %c0_470, %c0_471] : memref<2x4x64x16xbf16, #tpu.memory_space<vmem>>, vector<1x1x64x16xbf16>
    %734 = vector.shape_cast %733 : vector<1x1x64x16xbf16> to vector<64x16xbf16>
    %cst_472 = arith.constant dense<0.000000e+00> : vector<16x16xf32>
    %735 = tpu.matmul %651, %734, %cst_472 {dimension_numbers = #tpu.dot_dimension_numbers<[1], [0], [0], [1], [0, 0, 1, 1], [], []>} : vector<16x64xbf16>, vector<64x16xbf16>, vector<16x16xf32> -> vector<16x16xf32>
    %736 = arith.truncf %735 : vector<16x16xf32> to vector<16x16xbf16>
    %c1_473 = arith.constant 1 : index
    %c3_474 = arith.constant 3 : index
    %c0_475 = arith.constant 0 : index
    %c0_476 = arith.constant 0 : index
    %737 = vector.load %arg9[%c1_473, %c3_474, %c0_475, %c0_476] : memref<2x4x64x16xbf16, #tpu.memory_space<vmem>>, vector<1x1x64x16xbf16>
    %738 = vector.shape_cast %737 : vector<1x1x64x16xbf16> to vector<64x16xbf16>
    %cst_477 = arith.constant dense<0.000000e+00> : vector<16x16xf32>
    %739 = tpu.matmul %651, %738, %cst_477 {dimension_numbers = #tpu.dot_dimension_numbers<[1], [0], [0], [1], [0, 0, 1, 1], [], []>} : vector<16x64xbf16>, vector<64x16xbf16>, vector<16x16xf32> -> vector<16x16xf32>
    %740 = arith.truncf %739 : vector<16x16xf32> to vector<16x16xbf16>
    %c1_478 = arith.constant 1 : index
    %c3_479 = arith.constant 3 : index
    %c0_480 = arith.constant 0 : index
    %c0_481 = arith.constant 0 : index
    %741 = vector.load %arg10[%c1_478, %c3_479, %c0_480, %c0_481] : memref<2x4x64x16xbf16, #tpu.memory_space<vmem>>, vector<1x1x64x16xbf16>
    %742 = vector.shape_cast %741 : vector<1x1x64x16xbf16> to vector<64x16xbf16>
    %cst_482 = arith.constant dense<0.000000e+00> : vector<16x16xf32>
    %743 = tpu.matmul %651, %742, %cst_482 {dimension_numbers = #tpu.dot_dimension_numbers<[1], [0], [0], [1], [0, 0, 1, 1], [], []>} : vector<16x64xbf16>, vector<64x16xbf16>, vector<16x16xf32> -> vector<16x16xf32>
    %744 = arith.truncf %743 : vector<16x16xf32> to vector<16x16xbf16>
    %cst_483 = arith.constant dense<0.000000e+00> : vector<16x16xf32>
    %745 = tpu.matmul %736, %740, %cst_483 {dimension_numbers = #tpu.dot_dimension_numbers<[1], [1], [0], [0], [0, 0, 1, 0], [], []>} : vector<16x16xbf16>, vector<16x16xbf16>, vector<16x16xf32> -> vector<16x16xf32>
    %746 = vector.broadcast %461 : vector<1x16xf32> to vector<16x16xf32>
    %747 = arith.addf %745, %746 : vector<16x16xf32>
    %cst_484 = arith.constant dense<0xFF800000> : vector<16xf32>
    %748 = vector.multi_reduction <maximumf>, %747, %cst_484 [1] : vector<16x16xf32> to vector<16xf32>
    %749 = vector.shape_cast %748 : vector<16xf32> to vector<16x1xf32>
    %750 = vector.broadcast %749 : vector<16x1xf32> to vector<16x16xf32>
    %751 = arith.subf %747, %750 : vector<16x16xf32>
    %752 = math.exp %751 : vector<16x16xf32>
    %cst_485 = arith.constant dense<0.000000e+00> : vector<16xf32>
    %753 = vector.multi_reduction <add>, %752, %cst_485 [1] : vector<16x16xf32> to vector<16xf32>
    %754 = vector.shape_cast %753 : vector<16xf32> to vector<16x1xf32>
    %755 = tpu.reciprocal %754 {approx = true} : vector<16x1xf32> -> vector<16x1xf32>
    %756 = vector.broadcast %755 : vector<16x1xf32> to vector<16x16xf32>
    %757 = arith.mulf %752, %756 : vector<16x16xf32>
    %758 = arith.truncf %757 : vector<16x16xf32> to vector<16x16xbf16>
    %cst_486 = arith.constant dense<0.000000e+00> : vector<16x16xf32>
    %759 = tpu.matmul %758, %744, %cst_486 {dimension_numbers = #tpu.dot_dimension_numbers<[1], [0], [0], [1], [0, 0, 1, 1], [], []>} : vector<16x16xbf16>, vector<16x16xbf16>, vector<16x16xf32> -> vector<16x16xf32>
    %760 = tpu.concatenate %678, %705, %732, %759 in 1 : vector<16x16xf32>, vector<16x16xf32>, vector<16x16xf32>, vector<16x16xf32> -> vector<16x64xf32>
    %761 = arith.truncf %760 : vector<16x64xf32> to vector<16x64xbf16>
    %c1_487 = arith.constant 1 : index
    %c0_488 = arith.constant 0 : index
    %c0_489 = arith.constant 0 : index
    %762 = vector.load %arg11[%c1_487, %c0_488, %c0_489] : memref<2x64x64xbf16, #tpu.memory_space<vmem>>, vector<1x64x64xbf16>
    %763 = vector.shape_cast %762 : vector<1x64x64xbf16> to vector<64x64xbf16>
    %cst_490 = arith.constant dense<0.000000e+00> : vector<16x64xf32>
    %764 = tpu.matmul %761, %763, %cst_490 {dimension_numbers = #tpu.dot_dimension_numbers<[1], [0], [0], [1], [0, 0, 1, 1], [], []>} : vector<16x64xbf16>, vector<64x64xbf16>, vector<16x64xf32> -> vector<16x64xf32>
    %765 = arith.addf %636, %764 : vector<16x64xf32>
    %c1_491 = arith.constant 1 : index
    %c0_492 = arith.constant 0 : index
    %c0_493 = arith.constant 0 : index
    %766 = vector.load %arg13[%c1_491, %c0_492, %c0_493] : memref<2x1x64xf32, #tpu.memory_space<vmem>>, vector<1x1x64xf32>
    %767 = vector.shape_cast %766 : vector<1x1x64xf32> to vector<1x64xf32>
    %768 = arith.mulf %765, %765 : vector<16x64xf32>
    %cst_494 = arith.constant dense<0.000000e+00> : vector<16xf32>
    %769 = vector.multi_reduction <add>, %768, %cst_494 [1] : vector<16x64xf32> to vector<16xf32>
    %770 = vector.shape_cast %769 : vector<16xf32> to vector<16x1xf32>
    %cst_495 = arith.constant 6.400000e+01 : f32
    %771 = vector.broadcast %cst_495 : f32 to vector<16x1xf32>
    %772 = arith.divf %770, %771 : vector<16x1xf32>
    %cst_496 = arith.constant 9.99999997E-7 : f32
    %773 = vector.broadcast %cst_496 : f32 to vector<16x1xf32>
    %774 = arith.addf %772, %773 : vector<16x1xf32>
    %775 = math.rsqrt %774 : vector<16x1xf32>
    %776 = vector.broadcast %775 : vector<16x1xf32> to vector<16x64xf32>
    %777 = arith.mulf %765, %776 : vector<16x64xf32>
    %778 = vector.broadcast %767 : vector<1x64xf32> to vector<16x64xf32>
    %779 = arith.mulf %777, %778 : vector<16x64xf32>
    %780 = arith.truncf %779 : vector<16x64xf32> to vector<16x64xbf16>
    %c1_497 = arith.constant 1 : index
    %c0_498 = arith.constant 0 : index
    %c0_499 = arith.constant 0 : index
    %781 = vector.load %arg14[%c1_497, %c0_498, %c0_499] : memref<2x64x128xbf16, #tpu.memory_space<vmem>>, vector<1x64x128xbf16>
    %782 = vector.shape_cast %781 : vector<1x64x128xbf16> to vector<64x128xbf16>
    %cst_500 = arith.constant dense<0.000000e+00> : vector<16x128xf32>
    %783 = tpu.matmul %780, %782, %cst_500 {dimension_numbers = #tpu.dot_dimension_numbers<[1], [0], [0], [1], [0, 0, 1, 1], [], []>} : vector<16x64xbf16>, vector<64x128xbf16>, vector<16x128xf32> -> vector<16x128xf32>
    %cst_501 = arith.constant 0.000000e+00 : f32
    %784 = vector.broadcast %cst_501 : f32 to vector<16x128xf32>
    %785 = arith.maximumf %783, %784 : vector<16x128xf32>
    %786 = arith.truncf %785 : vector<16x128xf32> to vector<16x128xbf16>
    %c1_502 = arith.constant 1 : index
    %c0_503 = arith.constant 0 : index
    %c0_504 = arith.constant 0 : index
    %787 = vector.load %arg15[%c1_502, %c0_503, %c0_504] : memref<2x128x64xbf16, #tpu.memory_space<vmem>>, vector<1x128x64xbf16>
    %788 = vector.shape_cast %787 : vector<1x128x64xbf16> to vector<128x64xbf16>
    %cst_505 = arith.constant dense<0.000000e+00> : vector<16x64xf32>
    %789 = tpu.matmul %786, %788, %cst_505 {dimension_numbers = #tpu.dot_dimension_numbers<[1], [0], [0], [1], [0, 0, 1, 1], [], []>} : vector<16x128xbf16>, vector<128x64xbf16>, vector<16x64xf32> -> vector<16x64xf32>
    %790 = arith.addf %765, %789 : vector<16x64xf32>
    %791 = arith.mulf %790, %790 : vector<16x64xf32>
    %cst_506 = arith.constant dense<0.000000e+00> : vector<16xf32>
    %792 = vector.multi_reduction <add>, %791, %cst_506 [1] : vector<16x64xf32> to vector<16xf32>
    %793 = vector.shape_cast %792 : vector<16xf32> to vector<16x1xf32>
    %cst_507 = arith.constant 6.400000e+01 : f32
    %794 = vector.broadcast %cst_507 : f32 to vector<16x1xf32>
    %795 = arith.divf %793, %794 : vector<16x1xf32>
    %cst_508 = arith.constant 9.99999997E-7 : f32
    %796 = vector.broadcast %cst_508 : f32 to vector<16x1xf32>
    %797 = arith.addf %795, %796 : vector<16x1xf32>
    %798 = math.rsqrt %797 : vector<16x1xf32>
    %799 = vector.broadcast %798 : vector<16x1xf32> to vector<16x64xf32>
    %800 = arith.mulf %790, %799 : vector<16x64xf32>
    %801 = vector.broadcast %3 : vector<1x64xf32> to vector<16x64xf32>
    %802 = arith.mulf %800, %801 : vector<16x64xf32>
    %c1_509 = arith.constant 1 : index
    %c0_510 = arith.constant 0 : index
    %c0_511 = arith.constant 0 : index
    %803 = vector.load %arg23[%c1_509, %c0_510, %c0_511] : memref<2x16x64xf32, #tpu.memory_space<vmem>>, vector<1x16x64xf32>
    %804 = vector.shape_cast %803 : vector<1x16x64xf32> to vector<16x64xf32>
    %805 = vector.shape_cast %802 : vector<16x64xf32> to vector<1x16x64xf32>
    tpu.vector_store %arg23[%c1_509, %c0_510, %c0_511], %805 {strides = array<i32>} : memref<2x16x64xf32, #tpu.memory_space<vmem>>, vector<1x16x64xf32>,
    %c1_512 = arith.constant 1 : index
    %c0_513 = arith.constant 0 : index
    %c0_514 = arith.constant 0 : index
    %806 = vector.load %arg4[%c1_512, %c0_513, %c0_514] : memref<2x16x1xf32, #tpu.memory_space<vmem>>, vector<1x16x1xf32>
    %807 = vector.shape_cast %806 : vector<1x16x1xf32> to vector<16x1xf32>
    %808 = vector.broadcast %807 : vector<16x1xf32> to vector<16x64xf32>
    %809 = arith.mulf %802, %808 : vector<16x64xf32>
    %810 = tpu.iota {dimensions = array<i32: 0>} : vector<16x64xi32>
    %c0_i32_515 = arith.constant 0 : i32
    %811 = vector.broadcast %c0_i32_515 : i32 to vector<16x64xi32>
    %812 = arith.cmpi eq, %810, %811 : vector<16x64xi32>
    %c1_i32_516 = arith.constant 1 : i32
    %813 = tpu.dynamic_rotate %809 by %c1_i32_516 dim 0 : vector<16x64xf32>, i32 -> vector<16x64xf32>
    %cst_517 = arith.constant 0.000000e+00 : f32
    %814 = vector.broadcast %cst_517 : f32 to vector<16x64xf32>
    %815 = arith.select %812, %814, %813 : vector<16x64xi1>, vector<16x64xf32>
    %c15_i32_518 = arith.constant 15 : i32
    %816 = vector.broadcast %c15_i32_518 : i32 to vector<16x64xi32>
    %817 = arith.cmpi eq, %810, %816 : vector<16x64xi32>
    %c15_i32_519 = arith.constant 15 : i32
    %818 = tpu.dynamic_rotate %809 by %c15_i32_519 dim 0 : vector<16x64xf32>, i32 -> vector<16x64xf32>
    %cst_520 = arith.constant 0.000000e+00 : f32
    %819 = vector.broadcast %cst_520 : f32 to vector<16x64xf32>
    %820 = arith.select %817, %819, %818 : vector<16x64xi1>, vector<16x64xf32>
    %821 = arith.truncf %815 : vector<16x64xf32> to vector<16x64xbf16>
    %c0_521 = arith.constant 0 : index
    %c0_522 = arith.constant 0 : index
    %c0_523 = arith.constant 0 : index
    %822 = vector.load %arg17[%c0_521, %c0_522, %c0_523] : memref<3x64x64xbf16, #tpu.memory_space<vmem>>, vector<1x64x64xbf16>
    %823 = vector.shape_cast %822 : vector<1x64x64xbf16> to vector<64x64xbf16>
    %cst_524 = arith.constant dense<0.000000e+00> : vector<16x64xf32>
    %824 = tpu.matmul %821, %823, %cst_524 {dimension_numbers = #tpu.dot_dimension_numbers<[1], [0], [0], [1], [0, 0, 1, 1], [], []>} : vector<16x64xbf16>, vector<64x64xbf16>, vector<16x64xf32> -> vector<16x64xf32>
    %825 = arith.truncf %809 : vector<16x64xf32> to vector<16x64xbf16>
    %c1_525 = arith.constant 1 : index
    %c0_526 = arith.constant 0 : index
    %c0_527 = arith.constant 0 : index
    %826 = vector.load %arg17[%c1_525, %c0_526, %c0_527] : memref<3x64x64xbf16, #tpu.memory_space<vmem>>, vector<1x64x64xbf16>
    %827 = vector.shape_cast %826 : vector<1x64x64xbf16> to vector<64x64xbf16>
    %cst_528 = arith.constant dense<0.000000e+00> : vector<16x64xf32>
    %828 = tpu.matmul %825, %827, %cst_528 {dimension_numbers = #tpu.dot_dimension_numbers<[1], [0], [0], [1], [0, 0, 1, 1], [], []>} : vector<16x64xbf16>, vector<64x64xbf16>, vector<16x64xf32> -> vector<16x64xf32>
    %829 = arith.addf %824, %828 : vector<16x64xf32>
    %830 = arith.truncf %820 : vector<16x64xf32> to vector<16x64xbf16>
    %c2_529 = arith.constant 2 : index
    %c0_530 = arith.constant 0 : index
    %c0_531 = arith.constant 0 : index
    %831 = vector.load %arg17[%c2_529, %c0_530, %c0_531] : memref<3x64x64xbf16, #tpu.memory_space<vmem>>, vector<1x64x64xbf16>
    %832 = vector.shape_cast %831 : vector<1x64x64xbf16> to vector<64x64xbf16>
    %cst_532 = arith.constant dense<0.000000e+00> : vector<16x64xf32>
    %833 = tpu.matmul %830, %832, %cst_532 {dimension_numbers = #tpu.dot_dimension_numbers<[1], [0], [0], [1], [0, 0, 1, 1], [], []>} : vector<16x64xbf16>, vector<64x64xbf16>, vector<16x64xf32> -> vector<16x64xf32>
    %834 = arith.addf %829, %833 : vector<16x64xf32>
    %835 = vector.broadcast %4 : vector<1x64xf32> to vector<16x64xf32>
    %836 = arith.addf %834, %835 : vector<16x64xf32>
    %cst_533 = arith.constant 0.000000e+00 : f32
    %837 = vector.broadcast %cst_533 : f32 to vector<16x64xf32>
    %838 = arith.maximumf %836, %837 : vector<16x64xf32>
    %839 = vector.broadcast %807 : vector<16x1xf32> to vector<16x64xf32>
    %840 = arith.mulf %838, %839 : vector<16x64xf32>
    %841 = tpu.iota {dimensions = array<i32: 0>} : vector<16x64xi32>
    %c0_i32_534 = arith.constant 0 : i32
    %842 = vector.broadcast %c0_i32_534 : i32 to vector<16x64xi32>
    %843 = arith.cmpi eq, %841, %842 : vector<16x64xi32>
    %c1_i32_535 = arith.constant 1 : i32
    %844 = tpu.dynamic_rotate %840 by %c1_i32_535 dim 0 : vector<16x64xf32>, i32 -> vector<16x64xf32>
    %cst_536 = arith.constant 0.000000e+00 : f32
    %845 = vector.broadcast %cst_536 : f32 to vector<16x64xf32>
    %846 = arith.select %843, %845, %844 : vector<16x64xi1>, vector<16x64xf32>
    %c15_i32_537 = arith.constant 15 : i32
    %847 = vector.broadcast %c15_i32_537 : i32 to vector<16x64xi32>
    %848 = arith.cmpi eq, %841, %847 : vector<16x64xi32>
    %c15_i32_538 = arith.constant 15 : i32
    %849 = tpu.dynamic_rotate %840 by %c15_i32_538 dim 0 : vector<16x64xf32>, i32 -> vector<16x64xf32>
    %cst_539 = arith.constant 0.000000e+00 : f32
    %850 = vector.broadcast %cst_539 : f32 to vector<16x64xf32>
    %851 = arith.select %848, %850, %849 : vector<16x64xi1>, vector<16x64xf32>
    %852 = arith.truncf %846 : vector<16x64xf32> to vector<16x64xbf16>
    %c0_540 = arith.constant 0 : index
    %c0_541 = arith.constant 0 : index
    %c0_542 = arith.constant 0 : index
    %853 = vector.load %arg19[%c0_540, %c0_541, %c0_542] : memref<3x64x64xbf16, #tpu.memory_space<vmem>>, vector<1x64x64xbf16>
    %854 = vector.shape_cast %853 : vector<1x64x64xbf16> to vector<64x64xbf16>
    %cst_543 = arith.constant dense<0.000000e+00> : vector<16x64xf32>
    %855 = tpu.matmul %852, %854, %cst_543 {dimension_numbers = #tpu.dot_dimension_numbers<[1], [0], [0], [1], [0, 0, 1, 1], [], []>} : vector<16x64xbf16>, vector<64x64xbf16>, vector<16x64xf32> -> vector<16x64xf32>
    %856 = arith.truncf %840 : vector<16x64xf32> to vector<16x64xbf16>
    %c1_544 = arith.constant 1 : index
    %c0_545 = arith.constant 0 : index
    %c0_546 = arith.constant 0 : index
    %857 = vector.load %arg19[%c1_544, %c0_545, %c0_546] : memref<3x64x64xbf16, #tpu.memory_space<vmem>>, vector<1x64x64xbf16>
    %858 = vector.shape_cast %857 : vector<1x64x64xbf16> to vector<64x64xbf16>
    %cst_547 = arith.constant dense<0.000000e+00> : vector<16x64xf32>
    %859 = tpu.matmul %856, %858, %cst_547 {dimension_numbers = #tpu.dot_dimension_numbers<[1], [0], [0], [1], [0, 0, 1, 1], [], []>} : vector<16x64xbf16>, vector<64x64xbf16>, vector<16x64xf32> -> vector<16x64xf32>
    %860 = arith.addf %855, %859 : vector<16x64xf32>
    %861 = arith.truncf %851 : vector<16x64xf32> to vector<16x64xbf16>
    %c2_548 = arith.constant 2 : index
    %c0_549 = arith.constant 0 : index
    %c0_550 = arith.constant 0 : index
    %862 = vector.load %arg19[%c2_548, %c0_549, %c0_550] : memref<3x64x64xbf16, #tpu.memory_space<vmem>>, vector<1x64x64xbf16>
    %863 = vector.shape_cast %862 : vector<1x64x64xbf16> to vector<64x64xbf16>
    %cst_551 = arith.constant dense<0.000000e+00> : vector<16x64xf32>
    %864 = tpu.matmul %861, %863, %cst_551 {dimension_numbers = #tpu.dot_dimension_numbers<[1], [0], [0], [1], [0, 0, 1, 1], [], []>} : vector<16x64xbf16>, vector<64x64xbf16>, vector<16x64xf32> -> vector<16x64xf32>
    %865 = arith.addf %860, %864 : vector<16x64xf32>
    %866 = vector.broadcast %5 : vector<1x64xf32> to vector<16x64xf32>
    %867 = arith.addf %865, %866 : vector<16x64xf32>
    %cst_552 = arith.constant 0.000000e+00 : f32
    %868 = vector.broadcast %cst_552 : f32 to vector<16x64xf32>
    %869 = arith.maximumf %867, %868 : vector<16x64xf32>
    %870 = vector.broadcast %807 : vector<16x1xf32> to vector<16x64xf32>
    %871 = arith.mulf %869, %870 : vector<16x64xf32>
    %872 = tpu.iota {dimensions = array<i32: 0>} : vector<16x64xi32>
    %c0_i32_553 = arith.constant 0 : i32
    %873 = vector.broadcast %c0_i32_553 : i32 to vector<16x64xi32>
    %874 = arith.cmpi eq, %872, %873 : vector<16x64xi32>
    %c1_i32_554 = arith.constant 1 : i32
    %875 = tpu.dynamic_rotate %871 by %c1_i32_554 dim 0 : vector<16x64xf32>, i32 -> vector<16x64xf32>
    %cst_555 = arith.constant 0.000000e+00 : f32
    %876 = vector.broadcast %cst_555 : f32 to vector<16x64xf32>
    %877 = arith.select %874, %876, %875 : vector<16x64xi1>, vector<16x64xf32>
    %c15_i32_556 = arith.constant 15 : i32
    %878 = vector.broadcast %c15_i32_556 : i32 to vector<16x64xi32>
    %879 = arith.cmpi eq, %872, %878 : vector<16x64xi32>
    %c15_i32_557 = arith.constant 15 : i32
    %880 = tpu.dynamic_rotate %871 by %c15_i32_557 dim 0 : vector<16x64xf32>, i32 -> vector<16x64xf32>
    %cst_558 = arith.constant 0.000000e+00 : f32
    %881 = vector.broadcast %cst_558 : f32 to vector<16x64xf32>
    %882 = arith.select %879, %881, %880 : vector<16x64xi1>, vector<16x64xf32>
    %883 = arith.truncf %877 : vector<16x64xf32> to vector<16x64xbf16>
    %c0_559 = arith.constant 0 : index
    %c0_560 = arith.constant 0 : index
    %c0_561 = arith.constant 0 : index
    %884 = vector.load %arg21[%c0_559, %c0_560, %c0_561] : memref<3x64x128xbf16, #tpu.memory_space<vmem>>, vector<1x64x128xbf16>
    %885 = vector.shape_cast %884 : vector<1x64x128xbf16> to vector<64x128xbf16>
    %cst_562 = arith.constant dense<0.000000e+00> : vector<16x128xf32>
    %886 = tpu.matmul %883, %885, %cst_562 {dimension_numbers = #tpu.dot_dimension_numbers<[1], [0], [0], [1], [0, 0, 1, 1], [], []>} : vector<16x64xbf16>, vector<64x128xbf16>, vector<16x128xf32> -> vector<16x128xf32>
    %887 = arith.truncf %871 : vector<16x64xf32> to vector<16x64xbf16>
    %c1_563 = arith.constant 1 : index
    %c0_564 = arith.constant 0 : index
    %c0_565 = arith.constant 0 : index
    %888 = vector.load %arg21[%c1_563, %c0_564, %c0_565] : memref<3x64x128xbf16, #tpu.memory_space<vmem>>, vector<1x64x128xbf16>
    %889 = vector.shape_cast %888 : vector<1x64x128xbf16> to vector<64x128xbf16>
    %cst_566 = arith.constant dense<0.000000e+00> : vector<16x128xf32>
    %890 = tpu.matmul %887, %889, %cst_566 {dimension_numbers = #tpu.dot_dimension_numbers<[1], [0], [0], [1], [0, 0, 1, 1], [], []>} : vector<16x64xbf16>, vector<64x128xbf16>, vector<16x128xf32> -> vector<16x128xf32>
    %891 = arith.addf %886, %890 : vector<16x128xf32>
    %892 = arith.truncf %882 : vector<16x64xf32> to vector<16x64xbf16>
    %c2_567 = arith.constant 2 : index
    %c0_568 = arith.constant 0 : index
    %c0_569 = arith.constant 0 : index
    %893 = vector.load %arg21[%c2_567, %c0_568, %c0_569] : memref<3x64x128xbf16, #tpu.memory_space<vmem>>, vector<1x64x128xbf16>
    %894 = vector.shape_cast %893 : vector<1x64x128xbf16> to vector<64x128xbf16>
    %cst_570 = arith.constant dense<0.000000e+00> : vector<16x128xf32>
    %895 = tpu.matmul %892, %894, %cst_570 {dimension_numbers = #tpu.dot_dimension_numbers<[1], [0], [0], [1], [0, 0, 1, 1], [], []>} : vector<16x64xbf16>, vector<64x128xbf16>, vector<16x128xf32> -> vector<16x128xf32>
    %896 = arith.addf %891, %895 : vector<16x128xf32>
    %897 = vector.broadcast %6 : vector<1x128xf32> to vector<16x128xf32>
    %898 = arith.addf %896, %897 : vector<16x128xf32>
    %899 = tpu.iota {dimensions = array<i32: 1>} : vector<16x128xi32>
    %c1_i32_571 = arith.constant 1 : i32
    %900 = vector.broadcast %c1_i32_571 : i32 to vector<16x128xi32>
    %901 = arith.cmpi sge, %899, %900 : vector<16x128xi32>
    %c3_i32_572 = arith.constant 3 : i32
    %902 = vector.broadcast %c3_i32_572 : i32 to vector<16x128xi32>
    %903 = arith.cmpi slt, %899, %902 : vector<16x128xi32>
    %904 = arith.andi %901, %903 : vector<16x128xi1>
    %cst_573 = arith.constant 0.000000e+00 : f32
    %905 = vector.broadcast %cst_573 : f32 to vector<16x128xf32>
    %906 = arith.maximumf %898, %905 : vector<16x128xf32>
    %907 = arith.select %904, %906, %898 : vector<16x128xi1>, vector<16x128xf32>
    %908 = vector.broadcast %807 : vector<16x1xf32> to vector<16x128xf32>
    %909 = arith.mulf %907, %908 : vector<16x128xf32>
    %c1_574 = arith.constant 1 : index
    %c0_575 = arith.constant 0 : index
    %c0_576 = arith.constant 0 : index
    %910 = vector.load %arg24[%c1_574, %c0_575, %c0_576] : memref<2x16x128xf32, #tpu.memory_space<vmem>>, vector<1x16x128xf32>
    %911 = vector.shape_cast %910 : vector<1x16x128xf32> to vector<16x128xf32>
    %912 = vector.shape_cast %909 : vector<16x128xf32> to vector<1x16x128xf32>
    tpu.vector_store %arg24[%c1_574, %c0_575, %c0_576], %912 {strides = array<i32>} : memref<2x16x128xf32, #tpu.memory_space<vmem>>, vector<1x16x128xf32>,
    return
  }
  func.func @transform_0(%arg0: i32) -> (i32, i32, i32) {
    %c0_i32 = arith.constant 0 : i32
    %c0_i32_0 = arith.constant 0 : i32
    %c0_i32_1 = arith.constant 0 : i32
    return %arg0, %c0_i32, %c0_i32_0 : i32, i32, i32
  }
  func.func @transform_1(%arg0: i32) -> (i32, i32, i32) {
    %c0_i32 = arith.constant 0 : i32
    %c0_i32_0 = arith.constant 0 : i32
    %c0_i32_1 = arith.constant 0 : i32
    return %arg0, %c0_i32, %c0_i32_0 : i32, i32, i32
  }
  func.func @transform_2(%arg0: i32) -> (i32, i32, i32) {
    %c0_i32 = arith.constant 0 : i32
    %c0_i32_0 = arith.constant 0 : i32
    %c0_i32_1 = arith.constant 0 : i32
    return %arg0, %c0_i32, %c0_i32_0 : i32, i32, i32
  }
  func.func @transform_3(%arg0: i32) -> (i32, i32, i32) {
    %c0_i32 = arith.constant 0 : i32
    %c0_i32_0 = arith.constant 0 : i32
    %c0_i32_1 = arith.constant 0 : i32
    return %arg0, %c0_i32, %c0_i32_0 : i32, i32, i32
  }
  func.func @transform_4(%arg0: i32) -> (i32, i32) {
    %c0_i32 = arith.constant 0 : i32
    %c0_i32_0 = arith.constant 0 : i32
    %c0_i32_1 = arith.constant 0 : i32
    return %c0_i32, %c0_i32_0 : i32, i32
  }
  func.func @transform_5(%arg0: i32) -> (i32, i32) {
    %c0_i32 = arith.constant 0 : i32
    %c0_i32_0 = arith.constant 0 : i32
    %c0_i32_1 = arith.constant 0 : i32
    return %c0_i32, %c0_i32_0 : i32, i32
  }
  func.func @transform_6(%arg0: i32) -> (i32, i32) {
    %c0_i32 = arith.constant 0 : i32
    %c0_i32_0 = arith.constant 0 : i32
    %c0_i32_1 = arith.constant 0 : i32
    return %c0_i32, %c0_i32_0 : i32, i32
  }
  func.func @transform_7(%arg0: i32) -> (i32, i32, i32, i32) {
    %c0_i32 = arith.constant 0 : i32
    %c0_i32_0 = arith.constant 0 : i32
    %c0_i32_1 = arith.constant 0 : i32
    %c0_i32_2 = arith.constant 0 : i32
    %c0_i32_3 = arith.constant 0 : i32
    return %c0_i32, %c0_i32_0, %c0_i32_1, %c0_i32_2 : i32, i32, i32, i32
  }
  func.func @transform_8(%arg0: i32) -> (i32, i32, i32, i32) {
    %c0_i32 = arith.constant 0 : i32
    %c0_i32_0 = arith.constant 0 : i32
    %c0_i32_1 = arith.constant 0 : i32
    %c0_i32_2 = arith.constant 0 : i32
    %c0_i32_3 = arith.constant 0 : i32
    return %c0_i32, %c0_i32_0, %c0_i32_1, %c0_i32_2 : i32, i32, i32, i32
  }
  func.func @transform_9(%arg0: i32) -> (i32, i32, i32, i32) {
    %c0_i32 = arith.constant 0 : i32
    %c0_i32_0 = arith.constant 0 : i32
    %c0_i32_1 = arith.constant 0 : i32
    %c0_i32_2 = arith.constant 0 : i32
    %c0_i32_3 = arith.constant 0 : i32
    return %c0_i32, %c0_i32_0, %c0_i32_1, %c0_i32_2 : i32, i32, i32, i32
  }
  func.func @transform_10(%arg0: i32) -> (i32, i32, i32) {
    %c0_i32 = arith.constant 0 : i32
    %c0_i32_0 = arith.constant 0 : i32
    %c0_i32_1 = arith.constant 0 : i32
    %c0_i32_2 = arith.constant 0 : i32
    return %c0_i32, %c0_i32_0, %c0_i32_1 : i32, i32, i32
  }
  func.func @transform_11(%arg0: i32) -> (i32, i32, i32) {
    %c0_i32 = arith.constant 0 : i32
    %c0_i32_0 = arith.constant 0 : i32
    %c0_i32_1 = arith.constant 0 : i32
    %c0_i32_2 = arith.constant 0 : i32
    return %c0_i32, %c0_i32_0, %c0_i32_1 : i32, i32, i32
  }
  func.func @transform_12(%arg0: i32) -> (i32, i32, i32) {
    %c0_i32 = arith.constant 0 : i32
    %c0_i32_0 = arith.constant 0 : i32
    %c0_i32_1 = arith.constant 0 : i32
    %c0_i32_2 = arith.constant 0 : i32
    return %c0_i32, %c0_i32_0, %c0_i32_1 : i32, i32, i32
  }
  func.func @transform_13(%arg0: i32) -> (i32, i32, i32) {
    %c0_i32 = arith.constant 0 : i32
    %c0_i32_0 = arith.constant 0 : i32
    %c0_i32_1 = arith.constant 0 : i32
    %c0_i32_2 = arith.constant 0 : i32
    return %c0_i32, %c0_i32_0, %c0_i32_1 : i32, i32, i32
  }
  func.func @transform_14(%arg0: i32) -> (i32, i32, i32) {
    %c0_i32 = arith.constant 0 : i32
    %c0_i32_0 = arith.constant 0 : i32
    %c0_i32_1 = arith.constant 0 : i32
    %c0_i32_2 = arith.constant 0 : i32
    return %c0_i32, %c0_i32_0, %c0_i32_1 : i32, i32, i32
  }
  func.func @transform_15(%arg0: i32) -> (i32, i32) {
    %c0_i32 = arith.constant 0 : i32
    %c0_i32_0 = arith.constant 0 : i32
    %c0_i32_1 = arith.constant 0 : i32
    return %c0_i32, %c0_i32_0 : i32, i32
  }
  func.func @transform_16(%arg0: i32) -> (i32, i32, i32) {
    %c0_i32 = arith.constant 0 : i32
    %c0_i32_0 = arith.constant 0 : i32
    %c0_i32_1 = arith.constant 0 : i32
    %c0_i32_2 = arith.constant 0 : i32
    return %c0_i32, %c0_i32_0, %c0_i32_1 : i32, i32, i32
  }
  func.func @transform_17(%arg0: i32) -> (i32, i32) {
    %c0_i32 = arith.constant 0 : i32
    %c0_i32_0 = arith.constant 0 : i32
    %c0_i32_1 = arith.constant 0 : i32
    return %c0_i32, %c0_i32_0 : i32, i32
  }
  func.func @transform_18(%arg0: i32) -> (i32, i32, i32) {
    %c0_i32 = arith.constant 0 : i32
    %c0_i32_0 = arith.constant 0 : i32
    %c0_i32_1 = arith.constant 0 : i32
    %c0_i32_2 = arith.constant 0 : i32
    return %c0_i32, %c0_i32_0, %c0_i32_1 : i32, i32, i32
  }
  func.func @transform_19(%arg0: i32) -> (i32, i32) {
    %c0_i32 = arith.constant 0 : i32
    %c0_i32_0 = arith.constant 0 : i32
    %c0_i32_1 = arith.constant 0 : i32
    return %c0_i32, %c0_i32_0 : i32, i32
  }
  func.func @transform_20(%arg0: i32) -> (i32, i32, i32) {
    %c0_i32 = arith.constant 0 : i32
    %c0_i32_0 = arith.constant 0 : i32
    %c0_i32_1 = arith.constant 0 : i32
    %c0_i32_2 = arith.constant 0 : i32
    return %c0_i32, %c0_i32_0, %c0_i32_1 : i32, i32, i32
  }
  func.func @transform_21(%arg0: i32) -> (i32, i32) {
    %c0_i32 = arith.constant 0 : i32
    %c0_i32_0 = arith.constant 0 : i32
    %c0_i32_1 = arith.constant 0 : i32
    return %c0_i32, %c0_i32_0 : i32, i32
  }
  func.func @transform_22(%arg0: i32) -> (i32, i32, i32) {
    %c0_i32 = arith.constant 0 : i32
    %c0_i32_0 = arith.constant 0 : i32
    %c0_i32_1 = arith.constant 0 : i32
    return %arg0, %c0_i32, %c0_i32_0 : i32, i32, i32
  }
  func.func @transform_23(%arg0: i32) -> (i32, i32, i32) {
    %c0_i32 = arith.constant 0 : i32
    %c0_i32_0 = arith.constant 0 : i32
    %c0_i32_1 = arith.constant 0 : i32
    return %arg0, %c0_i32, %c0_i32_0 : i32, i32, i32
  }
}

</mosaic_0001>

<llo_original>
// kernel: ground_vqa_forward.1
$region0: #{ground_vqa_forward.1}
  #allocation0 [shape = 'u32[]', space=smem, size = 0x4, offset = 0x4, fixed_abs, tag = 'smem constant byte address 0x4 - core index']
  #allocation1 [shape = 'u32[144,128]{1,0:T(1,128)}', space=vmem, size = 0x12000, scoped, tag = 'internal scratch']
  %s0 = inlined_call_operand.vmem [shape: s32[2,16,1], index: 0, kind: input, shape index: {}]
  %s1 = inlined_call_operand.vmem [shape: bf16[2,16,32], index: 1, kind: input, shape index: {}]
  %s2 = inlined_call_operand.vmem [shape: f32[2,1,16], index: 2, kind: input, shape index: {}]
  %s3 = inlined_call_operand.vmem [shape: f32[2,16,1], index: 3, kind: input, shape index: {}]
  %s4 = inlined_call_operand.vmem [shape: f32[128,64], index: 4, kind: input, shape index: {}]
  %s5 = inlined_call_operand.vmem [shape: bf16[32,64], index: 5, kind: input, shape index: {}]
  %s6 = inlined_call_operand.vmem [shape: f32[1,64], index: 6, kind: input, shape index: {}]
  %s7 = inlined_call_operand.vmem [shape: bf16[2,4,64,16], index: 7, kind: input, shape index: {}]
  %s8 = inlined_call_operand.vmem [shape: bf16[2,4,64,16], index: 8, kind: input, shape index: {}]
  %s9 = inlined_call_operand.vmem [shape: bf16[2,4,64,16], index: 9, kind: input, shape index: {}]
  %s10 = inlined_call_operand.vmem [shape: bf16[2,64,64], index: 10, kind: input, shape index: {}]
  %s11 = inlined_call_operand.vmem [shape: f32[2,1,64], index: 11, kind: input, shape index: {}]
  %s12 = inlined_call_operand.vmem [shape: f32[2,1,64], index: 12, kind: input, shape index: {}]
  %s13 = inlined_call_operand.vmem [shape: bf16[2,64,128], index: 13, kind: input, shape index: {}]
  %s14 = inlined_call_operand.vmem [shape: bf16[2,128,64], index: 14, kind: input, shape index: {}]
  %s15 = inlined_call_operand.vmem [shape: f32[1,64], index: 15, kind: input, shape index: {}]
  %s16 = inlined_call_operand.vmem [shape: bf16[3,64,64], index: 16, kind: input, shape index: {}]
  %s17 = inlined_call_operand.vmem [shape: f32[1,64], index: 17, kind: input, shape index: {}]
  %s18 = inlined_call_operand.vmem [shape: bf16[3,64,64], index: 18, kind: input, shape index: {}]
  %s19 = inlined_call_operand.vmem [shape: f32[1,64], index: 19, kind: input, shape index: {}]
  %s20 = inlined_call_operand.vmem [shape: bf16[3,64,128], index: 20, kind: input, shape index: {}]
  %s21 = inlined_call_operand.vmem [shape: f32[1,128], index: 21, kind: input, shape index: {}]
  %s22 = inlined_call_operand.vmem [shape: f32[2,16,64], index: 22, kind: output, shape index: {0}]
  %s23 = inlined_call_operand.vmem [shape: f32[2,16,128], index: 23, kind: output, shape index: {1}]
  %24 = xla_tuple %s22, %s23
  %s25 = sld [smem:[#allocation0]]
  $region106: #{ground_vqa_forward.1} parent=0
    _
  %s27 = ssub.s32 1, %s25
  %s28 = scalar_select 0, %s27, %s25
  // Predicated region
  $region2: #{ground_vqa_forward.1} parent=0 // pred_check
    _
  $region3: #{ground_vqa_forward.1} parent=0 // pred_check_branch
    %30 = sbr.rel (0) target = $region5
  $region4: #{ground_vqa_forward.1} parent=0 // pred_region
    _
  $region5: #{ground_vqa_forward.1} parent=0 // pred_fallthru
    _
  // Predicated region
  $region6: #{ground_vqa_forward.1} parent=0 // pred_check
    _
  $region7: #{ground_vqa_forward.1} parent=0 // pred_check_branch
    %32 = sbr.rel (0) target = $region9
  $region8: #{ground_vqa_forward.1} parent=0 // pred_region
    _
  $region9: #{ground_vqa_forward.1} parent=0 // pred_fallthru
    _
  // Predicated region
  $region10: #{ground_vqa_forward.1} parent=0 // pred_check
    _
  $region11: #{ground_vqa_forward.1} parent=0 // pred_check_branch
    %34 = sbr.rel (0) target = $region13
  $region12: #{ground_vqa_forward.1} parent=0 // pred_region
    _
  $region13: #{ground_vqa_forward.1} parent=0 // pred_fallthru
    _
  // Predicated region
  $region14: #{ground_vqa_forward.1} parent=0 // pred_check
    _
  $region15: #{ground_vqa_forward.1} parent=0 // pred_check_branch
    %36 = sbr.rel (0) target = $region17
  $region16: #{ground_vqa_forward.1} parent=0 // pred_region
    _
  $region17: #{ground_vqa_forward.1} parent=0 // pred_fallthru
    _
  // Predicated region
  $region18: #{ground_vqa_forward.1} parent=0 // pred_check
    _
  $region19: #{ground_vqa_forward.1} parent=0 // pred_check_branch
    %38 = sbr.rel (0) target = $region21
  $region20: #{ground_vqa_forward.1} parent=0 // pred_region
    _
  $region21: #{ground_vqa_forward.1} parent=0 // pred_fallthru
    _
  // Predicated region
  $region22: #{ground_vqa_forward.1} parent=0 // pred_check
    _
  $region23: #{ground_vqa_forward.1} parent=0 // pred_check_branch
    %40 = sbr.rel (0) target = $region25
  $region24: #{ground_vqa_forward.1} parent=0 // pred_region
    _
  $region25: #{ground_vqa_forward.1} parent=0 // pred_fallthru
    _
  // Predicated region
  $region26: #{ground_vqa_forward.1} parent=0 // pred_check
    _
  $region27: #{ground_vqa_forward.1} parent=0 // pred_check_branch
    %42 = sbr.rel (0) target = $region29
  $region28: #{ground_vqa_forward.1} parent=0 // pred_region
    _
  $region29: #{ground_vqa_forward.1} parent=0 // pred_fallthru
    _
  // Predicated region
  $region30: #{ground_vqa_forward.1} parent=0 // pred_check
    _
  $region31: #{ground_vqa_forward.1} parent=0 // pred_check_branch
    %44 = sbr.rel (0) target = $region33
  $region32: #{ground_vqa_forward.1} parent=0 // pred_region
    _
  $region33: #{ground_vqa_forward.1} parent=0 // pred_fallthru
    _
  // Predicated region
  $region34: #{ground_vqa_forward.1} parent=0 // pred_check
    _
  $region35: #{ground_vqa_forward.1} parent=0 // pred_check_branch
    %46 = sbr.rel (0) target = $region37
  $region36: #{ground_vqa_forward.1} parent=0 // pred_region
    _
  $region37: #{ground_vqa_forward.1} parent=0 // pred_fallthru
    _
  // Predicated region
  $region38: #{ground_vqa_forward.1} parent=0 // pred_check
    _
  $region39: #{ground_vqa_forward.1} parent=0 // pred_check_branch
    %48 = sbr.rel (0) target = $region41
  $region40: #{ground_vqa_forward.1} parent=0 // pred_region
    _
  $region41: #{ground_vqa_forward.1} parent=0 // pred_fallthru
    _
  // Predicated region
  $region42: #{ground_vqa_forward.1} parent=0 // pred_check
    _
  $region43: #{ground_vqa_forward.1} parent=0 // pred_check_branch
    %50 = sbr.rel (0) target = $region45
  $region44: #{ground_vqa_forward.1} parent=0 // pred_region
    _
  $region45: #{ground_vqa_forward.1} parent=0 // pred_fallthru
    _
  // Predicated region
  $region46: #{ground_vqa_forward.1} parent=0 // pred_check
    _
  $region47: #{ground_vqa_forward.1} parent=0 // pred_check_branch
    %52 = sbr.rel (0) target = $region49
  $region48: #{ground_vqa_forward.1} parent=0 // pred_region
    _
  $region49: #{ground_vqa_forward.1} parent=0 // pred_fallthru
    _
  // Predicated region
  $region50: #{ground_vqa_forward.1} parent=0 // pred_check
    _
  $region51: #{ground_vqa_forward.1} parent=0 // pred_check_branch
    %54 = sbr.rel (0) target = $region53
  $region52: #{ground_vqa_forward.1} parent=0 // pred_region
    _
  $region53: #{ground_vqa_forward.1} parent=0 // pred_fallthru
    _
  // Predicated region
  $region54: #{ground_vqa_forward.1} parent=0 // pred_check
    _
  $region55: #{ground_vqa_forward.1} parent=0 // pred_check_branch
    %56 = sbr.rel (0) target = $region57
  $region56: #{ground_vqa_forward.1} parent=0 // pred_region
    _
  $region57: #{ground_vqa_forward.1} parent=0 // pred_fallthru
    _
  // Predicated region
  $region58: #{ground_vqa_forward.1} parent=0 // pred_check
    _
  $region59: #{ground_vqa_forward.1} parent=0 // pred_check_branch
    %58 = sbr.rel (0) target = $region61
  $region60: #{ground_vqa_forward.1} parent=0 // pred_region
    _
  $region61: #{ground_vqa_forward.1} parent=0 // pred_fallthru
    _
  // Predicated region
  $region62: #{ground_vqa_forward.1} parent=0 // pred_check
    _
  $region63: #{ground_vqa_forward.1} parent=0 // pred_check_branch
    %60 = sbr.rel (0) target = $region65
  $region64: #{ground_vqa_forward.1} parent=0 // pred_region
    _
  $region65: #{ground_vqa_forward.1} parent=0 // pred_fallthru
    _
  // Predicated region
  $region66: #{ground_vqa_forward.1} parent=0 // pred_check
    _
  $region67: #{ground_vqa_forward.1} parent=0 // pred_check_branch
    %62 = sbr.rel (0) target = $region69
  $region68: #{ground_vqa_forward.1} parent=0 // pred_region
    _
  $region69: #{ground_vqa_forward.1} parent=0 // pred_fallthru
    _
  // Predicated region
  $region70: #{ground_vqa_forward.1} parent=0 // pred_check
    _
  $region71: #{ground_vqa_forward.1} parent=0 // pred_check_branch
    %64 = sbr.rel (0) target = $region73
  $region72: #{ground_vqa_forward.1} parent=0 // pred_region
    _
  $region73: #{ground_vqa_forward.1} parent=0 // pred_fallthru
    _
  // Predicated region
  $region74: #{ground_vqa_forward.1} parent=0 // pred_check
    _
  $region75: #{ground_vqa_forward.1} parent=0 // pred_check_branch
    %66 = sbr.rel (0) target = $region77
  $region76: #{ground_vqa_forward.1} parent=0 // pred_region
    _
  $region77: #{ground_vqa_forward.1} parent=0 // pred_fallthru
    _
  // Predicated region
  $region78: #{ground_vqa_forward.1} parent=0 // pred_check
    _
  $region79: #{ground_vqa_forward.1} parent=0 // pred_check_branch
    %68 = sbr.rel (0) target = $region81
  $region80: #{ground_vqa_forward.1} parent=0 // pred_region
    _
  $region81: #{ground_vqa_forward.1} parent=0 // pred_fallthru
    _
  // Predicated region
  $region82: #{ground_vqa_forward.1} parent=0 // pred_check
    _
  $region83: #{ground_vqa_forward.1} parent=0 // pred_check_branch
    %70 = sbr.rel (0) target = $region85
  $region84: #{ground_vqa_forward.1} parent=0 // pred_region
    _
  $region85: #{ground_vqa_forward.1} parent=0 // pred_fallthru
    _
  // Predicated region
  $region86: #{ground_vqa_forward.1} parent=0 // pred_check
    _
  $region87: #{ground_vqa_forward.1} parent=0 // pred_check_branch
    %72 = sbr.rel (0) target = $region89
  $region88: #{ground_vqa_forward.1} parent=0 // pred_region
    _
  $region89: #{ground_vqa_forward.1} parent=0 // pred_fallthru
    _
  %v74 = vld [vmem:[%s4] sm:$0xff]
  %v75 = vld [vmem:[%s4 + $0x8] sm:$0xff]
  %v76 = vld [vmem:[%s4 + $0x10] sm:$0xff]
  %v77 = vld [vmem:[%s4 + $0x18] sm:$0xff]
  %v78 = vld [vmem:[%s4 + $0x20] sm:$0xff]
  %v79 = vld [vmem:[%s4 + $0x28] sm:$0xff]
  %v80 = vld [vmem:[%s4 + $0x30] sm:$0xff]
  %v81 = vld [vmem:[%s4 + $0x38] sm:$0xff]
  %v82 = vld [vmem:[%s4 + $0x40] sm:$0xff]
  %v83 = vld [vmem:[%s4 + $0x48] sm:$0xff]
  %v84 = vld [vmem:[%s4 + $0x50] sm:$0xff]
  %v85 = vld [vmem:[%s4 + $0x58] sm:$0xff]
  %v86 = vld [vmem:[%s4 + $0x60] sm:$0xff]
  %v87 = vld [vmem:[%s4 + $0x68] sm:$0xff]
  %v88 = vld [vmem:[%s4 + $0x70] sm:$0xff]
  %v89 = vld [vmem:[%s4 + $0x78] sm:$0xff]
  %v90 = vld [vmem:[%s5] sm:$0xf]
  %v91 = vld [vmem:[%s5 + $0x4] sm:$0xf]
  %v92 = vld [vmem:[%s5 + $0x8] sm:$0xf]
  %v93 = vld [vmem:[%s5 + $0xc] sm:$0xf]
  %v94 = vld [vmem:[%s6] sm:$0x1]
  %v95 = vld [vmem:[%s15] sm:$0x1]
  %v96 = vld [vmem:[%s17] sm:$0x1]
  %v97 = vld [vmem:[%s19] sm:$0x1]
  %v98 = vld [vmem:[%s21] sm:$0x1]
  %v99 = vld [vmem:[%s2] sm:$0x1]
  %v100 = vld [vmem:[%s0] sm:$0xff]
  %v101 = vld [vmem:[%s0 + $0x8] sm:$0xff]
  %v102 = vlaneseq
  %v103 = vand.u32 %v102, 127
  %104 = vset.pattern.permute.xlu0 0
  %105 = vperm.xlu0 %104, %v100
  %v106 = vpop.permute.xlu0 %105
  %107 = vset.pattern.permute.xlu0 0
  %108 = vperm.xlu0 %107, %v101
  %v109 = vpop.permute.xlu0 %108
  %vm110 = vcmp.eq.s32.totalorder %v103, %v106
  %vm111 = vcmp.eq.s32.totalorder %v103, %v109
  %v112 = vsel %vm110, 1, 0
  %v113 = vsel %vm111, 1, 0
  %v114 = vcvt.s32.f32 %v112
  %v115 = vcvt.s32.f32 %v113
  %116 = vmatprep.subr.mxu0 0.0
  %117 = vmatpush1.msra.mxu0 %v74
  %118 = vmatprep.subr.mxu0 0.0
  %119 = vmatpush1.msra.mxu0 %v75
  %120 = vmatprep.subr.mxu0 0.0
  %121 = vmatpush1.msra.mxu0 %v76
  %122 = vmatprep.subr.mxu0 0.0
  %123 = vmatpush1.msra.mxu0 %v77
  %124 = vmatprep.subr.mxu0 0.0
  %125 = vmatpush1.msra.mxu0 %v78
  %126 = vmatprep.subr.mxu0 0.0
  %127 = vmatpush1.msra.mxu0 %v79
  %128 = vmatprep.subr.mxu0 0.0
  %129 = vmatpush1.msra.mxu0 %v80
  %130 = vmatprep.subr.mxu0 0.0
  %131 = vmatpush1.msra.mxu0 %v81
  %132 = vmatprep.subr.mxu0 0.0
  %133 = vmatpush1.msra.mxu0 %v82
  %134 = vmatprep.subr.mxu0 0.0
  %135 = vmatpush1.msra.mxu0 %v83
  %136 = vmatprep.subr.mxu0 0.0
  %137 = vmatpush1.msra.mxu0 %v84
  %138 = vmatprep.subr.mxu0 0.0
  %139 = vmatpush1.msra.mxu0 %v85
  %140 = vmatprep.subr.mxu0 0.0
  %141 = vmatpush1.msra.mxu0 %v86
  %142 = vmatprep.subr.mxu0 0.0
  %143 = vmatpush1.msra.mxu0 %v87
  %144 = vmatprep.subr.mxu0 0.0
  %145 = vmatpush1.msra.mxu0 %v88
  %146 = vmatprep.subr.mxu0 0.0
  %147 = vmatpush1.msra.mxu0 %v89
  %148 = vmatprep.subr.mxu0 0.0
  %149 = vmatpush1.msra.mxu0 0.0
  %150 = vmatprep.subr.mxu0 0.0
  %151 = vmatpush1.msra.mxu0 0.0
  %152 = vmatprep.subr.mxu0 0.0
  %153 = vmatpush1.msra.mxu0 0.0
  %154 = vmatprep.subr.mxu0 0.0
  %155 = vmatpush1.msra.mxu0 0.0
  %156 = vmatprep.subr.mxu0 0.0
  %157 = vmatpush1.msra.mxu0 0.0
  %158 = vmatprep.subr.mxu0 0.0
  %159 = vmatpush1.msra.mxu0 0.0
  %160 = vmatprep.subr.mxu0 0.0
  %161 = vmatpush1.msra.mxu0 0.0
  %162 = vmatprep.subr.mxu0 0.0
  %163 = vmatpush1.msra.mxu0 0.0
  %164 = vmatprep.subr.mxu0 0.0
  %165 = vmatpush1.msra.mxu0 0.0
  %166 = vmatprep.subr.mxu0 0.0
  %167 = vmatpush1.msra.mxu0 0.0
  %168 = vmatprep.subr.mxu0 0.0
  %169 = vmatpush1.msra.mxu0 0.0
  %170 = vmatprep.subr.mxu0 0.0
  %171 = vmatpush1.msra.mxu0 0.0
  %172 = vmatprep.subr.mxu0 0.0
  %173 = vmatpush1.msra.mxu0 0.0
  %174 = vmatprep.subr.mxu0 0.0
  %175 = vmatpush1.msra.mxu0 0.0
  %176 = vmatprep.subr.mxu0 0.0
  %177 = vmatpush1.msra.mxu0 0.0
  %178 = vmatprep.subr.mxu0 0.0
  %179 = vmatpush1.msra.mxu0 0.0
  %180 = vmatprep.mubr.f32.mxu0 0.0
  %181 = vmatmul.mubr.f32.gmra.mrb[0].mxu0 %v114
  %v182 = vpop.f32.mrb[0].mxu0
  %v183 = vadd.f32 0.0, %v182
  %v184 = vpop.f32.mrb[0].mxu0
  %185 = vmatprep.mubr.f32.mxu0 0.0
  %186 = vmatmul.mubr.f32.gmra.mrb[0].mxu0 %v115
  %v187 = vpop.f32.mrb[0].mxu0
  %v188 = vadd.f32 0.0, %v187
  %v189 = vpop.f32.mrb[0].mxu0
  %190 = vdwg.mxu0
  %v191 = vld [vmem:[%s1] sm:$0xf]
  %v192 = vld [vmem:[%s1 + $0x4] sm:$0xf]
  %v194 = vlaneseq
  %v195 = vshrl.u32 %v194, 7
  %v196 = vsub.s32 0, %v195
  %v197 = vrot.slane %v94, %v196
  %v201 = vunpack.c.l.b16 %v191
  %v202 = vunpack.c.l.b16 %v192
  %v203 = vpack.c.b16 %v202, %v201
  %v208 = vunpack.c.l.b16 %v90
  %v209 = vunpack.c.l.b16 %v91
  %v210 = vunpack.c.l.b16 %v92
  %v211 = vunpack.c.l.b16 %v93
  %v212 = vpack.c.b16 %v209, %v208
  %v213 = vpack.c.b16 %v211, %v210
  %vm216 = vcmask 261120
  %v218 = vsel %vm216, %v203, 0
  %220 = vmatprep.subr.bf16.mxu0 0
  %221 = vmatpush1.bf16.msra.mxu0 %v212
  %222 = vmatprep.subr.bf16.mxu0 0
  %223 = vmatpush1.bf16.msra.mxu0 %v213
  %224 = vmatprep.subr.bf16.mxu0 0
  %225 = vmatpush1.bf16.msra.mxu0 0
  %226 = vmatprep.subr.bf16.mxu0 0
  %227 = vmatpush1.bf16.msra.mxu0 0
  %228 = vmatprep.subr.bf16.mxu0 0
  %229 = vmatpush1.bf16.msra.mxu0 0
  %230 = vmatprep.subr.bf16.mxu0 0
  %231 = vmatpush1.bf16.msra.mxu0 0
  %232 = vmatprep.subr.bf16.mxu0 0
  %233 = vmatpush1.bf16.msra.mxu0 0
  %234 = vmatprep.subr.bf16.mxu0 0
  %235 = vmatpush1.bf16.msra.mxu0 0
  %236 = vmatprep.subr.bf16.mxu0 0
  %237 = vmatpush1.bf16.msra.mxu0 0
  %238 = vmatprep.subr.bf16.mxu0 0
  %239 = vmatpush1.bf16.msra.mxu0 0
  %240 = vmatprep.subr.bf16.mxu0 0
  %241 = vmatpush1.bf16.msra.mxu0 0
  %242 = vmatprep.subr.bf16.mxu0 0
  %243 = vmatpush1.bf16.msra.mxu0 0
  %244 = vmatprep.subr.bf16.mxu0 0
  %245 = vmatpush1.bf16.msra.mxu0 0
  %246 = vmatprep.subr.bf16.mxu0 0
  %247 = vmatpush1.bf16.msra.mxu0 0
  %248 = vmatprep.subr.bf16.mxu0 0
  %249 = vmatpush1.bf16.msra.mxu0 0
  %250 = vmatprep.subr.bf16.mxu0 0
  %251 = vmatpush1.bf16.msra.mxu0 0
  %252 = vmatprep.mubr.bf16.mxu0 0
  %253 = vmatmul.mubr.bf16.gmra.mrb[0].mxu0 %v218
  %v254 = vpop.f32.mrb[0].mxu0
  %v255 = vadd.f32 %v197, %v254
  %v256 = vpop.f32.mrb[0].mxu0
  %v257 = vpop.f32.mrb[0].mxu0
  %v258 = vadd.f32 %v197, %v257
  %v259 = vpop.f32.mrb[0].mxu0
  %260 = vdwg.mxu0
  %v261 = vlaneseq
  %v262 = vshrl.u32 %v261, 7
  %v263 = vadd.s32 %v262, 8
  %vm264 = vcmp.lt.s32.totalorder %v262, 6
  %vm265 = vcmp.lt.s32.totalorder %v263, 6
  %vm266 = vcmp.lt.s32.totalorder %v262, 16
  %vm267 = vcmp.lt.s32.totalorder %v263, 16
  %v268 = vsel %vm266, %v255, 0.0
  %v269 = vsel %vm267, %v258, 0.0
  %v270 = vsel %vm264, %v183, %v268
  %v271 = vsel %vm265, %v188, %v269
  %v272 = vld [vmem:[%s11] sm:$0x1]
  %v273 = vmul.f32 %v270, %v270
  %v274 = vmul.f32 %v271, %v271
  %vm275 = vcmask 523264
  %v276 = vsel %vm275, %v273, 0.0
  %277 = vadd.xlane.f32.xlu0 %v276
  %v278 = vpop.xlane.xlu0 %277
  %v279 = vsel %vm275, %v274, 0.0
  %280 = vadd.xlane.f32.xlu0 %v279
  %v281 = vpop.xlane.xlu0 %280
  %v282 = vrcp.pop 64.0
  %v283 = vmul.f32 %v278, %v282
  %v284 = vmul.f32 %v281, %v282
  %v285 = vadd.f32 %v283, 1e-06
  %v286 = vadd.f32 %v284, 1e-06
  %v287 = vrsqrt.pop %v285
  %v288 = vrsqrt.pop %v286
  %v289 = vmul.f32 %v270, %v287
  %v290 = vmul.f32 %v271, %v288
  %v292 = vlaneseq
  %v293 = vshrl.u32 %v292, 7
  %v294 = vsub.s32 0, %v293
  %v295 = vrot.slane %v272, %v294
  %v297 = vmul.f32 %v289, %v295
  %v298 = vmul.f32 %v290, %v295
  %v299 = vpack.c.bf16 %v298, %v297
  %v300 = vld [vmem:[%s7] sm:$0xf]
  %v301 = vld [vmem:[%s7 + $0x4] sm:$0xf]
  %v302 = vld [vmem:[%s7 + $0x8] sm:$0xf]
  %v303 = vld [vmem:[%s7 + $0xc] sm:$0xf]
  %v304 = vld [vmem:[%s7 + $0x10] sm:$0xf]
  %v305 = vld [vmem:[%s7 + $0x14] sm:$0xf]
  %v306 = vld [vmem:[%s7 + $0x18] sm:$0xf]
  %v307 = vld [vmem:[%s7 + $0x1c] sm:$0xf]
  %v316 = vunpack.c.l.b16 %v300
  %v317 = vunpack.c.l.b16 %v301
  %v318 = vunpack.c.l.b16 %v302
  %v319 = vunpack.c.l.b16 %v303
  %v320 = vunpack.c.l.b16 %v304
  %v321 = vunpack.c.l.b16 %v305
  %v322 = vunpack.c.l.b16 %v306
  %v323 = vunpack.c.l.b16 %v307
  %v324 = vpack.c.b16 %v317, %v316
  %v325 = vpack.c.b16 %v319, %v318
  %v326 = vpack.c.b16 %v321, %v320
  %v327 = vpack.c.b16 %v323, %v322
  %v333 = vsel %vm275, %v299, 0
  %335 = vmatprep.subr.bf16.mxu0 0
  %336 = vmatpush1.bf16.msra.mxu0 %v324
  %337 = vmatprep.subr.bf16.mxu0 0
  %338 = vmatpush1.bf16.msra.mxu0 %v325
  %339 = vmatprep.subr.bf16.mxu0 0
  %340 = vmatpush1.bf16.msra.mxu0 %v326
  %341 = vmatprep.subr.bf16.mxu0 0
  %342 = vmatpush1.bf16.msra.mxu0 %v327
  %343 = vmatprep.subr.bf16.mxu0 0
  %344 = vmatpush1.bf16.msra.mxu0 0
  %345 = vmatprep.subr.bf16.mxu0 0
  %346 = vmatpush1.bf16.msra.mxu0 0
  %347 = vmatprep.subr.bf16.mxu0 0
  %348 = vmatpush1.bf16.msra.mxu0 0
  %349 = vmatprep.subr.bf16.mxu0 0
  %350 = vmatpush1.bf16.msra.mxu0 0
  %351 = vmatprep.subr.bf16.mxu0 0
  %352 = vmatpush1.bf16.msra.mxu0 0
  %353 = vmatprep.subr.bf16.mxu0 0
  %354 = vmatpush1.bf16.msra.mxu0 0
  %355 = vmatprep.subr.bf16.mxu0 0
  %356 = vmatpush1.bf16.msra.mxu0 0
  %357 = vmatprep.subr.bf16.mxu0 0
  %358 = vmatpush1.bf16.msra.mxu0 0
  %359 = vmatprep.subr.bf16.mxu0 0
  %360 = vmatpush1.bf16.msra.mxu0 0
  %361 = vmatprep.subr.bf16.mxu0 0
  %362 = vmatpush1.bf16.msra.mxu0 0
  %363 = vmatprep.subr.bf16.mxu0 0
  %364 = vmatpush1.bf16.msra.mxu0 0
  %365 = vmatprep.subr.bf16.mxu0 0
  %366 = vmatpush1.bf16.msra.mxu0 0
  %367 = vmatprep.mubr.bf16.mxu0 0
  %368 = vmatmul.mubr.bf16.gmra.mrb[0].mxu0 %v333
  %v369 = vpop.f32.mrb[0].mxu0
  %v370 = vadd.f32 0.0, %v369
  %v371 = vpop.f32.mrb[0].mxu0
  %v372 = vpop.f32.mrb[0].mxu0
  %v373 = vadd.f32 0.0, %v372
  %v374 = vpop.f32.mrb[0].mxu0
  %375 = vdwg.mxu0
  %v376 = vpack.c.bf16 %v373, %v370
  %v377 = vld [vmem:[%s8] sm:$0xf]
  %v378 = vld [vmem:[%s8 + $0x4] sm:$0xf]
  %v379 = vld [vmem:[%s8 + $0x8] sm:$0xf]
  %v380 = vld [vmem:[%s8 + $0xc] sm:$0xf]
  %v381 = vld [vmem:[%s8 + $0x10] sm:$0xf]
  %v382 = vld [vmem:[%s8 + $0x14] sm:$0xf]
  %v383 = vld [vmem:[%s8 + $0x18] sm:$0xf]
  %v384 = vld [vmem:[%s8 + $0x1c] sm:$0xf]
  %v393 = vunpack.c.l.b16 %v377
  %v394 = vunpack.c.l.b16 %v378
  %v395 = vunpack.c.l.b16 %v379
  %v396 = vunpack.c.l.b16 %v380
  %v397 = vunpack.c.l.b16 %v381
  %v398 = vunpack.c.l.b16 %v382
  %v399 = vunpack.c.l.b16 %v383
  %v400 = vunpack.c.l.b16 %v384
  %v401 = vpack.c.b16 %v394, %v393
  %v402 = vpack.c.b16 %v396, %v395
  %v403 = vpack.c.b16 %v398, %v397
  %v404 = vpack.c.b16 %v400, %v399
  %409 = vmatprep.subr.bf16.mxu0 0
  %410 = vmatpush1.bf16.msra.mxu0 %v401
  %411 = vmatprep.subr.bf16.mxu0 0
  %412 = vmatpush1.bf16.msra.mxu0 %v402
  %413 = vmatprep.subr.bf16.mxu0 0
  %414 = vmatpush1.bf16.msra.mxu0 %v403
  %415 = vmatprep.subr.bf16.mxu0 0
  %416 = vmatpush1.bf16.msra.mxu0 %v404
  %417 = vmatprep.subr.bf16.mxu0 0
  %418 = vmatpush1.bf16.msra.mxu0 0
  %419 = vmatprep.subr.bf16.mxu0 0
  %420 = vmatpush1.bf16.msra.mxu0 0
  %421 = vmatprep.subr.bf16.mxu0 0
  %422 = vmatpush1.bf16.msra.mxu0 0
  %423 = vmatprep.subr.bf16.mxu0 0
  %424 = vmatpush1.bf16.msra.mxu0 0
  %425 = vmatprep.subr.bf16.mxu0 0
  %426 = vmatpush1.bf16.msra.mxu0 0
  %427 = vmatprep.subr.bf16.mxu0 0
  %428 = vmatpush1.bf16.msra.mxu0 0
  %429 = vmatprep.subr.bf16.mxu0 0
  %430 = vmatpush1.bf16.msra.mxu0 0
  %431 = vmatprep.subr.bf16.mxu0 0
  %432 = vmatpush1.bf16.msra.mxu0 0
  %433 = vmatprep.subr.bf16.mxu0 0
  %434 = vmatpush1.bf16.msra.mxu0 0
  %435 = vmatprep.subr.bf16.mxu0 0
  %436 = vmatpush1.bf16.msra.mxu0 0
  %437 = vmatprep.subr.bf16.mxu0 0
  %438 = vmatpush1.bf16.msra.mxu0 0
  %439 = vmatprep.subr.bf16.mxu0 0
  %440 = vmatpush1.bf16.msra.mxu0 0
  %441 = vmatprep.mubr.bf16.mxu0 0
  %442 = vmatmul.mubr.bf16.gmra.mrb[0].mxu0 %v333
  %v443 = vpop.f32.mrb[0].mxu0
  %v444 = vadd.f32 0.0, %v443
  %v445 = vpop.f32.mrb[0].mxu0
  %v446 = vpop.f32.mrb[0].mxu0
  %v447 = vadd.f32 0.0, %v446
  %v448 = vpop.f32.mrb[0].mxu0
  %449 = vdwg.mxu0
  %v450 = vpack.c.bf16 %v447, %v444
  %v451 = vld [vmem:[%s9] sm:$0xf]
  %v452 = vld [vmem:[%s9 + $0x4] sm:$0xf]
  %v453 = vld [vmem:[%s9 + $0x8] sm:$0xf]
  %v454 = vld [vmem:[%s9 + $0xc] sm:$0xf]
  %v455 = vld [vmem:[%s9 + $0x10] sm:$0xf]
  %v456 = vld [vmem:[%s9 + $0x14] sm:$0xf]
  %v457 = vld [vmem:[%s9 + $0x18] sm:$0xf]
  %v458 = vld [vmem:[%s9 + $0x1c] sm:$0xf]
  %v467 = vunpack.c.l.b16 %v451
  %v468 = vunpack.c.l.b16 %v452
  %v469 = vunpack.c.l.b16 %v453
  %v470 = vunpack.c.l.b16 %v454
  %v471 = vunpack.c.l.b16 %v455
  %v472 = vunpack.c.l.b16 %v456
  %v473 = vunpack.c.l.b16 %v457
  %v474 = vunpack.c.l.b16 %v458
  %v475 = vpack.c.b16 %v468, %v467
  %v476 = vpack.c.b16 %v470, %v469
  %v477 = vpack.c.b16 %v472, %v471
  %v478 = vpack.c.b16 %v474, %v473
  %483 = vmatprep.subr.bf16.mxu0 0
  %484 = vmatpush1.bf16.msra.mxu0 %v475
  %485 = vmatprep.subr.bf16.mxu0 0
  %486 = vmatpush1.bf16.msra.mxu0 %v476
  %487 = vmatprep.subr.bf16.mxu0 0
  %488 = vmatpush1.bf16.msra.mxu0 %v477
  %489 = vmatprep.subr.bf16.mxu0 0
  %490 = vmatpush1.bf16.msra.mxu0 %v478
  %491 = vmatprep.subr.bf16.mxu0 0
  %492 = vmatpush1.bf16.msra.mxu0 0
  %493 = vmatprep.subr.bf16.mxu0 0
  %494 = vmatpush1.bf16.msra.mxu0 0
  %495 = vmatprep.subr.bf16.mxu0 0
  %496 = vmatpush1.bf16.msra.mxu0 0
  %497 = vmatprep.subr.bf16.mxu0 0
  %498 = vmatpush1.bf16.msra.mxu0 0
  %499 = vmatprep.subr.bf16.mxu0 0
  %500 = vmatpush1.bf16.msra.mxu0 0
  %501 = vmatprep.subr.bf16.mxu0 0
  %502 = vmatpush1.bf16.msra.mxu0 0
  %503 = vmatprep.subr.bf16.mxu0 0
  %504 = vmatpush1.bf16.msra.mxu0 0
  %505 = vmatprep.subr.bf16.mxu0 0
  %506 = vmatpush1.bf16.msra.mxu0 0
  %507 = vmatprep.subr.bf16.mxu0 0
  %508 = vmatpush1.bf16.msra.mxu0 0
  %509 = vmatprep.subr.bf16.mxu0 0
  %510 = vmatpush1.bf16.msra.mxu0 0
  %511 = vmatprep.subr.bf16.mxu0 0
  %512 = vmatpush1.bf16.msra.mxu0 0
  %513 = vmatprep.subr.bf16.mxu0 0
  %514 = vmatpush1.bf16.msra.mxu0 0
  %515 = vmatprep.mubr.bf16.mxu0 0
  %516 = vmatmul.mubr.bf16.gmra.mrb[0].mxu0 %v333
  %v517 = vpop.f32.mrb[0].mxu0
  %v518 = vadd.f32 0.0, %v517
  %v519 = vpop.f32.mrb[0].mxu0
  %v520 = vpop.f32.mrb[0].mxu0
  %v521 = vadd.f32 0.0, %v520
  %v522 = vpop.f32.mrb[0].mxu0
  %523 = vdwg.mxu0
  %v524 = vpack.c.bf16 %v521, %v518
  %v526 = vlaneseq
  %v527 = vshrl.u32 %v526, 7
  %v528 = vsub.s32 0, %v527
  %v529 = vrot.slane %v99, %v528
  %vm531 = vcmask 130048
  %v533 = vsel %vm531, %v376, 0
  %v536 = vsel %vm531, %v450, 0
  %538 = vmatprep.subr.bf16.mxu0 0
  %539 = vmatpush1.bf16.xpose.msra.mxu0 %v536
  %540 = vmatprep.subr.bf16.mxu0 0
  %541 = vmatpush1.bf16.xpose.msra.mxu0 0
  %542 = vmatprep.subr.bf16.mxu0 0
  %543 = vmatpush1.bf16.xpose.msra.mxu0 0
  %544 = vmatprep.subr.bf16.mxu0 0
  %545 = vmatpush1.bf16.xpose.msra.mxu0 0
  %546 = vmatprep.subr.bf16.mxu0 0
  %547 = vmatpush1.bf16.xpose.msra.mxu0 0
  %548 = vmatprep.subr.bf16.mxu0 0
  %549 = vmatpush1.bf16.xpose.msra.mxu0 0
  %550 = vmatprep.subr.bf16.mxu0 0
  %551 = vmatpush1.bf16.xpose.msra.mxu0 0
  %552 = vmatprep.subr.bf16.mxu0 0
  %553 = vmatpush1.bf16.xpose.msra.mxu0 0
  %554 = vmatprep.subr.bf16.mxu0 0
  %555 = vmatpush1.bf16.xpose.msra.mxu0 0
  %556 = vmatprep.subr.bf16.mxu0 0
  %557 = vmatpush1.bf16.xpose.msra.mxu0 0
  %558 = vmatprep.subr.bf16.mxu0 0
  %559 = vmatpush1.bf16.xpose.msra.mxu0 0
  %560 = vmatprep.subr.bf16.mxu0 0
  %561 = vmatpush1.bf16.xpose.msra.mxu0 0
  %562 = vmatprep.subr.bf16.mxu0 0
  %563 = vmatpush1.bf16.xpose.msra.mxu0 0
  %564 = vmatprep.subr.bf16.mxu0 0
  %565 = vmatpush1.bf16.xpose.msra.mxu0 0
  %566 = vmatprep.subr.bf16.mxu0 0
  %567 = vmatpush1.bf16.xpose.msra.mxu0 0
  %568 = vmatprep.subr.bf16.mxu0 0
  %569 = vmatpush1.bf16.xpose.msra.mxu0 0
  %570 = vmatprep.mubr.bf16.mxu0 0
  %571 = vmatmul.mubr.bf16.gmra.mrb[0].mxu0 %v533
  %v572 = vpop.f32.mrb[0].mxu0
  %v573 = vadd.f32 %v529, %v572
  %v574 = vpop.f32.mrb[0].mxu0
  %v575 = vpop.f32.mrb[0].mxu0
  %v576 = vadd.f32 %v529, %v575
  %v577 = vpop.f32.mrb[0].mxu0
  %578 = vdwg.mxu0
  %v579 = vsel %vm531, %v573, -inf
  %580 = vmax.xlane.f32.xlu0 %v579
  %v581 = vpop.xlane.xlu0 %580
  %v582 = vsel %vm531, %v576, -inf
  %583 = vmax.xlane.f32.xlu0 %v582
  %v584 = vpop.xlane.xlu0 %583
  %v585 = vsub.f32 %v573, %v581
  %v586 = vsub.f32 %v576, %v584
  %v587 = vmul.f32 %v585, 1.442695
  %v588 = vpow.pop %v587
  %v589 = vmul.f32 %v586, 1.442695
  %v590 = vpow.pop %v589
  %v591 = vsel %vm531, %v588, 0.0
  %592 = vadd.xlane.f32.xlu0 %v591
  %v593 = vpop.xlane.xlu0 %592
  %v594 = vsel %vm531, %v590, 0.0
  %595 = vadd.xlane.f32.xlu0 %v594
  %v596 = vpop.xlane.xlu0 %595
  %v597 = vrcp.pop %v593
  %v598 = vrcp.pop %v596
  %v599 = vmul.f32 %v588, %v597
  %v600 = vmul.f32 %v590, %v598
  %v601 = vpack.c.bf16 %v600, %v599
  %v603 = vsel %vm531, %v601, 0
  %605 = vmatprep.subr.bf16.mxu0 0
  %606 = vmatpush1.bf16.msra.mxu0 %v524
  %607 = vmatprep.subr.bf16.mxu0 0
  %608 = vmatpush1.bf16.msra.mxu0 0
  %609 = vmatprep.subr.bf16.mxu0 0
  %610 = vmatpush1.bf16.msra.mxu0 0
  %611 = vmatprep.subr.bf16.mxu0 0
  %612 = vmatpush1.bf16.msra.mxu0 0
  %613 = vmatprep.subr.bf16.mxu0 0
  %614 = vmatpush1.bf16.msra.mxu0 0
  %615 = vmatprep.subr.bf16.mxu0 0
  %616 = vmatpush1.bf16.msra.mxu0 0
  %617 = vmatprep.subr.bf16.mxu0 0
  %618 = vmatpush1.bf16.msra.mxu0 0
  %619 = vmatprep.subr.bf16.mxu0 0
  %620 = vmatpush1.bf16.msra.mxu0 0
  %621 = vmatprep.subr.bf16.mxu0 0
  %622 = vmatpush1.bf16.msra.mxu0 0
  %623 = vmatprep.subr.bf16.mxu0 0
  %624 = vmatpush1.bf16.msra.mxu0 0
  %625 = vmatprep.subr.bf16.mxu0 0
  %626 = vmatpush1.bf16.msra.mxu0 0
  %627 = vmatprep.subr.bf16.mxu0 0
  %628 = vmatpush1.bf16.msra.mxu0 0
  %629 = vmatprep.subr.bf16.mxu0 0
  %630 = vmatpush1.bf16.msra.mxu0 0
  %631 = vmatprep.subr.bf16.mxu0 0
  %632 = vmatpush1.bf16.msra.mxu0 0
  %633 = vmatprep.subr.bf16.mxu0 0
  %634 = vmatpush1.bf16.msra.mxu0 0
  %635 = vmatprep.subr.bf16.mxu0 0
  %636 = vmatpush1.bf16.msra.mxu0 0
  %637 = vmatprep.mubr.bf16.mxu0 0
  %638 = vmatmul.mubr.bf16.gmra.mrb[0].mxu0 %v603
  %v639 = vpop.f32.mrb[0].mxu0
  %v640 = vadd.f32 0.0, %v639
  %v641 = vpop.f32.mrb[0].mxu0
  %v642 = vpop.f32.mrb[0].mxu0
  %v643 = vadd.f32 0.0, %v642
  %v644 = vpop.f32.mrb[0].mxu0
  %645 = vdwg.mxu0
  %s646 = scalar_lea.vmem %s7, 32
  %v647 = vld [vmem:[%s646] sm:$0xf]
  %v648 = vld [vmem:[%s646 + $0x4] sm:$0xf]
  %v649 = vld [vmem:[%s646 + $0x8] sm:$0xf]
  %v650 = vld [vmem:[%s646 + $0xc] sm:$0xf]
  %v651 = vld [vmem:[%s646 + $0x10] sm:$0xf]
  %v652 = vld [vmem:[%s646 + $0x14] sm:$0xf]
  %v653 = vld [vmem:[%s646 + $0x18] sm:$0xf]
  %v654 = vld [vmem:[%s646 + $0x1c] sm:$0xf]
  %v663 = vunpack.c.l.b16 %v647
  %v664 = vunpack.c.l.b16 %v648
  %v665 = vunpack.c.l.b16 %v649
  %v666 = vunpack.c.l.b16 %v650
  %v667 = vunpack.c.l.b16 %v651
  %v668 = vunpack.c.l.b16 %v652
  %v669 = vunpack.c.l.b16 %v653
  %v670 = vunpack.c.l.b16 %v654
  %v671 = vpack.c.b16 %v664, %v663
  %v672 = vpack.c.b16 %v666, %v665
  %v673 = vpack.c.b16 %v668, %v667
  %v674 = vpack.c.b16 %v670, %v669
  %679 = vmatprep.subr.bf16.mxu0 0
  %680 = vmatpush1.bf16.msra.mxu0 %v671
  %681 = vmatprep.subr.bf16.mxu0 0
  %682 = vmatpush1.bf16.msra.mxu0 %v672
  %683 = vmatprep.subr.bf16.mxu0 0
  %684 = vmatpush1.bf16.msra.mxu0 %v673
  %685 = vmatprep.subr.bf16.mxu0 0
  %686 = vmatpush1.bf16.msra.mxu0 %v674
  %687 = vmatprep.subr.bf16.mxu0 0
  %688 = vmatpush1.bf16.msra.mxu0 0
  %689 = vmatprep.subr.bf16.mxu0 0
  %690 = vmatpush1.bf16.msra.mxu0 0
  %691 = vmatprep.subr.bf16.mxu0 0
  %692 = vmatpush1.bf16.msra.mxu0 0
  %693 = vmatprep.subr.bf16.mxu0 0
  %694 = vmatpush1.bf16.msra.mxu0 0
  %695 = vmatprep.subr.bf16.mxu0 0
  %696 = vmatpush1.bf16.msra.mxu0 0
  %697 = vmatprep.subr.bf16.mxu0 0
  %698 = vmatpush1.bf16.msra.mxu0 0
  %699 = vmatprep.subr.bf16.mxu0 0
  %700 = vmatpush1.bf16.msra.mxu0 0
  %701 = vmatprep.subr.bf16.mxu0 0
  %702 = vmatpush1.bf16.msra.mxu0 0
  %703 = vmatprep.subr.bf16.mxu0 0
  %704 = vmatpush1.bf16.msra.mxu0 0
  %705 = vmatprep.subr.bf16.mxu0 0
  %706 = vmatpush1.bf16.msra.mxu0 0
  %707 = vmatprep.subr.bf16.mxu0 0
  %708 = vmatpush1.bf16.msra.mxu0 0
  %709 = vmatprep.subr.bf16.mxu0 0
  %710 = vmatpush1.bf16.msra.mxu0 0
  %711 = vmatprep.mubr.bf16.mxu0 0
  %712 = vmatmul.mubr.bf16.gmra.mrb[0].mxu0 %v333
  %v713 = vpop.f32.mrb[0].mxu0
  %v714 = vadd.f32 0.0, %v713
  %v715 = vpop.f32.mrb[0].mxu0
  %v716 = vpop.f32.mrb[0].mxu0
  %v717 = vadd.f32 0.0, %v716
  %v718 = vpop.f32.mrb[0].mxu0
  %719 = vdwg.mxu0
  %v720 = vpack.c.bf16 %v717, %v714
  %s721 = scalar_lea.vmem %s8, 32
  %v722 = vld [vmem:[%s721] sm:$0xf]
  %v723 = vld [vmem:[%s721 + $0x4] sm:$0xf]
  %v724 = vld [vmem:[%s721 + $0x8] sm:$0xf]
  %v725 = vld [vmem:[%s721 + $0xc] sm:$0xf]
  %v726 = vld [vmem:[%s721 + $0x10] sm:$0xf]
  %v727 = vld [vmem:[%s721 + $0x14] sm:$0xf]
  %v728 = vld [vmem:[%s721 + $0x18] sm:$0xf]
  %v729 = vld [vmem:[%s721 + $0x1c] sm:$0xf]
  %v738 = vunpack.c.l.b16 %v722
  %v739 = vunpack.c.l.b16 %v723
  %v740 = vunpack.c.l.b16 %v724
  %v741 = vunpack.c.l.b16 %v725
  %v742 = vunpack.c.l.b16 %v726
  %v743 = vunpack.c.l.b16 %v727
  %v744 = vunpack.c.l.b16 %v728
  %v745 = vunpack.c.l.b16 %v729
  %v746 = vpack.c.b16 %v739, %v738
  %v747 = vpack.c.b16 %v741, %v740
  %v748 = vpack.c.b16 %v743, %v742
  %v749 = vpack.c.b16 %v745, %v744
  %754 = vmatprep.subr.bf16.mxu0 0
  %755 = vmatpush1.bf16.msra.mxu0 %v746
  %756 = vmatprep.subr.bf16.mxu0 0
  %757 = vmatpush1.bf16.msra.mxu0 %v747
  %758 = vmatprep.subr.bf16.mxu0 0
  %759 = vmatpush1.bf16.msra.mxu0 %v748
  %760 = vmatprep.subr.bf16.mxu0 0
  %761 = vmatpush1.bf16.msra.mxu0 %v749
  %762 = vmatprep.subr.bf16.mxu0 0
  %763 = vmatpush1.bf16.msra.mxu0 0
  %764 = vmatprep.subr.bf16.mxu0 0
  %765 = vmatpush1.bf16.msra.mxu0 0
  %766 = vmatprep.subr.bf16.mxu0 0
  %767 = vmatpush1.bf16.msra.mxu0 0
  %768 = vmatprep.subr.bf16.mxu0 0
  %769 = vmatpush1.bf16.msra.mxu0 0
  %770 = vmatprep.subr.bf16.mxu0 0
  %771 = vmatpush1.bf16.msra.mxu0 0
  %772 = vmatprep.subr.bf16.mxu0 0
  %773 = vmatpush1.bf16.msra.mxu0 0
  %774 = vmatprep.subr.bf16.mxu0 0
  %775 = vmatpush1.bf16.msra.mxu0 0
  %776 = vmatprep.subr.bf16.mxu0 0
  %777 = vmatpush1.bf16.msra.mxu0 0
  %778 = vmatprep.subr.bf16.mxu0 0
  %779 = vmatpush1.bf16.msra.mxu0 0
  %780 = vmatprep.subr.bf16.mxu0 0
  %781 = vmatpush1.bf16.msra.mxu0 0
  %782 = vmatprep.subr.bf16.mxu0 0
  %783 = vmatpush1.bf16.msra.mxu0 0
  %784 = vmatprep.subr.bf16.mxu0 0
  %785 = vmatpush1.bf16.msra.mxu0 0
  %786 = vmatprep.mubr.bf16.mxu0 0
  %787 = vmatmul.mubr.bf16.gmra.mrb[0].mxu0 %v333
  %v788 = vpop.f32.mrb[0].mxu0
  %v789 = vadd.f32 0.0, %v788
  %v790 = vpop.f32.mrb[0].mxu0
  %v791 = vpop.f32.mrb[0].mxu0
  %v792 = vadd.f32 0.0, %v791
  %v793 = vpop.f32.mrb[0].mxu0
  %794 = vdwg.mxu0
  %v795 = vpack.c.bf16 %v792, %v789
  %s796 = scalar_lea.vmem %s9, 32
  %v797 = vld [vmem:[%s796] sm:$0xf]
  %v798 = vld [vmem:[%s796 + $0x4] sm:$0xf]
  %v799 = vld [vmem:[%s796 + $0x8] sm:$0xf]
  %v800 = vld [vmem:[%s796 + $0xc] sm:$0xf]
  %v801 = vld [vmem:[%s796 + $0x10] sm:$0xf]
  %v802 = vld [vmem:[%s796 + $0x14] sm:$0xf]
  %v803 = vld [vmem:[%s796 + $0x18] sm:$0xf]
  %v804 = vld [vmem:[%s796 + $0x1c] sm:$0xf]
  %v813 = vunpack.c.l.b16 %v797
  %v814 = vunpack.c.l.b16 %v798
  %v815 = vunpack.c.l.b16 %v799
  %v816 = vunpack.c.l.b16 %v800
  %v817 = vunpack.c.l.b16 %v801
  %v818 = vunpack.c.l.b16 %v802
  %v819 = vunpack.c.l.b16 %v803
  %v820 = vunpack.c.l.b16 %v804
  %v821 = vpack.c.b16 %v814, %v813
  %v822 = vpack.c.b16 %v816, %v815
  %v823 = vpack.c.b16 %v818, %v817
  %v824 = vpack.c.b16 %v820, %v819
  %829 = vmatprep.subr.bf16.mxu0 0
  %830 = vmatpush1.bf16.msra.mxu0 %v821
  %831 = vmatprep.subr.bf16.mxu0 0
  %832 = vmatpush1.bf16.msra.mxu0 %v822
  %833 = vmatprep.subr.bf16.mxu0 0
  %834 = vmatpush1.bf16.msra.mxu0 %v823
  %835 = vmatprep.subr.bf16.mxu0 0
  %836 = vmatpush1.bf16.msra.mxu0 %v824
  %837 = vmatprep.subr.bf16.mxu0 0
  %838 = vmatpush1.bf16.msra.mxu0 0
  %839 = vmatprep.subr.bf16.mxu0 0
  %840 = vmatpush1.bf16.msra.mxu0 0
  %841 = vmatprep.subr.bf16.mxu0 0
  %842 = vmatpush1.bf16.msra.mxu0 0
  %843 = vmatprep.subr.bf16.mxu0 0
  %844 = vmatpush1.bf16.msra.mxu0 0
  %845 = vmatprep.subr.bf16.mxu0 0
  %846 = vmatpush1.bf16.msra.mxu0 0
  %847 = vmatprep.subr.bf16.mxu0 0
  %848 = vmatpush1.bf16.msra.mxu0 0
  %849 = vmatprep.subr.bf16.mxu0 0
  %850 = vmatpush1.bf16.msra.mxu0 0
  %851 = vmatprep.subr.bf16.mxu0 0
  %852 = vmatpush1.bf16.msra.mxu0 0
  %853 = vmatprep.subr.bf16.mxu0 0
  %854 = vmatpush1.bf16.msra.mxu0 0
  %855 = vmatprep.subr.bf16.mxu0 0
  %856 = vmatpush1.bf16.msra.mxu0 0
  %857 = vmatprep.subr.bf16.mxu0 0
  %858 = vmatpush1.bf16.msra.mxu0 0
  %859 = vmatprep.subr.bf16.mxu0 0
  %860 = vmatpush1.bf16.msra.mxu0 0
  %861 = vmatprep.mubr.bf16.mxu0 0
  %862 = vmatmul.mubr.bf16.gmra.mrb[0].mxu0 %v333
  %v863 = vpop.f32.mrb[0].mxu0
  %v864 = vadd.f32 0.0, %v863
  %v865 = vpop.f32.mrb[0].mxu0
  %v866 = vpop.f32.mrb[0].mxu0
  %v867 = vadd.f32 0.0, %v866
  %v868 = vpop.f32.mrb[0].mxu0
  %869 = vdwg.mxu0
  %v870 = vpack.c.bf16 %v867, %v864
  %v872 = vsel %vm531, %v720, 0
  %v875 = vsel %vm531, %v795, 0
  %877 = vmatprep.subr.bf16.mxu0 0
  %878 = vmatpush1.bf16.xpose.msra.mxu0 %v875
  %879 = vmatprep.subr.bf16.mxu0 0
  %880 = vmatpush1.bf16.xpose.msra.mxu0 0
  %881 = vmatprep.subr.bf16.mxu0 0
  %882 = vmatpush1.bf16.xpose.msra.mxu0 0
  %883 = vmatprep.subr.bf16.mxu0 0
  %884 = vmatpush1.bf16.xpose.msra.mxu0 0
  %885 = vmatprep.subr.bf16.mxu0 0
  %886 = vmatpush1.bf16.xpose.msra.mxu0 0
  %887 = vmatprep.subr.bf16.mxu0 0
  %888 = vmatpush1.bf16.xpose.msra.mxu0 0
  %889 = vmatprep.subr.bf16.mxu0 0
  %890 = vmatpush1.bf16.xpose.msra.mxu0 0
  %891 = vmatprep.subr.bf16.mxu0 0
  %892 = vmatpush1.bf16.xpose.msra.mxu0 0
  %893 = vmatprep.subr.bf16.mxu0 0
  %894 = vmatpush1.bf16.xpose.msra.mxu0 0
  %895 = vmatprep.subr.bf16.mxu0 0
  %896 = vmatpush1.bf16.xpose.msra.mxu0 0
  %897 = vmatprep.subr.bf16.mxu0 0
  %898 = vmatpush1.bf16.xpose.msra.mxu0 0
  %899 = vmatprep.subr.bf16.mxu0 0
  %900 = vmatpush1.bf16.xpose.msra.mxu0 0
  %901 = vmatprep.subr.bf16.mxu0 0
  %902 = vmatpush1.bf16.xpose.msra.mxu0 0
  %903 = vmatprep.subr.bf16.mxu0 0
  %904 = vmatpush1.bf16.xpose.msra.mxu0 0
  %905 = vmatprep.subr.bf16.mxu0 0
  %906 = vmatpush1.bf16.xpose.msra.mxu0 0
  %907 = vmatprep.subr.bf16.mxu0 0
  %908 = vmatpush1.bf16.xpose.msra.mxu0 0
  %909 = vmatprep.mubr.bf16.mxu0 0
  %910 = vmatmul.mubr.bf16.gmra.mrb[0].mxu0 %v872
  %v911 = vpop.f32.mrb[0].mxu0
  %v912 = vadd.f32 %v529, %v911
  %v913 = vpop.f32.mrb[0].mxu0
  %v914 = vpop.f32.mrb[0].mxu0
  %v915 = vadd.f32 %v529, %v914
  %v916 = vpop.f32.mrb[0].mxu0
  %917 = vdwg.mxu0
  %v918 = vsel %vm531, %v912, -inf
  %919 = vmax.xlane.f32.xlu0 %v918
  %v920 = vpop.xlane.xlu0 %919
  %v921 = vsel %vm531, %v915, -inf
  %922 = vmax.xlane.f32.xlu0 %v921
  %v923 = vpop.xlane.xlu0 %922
  %v924 = vsub.f32 %v912, %v920
  %v925 = vsub.f32 %v915, %v923
  %v926 = vmul.f32 %v924, 1.442695
  %v927 = vpow.pop %v926
  %v928 = vmul.f32 %v925, 1.442695
  %v929 = vpow.pop %v928
  %v930 = vsel %vm531, %v927, 0.0
  %931 = vadd.xlane.f32.xlu0 %v930
  %v932 = vpop.xlane.xlu0 %931
  %v933 = vsel %vm531, %v929, 0.0
  %934 = vadd.xlane.f32.xlu0 %v933
  %v935 = vpop.xlane.xlu0 %934
  %v936 = vrcp.pop %v932
  %v937 = vrcp.pop %v935
  %v938 = vmul.f32 %v927, %v936
  %v939 = vmul.f32 %v929, %v937
  %v940 = vpack.c.bf16 %v939, %v938
  %v942 = vsel %vm531, %v940, 0
  %944 = vmatprep.subr.bf16.mxu0 0
  %945 = vmatpush1.bf16.msra.mxu0 %v870
  %946 = vmatprep.subr.bf16.mxu0 0
  %947 = vmatpush1.bf16.msra.mxu0 0
  %948 = vmatprep.subr.bf16.mxu0 0
  %949 = vmatpush1.bf16.msra.mxu0 0
  %950 = vmatprep.subr.bf16.mxu0 0
  %951 = vmatpush1.bf16.msra.mxu0 0
  %952 = vmatprep.subr.bf16.mxu0 0
  %953 = vmatpush1.bf16.msra.mxu0 0
  %954 = vmatprep.subr.bf16.mxu0 0
  %955 = vmatpush1.bf16.msra.mxu0 0
  %956 = vmatprep.subr.bf16.mxu0 0
  %957 = vmatpush1.bf16.msra.mxu0 0
  %958 = vmatprep.subr.bf16.mxu0 0
  %959 = vmatpush1.bf16.msra.mxu0 0
  %960 = vmatprep.subr.bf16.mxu0 0
  %961 = vmatpush1.bf16.msra.mxu0 0
  %962 = vmatprep.subr.bf16.mxu0 0
  %963 = vmatpush1.bf16.msra.mxu0 0
  %964 = vmatprep.subr.bf16.mxu0 0
  %965 = vmatpush1.bf16.msra.mxu0 0
  %966 = vmatprep.subr.bf16.mxu0 0
  %967 = vmatpush1.bf16.msra.mxu0 0
  %968 = vmatprep.subr.bf16.mxu0 0
  %969 = vmatpush1.bf16.msra.mxu0 0
  %970 = vmatprep.subr.bf16.mxu0 0
  %971 = vmatpush1.bf16.msra.mxu0 0
  %972 = vmatprep.subr.bf16.mxu0 0
  %973 = vmatpush1.bf16.msra.mxu0 0
  %974 = vmatprep.subr.bf16.mxu0 0
  %975 = vmatpush1.bf16.msra.mxu0 0
  %976 = vmatprep.mubr.bf16.mxu0 0
  %977 = vmatmul.mubr.bf16.gmra.mrb[0].mxu0 %v942
  %v978 = vpop.f32.mrb[0].mxu0
  %v979 = vadd.f32 0.0, %v978
  %v980 = vpop.f32.mrb[0].mxu0
  %v981 = vpop.f32.mrb[0].mxu0
  %v982 = vadd.f32 0.0, %v981
  %v983 = vpop.f32.mrb[0].mxu0
  %984 = vdwg.mxu0
  %s985 = scalar_lea.vmem %s7, 64
  %v986 = vld [vmem:[%s985] sm:$0xf]
  %v987 = vld [vmem:[%s985 + $0x4] sm:$0xf]
  %v988 = vld [vmem:[%s985 + $0x8] sm:$0xf]
  %v989 = vld [vmem:[%s985 + $0xc] sm:$0xf]
  %v990 = vld [vmem:[%s985 + $0x10] sm:$0xf]
  %v991 = vld [vmem:[%s985 + $0x14] sm:$0xf]
  %v992 = vld [vmem:[%s985 + $0x18] sm:$0xf]
  %v993 = vld [vmem:[%s985 + $0x1c] sm:$0xf]
  %v1002 = vunpack.c.l.b16 %v986
  %v1003 = vunpack.c.l.b16 %v987
  %v1004 = vunpack.c.l.b16 %v988
  %v1005 = vunpack.c.l.b16 %v989
  %v1006 = vunpack.c.l.b16 %v990
  %v1007 = vunpack.c.l.b16 %v991
  %v1008 = vunpack.c.l.b16 %v992
  %v1009 = vunpack.c.l.b16 %v993
  %v1010 = vpack.c.b16 %v1003, %v1002
  %v1011 = vpack.c.b16 %v1005, %v1004
  %v1012 = vpack.c.b16 %v1007, %v1006
  %v1013 = vpack.c.b16 %v1009, %v1008
  %1018 = vmatprep.subr.bf16.mxu0 0
  %1019 = vmatpush1.bf16.msra.mxu0 %v1010
  %1020 = vmatprep.subr.bf16.mxu0 0
  %1021 = vmatpush1.bf16.msra.mxu0 %v1011
  %1022 = vmatprep.subr.bf16.mxu0 0
  %1023 = vmatpush1.bf16.msra.mxu0 %v1012
  %1024 = vmatprep.subr.bf16.mxu0 0
  %1025 = vmatpush1.bf16.msra.mxu0 %v1013
  %1026 = vmatprep.subr.bf16.mxu0 0
  %1027 = vmatpush1.bf16.msra.mxu0 0
  %1028 = vmatprep.subr.bf16.mxu0 0
  %1029 = vmatpush1.bf16.msra.mxu0 0
  %1030 = vmatprep.subr.bf16.mxu0 0
  %1031 = vmatpush1.bf16.msra.mxu0 0
  %1032 = vmatprep.subr.bf16.mxu0 0
  %1033 = vmatpush1.bf16.msra.mxu0 0
  %1034 = vmatprep.subr.bf16.mxu0 0
  %1035 = vmatpush1.bf16.msra.mxu0 0
  %1036 = vmatprep.subr.bf16.mxu0 0
  %1037 = vmatpush1.bf16.msra.mxu0 0
  %1038 = vmatprep.subr.bf16.mxu0 0
  %1039 = vmatpush1.bf16.msra.mxu0 0
  %1040 = vmatprep.subr.bf16.mxu0 0
  %1041 = vmatpush1.bf16.msra.mxu0 0
  %1042 = vmatprep.subr.bf16.mxu0 0
  %1043 = vmatpush1.bf16.msra.mxu0 0
  %1044 = vmatprep.subr.bf16.mxu0 0
  %1045 = vmatpush1.bf16.msra.mxu0 0
  %1046 = vmatprep.subr.bf16.mxu0 0
  %1047 = vmatpush1.bf16.msra.mxu0 0
  %1048 = vmatprep.subr.bf16.mxu0 0
  %1049 = vmatpush1.bf16.msra.mxu0 0
  %1050 = vmatprep.mubr.bf16.mxu0 0
  %1051 = vmatmul.mubr.bf16.gmra.mrb[0].mxu0 %v333
  %v1052 = vpop.f32.mrb[0].mxu0
  %v1053 = vadd.f32 0.0, %v1052
  %v1054 = vpop.f32.mrb[0].mxu0
  %v1055 = vpop.f32.mrb[0].mxu0
  %v1056 = vadd.f32 0.0, %v1055
  %v1057 = vpop.f32.mrb[0].mxu0
  %1058 = vdwg.mxu0
  %v1059 = vpack.c.bf16 %v1056, %v1053
  %s1060 = scalar_lea.vmem %s8, 64
  %v1061 = vld [vmem:[%s1060] sm:$0xf]
  %v1062 = vld [vmem:[%s1060 + $0x4] sm:$0xf]
  %v1063 = vld [vmem:[%s1060 + $0x8] sm:$0xf]
  %v1064 = vld [vmem:[%s1060 + $0xc] sm:$0xf]
  %v1065 = vld [vmem:[%s1060 + $0x10] sm:$0xf]
  %v1066 = vld [vmem:[%s1060 + $0x14] sm:$0xf]
  %v1067 = vld [vmem:[%s1060 + $0x18] sm:$0xf]
  %v1068 = vld [vmem:[%s1060 + $0x1c] sm:$0xf]
  %v1077 = vunpack.c.l.b16 %v1061
  %v1078 = vunpack.c.l.b16 %v1062
  %v1079 = vunpack.c.l.b16 %v1063
  %v1080 = vunpack.c.l.b16 %v1064
  %v1081 = vunpack.c.l.b16 %v1065
  %v1082 = vunpack.c.l.b16 %v1066
  %v1083 = vunpack.c.l.b16 %v1067
  %v1084 = vunpack.c.l.b16 %v1068
  %v1085 = vpack.c.b16 %v1078, %v1077
  %v1086 = vpack.c.b16 %v1080, %v1079
  %v1087 = vpack.c.b16 %v1082, %v1081
  %v1088 = vpack.c.b16 %v1084, %v1083
  %1093 = vmatprep.subr.bf16.mxu0 0
  %1094 = vmatpush1.bf16.msra.mxu0 %v1085
  %1095 = vmatprep.subr.bf16.mxu0 0
  %1096 = vmatpush1.bf16.msra.mxu0 %v1086
  %1097 = vmatprep.subr.bf16.mxu0 0
  %1098 = vmatpush1.bf16.msra.mxu0 %v1087
  %1099 = vmatprep.subr.bf16.mxu0 0
  %1100 = vmatpush1.bf16.msra.mxu0 %v1088
  %1101 = vmatprep.subr.bf16.mxu0 0
  %1102 = vmatpush1.bf16.msra.mxu0 0
  %1103 = vmatprep.subr.bf16.mxu0 0
  %1104 = vmatpush1.bf16.msra.mxu0 0
  %1105 = vmatprep.subr.bf16.mxu0 0
  %1106 = vmatpush1.bf16.msra.mxu0 0
  %1107 = vmatprep.subr.bf16.mxu0 0
  %1108 = vmatpush1.bf16.msra.mxu0 0
  %1109 = vmatprep.subr.bf16.mxu0 0
  %1110 = vmatpush1.bf16.msra.mxu0 0
  %1111 = vmatprep.subr.bf16.mxu0 0
  %1112 = vmatpush1.bf16.msra.mxu0 0
  %1113 = vmatprep.subr.bf16.mxu0 0
  %1114 = vmatpush1.bf16.msra.mxu0 0
  %1115 = vmatprep.subr.bf16.mxu0 0
  %1116 = vmatpush1.bf16.msra.mxu0 0
  %1117 = vmatprep.subr.bf16.mxu0 0
  %1118 = vmatpush1.bf16.msra.mxu0 0
  %1119 = vmatprep.subr.bf16.mxu0 0
  %1120 = vmatpush1.bf16.msra.mxu0 0
  %1121 = vmatprep.subr.bf16.mxu0 0
  %1122 = vmatpush1.bf16.msra.mxu0 0
  %1123 = vmatprep.subr.bf16.mxu0 0
  %1124 = vmatpush1.bf16.msra.mxu0 0
  %1125 = vmatprep.mubr.bf16.mxu0 0
  %1126 = vmatmul.mubr.bf16.gmra.mrb[0].mxu0 %v333
  %v1127 = vpop.f32.mrb[0].mxu0
  %v1128 = vadd.f32 0.0, %v1127
  %v1129 = vpop.f32.mrb[0].mxu0
  %v1130 = vpop.f32.mrb[0].mxu0
  %v1131 = vadd.f32 0.0, %v1130
  %v1132 = vpop.f32.mrb[0].mxu0
  %1133 = vdwg.mxu0
  %v1134 = vpack.c.bf16 %v1131, %v1128
  %s1135 = scalar_lea.vmem %s9, 64
  %v1136 = vld [vmem:[%s1135] sm:$0xf]
  %v1137 = vld [vmem:[%s1135 + $0x4] sm:$0xf]
  %v1138 = vld [vmem:[%s1135 + $0x8] sm:$0xf]
  %v1139 = vld [vmem:[%s1135 + $0xc] sm:$0xf]
  %v1140 = vld [vmem:[%s1135 + $0x10] sm:$0xf]
  %v1141 = vld [vmem:[%s1135 + $0x14] sm:$0xf]
  %v1142 = vld [vmem:[%s1135 + $0x18] sm:$0xf]
  %v1143 = vld [vmem:[%s1135 + $0x1c] sm:$0xf]
  %v1152 = vunpack.c.l.b16 %v1136
  %v1153 = vunpack.c.l.b16 %v1137
  %v1154 = vunpack.c.l.b16 %v1138
  %v1155 = vunpack.c.l.b16 %v1139
  %v1156 = vunpack.c.l.b16 %v1140
  %v1157 = vunpack.c.l.b16 %v1141
  %v1158 = vunpack.c.l.b16 %v1142
  %v1159 = vunpack.c.l.b16 %v1143
  %v1160 = vpack.c.b16 %v1153, %v1152
  %v1161 = vpack.c.b16 %v1155, %v1154
  %v1162 = vpack.c.b16 %v1157, %v1156
  %v1163 = vpack.c.b16 %v1159, %v1158
  %1168 = vmatprep.subr.bf16.mxu0 0
  %1169 = vmatpush1.bf16.msra.mxu0 %v1160
  %1170 = vmatprep.subr.bf16.mxu0 0
  %1171 = vmatpush1.bf16.msra.mxu0 %v1161
  %1172 = vmatprep.subr.bf16.mxu0 0
  %1173 = vmatpush1.bf16.msra.mxu0 %v1162
  %1174 = vmatprep.subr.bf16.mxu0 0
  %1175 = vmatpush1.bf16.msra.mxu0 %v1163
  %1176 = vmatprep.subr.bf16.mxu0 0
  %1177 = vmatpush1.bf16.msra.mxu0 0
  %1178 = vmatprep.subr.bf16.mxu0 0
  %1179 = vmatpush1.bf16.msra.mxu0 0
  %1180 = vmatprep.subr.bf16.mxu0 0
  %1181 = vmatpush1.bf16.msra.mxu0 0
  %1182 = vmatprep.subr.bf16.mxu0 0
  %1183 = vmatpush1.bf16.msra.mxu0 0
  %1184 = vmatprep.subr.bf16.mxu0 0
  %1185 = vmatpush1.bf16.msra.mxu0 0
  %1186 = vmatprep.subr.bf16.mxu0 0
  %1187 = vmatpush1.bf16.msra.mxu0 0
  %1188 = vmatprep.subr.bf16.mxu0 0
  %1189 = vmatpush1.bf16.msra.mxu0 0
  %1190 = vmatprep.subr.bf16.mxu0 0
  %1191 = vmatpush1.bf16.msra.mxu0 0
  %1192 = vmatprep.subr.bf16.mxu0 0
  %1193 = vmatpush1.bf16.msra.mxu0 0
  %1194 = vmatprep.subr.bf16.mxu0 0
  %1195 = vmatpush1.bf16.msra.mxu0 0
  %1196 = vmatprep.subr.bf16.mxu0 0
  %1197 = vmatpush1.bf16.msra.mxu0 0
  %1198 = vmatprep.subr.bf16.mxu0 0
  %1199 = vmatpush1.bf16.msra.mxu0 0
  %1200 = vmatprep.mubr.bf16.mxu0 0
  %1201 = vmatmul.mubr.bf16.gmra.mrb[0].mxu0 %v333
  %v1202 = vpop.f32.mrb[0].mxu0
  %v1203 = vadd.f32 0.0, %v1202
  %v1204 = vpop.f32.mrb[0].mxu0
  %v1205 = vpop.f32.mrb[0].mxu0
  %v1206 = vadd.f32 0.0, %v1205
  %v1207 = vpop.f32.mrb[0].mxu0
  %1208 = vdwg.mxu0
  %v1209 = vpack.c.bf16 %v1206, %v1203
  %v1211 = vsel %vm531, %v1059, 0
  %v1214 = vsel %vm531, %v1134, 0
  %1216 = vmatprep.subr.bf16.mxu0 0
  %1217 = vmatpush1.bf16.xpose.msra.mxu0 %v1214
  %1218 = vmatprep.subr.bf16.mxu0 0
  %1219 = vmatpush1.bf16.xpose.msra.mxu0 0
  %1220 = vmatprep.subr.bf16.mxu0 0
  %1221 = vmatpush1.bf16.xpose.msra.mxu0 0
  %1222 = vmatprep.subr.bf16.mxu0 0
  %1223 = vmatpush1.bf16.xpose.msra.mxu0 0
  %1224 = vmatprep.subr.bf16.mxu0 0
  %1225 = vmatpush1.bf16.xpose.msra.mxu0 0
  %1226 = vmatprep.subr.bf16.mxu0 0
  %1227 = vmatpush1.bf16.xpose.msra.mxu0 0
  %1228 = vmatprep.subr.bf16.mxu0 0
  %1229 = vmatpush1.bf16.xpose.msra.mxu0 0
  %1230 = vmatprep.subr.bf16.mxu0 0
  %1231 = vmatpush1.bf16.xpose.msra.mxu0 0
  %1232 = vmatprep.subr.bf16.mxu0 0
  %1233 = vmatpush1.bf16.xpose.msra.mxu0 0
  %1234 = vmatprep.subr.bf16.mxu0 0
  %1235 = vmatpush1.bf16.xpose.msra.mxu0 0
  %1236 = vmatprep.subr.bf16.mxu0 0
  %1237 = vmatpush1.bf16.xpose.msra.mxu0 0
  %1238 = vmatprep.subr.bf16.mxu0 0
  %1239 = vmatpush1.bf16.xpose.msra.mxu0 0
  %1240 = vmatprep.subr.bf16.mxu0 0
  %1241 = vmatpush1.bf16.xpose.msra.mxu0 0
  %1242 = vmatprep.subr.bf16.mxu0 0
  %1243 = vmatpush1.bf16.xpose.msra.mxu0 0
  %1244 = vmatprep.subr.bf16.mxu0 0
  %1245 = vmatpush1.bf16.xpose.msra.mxu0 0
  %1246 = vmatprep.subr.bf16.mxu0 0
  %1247 = vmatpush1.bf16.xpose.msra.mxu0 0
  %1248 = vmatprep.mubr.bf16.mxu0 0
  %1249 = vmatmul.mubr.bf16.gmra.mrb[0].mxu0 %v1211
  %v1250 = vpop.f32.mrb[0].mxu0
  %v1251 = vadd.f32 %v529, %v1250
  %v1252 = vpop.f32.mrb[0].mxu0
  %v1253 = vpop.f32.mrb[0].mxu0
  %v1254 = vadd.f32 %v529, %v1253
  %v1255 = vpop.f32.mrb[0].mxu0
  %1256 = vdwg.mxu0
  %v1257 = vsel %vm531, %v1251, -inf
  %1258 = vmax.xlane.f32.xlu0 %v1257
  %v1259 = vpop.xlane.xlu0 %1258
  %v1260 = vsel %vm531, %v1254, -inf
  %1261 = vmax.xlane.f32.xlu0 %v1260
  %v1262 = vpop.xlane.xlu0 %1261
  %v1263 = vsub.f32 %v1251, %v1259
  %v1264 = vsub.f32 %v1254, %v1262
  %v1265 = vmul.f32 %v1263, 1.442695
  %v1266 = vpow.pop %v1265
  %v1267 = vmul.f32 %v1264, 1.442695
  %v1268 = vpow.pop %v1267
  %v1269 = vsel %vm531, %v1266, 0.0
  %1270 = vadd.xlane.f32.xlu0 %v1269
  %v1271 = vpop.xlane.xlu0 %1270
  %v1272 = vsel %vm531, %v1268, 0.0
  %1273 = vadd.xlane.f32.xlu0 %v1272
  %v1274 = vpop.xlane.xlu0 %1273
  %v1275 = vrcp.pop %v1271
  %v1276 = vrcp.pop %v1274
  %v1277 = vmul.f32 %v1266, %v1275
  %v1278 = vmul.f32 %v1268, %v1276
  %v1279 = vpack.c.bf16 %v1278, %v1277
  %v1281 = vsel %vm531, %v1279, 0
  %1283 = vmatprep.subr.bf16.mxu0 0
  %1284 = vmatpush1.bf16.msra.mxu0 %v1209
  %1285 = vmatprep.subr.bf16.mxu0 0
  %1286 = vmatpush1.bf16.msra.mxu0 0
  %1287 = vmatprep.subr.bf16.mxu0 0
  %1288 = vmatpush1.bf16.msra.mxu0 0
  %1289 = vmatprep.subr.bf16.mxu0 0
  %1290 = vmatpush1.bf16.msra.mxu0 0
  %1291 = vmatprep.subr.bf16.mxu0 0
  %1292 = vmatpush1.bf16.msra.mxu0 0
  %1293 = vmatprep.subr.bf16.mxu0 0
  %1294 = vmatpush1.bf16.msra.mxu0 0
  %1295 = vmatprep.subr.bf16.mxu0 0
  %1296 = vmatpush1.bf16.msra.mxu0 0
  %1297 = vmatprep.subr.bf16.mxu0 0
  %1298 = vmatpush1.bf16.msra.mxu0 0
  %1299 = vmatprep.subr.bf16.mxu0 0
  %1300 = vmatpush1.bf16.msra.mxu0 0
  %1301 = vmatprep.subr.bf16.mxu0 0
  %1302 = vmatpush1.bf16.msra.mxu0 0
  %1303 = vmatprep.subr.bf16.mxu0 0
  %1304 = vmatpush1.bf16.msra.mxu0 0
  %1305 = vmatprep.subr.bf16.mxu0 0
  %1306 = vmatpush1.bf16.msra.mxu0 0
  %1307 = vmatprep.subr.bf16.mxu0 0
  %1308 = vmatpush1.bf16.msra.mxu0 0
  %1309 = vmatprep.subr.bf16.mxu0 0
  %1310 = vmatpush1.bf16.msra.mxu0 0
  %1311 = vmatprep.subr.bf16.mxu0 0
  %1312 = vmatpush1.bf16.msra.mxu0 0
  %1313 = vmatprep.subr.bf16.mxu0 0
  %1314 = vmatpush1.bf16.msra.mxu0 0
  %1315 = vmatprep.mubr.bf16.mxu0 0
  %1316 = vmatmul.mubr.bf16.gmra.mrb[0].mxu0 %v1281
  %v1317 = vpop.f32.mrb[0].mxu0
  %v1318 = vadd.f32 0.0, %v1317
  %v1319 = vpop.f32.mrb[0].mxu0
  %v1320 = vpop.f32.mrb[0].mxu0
  %v1321 = vadd.f32 0.0, %v1320
  %v1322 = vpop.f32.mrb[0].mxu0
  %1323 = vdwg.mxu0
  %s1324 = scalar_lea.vmem %s7, 96
  %v1325 = vld [vmem:[%s1324] sm:$0xf]
  %v1326 = vld [vmem:[%s1324 + $0x4] sm:$0xf]
  %v1327 = vld [vmem:[%s1324 + $0x8] sm:$0xf]
  %v1328 = vld [vmem:[%s1324 + $0xc] sm:$0xf]
  %v1329 = vld [vmem:[%s1324 + $0x10] sm:$0xf]
  %v1330 = vld [vmem:[%s1324 + $0x14] sm:$0xf]
  %v1331 = vld [vmem:[%s1324 + $0x18] sm:$0xf]
  %v1332 = vld [vmem:[%s1324 + $0x1c] sm:$0xf]
  %v1341 = vunpack.c.l.b16 %v1325
  %v1342 = vunpack.c.l.b16 %v1326
  %v1343 = vunpack.c.l.b16 %v1327
  %v1344 = vunpack.c.l.b16 %v1328
  %v1345 = vunpack.c.l.b16 %v1329
  %v1346 = vunpack.c.l.b16 %v1330
  %v1347 = vunpack.c.l.b16 %v1331
  %v1348 = vunpack.c.l.b16 %v1332
  %v1349 = vpack.c.b16 %v1342, %v1341
  %v1350 = vpack.c.b16 %v1344, %v1343
  %v1351 = vpack.c.b16 %v1346, %v1345
  %v1352 = vpack.c.b16 %v1348, %v1347
  %1357 = vmatprep.subr.bf16.mxu0 0
  %1358 = vmatpush1.bf16.msra.mxu0 %v1349
  %1359 = vmatprep.subr.bf16.mxu0 0
  %1360 = vmatpush1.bf16.msra.mxu0 %v1350
  %1361 = vmatprep.subr.bf16.mxu0 0
  %1362 = vmatpush1.bf16.msra.mxu0 %v1351
  %1363 = vmatprep.subr.bf16.mxu0 0
  %1364 = vmatpush1.bf16.msra.mxu0 %v1352
  %1365 = vmatprep.subr.bf16.mxu0 0
  %1366 = vmatpush1.bf16.msra.mxu0 0
  %1367 = vmatprep.subr.bf16.mxu0 0
  %1368 = vmatpush1.bf16.msra.mxu0 0
  %1369 = vmatprep.subr.bf16.mxu0 0
  %1370 = vmatpush1.bf16.msra.mxu0 0
  %1371 = vmatprep.subr.bf16.mxu0 0
  %1372 = vmatpush1.bf16.msra.mxu0 0
  %1373 = vmatprep.subr.bf16.mxu0 0
  %1374 = vmatpush1.bf16.msra.mxu0 0
  %1375 = vmatprep.subr.bf16.mxu0 0
  %1376 = vmatpush1.bf16.msra.mxu0 0
  %1377 = vmatprep.subr.bf16.mxu0 0
  %1378 = vmatpush1.bf16.msra.mxu0 0
  %1379 = vmatprep.subr.bf16.mxu0 0
  %1380 = vmatpush1.bf16.msra.mxu0 0
  %1381 = vmatprep.subr.bf16.mxu0 0
  %1382 = vmatpush1.bf16.msra.mxu0 0
  %1383 = vmatprep.subr.bf16.mxu0 0
  %1384 = vmatpush1.bf16.msra.mxu0 0
  %1385 = vmatprep.subr.bf16.mxu0 0
  %1386 = vmatpush1.bf16.msra.mxu0 0
  %1387 = vmatprep.subr.bf16.mxu0 0
  %1388 = vmatpush1.bf16.msra.mxu0 0
  %1389 = vmatprep.mubr.bf16.mxu0 0
  %1390 = vmatmul.mubr.bf16.gmra.mrb[0].mxu0 %v333
  %v1391 = vpop.f32.mrb[0].mxu0
  %v1392 = vadd.f32 0.0, %v1391
  %v1393 = vpop.f32.mrb[0].mxu0
  %v1394 = vpop.f32.mrb[0].mxu0
  %v1395 = vadd.f32 0.0, %v1394
  %v1396 = vpop.f32.mrb[0].mxu0
  %1397 = vdwg.mxu0
  %v1398 = vpack.c.bf16 %v1395, %v1392
  %s1399 = scalar_lea.vmem %s8, 96
  %v1400 = vld [vmem:[%s1399] sm:$0xf]
  %v1401 = vld [vmem:[%s1399 + $0x4] sm:$0xf]
  %v1402 = vld [vmem:[%s1399 + $0x8] sm:$0xf]
  %v1403 = vld [vmem:[%s1399 + $0xc] sm:$0xf]
  %v1404 = vld [vmem:[%s1399 + $0x10] sm:$0xf]
  %v1405 = vld [vmem:[%s1399 + $0x14] sm:$0xf]
  %v1406 = vld [vmem:[%s1399 + $0x18] sm:$0xf]
  %v1407 = vld [vmem:[%s1399 + $0x1c] sm:$0xf]
  %v1416 = vunpack.c.l.b16 %v1400
  %v1417 = vunpack.c.l.b16 %v1401
  %v1418 = vunpack.c.l.b16 %v1402
  %v1419 = vunpack.c.l.b16 %v1403
  %v1420 = vunpack.c.l.b16 %v1404
  %v1421 = vunpack.c.l.b16 %v1405
  %v1422 = vunpack.c.l.b16 %v1406
  %v1423 = vunpack.c.l.b16 %v1407
  %v1424 = vpack.c.b16 %v1417, %v1416
  %v1425 = vpack.c.b16 %v1419, %v1418
  %v1426 = vpack.c.b16 %v1421, %v1420
  %v1427 = vpack.c.b16 %v1423, %v1422
  %1432 = vmatprep.subr.bf16.mxu0 0
  %1433 = vmatpush1.bf16.msra.mxu0 %v1424
  %1434 = vmatprep.subr.bf16.mxu0 0
  %1435 = vmatpush1.bf16.msra.mxu0 %v1425
  %1436 = vmatprep.subr.bf16.mxu0 0
  %1437 = vmatpush1.bf16.msra.mxu0 %v1426
  %1438 = vmatprep.subr.bf16.mxu0 0
  %1439 = vmatpush1.bf16.msra.mxu0 %v1427
  %1440 = vmatprep.subr.bf16.mxu0 0
  %1441 = vmatpush1.bf16.msra.mxu0 0
  %1442 = vmatprep.subr.bf16.mxu0 0
  %1443 = vmatpush1.bf16.msra.mxu0 0
  %1444 = vmatprep.subr.bf16.mxu0 0
  %1445 = vmatpush1.bf16.msra.mxu0 0
  %1446 = vmatprep.subr.bf16.mxu0 0
  %1447 = vmatpush1.bf16.msra.mxu0 0
  %1448 = vmatprep.subr.bf16.mxu0 0
  %1449 = vmatpush1.bf16.msra.mxu0 0
  %1450 = vmatprep.subr.bf16.mxu0 0
  %1451 = vmatpush1.bf16.msra.mxu0 0
  %1452 = vmatprep.subr.bf16.mxu0 0
  %1453 = vmatpush1.bf16.msra.mxu0 0
  %1454 = vmatprep.subr.bf16.mxu0 0
  %1455 = vmatpush1.bf16.msra.mxu0 0
  %1456 = vmatprep.subr.bf16.mxu0 0
  %1457 = vmatpush1.bf16.msra.mxu0 0
  %1458 = vmatprep.subr.bf16.mxu0 0
  %1459 = vmatpush1.bf16.msra.mxu0 0
  %1460 = vmatprep.subr.bf16.mxu0 0
  %1461 = vmatpush1.bf16.msra.mxu0 0
  %1462 = vmatprep.subr.bf16.mxu0 0
  %1463 = vmatpush1.bf16.msra.mxu0 0
  %1464 = vmatprep.mubr.bf16.mxu0 0
  %1465 = vmatmul.mubr.bf16.gmra.mrb[0].mxu0 %v333
  %v1466 = vpop.f32.mrb[0].mxu0
  %v1467 = vadd.f32 0.0, %v1466
  %v1468 = vpop.f32.mrb[0].mxu0
  %v1469 = vpop.f32.mrb[0].mxu0
  %v1470 = vadd.f32 0.0, %v1469
  %v1471 = vpop.f32.mrb[0].mxu0
  %1472 = vdwg.mxu0
  %v1473 = vpack.c.bf16 %v1470, %v1467
  %s1474 = scalar_lea.vmem %s9, 96
  %v1475 = vld [vmem:[%s1474] sm:$0xf]
  %v1476 = vld [vmem:[%s1474 + $0x4] sm:$0xf]
  %v1477 = vld [vmem:[%s1474 + $0x8] sm:$0xf]
  %v1478 = vld [vmem:[%s1474 + $0xc] sm:$0xf]
  %v1479 = vld [vmem:[%s1474 + $0x10] sm:$0xf]
  %v1480 = vld [vmem:[%s1474 + $0x14] sm:$0xf]
  %v1481 = vld [vmem:[%s1474 + $0x18] sm:$0xf]
  %v1482 = vld [vmem:[%s1474 + $0x1c] sm:$0xf]
  %v1491 = vunpack.c.l.b16 %v1475
  %v1492 = vunpack.c.l.b16 %v1476
  %v1493 = vunpack.c.l.b16 %v1477
  %v1494 = vunpack.c.l.b16 %v1478
  %v1495 = vunpack.c.l.b16 %v1479
  %v1496 = vunpack.c.l.b16 %v1480
  %v1497 = vunpack.c.l.b16 %v1481
  %v1498 = vunpack.c.l.b16 %v1482
  %v1499 = vpack.c.b16 %v1492, %v1491
  %v1500 = vpack.c.b16 %v1494, %v1493
  %v1501 = vpack.c.b16 %v1496, %v1495
  %v1502 = vpack.c.b16 %v1498, %v1497
  %1507 = vmatprep.subr.bf16.mxu0 0
  %1508 = vmatpush1.bf16.msra.mxu0 %v1499
  %1509 = vmatprep.subr.bf16.mxu0 0
  %1510 = vmatpush1.bf16.msra.mxu0 %v1500
  %1511 = vmatprep.subr.bf16.mxu0 0
  %1512 = vmatpush1.bf16.msra.mxu0 %v1501
  %1513 = vmatprep.subr.bf16.mxu0 0
  %1514 = vmatpush1.bf16.msra.mxu0 %v1502
  %1515 = vmatprep.subr.bf16.mxu0 0
  %1516 = vmatpush1.bf16.msra.mxu0 0
  %1517 = vmatprep.subr.bf16.mxu0 0
  %1518 = vmatpush1.bf16.msra.mxu0 0
  %1519 = vmatprep.subr.bf16.mxu0 0
  %1520 = vmatpush1.bf16.msra.mxu0 0
  %1521 = vmatprep.subr.bf16.mxu0 0
  %1522 = vmatpush1.bf16.msra.mxu0 0
  %1523 = vmatprep.subr.bf16.mxu0 0
  %1524 = vmatpush1.bf16.msra.mxu0 0
  %1525 = vmatprep.subr.bf16.mxu0 0
  %1526 = vmatpush1.bf16.msra.mxu0 0
  %1527 = vmatprep.subr.bf16.mxu0 0
  %1528 = vmatpush1.bf16.msra.mxu0 0
  %1529 = vmatprep.subr.bf16.mxu0 0
  %1530 = vmatpush1.bf16.msra.mxu0 0
  %1531 = vmatprep.subr.bf16.mxu0 0
  %1532 = vmatpush1.bf16.msra.mxu0 0
  %1533 = vmatprep.subr.bf16.mxu0 0
  %1534 = vmatpush1.bf16.msra.mxu0 0
  %1535 = vmatprep.subr.bf16.mxu0 0
  %1536 = vmatpush1.bf16.msra.mxu0 0
  %1537 = vmatprep.subr.bf16.mxu0 0
  %1538 = vmatpush1.bf16.msra.mxu0 0
  %1539 = vmatprep.mubr.bf16.mxu0 0
  %1540 = vmatmul.mubr.bf16.gmra.mrb[0].mxu0 %v333
  %v1541 = vpop.f32.mrb[0].mxu0
  %v1542 = vadd.f32 0.0, %v1541
  %v1543 = vpop.f32.mrb[0].mxu0
  %v1544 = vpop.f32.mrb[0].mxu0
  %v1545 = vadd.f32 0.0, %v1544
  %v1546 = vpop.f32.mrb[0].mxu0
  %1547 = vdwg.mxu0
  %v1548 = vpack.c.bf16 %v1545, %v1542
  %v1550 = vsel %vm531, %v1398, 0
  %v1553 = vsel %vm531, %v1473, 0
  %1555 = vmatprep.subr.bf16.mxu0 0
  %1556 = vmatpush1.bf16.xpose.msra.mxu0 %v1553
  %1557 = vmatprep.subr.bf16.mxu0 0
  %1558 = vmatpush1.bf16.xpose.msra.mxu0 0
  %1559 = vmatprep.subr.bf16.mxu0 0
  %1560 = vmatpush1.bf16.xpose.msra.mxu0 0
  %1561 = vmatprep.subr.bf16.mxu0 0
  %1562 = vmatpush1.bf16.xpose.msra.mxu0 0
  %1563 = vmatprep.subr.bf16.mxu0 0
  %1564 = vmatpush1.bf16.xpose.msra.mxu0 0
  %1565 = vmatprep.subr.bf16.mxu0 0
  %1566 = vmatpush1.bf16.xpose.msra.mxu0 0
  %1567 = vmatprep.subr.bf16.mxu0 0
  %1568 = vmatpush1.bf16.xpose.msra.mxu0 0
  %1569 = vmatprep.subr.bf16.mxu0 0
  %1570 = vmatpush1.bf16.xpose.msra.mxu0 0
  %1571 = vmatprep.subr.bf16.mxu0 0
  %1572 = vmatpush1.bf16.xpose.msra.mxu0 0
  %1573 = vmatprep.subr.bf16.mxu0 0
  %1574 = vmatpush1.bf16.xpose.msra.mxu0 0
  %1575 = vmatprep.subr.bf16.mxu0 0
  %1576 = vmatpush1.bf16.xpose.msra.mxu0 0
  %1577 = vmatprep.subr.bf16.mxu0 0
  %1578 = vmatpush1.bf16.xpose.msra.mxu0 0
  %1579 = vmatprep.subr.bf16.mxu0 0
  %1580 = vmatpush1.bf16.xpose.msra.mxu0 0
  %1581 = vmatprep.subr.bf16.mxu0 0
  %1582 = vmatpush1.bf16.xpose.msra.mxu0 0
  %1583 = vmatprep.subr.bf16.mxu0 0
  %1584 = vmatpush1.bf16.xpose.msra.mxu0 0
  %1585 = vmatprep.subr.bf16.mxu0 0
  %1586 = vmatpush1.bf16.xpose.msra.mxu0 0
  %1587 = vmatprep.mubr.bf16.mxu0 0
  %1588 = vmatmul.mubr.bf16.gmra.mrb[0].mxu0 %v1550
  %v1589 = vpop.f32.mrb[0].mxu0
  %v1590 = vadd.f32 %v529, %v1589
  %v1591 = vpop.f32.mrb[0].mxu0
  %v1592 = vpop.f32.mrb[0].mxu0
  %v1593 = vadd.f32 %v529, %v1592
  %v1594 = vpop.f32.mrb[0].mxu0
  %1595 = vdwg.mxu0
  %v1596 = vsel %vm531, %v1590, -inf
  %1597 = vmax.xlane.f32.xlu0 %v1596
  %v1598 = vpop.xlane.xlu0 %1597
  %v1599 = vsel %vm531, %v1593, -inf
  %1600 = vmax.xlane.f32.xlu0 %v1599
  %v1601 = vpop.xlane.xlu0 %1600
  %v1602 = vsub.f32 %v1590, %v1598
  %v1603 = vsub.f32 %v1593, %v1601
  %v1604 = vmul.f32 %v1602, 1.442695
  %v1605 = vpow.pop %v1604
  %v1606 = vmul.f32 %v1603, 1.442695
  %v1607 = vpow.pop %v1606
  %v1608 = vsel %vm531, %v1605, 0.0
  %1609 = vadd.xlane.f32.xlu0 %v1608
  %v1610 = vpop.xlane.xlu0 %1609
  %v1611 = vsel %vm531, %v1607, 0.0
  %1612 = vadd.xlane.f32.xlu0 %v1611
  %v1613 = vpop.xlane.xlu0 %1612
  %v1614 = vrcp.pop %v1610
  %v1615 = vrcp.pop %v1613
  %v1616 = vmul.f32 %v1605, %v1614
  %v1617 = vmul.f32 %v1607, %v1615
  %v1618 = vpack.c.bf16 %v1617, %v1616
  %v1620 = vsel %vm531, %v1618, 0
  %1622 = vmatprep.subr.bf16.mxu0 0
  %1623 = vmatpush1.bf16.msra.mxu0 %v1548
  %1624 = vmatprep.subr.bf16.mxu0 0
  %1625 = vmatpush1.bf16.msra.mxu0 0
  %1626 = vmatprep.subr.bf16.mxu0 0
  %1627 = vmatpush1.bf16.msra.mxu0 0
  %1628 = vmatprep.subr.bf16.mxu0 0
  %1629 = vmatpush1.bf16.msra.mxu0 0
  %1630 = vmatprep.subr.bf16.mxu0 0
  %1631 = vmatpush1.bf16.msra.mxu0 0
  %1632 = vmatprep.subr.bf16.mxu0 0
  %1633 = vmatpush1.bf16.msra.mxu0 0
  %1634 = vmatprep.subr.bf16.mxu0 0
  %1635 = vmatpush1.bf16.msra.mxu0 0
  %1636 = vmatprep.subr.bf16.mxu0 0
  %1637 = vmatpush1.bf16.msra.mxu0 0
  %1638 = vmatprep.subr.bf16.mxu0 0
  %1639 = vmatpush1.bf16.msra.mxu0 0
  %1640 = vmatprep.subr.bf16.mxu0 0
  %1641 = vmatpush1.bf16.msra.mxu0 0
  %1642 = vmatprep.subr.bf16.mxu0 0
  %1643 = vmatpush1.bf16.msra.mxu0 0
  %1644 = vmatprep.subr.bf16.mxu0 0
  %1645 = vmatpush1.bf16.msra.mxu0 0
  %1646 = vmatprep.subr.bf16.mxu0 0
  %1647 = vmatpush1.bf16.msra.mxu0 0
  %1648 = vmatprep.subr.bf16.mxu0 0
  %1649 = vmatpush1.bf16.msra.mxu0 0
  %1650 = vmatprep.subr.bf16.mxu0 0
  %1651 = vmatpush1.bf16.msra.mxu0 0
  %1652 = vmatprep.subr.bf16.mxu0 0
  %1653 = vmatpush1.bf16.msra.mxu0 0
  %1654 = vmatprep.mubr.bf16.mxu0 0
  %1655 = vmatmul.mubr.bf16.gmra.mrb[0].mxu0 %v1620
  %v1656 = vpop.f32.mrb[0].mxu0
  %v1657 = vadd.f32 0.0, %v1656
  %v1658 = vpop.f32.mrb[0].mxu0
  %v1659 = vpop.f32.mrb[0].mxu0
  %v1660 = vadd.f32 0.0, %v1659
  %v1661 = vpop.f32.mrb[0].mxu0
  %1662 = vdwg.mxu0
  %1665 = vrot.lane.b32.xlu0 %v979, 16
  %v1666 = vpop.permute.xlu0 %1665
  %1667 = vrot.lane.b32.xlu0 %v982, 16
  %v1668 = vpop.permute.xlu0 %1667
  %1673 = vrot.lane.b32.xlu0 %v1318, 32
  %v1674 = vpop.permute.xlu0 %1673
  %1675 = vrot.lane.b32.xlu0 %v1321, 32
  %v1676 = vpop.permute.xlu0 %1675
  %1681 = vrot.lane.b32.xlu0 %v1657, 48
  %v1682 = vpop.permute.xlu0 %1681
  %1683 = vrot.lane.b32.xlu0 %v1660, 48
  %v1684 = vpop.permute.xlu0 %1683
  %v1687 = vsel %vm531, %v640, %v1666
  %v1688 = vsel %vm531, %v643, %v1668
  %v1689 = vsel %vm216, %v1687, %v1674
  %v1690 = vsel %vm216, %v1688, %v1676
  %vm1691 = vcmask 392192
  %v1692 = vsel %vm1691, %v1689, %v1682
  %v1693 = vsel %vm1691, %v1690, %v1684
  %v1694 = vpack.c.bf16 %v1693, %v1692
  %v1695 = vld [vmem:[%s10] sm:$0xf]
  %v1696 = vld [vmem:[%s10 + $0x4] sm:$0xf]
  %v1697 = vld [vmem:[%s10 + $0x8] sm:$0xf]
  %v1698 = vld [vmem:[%s10 + $0xc] sm:$0xf]
  %v1699 = vld [vmem:[%s10 + $0x10] sm:$0xf]
  %v1700 = vld [vmem:[%s10 + $0x14] sm:$0xf]
  %v1701 = vld [vmem:[%s10 + $0x18] sm:$0xf]
  %v1702 = vld [vmem:[%s10 + $0x1c] sm:$0xf]
  %v1711 = vunpack.c.l.b16 %v1695
  %v1712 = vunpack.c.l.b16 %v1696
  %v1713 = vunpack.c.l.b16 %v1697
  %v1714 = vunpack.c.l.b16 %v1698
  %v1715 = vunpack.c.l.b16 %v1699
  %v1716 = vunpack.c.l.b16 %v1700
  %v1717 = vunpack.c.l.b16 %v1701
  %v1718 = vunpack.c.l.b16 %v1702
  %v1719 = vpack.c.b16 %v1712, %v1711
  %v1720 = vpack.c.b16 %v1714, %v1713
  %v1721 = vpack.c.b16 %v1716, %v1715
  %v1722 = vpack.c.b16 %v1718, %v1717
  %v1728 = vsel %vm275, %v1694, 0
  %1730 = vmatprep.subr.bf16.mxu0 0
  %1731 = vmatpush1.bf16.msra.mxu0 %v1719
  %1732 = vmatprep.subr.bf16.mxu0 0
  %1733 = vmatpush1.bf16.msra.mxu0 %v1720
  %1734 = vmatprep.subr.bf16.mxu0 0
  %1735 = vmatpush1.bf16.msra.mxu0 %v1721
  %1736 = vmatprep.subr.bf16.mxu0 0
  %1737 = vmatpush1.bf16.msra.mxu0 %v1722
  %1738 = vmatprep.subr.bf16.mxu0 0
  %1739 = vmatpush1.bf16.msra.mxu0 0
  %1740 = vmatprep.subr.bf16.mxu0 0
  %1741 = vmatpush1.bf16.msra.mxu0 0
  %1742 = vmatprep.subr.bf16.mxu0 0
  %1743 = vmatpush1.bf16.msra.mxu0 0
  %1744 = vmatprep.subr.bf16.mxu0 0
  %1745 = vmatpush1.bf16.msra.mxu0 0
  %1746 = vmatprep.subr.bf16.mxu0 0
  %1747 = vmatpush1.bf16.msra.mxu0 0
  %1748 = vmatprep.subr.bf16.mxu0 0
  %1749 = vmatpush1.bf16.msra.mxu0 0
  %1750 = vmatprep.subr.bf16.mxu0 0
  %1751 = vmatpush1.bf16.msra.mxu0 0
  %1752 = vmatprep.subr.bf16.mxu0 0
  %1753 = vmatpush1.bf16.msra.mxu0 0
  %1754 = vmatprep.subr.bf16.mxu0 0
  %1755 = vmatpush1.bf16.msra.mxu0 0
  %1756 = vmatprep.subr.bf16.mxu0 0
  %1757 = vmatpush1.bf16.msra.mxu0 0
  %1758 = vmatprep.subr.bf16.mxu0 0
  %1759 = vmatpush1.bf16.msra.mxu0 0
  %1760 = vmatprep.subr.bf16.mxu0 0
  %1761 = vmatpush1.bf16.msra.mxu0 0
  %1762 = vmatprep.mubr.bf16.mxu0 0
  %1763 = vmatmul.mubr.bf16.gmra.mrb[0].mxu0 %v1728
  %v1764 = vpop.f32.mrb[0].mxu0
  %v1765 = vadd.f32 0.0, %v1764
  %v1766 = vpop.f32.mrb[0].mxu0
  %v1767 = vpop.f32.mrb[0].mxu0
  %v1768 = vadd.f32 0.0, %v1767
  %v1769 = vpop.f32.mrb[0].mxu0
  %1770 = vdwg.mxu0
  %v1771 = vadd.f32 %v270, %v1765
  %v1772 = vadd.f32 %v271, %v1768
  %v1773 = vld [vmem:[%s12] sm:$0x1]
  %v1774 = vmul.f32 %v1771, %v1771
  %v1775 = vmul.f32 %v1772, %v1772
  %v1776 = vsel %vm275, %v1774, 0.0
  %1777 = vadd.xlane.f32.xlu0 %v1776
  %v1778 = vpop.xlane.xlu0 %1777
  %v1779 = vsel %vm275, %v1775, 0.0
  %1780 = vadd.xlane.f32.xlu0 %v1779
  %v1781 = vpop.xlane.xlu0 %1780
  %v1782 = vmul.f32 %v1778, %v282
  %v1783 = vmul.f32 %v1781, %v282
  %v1784 = vadd.f32 %v1782, 1e-06
  %v1785 = vadd.f32 %v1783, 1e-06
  %v1786 = vrsqrt.pop %v1784
  %v1787 = vrsqrt.pop %v1785
  %v1788 = vmul.f32 %v1771, %v1786
  %v1789 = vmul.f32 %v1772, %v1787
  %v1791 = vlaneseq
  %v1792 = vshrl.u32 %v1791, 7
  %v1793 = vsub.s32 0, %v1792
  %v1794 = vrot.slane %v1773, %v1793
  %v1796 = vmul.f32 %v1788, %v1794
  %v1797 = vmul.f32 %v1789, %v1794
  %v1798 = vpack.c.bf16 %v1797, %v1796
  %v1799 = vld [vmem:[%s13] sm:$0xf]
  %v1800 = vld [vmem:[%s13 + $0x4] sm:$0xf]
  %v1801 = vld [vmem:[%s13 + $0x8] sm:$0xf]
  %v1802 = vld [vmem:[%s13 + $0xc] sm:$0xf]
  %v1803 = vld [vmem:[%s13 + $0x10] sm:$0xf]
  %v1804 = vld [vmem:[%s13 + $0x14] sm:$0xf]
  %v1805 = vld [vmem:[%s13 + $0x18] sm:$0xf]
  %v1806 = vld [vmem:[%s13 + $0x1c] sm:$0xf]
  %v1815 = vunpack.c.l.b16 %v1799
  %v1816 = vunpack.c.l.b16 %v1800
  %v1817 = vunpack.c.l.b16 %v1801
  %v1818 = vunpack.c.l.b16 %v1802
  %v1819 = vunpack.c.l.b16 %v1803
  %v1820 = vunpack.c.l.b16 %v1804
  %v1821 = vunpack.c.l.b16 %v1805
  %v1822 = vunpack.c.l.b16 %v1806
  %v1823 = vpack.c.b16 %v1816, %v1815
  %v1824 = vpack.c.b16 %v1818, %v1817
  %v1825 = vpack.c.b16 %v1820, %v1819
  %v1826 = vpack.c.b16 %v1822, %v1821
  %v1832 = vsel %vm275, %v1798, 0
  %1834 = vmatprep.subr.bf16.mxu0 0
  %1835 = vmatpush1.bf16.msra.mxu0 %v1823
  %1836 = vmatprep.subr.bf16.mxu0 0
  %1837 = vmatpush1.bf16.msra.mxu0 %v1824
  %1838 = vmatprep.subr.bf16.mxu0 0
  %1839 = vmatpush1.bf16.msra.mxu0 %v1825
  %1840 = vmatprep.subr.bf16.mxu0 0
  %1841 = vmatpush1.bf16.msra.mxu0 %v1826
  %1842 = vmatprep.subr.bf16.mxu0 0
  %1843 = vmatpush1.bf16.msra.mxu0 0
  %1844 = vmatprep.subr.bf16.mxu0 0
  %1845 = vmatpush1.bf16.msra.mxu0 0
  %1846 = vmatprep.subr.bf16.mxu0 0
  %1847 = vmatpush1.bf16.msra.mxu0 0
  %1848 = vmatprep.subr.bf16.mxu0 0
  %1849 = vmatpush1.bf16.msra.mxu0 0
  %1850 = vmatprep.subr.bf16.mxu0 0
  %1851 = vmatpush1.bf16.msra.mxu0 0
  %1852 = vmatprep.subr.bf16.mxu0 0
  %1853 = vmatpush1.bf16.msra.mxu0 0
  %1854 = vmatprep.subr.bf16.mxu0 0
  %1855 = vmatpush1.bf16.msra.mxu0 0
  %1856 = vmatprep.subr.bf16.mxu0 0
  %1857 = vmatpush1.bf16.msra.mxu0 0
  %1858 = vmatprep.subr.bf16.mxu0 0
  %1859 = vmatpush1.bf16.msra.mxu0 0
  %1860 = vmatprep.subr.bf16.mxu0 0
  %1861 = vmatpush1.bf16.msra.mxu0 0
  %1862 = vmatprep.subr.bf16.mxu0 0
  %1863 = vmatpush1.bf16.msra.mxu0 0
  %1864 = vmatprep.subr.bf16.mxu0 0
  %1865 = vmatpush1.bf16.msra.mxu0 0
  %1866 = vmatprep.mubr.bf16.mxu0 0
  %1867 = vmatmul.mubr.bf16.gmra.mrb[0].mxu0 %v1832
  %v1868 = vpop.f32.mrb[0].mxu0
  %v1869 = vadd.f32 0.0, %v1868
  %v1870 = vpop.f32.mrb[0].mxu0
  %v1871 = vpop.f32.mrb[0].mxu0
  %v1872 = vadd.f32 0.0, %v1871
  %v1873 = vpop.f32.mrb[0].mxu0
  %1874 = vdwg.mxu0
  %v1875 = vmax.f32 %v1869, 0.0
  %v1876 = vmax.f32 %v1872, 0.0
  %v1877 = vpack.c.bf16 %v1876, %v1875
  %v1878 = vld [vmem:[%s14] sm:$0xf]
  %v1879 = vld [vmem:[%s14 + $0x4] sm:$0xf]
  %v1880 = vld [vmem:[%s14 + $0x8] sm:$0xf]
  %v1881 = vld [vmem:[%s14 + $0xc] sm:$0xf]
  %v1882 = vld [vmem:[%s14 + $0x10] sm:$0xf]
  %v1883 = vld [vmem:[%s14 + $0x14] sm:$0xf]
  %v1884 = vld [vmem:[%s14 + $0x18] sm:$0xf]
  %v1885 = vld [vmem:[%s14 + $0x1c] sm:$0xf]
  %v1886 = vld [vmem:[%s14 + $0x20] sm:$0xf]
  %v1887 = vld [vmem:[%s14 + $0x24] sm:$0xf]
  %v1888 = vld [vmem:[%s14 + $0x28] sm:$0xf]
  %v1889 = vld [vmem:[%s14 + $0x2c] sm:$0xf]
  %v1890 = vld [vmem:[%s14 + $0x30] sm:$0xf]
  %v1891 = vld [vmem:[%s14 + $0x34] sm:$0xf]
  %v1892 = vld [vmem:[%s14 + $0x38] sm:$0xf]
  %v1893 = vld [vmem:[%s14 + $0x3c] sm:$0xf]
  %v1910 = vunpack.c.l.b16 %v1878
  %v1911 = vunpack.c.l.b16 %v1879
  %v1912 = vunpack.c.l.b16 %v1880
  %v1913 = vunpack.c.l.b16 %v1881
  %v1914 = vunpack.c.l.b16 %v1882
  %v1915 = vunpack.c.l.b16 %v1883
  %v1916 = vunpack.c.l.b16 %v1884
  %v1917 = vunpack.c.l.b16 %v1885
  %v1918 = vunpack.c.l.b16 %v1886
  %v1919 = vunpack.c.l.b16 %v1887
  %v1920 = vunpack.c.l.b16 %v1888
  %v1921 = vunpack.c.l.b16 %v1889
  %v1922 = vunpack.c.l.b16 %v1890
  %v1923 = vunpack.c.l.b16 %v1891
  %v1924 = vunpack.c.l.b16 %v1892
  %v1925 = vunpack.c.l.b16 %v1893
  %v1926 = vpack.c.b16 %v1911, %v1910
  %v1927 = vpack.c.b16 %v1913, %v1912
  %v1928 = vpack.c.b16 %v1915, %v1914
  %v1929 = vpack.c.b16 %v1917, %v1916
  %v1930 = vpack.c.b16 %v1919, %v1918
  %v1931 = vpack.c.b16 %v1921, %v1920
  %v1932 = vpack.c.b16 %v1923, %v1922
  %v1933 = vpack.c.b16 %v1925, %v1924
  %1942 = vmatprep.subr.bf16.mxu0 0
  %1943 = vmatpush1.bf16.msra.mxu0 %v1926
  %1944 = vmatprep.subr.bf16.mxu0 0
  %1945 = vmatpush1.bf16.msra.mxu0 %v1927
  %1946 = vmatprep.subr.bf16.mxu0 0
  %1947 = vmatpush1.bf16.msra.mxu0 %v1928
  %1948 = vmatprep.subr.bf16.mxu0 0
  %1949 = vmatpush1.bf16.msra.mxu0 %v1929
  %1950 = vmatprep.subr.bf16.mxu0 0
  %1951 = vmatpush1.bf16.msra.mxu0 %v1930
  %1952 = vmatprep.subr.bf16.mxu0 0
  %1953 = vmatpush1.bf16.msra.mxu0 %v1931
  %1954 = vmatprep.subr.bf16.mxu0 0
  %1955 = vmatpush1.bf16.msra.mxu0 %v1932
  %1956 = vmatprep.subr.bf16.mxu0 0
  %1957 = vmatpush1.bf16.msra.mxu0 %v1933
  %1958 = vmatprep.subr.bf16.mxu0 0
  %1959 = vmatpush1.bf16.msra.mxu0 0
  %1960 = vmatprep.subr.bf16.mxu0 0
  %1961 = vmatpush1.bf16.msra.mxu0 0
  %1962 = vmatprep.subr.bf16.mxu0 0
  %1963 = vmatpush1.bf16.msra.mxu0 0
  %1964 = vmatprep.subr.bf16.mxu0 0
  %1965 = vmatpush1.bf16.msra.mxu0 0
  %1966 = vmatprep.subr.bf16.mxu0 0
  %1967 = vmatpush1.bf16.msra.mxu0 0
  %1968 = vmatprep.subr.bf16.mxu0 0
  %1969 = vmatpush1.bf16.msra.mxu0 0
  %1970 = vmatprep.subr.bf16.mxu0 0
  %1971 = vmatpush1.bf16.msra.mxu0 0
  %1972 = vmatprep.subr.bf16.mxu0 0
  %1973 = vmatpush1.bf16.msra.mxu0 0
  %1974 = vmatprep.mubr.bf16.mxu0 0
  %1975 = vmatmul.mubr.bf16.gmra.mrb[0].mxu0 %v1877
  %v1976 = vpop.f32.mrb[0].mxu0
  %v1977 = vadd.f32 0.0, %v1976
  %v1978 = vpop.f32.mrb[0].mxu0
  %v1979 = vpop.f32.mrb[0].mxu0
  %v1980 = vadd.f32 0.0, %v1979
  %v1981 = vpop.f32.mrb[0].mxu0
  %1982 = vdwg.mxu0
  %v1983 = vadd.f32 %v1771, %v1977
  %v1984 = vadd.f32 %v1772, %v1980
  %s1985 = scalar_lea.vmem %s11, 1
  %v1986 = vld [vmem:[%s1985] sm:$0x1]
  %v1987 = vmul.f32 %v1983, %v1983
  %v1988 = vmul.f32 %v1984, %v1984
  %v1989 = vsel %vm275, %v1987, 0.0
  %1990 = vadd.xlane.f32.xlu0 %v1989
  %v1991 = vpop.xlane.xlu0 %1990
  %v1992 = vsel %vm275, %v1988, 0.0
  %1993 = vadd.xlane.f32.xlu0 %v1992
  %v1994 = vpop.xlane.xlu0 %1993
  %v1995 = vmul.f32 %v1991, %v282
  %v1996 = vmul.f32 %v1994, %v282
  %v1997 = vadd.f32 %v1995, 1e-06
  %v1998 = vadd.f32 %v1996, 1e-06
  %v1999 = vrsqrt.pop %v1997
  %v2000 = vrsqrt.pop %v1998
  %v2001 = vmul.f32 %v1983, %v1999
  %v2002 = vmul.f32 %v1984, %v2000
  %v2004 = vlaneseq
  %v2005 = vshrl.u32 %v2004, 7
  %v2006 = vsub.s32 0, %v2005
  %v2007 = vrot.slane %v1986, %v2006
  %v2009 = vmul.f32 %v2001, %v2007
  %v2010 = vmul.f32 %v2002, %v2007
  %v2011 = vpack.c.bf16 %v2010, %v2009
  %s2012 = scalar_lea.vmem %s7, 128
  %v2013 = vld [vmem:[%s2012] sm:$0xf]
  %v2014 = vld [vmem:[%s2012 + $0x4] sm:$0xf]
  %v2015 = vld [vmem:[%s2012 + $0x8] sm:$0xf]
  %v2016 = vld [vmem:[%s2012 + $0xc] sm:$0xf]
  %v2017 = vld [vmem:[%s2012 + $0x10] sm:$0xf]
  %v2018 = vld [vmem:[%s2012 + $0x14] sm:$0xf]
  %v2019 = vld [vmem:[%s2012 + $0x18] sm:$0xf]
  %v2020 = vld [vmem:[%s2012 + $0x1c] sm:$0xf]
  %v2029 = vunpack.c.l.b16 %v2013
  %v2030 = vunpack.c.l.b16 %v2014
  %v2031 = vunpack.c.l.b16 %v2015
  %v2032 = vunpack.c.l.b16 %v2016
  %v2033 = vunpack.c.l.b16 %v2017
  %v2034 = vunpack.c.l.b16 %v2018
  %v2035 = vunpack.c.l.b16 %v2019
  %v2036 = vunpack.c.l.b16 %v2020
  %v2037 = vpack.c.b16 %v2030, %v2029
  %v2038 = vpack.c.b16 %v2032, %v2031
  %v2039 = vpack.c.b16 %v2034, %v2033
  %v2040 = vpack.c.b16 %v2036, %v2035
  %v2046 = vsel %vm275, %v2011, 0
  %2048 = vmatprep.subr.bf16.mxu0 0
  %2049 = vmatpush1.bf16.msra.mxu0 %v2037
  %2050 = vmatprep.subr.bf16.mxu0 0
  %2051 = vmatpush1.bf16.msra.mxu0 %v2038
  %2052 = vmatprep.subr.bf16.mxu0 0
  %2053 = vmatpush1.bf16.msra.mxu0 %v2039
  %2054 = vmatprep.subr.bf16.mxu0 0
  %2055 = vmatpush1.bf16.msra.mxu0 %v2040
  %2056 = vmatprep.subr.bf16.mxu0 0
  %2057 = vmatpush1.bf16.msra.mxu0 0
  %2058 = vmatprep.subr.bf16.mxu0 0
  %2059 = vmatpush1.bf16.msra.mxu0 0
  %2060 = vmatprep.subr.bf16.mxu0 0
  %2061 = vmatpush1.bf16.msra.mxu0 0
  %2062 = vmatprep.subr.bf16.mxu0 0
  %2063 = vmatpush1.bf16.msra.mxu0 0
  %2064 = vmatprep.subr.bf16.mxu0 0
  %2065 = vmatpush1.bf16.msra.mxu0 0
  %2066 = vmatprep.subr.bf16.mxu0 0
  %2067 = vmatpush1.bf16.msra.mxu0 0
  %2068 = vmatprep.subr.bf16.mxu0 0
  %2069 = vmatpush1.bf16.msra.mxu0 0
  %2070 = vmatprep.subr.bf16.mxu0 0
  %2071 = vmatpush1.bf16.msra.mxu0 0
  %2072 = vmatprep.subr.bf16.mxu0 0
  %2073 = vmatpush1.bf16.msra.mxu0 0
  %2074 = vmatprep.subr.bf16.mxu0 0
  %2075 = vmatpush1.bf16.msra.mxu0 0
  %2076 = vmatprep.subr.bf16.mxu0 0
  %2077 = vmatpush1.bf16.msra.mxu0 0
  %2078 = vmatprep.subr.bf16.mxu0 0
  %2079 = vmatpush1.bf16.msra.mxu0 0
  %2080 = vmatprep.mubr.bf16.mxu0 0
  %2081 = vmatmul.mubr.bf16.gmra.mrb[0].mxu0 %v2046
  %v2082 = vpop.f32.mrb[0].mxu0
  %v2083 = vadd.f32 0.0, %v2082
  %v2084 = vpop.f32.mrb[0].mxu0
  %v2085 = vpop.f32.mrb[0].mxu0
  %v2086 = vadd.f32 0.0, %v2085
  %v2087 = vpop.f32.mrb[0].mxu0
  %2088 = vdwg.mxu0
  %v2089 = vpack.c.bf16 %v2086, %v2083
  %s2090 = scalar_lea.vmem %s8, 128
  %v2091 = vld [vmem:[%s2090] sm:$0xf]
  %v2092 = vld [vmem:[%s2090 + $0x4] sm:$0xf]
  %v2093 = vld [vmem:[%s2090 + $0x8] sm:$0xf]
  %v2094 = vld [vmem:[%s2090 + $0xc] sm:$0xf]
  %v2095 = vld [vmem:[%s2090 + $0x10] sm:$0xf]
  %v2096 = vld [vmem:[%s2090 + $0x14] sm:$0xf]
  %v2097 = vld [vmem:[%s2090 + $0x18] sm:$0xf]
  %v2098 = vld [vmem:[%s2090 + $0x1c] sm:$0xf]
  %v2107 = vunpack.c.l.b16 %v2091
  %v2108 = vunpack.c.l.b16 %v2092
  %v2109 = vunpack.c.l.b16 %v2093
  %v2110 = vunpack.c.l.b16 %v2094
  %v2111 = vunpack.c.l.b16 %v2095
  %v2112 = vunpack.c.l.b16 %v2096
  %v2113 = vunpack.c.l.b16 %v2097
  %v2114 = vunpack.c.l.b16 %v2098
  %v2115 = vpack.c.b16 %v2108, %v2107
  %v2116 = vpack.c.b16 %v2110, %v2109
  %v2117 = vpack.c.b16 %v2112, %v2111
  %v2118 = vpack.c.b16 %v2114, %v2113
  %2123 = vmatprep.subr.bf16.mxu0 0
  %2124 = vmatpush1.bf16.msra.mxu0 %v2115
  %2125 = vmatprep.subr.bf16.mxu0 0
  %2126 = vmatpush1.bf16.msra.mxu0 %v2116
  %2127 = vmatprep.subr.bf16.mxu0 0
  %2128 = vmatpush1.bf16.msra.mxu0 %v2117
  %2129 = vmatprep.subr.bf16.mxu0 0
  %2130 = vmatpush1.bf16.msra.mxu0 %v2118
  %2131 = vmatprep.subr.bf16.mxu0 0
  %2132 = vmatpush1.bf16.msra.mxu0 0
  %2133 = vmatprep.subr.bf16.mxu0 0
  %2134 = vmatpush1.bf16.msra.mxu0 0
  %2135 = vmatprep.subr.bf16.mxu0 0
  %2136 = vmatpush1.bf16.msra.mxu0 0
  %2137 = vmatprep.subr.bf16.mxu0 0
  %2138 = vmatpush1.bf16.msra.mxu0 0
  %2139 = vmatprep.subr.bf16.mxu0 0
  %2140 = vmatpush1.bf16.msra.mxu0 0
  %2141 = vmatprep.subr.bf16.mxu0 0
  %2142 = vmatpush1.bf16.msra.mxu0 0
  %2143 = vmatprep.subr.bf16.mxu0 0
  %2144 = vmatpush1.bf16.msra.mxu0 0
  %2145 = vmatprep.subr.bf16.mxu0 0
  %2146 = vmatpush1.bf16.msra.mxu0 0
  %2147 = vmatprep.subr.bf16.mxu0 0
  %2148 = vmatpush1.bf16.msra.mxu0 0
  %2149 = vmatprep.subr.bf16.mxu0 0
  %2150 = vmatpush1.bf16.msra.mxu0 0
  %2151 = vmatprep.subr.bf16.mxu0 0
  %2152 = vmatpush1.bf16.msra.mxu0 0
  %2153 = vmatprep.subr.bf16.mxu0 0
  %2154 = vmatpush1.bf16.msra.mxu0 0
  %2155 = vmatprep.mubr.bf16.mxu0 0
  %2156 = vmatmul.mubr.bf16.gmra.mrb[0].mxu0 %v2046
  %v2157 = vpop.f32.mrb[0].mxu0
  %v2158 = vadd.f32 0.0, %v2157
  %v2159 = vpop.f32.mrb[0].mxu0
  %v2160 = vpop.f32.mrb[0].mxu0
  %v2161 = vadd.f32 0.0, %v2160
  %v2162 = vpop.f32.mrb[0].mxu0
  %2163 = vdwg.mxu0
  %v2164 = vpack.c.bf16 %v2161, %v2158
  %s2165 = scalar_lea.vmem %s9, 128
  %v2166 = vld [vmem:[%s2165] sm:$0xf]
  %v2167 = vld [vmem:[%s2165 + $0x4] sm:$0xf]
  %v2168 = vld [vmem:[%s2165 + $0x8] sm:$0xf]
  %v2169 = vld [vmem:[%s2165 + $0xc] sm:$0xf]
  %v2170 = vld [vmem:[%s2165 + $0x10] sm:$0xf]
  %v2171 = vld [vmem:[%s2165 + $0x14] sm:$0xf]
  %v2172 = vld [vmem:[%s2165 + $0x18] sm:$0xf]
  %v2173 = vld [vmem:[%s2165 + $0x1c] sm:$0xf]
  %v2182 = vunpack.c.l.b16 %v2166
  %v2183 = vunpack.c.l.b16 %v2167
  %v2184 = vunpack.c.l.b16 %v2168
  %v2185 = vunpack.c.l.b16 %v2169
  %v2186 = vunpack.c.l.b16 %v2170
  %v2187 = vunpack.c.l.b16 %v2171
  %v2188 = vunpack.c.l.b16 %v2172
  %v2189 = vunpack.c.l.b16 %v2173
  %v2190 = vpack.c.b16 %v2183, %v2182
  %v2191 = vpack.c.b16 %v2185, %v2184
  %v2192 = vpack.c.b16 %v2187, %v2186
  %v2193 = vpack.c.b16 %v2189, %v2188
  %2198 = vmatprep.subr.bf16.mxu0 0
  %2199 = vmatpush1.bf16.msra.mxu0 %v2190
  %2200 = vmatprep.subr.bf16.mxu0 0
  %2201 = vmatpush1.bf16.msra.mxu0 %v2191
  %2202 = vmatprep.subr.bf16.mxu0 0
  %2203 = vmatpush1.bf16.msra.mxu0 %v2192
  %2204 = vmatprep.subr.bf16.mxu0 0
  %2205 = vmatpush1.bf16.msra.mxu0 %v2193
  %2206 = vmatprep.subr.bf16.mxu0 0
  %2207 = vmatpush1.bf16.msra.mxu0 0
  %2208 = vmatprep.subr.bf16.mxu0 0
  %2209 = vmatpush1.bf16.msra.mxu0 0
  %2210 = vmatprep.subr.bf16.mxu0 0
  %2211 = vmatpush1.bf16.msra.mxu0 0
  %2212 = vmatprep.subr.bf16.mxu0 0
  %2213 = vmatpush1.bf16.msra.mxu0 0
  %2214 = vmatprep.subr.bf16.mxu0 0
  %2215 = vmatpush1.bf16.msra.mxu0 0
  %2216 = vmatprep.subr.bf16.mxu0 0
  %2217 = vmatpush1.bf16.msra.mxu0 0
  %2218 = vmatprep.subr.bf16.mxu0 0
  %2219 = vmatpush1.bf16.msra.mxu0 0
  %2220 = vmatprep.subr.bf16.mxu0 0
  %2221 = vmatpush1.bf16.msra.mxu0 0
  %2222 = vmatprep.subr.bf16.mxu0 0
  %2223 = vmatpush1.bf16.msra.mxu0 0
  %2224 = vmatprep.subr.bf16.mxu0 0
  %2225 = vmatpush1.bf16.msra.mxu0 0
  %2226 = vmatprep.subr.bf16.mxu0 0
  %2227 = vmatpush1.bf16.msra.mxu0 0
  %2228 = vmatprep.subr.bf16.mxu0 0
  %2229 = vmatpush1.bf16.msra.mxu0 0
  %2230 = vmatprep.mubr.bf16.mxu0 0
  %2231 = vmatmul.mubr.bf16.gmra.mrb[0].mxu0 %v2046
  %v2232 = vpop.f32.mrb[0].mxu0
  %v2233 = vadd.f32 0.0, %v2232
  %v2234 = vpop.f32.mrb[0].mxu0
  %v2235 = vpop.f32.mrb[0].mxu0
  %v2236 = vadd.f32 0.0, %v2235
  %v2237 = vpop.f32.mrb[0].mxu0
  %2238 = vdwg.mxu0
  %v2239 = vpack.c.bf16 %v2236, %v2233
  %v2241 = vsel %vm531, %v2089, 0
  %v2244 = vsel %vm531, %v2164, 0
  %2246 = vmatprep.subr.bf16.mxu0 0
  %2247 = vmatpush1.bf16.xpose.msra.mxu0 %v2244
  %2248 = vmatprep.subr.bf16.mxu0 0
  %2249 = vmatpush1.bf16.xpose.msra.mxu0 0
  %2250 = vmatprep.subr.bf16.mxu0 0
  %2251 = vmatpush1.bf16.xpose.msra.mxu0 0
  %2252 = vmatprep.subr.bf16.mxu0 0
  %2253 = vmatpush1.bf16.xpose.msra.mxu0 0
  %2254 = vmatprep.subr.bf16.mxu0 0
  %2255 = vmatpush1.bf16.xpose.msra.mxu0 0
  %2256 = vmatprep.subr.bf16.mxu0 0
  %2257 = vmatpush1.bf16.xpose.msra.mxu0 0
  %2258 = vmatprep.subr.bf16.mxu0 0
  %2259 = vmatpush1.bf16.xpose.msra.mxu0 0
  %2260 = vmatprep.subr.bf16.mxu0 0
  %2261 = vmatpush1.bf16.xpose.msra.mxu0 0
  %2262 = vmatprep.subr.bf16.mxu0 0
  %2263 = vmatpush1.bf16.xpose.msra.mxu0 0
  %2264 = vmatprep.subr.bf16.mxu0 0
  %2265 = vmatpush1.bf16.xpose.msra.mxu0 0
  %2266 = vmatprep.subr.bf16.mxu0 0
  %2267 = vmatpush1.bf16.xpose.msra.mxu0 0
  %2268 = vmatprep.subr.bf16.mxu0 0
  %2269 = vmatpush1.bf16.xpose.msra.mxu0 0
  %2270 = vmatprep.subr.bf16.mxu0 0
  %2271 = vmatpush1.bf16.xpose.msra.mxu0 0
  %2272 = vmatprep.subr.bf16.mxu0 0
  %2273 = vmatpush1.bf16.xpose.msra.mxu0 0
  %2274 = vmatprep.subr.bf16.mxu0 0
  %2275 = vmatpush1.bf16.xpose.msra.mxu0 0
  %2276 = vmatprep.subr.bf16.mxu0 0
  %2277 = vmatpush1.bf16.xpose.msra.mxu0 0
  %2278 = vmatprep.mubr.bf16.mxu0 0
  %2279 = vmatmul.mubr.bf16.gmra.mrb[0].mxu0 %v2241
  %v2280 = vpop.f32.mrb[0].mxu0
  %v2281 = vadd.f32 %v529, %v2280
  %v2282 = vpop.f32.mrb[0].mxu0
  %v2283 = vpop.f32.mrb[0].mxu0
  %v2284 = vadd.f32 %v529, %v2283
  %v2285 = vpop.f32.mrb[0].mxu0
  %2286 = vdwg.mxu0
  %v2287 = vsel %vm531, %v2281, -inf
  %2288 = vmax.xlane.f32.xlu0 %v2287
  %v2289 = vpop.xlane.xlu0 %2288
  %v2290 = vsel %vm531, %v2284, -inf
  %2291 = vmax.xlane.f32.xlu0 %v2290
  %v2292 = vpop.xlane.xlu0 %2291
  %v2293 = vsub.f32 %v2281, %v2289
  %v2294 = vsub.f32 %v2284, %v2292
  %v2295 = vmul.f32 %v2293, 1.442695
  %v2296 = vpow.pop %v2295
  %v2297 = vmul.f32 %v2294, 1.442695
  %v2298 = vpow.pop %v2297
  %v2299 = vsel %vm531, %v2296, 0.0
  %2300 = vadd.xlane.f32.xlu0 %v2299
  %v2301 = vpop.xlane.xlu0 %2300
  %v2302 = vsel %vm531, %v2298, 0.0
  %2303 = vadd.xlane.f32.xlu0 %v2302
  %v2304 = vpop.xlane.xlu0 %2303
  %v2305 = vrcp.pop %v2301
  %v2306 = vrcp.pop %v2304
  %v2307 = vmul.f32 %v2296, %v2305
  %v2308 = vmul.f32 %v2298, %v2306
  %v2309 = vpack.c.bf16 %v2308, %v2307
  %v2311 = vsel %vm531, %v2309, 0
  %2313 = vmatprep.subr.bf16.mxu0 0
  %2314 = vmatpush1.bf16.msra.mxu0 %v2239
  %2315 = vmatprep.subr.bf16.mxu0 0
  %2316 = vmatpush1.bf16.msra.mxu0 0
  %2317 = vmatprep.subr.bf16.mxu0 0
  %2318 = vmatpush1.bf16.msra.mxu0 0
  %2319 = vmatprep.subr.bf16.mxu0 0
  %2320 = vmatpush1.bf16.msra.mxu0 0
  %2321 = vmatprep.subr.bf16.mxu0 0
  %2322 = vmatpush1.bf16.msra.mxu0 0
  %2323 = vmatprep.subr.bf16.mxu0 0
  %2324 = vmatpush1.bf16.msra.mxu0 0
  %2325 = vmatprep.subr.bf16.mxu0 0
  %2326 = vmatpush1.bf16.msra.mxu0 0
  %2327 = vmatprep.subr.bf16.mxu0 0
  %2328 = vmatpush1.bf16.msra.mxu0 0
  %2329 = vmatprep.subr.bf16.mxu0 0
  %2330 = vmatpush1.bf16.msra.mxu0 0
  %2331 = vmatprep.subr.bf16.mxu0 0
  %2332 = vmatpush1.bf16.msra.mxu0 0
  %2333 = vmatprep.subr.bf16.mxu0 0
  %2334 = vmatpush1.bf16.msra.mxu0 0
  %2335 = vmatprep.subr.bf16.mxu0 0
  %2336 = vmatpush1.bf16.msra.mxu0 0
  %2337 = vmatprep.subr.bf16.mxu0 0
  %2338 = vmatpush1.bf16.msra.mxu0 0
  %2339 = vmatprep.subr.bf16.mxu0 0
  %2340 = vmatpush1.bf16.msra.mxu0 0
  %2341 = vmatprep.subr.bf16.mxu0 0
  %2342 = vmatpush1.bf16.msra.mxu0 0
  %2343 = vmatprep.subr.bf16.mxu0 0
  %2344 = vmatpush1.bf16.msra.mxu0 0
  %2345 = vmatprep.mubr.bf16.mxu0 0
  %2346 = vmatmul.mubr.bf16.gmra.mrb[0].mxu0 %v2311
  %v2347 = vpop.f32.mrb[0].mxu0
  %v2348 = vadd.f32 0.0, %v2347
  %v2349 = vpop.f32.mrb[0].mxu0
  %v2350 = vpop.f32.mrb[0].mxu0
  %v2351 = vadd.f32 0.0, %v2350
  %v2352 = vpop.f32.mrb[0].mxu0
  %2353 = vdwg.mxu0
  %s2354 = scalar_lea.vmem %s7, 160
  %v2355 = vld [vmem:[%s2354] sm:$0xf]
  %v2356 = vld [vmem:[%s2354 + $0x4] sm:$0xf]
  %v2357 = vld [vmem:[%s2354 + $0x8] sm:$0xf]
  %v2358 = vld [vmem:[%s2354 + $0xc] sm:$0xf]
  %v2359 = vld [vmem:[%s2354 + $0x10] sm:$0xf]
  %v2360 = vld [vmem:[%s2354 + $0x14] sm:$0xf]
  %v2361 = vld [vmem:[%s2354 + $0x18] sm:$0xf]
  %v2362 = vld [vmem:[%s2354 + $0x1c] sm:$0xf]
  %v2371 = vunpack.c.l.b16 %v2355
  %v2372 = vunpack.c.l.b16 %v2356
  %v2373 = vunpack.c.l.b16 %v2357
  %v2374 = vunpack.c.l.b16 %v2358
  %v2375 = vunpack.c.l.b16 %v2359
  %v2376 = vunpack.c.l.b16 %v2360
  %v2377 = vunpack.c.l.b16 %v2361
  %v2378 = vunpack.c.l.b16 %v2362
  %v2379 = vpack.c.b16 %v2372, %v2371
  %v2380 = vpack.c.b16 %v2374, %v2373
  %v2381 = vpack.c.b16 %v2376, %v2375
  %v2382 = vpack.c.b16 %v2378, %v2377
  %2387 = vmatprep.subr.bf16.mxu0 0
  %2388 = vmatpush1.bf16.msra.mxu0 %v2379
  %2389 = vmatprep.subr.bf16.mxu0 0
  %2390 = vmatpush1.bf16.msra.mxu0 %v2380
  %2391 = vmatprep.subr.bf16.mxu0 0
  %2392 = vmatpush1.bf16.msra.mxu0 %v2381
  %2393 = vmatprep.subr.bf16.mxu0 0
  %2394 = vmatpush1.bf16.msra.mxu0 %v2382
  %2395 = vmatprep.subr.bf16.mxu0 0
  %2396 = vmatpush1.bf16.msra.mxu0 0
  %2397 = vmatprep.subr.bf16.mxu0 0
  %2398 = vmatpush1.bf16.msra.mxu0 0
  %2399 = vmatprep.subr.bf16.mxu0 0
  %2400 = vmatpush1.bf16.msra.mxu0 0
  %2401 = vmatprep.subr.bf16.mxu0 0
  %2402 = vmatpush1.bf16.msra.mxu0 0
  %2403 = vmatprep.subr.bf16.mxu0 0
  %2404 = vmatpush1.bf16.msra.mxu0 0
  %2405 = vmatprep.subr.bf16.mxu0 0
  %2406 = vmatpush1.bf16.msra.mxu0 0
  %2407 = vmatprep.subr.bf16.mxu0 0
  %2408 = vmatpush1.bf16.msra.mxu0 0
  %2409 = vmatprep.subr.bf16.mxu0 0
  %2410 = vmatpush1.bf16.msra.mxu0 0
  %2411 = vmatprep.subr.bf16.mxu0 0
  %2412 = vmatpush1.bf16.msra.mxu0 0
  %2413 = vmatprep.subr.bf16.mxu0 0
  %2414 = vmatpush1.bf16.msra.mxu0 0
  %2415 = vmatprep.subr.bf16.mxu0 0
  %2416 = vmatpush1.bf16.msra.mxu0 0
  %2417 = vmatprep.subr.bf16.mxu0 0
  %2418 = vmatpush1.bf16.msra.mxu0 0
  %2419 = vmatprep.mubr.bf16.mxu0 0
  %2420 = vmatmul.mubr.bf16.gmra.mrb[0].mxu0 %v2046
  %v2421 = vpop.f32.mrb[0].mxu0
  %v2422 = vadd.f32 0.0, %v2421
  %v2423 = vpop.f32.mrb[0].mxu0
  %v2424 = vpop.f32.mrb[0].mxu0
  %v2425 = vadd.f32 0.0, %v2424
  %v2426 = vpop.f32.mrb[0].mxu0
  %2427 = vdwg.mxu0
  %v2428 = vpack.c.bf16 %v2425, %v2422
  %s2429 = scalar_lea.vmem %s8, 160
  %v2430 = vld [vmem:[%s2429] sm:$0xf]
  %v2431 = vld [vmem:[%s2429 + $0x4] sm:$0xf]
  %v2432 = vld [vmem:[%s2429 + $0x8] sm:$0xf]
  %v2433 = vld [vmem:[%s2429 + $0xc] sm:$0xf]
  %v2434 = vld [vmem:[%s2429 + $0x10] sm:$0xf]
  %v2435 = vld [vmem:[%s2429 + $0x14] sm:$0xf]
  %v2436 = vld [vmem:[%s2429 + $0x18] sm:$0xf]
  %v2437 = vld [vmem:[%s2429 + $0x1c] sm:$0xf]
  %v2446 = vunpack.c.l.b16 %v2430
  %v2447 = vunpack.c.l.b16 %v2431
  %v2448 = vunpack.c.l.b16 %v2432
  %v2449 = vunpack.c.l.b16 %v2433
  %v2450 = vunpack.c.l.b16 %v2434
  %v2451 = vunpack.c.l.b16 %v2435
  %v2452 = vunpack.c.l.b16 %v2436
  %v2453 = vunpack.c.l.b16 %v2437
  %v2454 = vpack.c.b16 %v2447, %v2446
  %v2455 = vpack.c.b16 %v2449, %v2448
  %v2456 = vpack.c.b16 %v2451, %v2450
  %v2457 = vpack.c.b16 %v2453, %v2452
  %2462 = vmatprep.subr.bf16.mxu0 0
  %2463 = vmatpush1.bf16.msra.mxu0 %v2454
  %2464 = vmatprep.subr.bf16.mxu0 0
  %2465 = vmatpush1.bf16.msra.mxu0 %v2455
  %2466 = vmatprep.subr.bf16.mxu0 0
  %2467 = vmatpush1.bf16.msra.mxu0 %v2456
  %2468 = vmatprep.subr.bf16.mxu0 0
  %2469 = vmatpush1.bf16.msra.mxu0 %v2457
  %2470 = vmatprep.subr.bf16.mxu0 0
  %2471 = vmatpush1.bf16.msra.mxu0 0
  %2472 = vmatprep.subr.bf16.mxu0 0
  %2473 = vmatpush1.bf16.msra.mxu0 0
  %2474 = vmatprep.subr.bf16.mxu0 0
  %2475 = vmatpush1.bf16.msra.mxu0 0
  %2476 = vmatprep.subr.bf16.mxu0 0
  %2477 = vmatpush1.bf16.msra.mxu0 0
  %2478 = vmatprep.subr.bf16.mxu0 0
  %2479 = vmatpush1.bf16.msra.mxu0 0
  %2480 = vmatprep.subr.bf16.mxu0 0
  %2481 = vmatpush1.bf16.msra.mxu0 0
  %2482 = vmatprep.subr.bf16.mxu0 0
  %2483 = vmatpush1.bf16.msra.mxu0 0
  %2484 = vmatprep.subr.bf16.mxu0 0
  %2485 = vmatpush1.bf16.msra.mxu0 0
  %2486 = vmatprep.subr.bf16.mxu0 0
  %2487 = vmatpush1.bf16.msra.mxu0 0
  %2488 = vmatprep.subr.bf16.mxu0 0
  %2489 = vmatpush1.bf16.msra.mxu0 0
  %2490 = vmatprep.subr.bf16.mxu0 0
  %2491 = vmatpush1.bf16.msra.mxu0 0
  %2492 = vmatprep.subr.bf16.mxu0 0
  %2493 = vmatpush1.bf16.msra.mxu0 0
  %2494 = vmatprep.mubr.bf16.mxu0 0
  %2495 = vmatmul.mubr.bf16.gmra.mrb[0].mxu0 %v2046
  %v2496 = vpop.f32.mrb[0].mxu0
  %v2497 = vadd.f32 0.0, %v2496
  %v2498 = vpop.f32.mrb[0].mxu0
  %v2499 = vpop.f32.mrb[0].mxu0
  %v2500 = vadd.f32 0.0, %v2499
  %v2501 = vpop.f32.mrb[0].mxu0
  %2502 = vdwg.mxu0
  %v2503 = vpack.c.bf16 %v2500, %v2497
  %s2504 = scalar_lea.vmem %s9, 160
  %v2505 = vld [vmem:[%s2504] sm:$0xf]
  %v2506 = vld [vmem:[%s2504 + $0x4] sm:$0xf]
  %v2507 = vld [vmem:[%s2504 + $0x8] sm:$0xf]
  %v2508 = vld [vmem:[%s2504 + $0xc] sm:$0xf]
  %v2509 = vld [vmem:[%s2504 + $0x10] sm:$0xf]
  %v2510 = vld [vmem:[%s2504 + $0x14] sm:$0xf]
  %v2511 = vld [vmem:[%s2504 + $0x18] sm:$0xf]
  %v2512 = vld [vmem:[%s2504 + $0x1c] sm:$0xf]
  %v2521 = vunpack.c.l.b16 %v2505
  %v2522 = vunpack.c.l.b16 %v2506
  %v2523 = vunpack.c.l.b16 %v2507
  %v2524 = vunpack.c.l.b16 %v2508
  %v2525 = vunpack.c.l.b16 %v2509
  %v2526 = vunpack.c.l.b16 %v2510
  %v2527 = vunpack.c.l.b16 %v2511
  %v2528 = vunpack.c.l.b16 %v2512
  %v2529 = vpack.c.b16 %v2522, %v2521
  %v2530 = vpack.c.b16 %v2524, %v2523
  %v2531 = vpack.c.b16 %v2526, %v2525
  %v2532 = vpack.c.b16 %v2528, %v2527
  %2537 = vmatprep.subr.bf16.mxu0 0
  %2538 = vmatpush1.bf16.msra.mxu0 %v2529
  %2539 = vmatprep.subr.bf16.mxu0 0
  %2540 = vmatpush1.bf16.msra.mxu0 %v2530
  %2541 = vmatprep.subr.bf16.mxu0 0
  %2542 = vmatpush1.bf16.msra.mxu0 %v2531
  %2543 = vmatprep.subr.bf16.mxu0 0
  %2544 = vmatpush1.bf16.msra.mxu0 %v2532
  %2545 = vmatprep.subr.bf16.mxu0 0
  %2546 = vmatpush1.bf16.msra.mxu0 0
  %2547 = vmatprep.subr.bf16.mxu0 0
  %2548 = vmatpush1.bf16.msra.mxu0 0
  %2549 = vmatprep.subr.bf16.mxu0 0
  %2550 = vmatpush1.bf16.msra.mxu0 0
  %2551 = vmatprep.subr.bf16.mxu0 0
  %2552 = vmatpush1.bf16.msra.mxu0 0
  %2553 = vmatprep.subr.bf16.mxu0 0
  %2554 = vmatpush1.bf16.msra.mxu0 0
  %2555 = vmatprep.subr.bf16.mxu0 0
  %2556 = vmatpush1.bf16.msra.mxu0 0
  %2557 = vmatprep.subr.bf16.mxu0 0
  %2558 = vmatpush1.bf16.msra.mxu0 0
  %2559 = vmatprep.subr.bf16.mxu0 0
  %2560 = vmatpush1.bf16.msra.mxu0 0
  %2561 = vmatprep.subr.bf16.mxu0 0
  %2562 = vmatpush1.bf16.msra.mxu0 0
  %2563 = vmatprep.subr.bf16.mxu0 0
  %2564 = vmatpush1.bf16.msra.mxu0 0
  %2565 = vmatprep.subr.bf16.mxu0 0
  %2566 = vmatpush1.bf16.msra.mxu0 0
  %2567 = vmatprep.subr.bf16.mxu0 0
  %2568 = vmatpush1.bf16.msra.mxu0 0
  %2569 = vmatprep.mubr.bf16.mxu0 0
  %2570 = vmatmul.mubr.bf16.gmra.mrb[0].mxu0 %v2046
  %v2571 = vpop.f32.mrb[0].mxu0
  %v2572 = vadd.f32 0.0, %v2571
  %v2573 = vpop.f32.mrb[0].mxu0
  %v2574 = vpop.f32.mrb[0].mxu0
  %v2575 = vadd.f32 0.0, %v2574
  %v2576 = vpop.f32.mrb[0].mxu0
  %2577 = vdwg.mxu0
  %v2578 = vpack.c.bf16 %v2575, %v2572
  %v2580 = vsel %vm531, %v2428, 0
  %v2583 = vsel %vm531, %v2503, 0
  %2585 = vmatprep.subr.bf16.mxu0 0
  %2586 = vmatpush1.bf16.xpose.msra.mxu0 %v2583
  %2587 = vmatprep.subr.bf16.mxu0 0
  %2588 = vmatpush1.bf16.xpose.msra.mxu0 0
  %2589 = vmatprep.subr.bf16.mxu0 0
  %2590 = vmatpush1.bf16.xpose.msra.mxu0 0
  %2591 = vmatprep.subr.bf16.mxu0 0
  %2592 = vmatpush1.bf16.xpose.msra.mxu0 0
  %2593 = vmatprep.subr.bf16.mxu0 0
  %2594 = vmatpush1.bf16.xpose.msra.mxu0 0
  %2595 = vmatprep.subr.bf16.mxu0 0
  %2596 = vmatpush1.bf16.xpose.msra.mxu0 0
  %2597 = vmatprep.subr.bf16.mxu0 0
  %2598 = vmatpush1.bf16.xpose.msra.mxu0 0
  %2599 = vmatprep.subr.bf16.mxu0 0
  %2600 = vmatpush1.bf16.xpose.msra.mxu0 0
  %2601 = vmatprep.subr.bf16.mxu0 0
  %2602 = vmatpush1.bf16.xpose.msra.mxu0 0
  %2603 = vmatprep.subr.bf16.mxu0 0
  %2604 = vmatpush1.bf16.xpose.msra.mxu0 0
  %2605 = vmatprep.subr.bf16.mxu0 0
  %2606 = vmatpush1.bf16.xpose.msra.mxu0 0
  %2607 = vmatprep.subr.bf16.mxu0 0
  %2608 = vmatpush1.bf16.xpose.msra.mxu0 0
  %2609 = vmatprep.subr.bf16.mxu0 0
  %2610 = vmatpush1.bf16.xpose.msra.mxu0 0
  %2611 = vmatprep.subr.bf16.mxu0 0
  %2612 = vmatpush1.bf16.xpose.msra.mxu0 0
  %2613 = vmatprep.subr.bf16.mxu0 0
  %2614 = vmatpush1.bf16.xpose.msra.mxu0 0
  %2615 = vmatprep.subr.bf16.mxu0 0
  %2616 = vmatpush1.bf16.xpose.msra.mxu0 0
  %2617 = vmatprep.mubr.bf16.mxu0 0
  %2618 = vmatmul.mubr.bf16.gmra.mrb[0].mxu0 %v2580
  %v2619 = vpop.f32.mrb[0].mxu0
  %v2620 = vadd.f32 %v529, %v2619
  %v2621 = vpop.f32.mrb[0].mxu0
  %v2622 = vpop.f32.mrb[0].mxu0
  %v2623 = vadd.f32 %v529, %v2622
  %v2624 = vpop.f32.mrb[0].mxu0
  %2625 = vdwg.mxu0
  %v2626 = vsel %vm531, %v2620, -inf
  %2627 = vmax.xlane.f32.xlu0 %v2626
  %v2628 = vpop.xlane.xlu0 %2627
  %v2629 = vsel %vm531, %v2623, -inf
  %2630 = vmax.xlane.f32.xlu0 %v2629
  %v2631 = vpop.xlane.xlu0 %2630
  %v2632 = vsub.f32 %v2620, %v2628
  %v2633 = vsub.f32 %v2623, %v2631
  %v2634 = vmul.f32 %v2632, 1.442695
  %v2635 = vpow.pop %v2634
  %v2636 = vmul.f32 %v2633, 1.442695
  %v2637 = vpow.pop %v2636
  %v2638 = vsel %vm531, %v2635, 0.0
  %2639 = vadd.xlane.f32.xlu0 %v2638
  %v2640 = vpop.xlane.xlu0 %2639
  %v2641 = vsel %vm531, %v2637, 0.0
  %2642 = vadd.xlane.f32.xlu0 %v2641
  %v2643 = vpop.xlane.xlu0 %2642
  %v2644 = vrcp.pop %v2640
  %v2645 = vrcp.pop %v2643
  %v2646 = vmul.f32 %v2635, %v2644
  %v2647 = vmul.f32 %v2637, %v2645
  %v2648 = vpack.c.bf16 %v2647, %v2646
  %v2650 = vsel %vm531, %v2648, 0
  %2652 = vmatprep.subr.bf16.mxu0 0
  %2653 = vmatpush1.bf16.msra.mxu0 %v2578
  %2654 = vmatprep.subr.bf16.mxu0 0
  %2655 = vmatpush1.bf16.msra.mxu0 0
  %2656 = vmatprep.subr.bf16.mxu0 0
  %2657 = vmatpush1.bf16.msra.mxu0 0
  %2658 = vmatprep.subr.bf16.mxu0 0
  %2659 = vmatpush1.bf16.msra.mxu0 0
  %2660 = vmatprep.subr.bf16.mxu0 0
  %2661 = vmatpush1.bf16.msra.mxu0 0
  %2662 = vmatprep.subr.bf16.mxu0 0
  %2663 = vmatpush1.bf16.msra.mxu0 0
  %2664 = vmatprep.subr.bf16.mxu0 0
  %2665 = vmatpush1.bf16.msra.mxu0 0
  %2666 = vmatprep.subr.bf16.mxu0 0
  %2667 = vmatpush1.bf16.msra.mxu0 0
  %2668 = vmatprep.subr.bf16.mxu0 0
  %2669 = vmatpush1.bf16.msra.mxu0 0
  %2670 = vmatprep.subr.bf16.mxu0 0
  %2671 = vmatpush1.bf16.msra.mxu0 0
  %2672 = vmatprep.subr.bf16.mxu0 0
  %2673 = vmatpush1.bf16.msra.mxu0 0
  %2674 = vmatprep.subr.bf16.mxu0 0
  %2675 = vmatpush1.bf16.msra.mxu0 0
  %2676 = vmatprep.subr.bf16.mxu0 0
  %2677 = vmatpush1.bf16.msra.mxu0 0
  %2678 = vmatprep.subr.bf16.mxu0 0
  %2679 = vmatpush1.bf16.msra.mxu0 0
  %2680 = vmatprep.subr.bf16.mxu0 0
  %2681 = vmatpush1.bf16.msra.mxu0 0
  %2682 = vmatprep.subr.bf16.mxu0 0
  %2683 = vmatpush1.bf16.msra.mxu0 0
  %2684 = vmatprep.mubr.bf16.mxu0 0
  %2685 = vmatmul.mubr.bf16.gmra.mrb[0].mxu0 %v2650
  %v2686 = vpop.f32.mrb[0].mxu0
  %v2687 = vadd.f32 0.0, %v2686
  %v2688 = vpop.f32.mrb[0].mxu0
  %v2689 = vpop.f32.mrb[0].mxu0
  %v2690 = vadd.f32 0.0, %v2689
  %v2691 = vpop.f32.mrb[0].mxu0
  %2692 = vdwg.mxu0
  %s2693 = scalar_lea.vmem %s7, 192
  %v2694 = vld [vmem:[%s2693] sm:$0xf]
  %v2695 = vld [vmem:[%s2693 + $0x4] sm:$0xf]
  %v2696 = vld [vmem:[%s2693 + $0x8] sm:$0xf]
  %v2697 = vld [vmem:[%s2693 + $0xc] sm:$0xf]
  %v2698 = vld [vmem:[%s2693 + $0x10] sm:$0xf]
  %v2699 = vld [vmem:[%s2693 + $0x14] sm:$0xf]
  %v2700 = vld [vmem:[%s2693 + $0x18] sm:$0xf]
  %v2701 = vld [vmem:[%s2693 + $0x1c] sm:$0xf]
  %v2710 = vunpack.c.l.b16 %v2694
  %v2711 = vunpack.c.l.b16 %v2695
  %v2712 = vunpack.c.l.b16 %v2696
  %v2713 = vunpack.c.l.b16 %v2697
  %v2714 = vunpack.c.l.b16 %v2698
  %v2715 = vunpack.c.l.b16 %v2699
  %v2716 = vunpack.c.l.b16 %v2700
  %v2717 = vunpack.c.l.b16 %v2701
  %v2718 = vpack.c.b16 %v2711, %v2710
  %v2719 = vpack.c.b16 %v2713, %v2712
  %v2720 = vpack.c.b16 %v2715, %v2714
  %v2721 = vpack.c.b16 %v2717, %v2716
  %2726 = vmatprep.subr.bf16.mxu0 0
  %2727 = vmatpush1.bf16.msra.mxu0 %v2718
  %2728 = vmatprep.subr.bf16.mxu0 0
  %2729 = vmatpush1.bf16.msra.mxu0 %v2719
  %2730 = vmatprep.subr.bf16.mxu0 0
  %2731 = vmatpush1.bf16.msra.mxu0 %v2720
  %2732 = vmatprep.subr.bf16.mxu0 0
  %2733 = vmatpush1.bf16.msra.mxu0 %v2721
  %2734 = vmatprep.subr.bf16.mxu0 0
  %2735 = vmatpush1.bf16.msra.mxu0 0
  %2736 = vmatprep.subr.bf16.mxu0 0
  %2737 = vmatpush1.bf16.msra.mxu0 0
  %2738 = vmatprep.subr.bf16.mxu0 0
  %2739 = vmatpush1.bf16.msra.mxu0 0
  %2740 = vmatprep.subr.bf16.mxu0 0
  %2741 = vmatpush1.bf16.msra.mxu0 0
  %2742 = vmatprep.subr.bf16.mxu0 0
  %2743 = vmatpush1.bf16.msra.mxu0 0
  %2744 = vmatprep.subr.bf16.mxu0 0
  %2745 = vmatpush1.bf16.msra.mxu0 0
  %2746 = vmatprep.subr.bf16.mxu0 0
  %2747 = vmatpush1.bf16.msra.mxu0 0
  %2748 = vmatprep.subr.bf16.mxu0 0
  %2749 = vmatpush1.bf16.msra.mxu0 0
  %2750 = vmatprep.subr.bf16.mxu0 0
  %2751 = vmatpush1.bf16.msra.mxu0 0
  %2752 = vmatprep.subr.bf16.mxu0 0
  %2753 = vmatpush1.bf16.msra.mxu0 0
  %2754 = vmatprep.subr.bf16.mxu0 0
  %2755 = vmatpush1.bf16.msra.mxu0 0
  %2756 = vmatprep.subr.bf16.mxu0 0
  %2757 = vmatpush1.bf16.msra.mxu0 0
  %2758 = vmatprep.mubr.bf16.mxu0 0
  %2759 = vmatmul.mubr.bf16.gmra.mrb[0].mxu0 %v2046
  %v2760 = vpop.f32.mrb[0].mxu0
  %v2761 = vadd.f32 0.0, %v2760
  %v2762 = vpop.f32.mrb[0].mxu0
  %v2763 = vpop.f32.mrb[0].mxu0
  %v2764 = vadd.f32 0.0, %v2763
  %v2765 = vpop.f32.mrb[0].mxu0
  %2766 = vdwg.mxu0
  %v2767 = vpack.c.bf16 %v2764, %v2761
  %s2768 = scalar_lea.vmem %s8, 192
  %v2769 = vld [vmem:[%s2768] sm:$0xf]
  %v2770 = vld [vmem:[%s2768 + $0x4] sm:$0xf]
  %v2771 = vld [vmem:[%s2768 + $0x8] sm:$0xf]
  %v2772 = vld [vmem:[%s2768 + $0xc] sm:$0xf]
  %v2773 = vld [vmem:[%s2768 + $0x10] sm:$0xf]
  %v2774 = vld [vmem:[%s2768 + $0x14] sm:$0xf]
  %v2775 = vld [vmem:[%s2768 + $0x18] sm:$0xf]
  %v2776 = vld [vmem:[%s2768 + $0x1c] sm:$0xf]
  %v2785 = vunpack.c.l.b16 %v2769
  %v2786 = vunpack.c.l.b16 %v2770
  %v2787 = vunpack.c.l.b16 %v2771
  %v2788 = vunpack.c.l.b16 %v2772
  %v2789 = vunpack.c.l.b16 %v2773
  %v2790 = vunpack.c.l.b16 %v2774
  %v2791 = vunpack.c.l.b16 %v2775
  %v2792 = vunpack.c.l.b16 %v2776
  %v2793 = vpack.c.b16 %v2786, %v2785
  %v2794 = vpack.c.b16 %v2788, %v2787
  %v2795 = vpack.c.b16 %v2790, %v2789
  %v2796 = vpack.c.b16 %v2792, %v2791
  %2801 = vmatprep.subr.bf16.mxu0 0
  %2802 = vmatpush1.bf16.msra.mxu0 %v2793
  %2803 = vmatprep.subr.bf16.mxu0 0
  %2804 = vmatpush1.bf16.msra.mxu0 %v2794
  %2805 = vmatprep.subr.bf16.mxu0 0
  %2806 = vmatpush1.bf16.msra.mxu0 %v2795
  %2807 = vmatprep.subr.bf16.mxu0 0
  %2808 = vmatpush1.bf16.msra.mxu0 %v2796
  %2809 = vmatprep.subr.bf16.mxu0 0
  %2810 = vmatpush1.bf16.msra.mxu0 0
  %2811 = vmatprep.subr.bf16.mxu0 0
  %2812 = vmatpush1.bf16.msra.mxu0 0
  %2813 = vmatprep.subr.bf16.mxu0 0
  %2814 = vmatpush1.bf16.msra.mxu0 0
  %2815 = vmatprep.subr.bf16.mxu0 0
  %2816 = vmatpush1.bf16.msra.mxu0 0
  %2817 = vmatprep.subr.bf16.mxu0 0
  %2818 = vmatpush1.bf16.msra.mxu0 0
  %2819 = vmatprep.subr.bf16.mxu0 0
  %2820 = vmatpush1.bf16.msra.mxu0 0
  %2821 = vmatprep.subr.bf16.mxu0 0
  %2822 = vmatpush1.bf16.msra.mxu0 0
  %2823 = vmatprep.subr.bf16.mxu0 0
  %2824 = vmatpush1.bf16.msra.mxu0 0
  %2825 = vmatprep.subr.bf16.mxu0 0
  %2826 = vmatpush1.bf16.msra.mxu0 0
  %2827 = vmatprep.subr.bf16.mxu0 0
  %2828 = vmatpush1.bf16.msra.mxu0 0
  %2829 = vmatprep.subr.bf16.mxu0 0
  %2830 = vmatpush1.bf16.msra.mxu0 0
  %2831 = vmatprep.subr.bf16.mxu0 0
  %2832 = vmatpush1.bf16.msra.mxu0 0
  %2833 = vmatprep.mubr.bf16.mxu0 0
  %2834 = vmatmul.mubr.bf16.gmra.mrb[0].mxu0 %v2046
  %v2835 = vpop.f32.mrb[0].mxu0
  %v2836 = vadd.f32 0.0, %v2835
  %v2837 = vpop.f32.mrb[0].mxu0
  %v2838 = vpop.f32.mrb[0].mxu0
  %v2839 = vadd.f32 0.0, %v2838
  %v2840 = vpop.f32.mrb[0].mxu0
  %2841 = vdwg.mxu0
  %v2842 = vpack.c.bf16 %v2839, %v2836
  %s2843 = scalar_lea.vmem %s9, 192
  %v2844 = vld [vmem:[%s2843] sm:$0xf]
  %v2845 = vld [vmem:[%s2843 + $0x4] sm:$0xf]
  %v2846 = vld [vmem:[%s2843 + $0x8] sm:$0xf]
  %v2847 = vld [vmem:[%s2843 + $0xc] sm:$0xf]
  %v2848 = vld [vmem:[%s2843 + $0x10] sm:$0xf]
  %v2849 = vld [vmem:[%s2843 + $0x14] sm:$0xf]
  %v2850 = vld [vmem:[%s2843 + $0x18] sm:$0xf]
  %v2851 = vld [vmem:[%s2843 + $0x1c] sm:$0xf]
  %v2860 = vunpack.c.l.b16 %v2844
  %v2861 = vunpack.c.l.b16 %v2845
  %v2862 = vunpack.c.l.b16 %v2846
  %v2863 = vunpack.c.l.b16 %v2847
  %v2864 = vunpack.c.l.b16 %v2848
  %v2865 = vunpack.c.l.b16 %v2849
  %v2866 = vunpack.c.l.b16 %v2850
  %v2867 = vunpack.c.l.b16 %v2851
  %v2868 = vpack.c.b16 %v2861, %v2860
  %v2869 = vpack.c.b16 %v2863, %v2862
  %v2870 = vpack.c.b16 %v2865, %v2864
  %v2871 = vpack.c.b16 %v2867, %v2866
  %2876 = vmatprep.subr.bf16.mxu0 0
  %2877 = vmatpush1.bf16.msra.mxu0 %v2868
  %2878 = vmatprep.subr.bf16.mxu0 0
  %2879 = vmatpush1.bf16.msra.mxu0 %v2869
  %2880 = vmatprep.subr.bf16.mxu0 0
  %2881 = vmatpush1.bf16.msra.mxu0 %v2870
  %2882 = vmatprep.subr.bf16.mxu0 0
  %2883 = vmatpush1.bf16.msra.mxu0 %v2871
  %2884 = vmatprep.subr.bf16.mxu0 0
  %2885 = vmatpush1.bf16.msra.mxu0 0
  %2886 = vmatprep.subr.bf16.mxu0 0
  %2887 = vmatpush1.bf16.msra.mxu0 0
  %2888 = vmatprep.subr.bf16.mxu0 0
  %2889 = vmatpush1.bf16.msra.mxu0 0
  %2890 = vmatprep.subr.bf16.mxu0 0
  %2891 = vmatpush1.bf16.msra.mxu0 0
  %2892 = vmatprep.subr.bf16.mxu0 0
  %2893 = vmatpush1.bf16.msra.mxu0 0
  %2894 = vmatprep.subr.bf16.mxu0 0
  %2895 = vmatpush1.bf16.msra.mxu0 0
  %2896 = vmatprep.subr.bf16.mxu0 0
  %2897 = vmatpush1.bf16.msra.mxu0 0
  %2898 = vmatprep.subr.bf16.mxu0 0
  %2899 = vmatpush1.bf16.msra.mxu0 0
  %2900 = vmatprep.subr.bf16.mxu0 0
  %2901 = vmatpush1.bf16.msra.mxu0 0
  %2902 = vmatprep.subr.bf16.mxu0 0
  %2903 = vmatpush1.bf16.msra.mxu0 0
  %2904 = vmatprep.subr.bf16.mxu0 0
  %2905 = vmatpush1.bf16.msra.mxu0 0
  %2906 = vmatprep.subr.bf16.mxu0 0
  %2907 = vmatpush1.bf16.msra.mxu0 0
  %2908 = vmatprep.mubr.bf16.mxu0 0
  %2909 = vmatmul.mubr.bf16.gmra.mrb[0].mxu0 %v2046
  %v2910 = vpop.f32.mrb[0].mxu0
  %v2911 = vadd.f32 0.0, %v2910
  %v2912 = vpop.f32.mrb[0].mxu0
  %v2913 = vpop.f32.mrb[0].mxu0
  %v2914 = vadd.f32 0.0, %v2913
  %v2915 = vpop.f32.mrb[0].mxu0
  %2916 = vdwg.mxu0
  %v2917 = vpack.c.bf16 %v2914, %v2911
  %v2919 = vsel %vm531, %v2767, 0
  %v2922 = vsel %vm531, %v2842, 0
  %2924 = vmatprep.subr.bf16.mxu0 0
  %2925 = vmatpush1.bf16.xpose.msra.mxu0 %v2922
  %2926 = vmatprep.subr.bf16.mxu0 0
  %2927 = vmatpush1.bf16.xpose.msra.mxu0 0
  %2928 = vmatprep.subr.bf16.mxu0 0
  %2929 = vmatpush1.bf16.xpose.msra.mxu0 0
  %2930 = vmatprep.subr.bf16.mxu0 0
  %2931 = vmatpush1.bf16.xpose.msra.mxu0 0
  %2932 = vmatprep.subr.bf16.mxu0 0
  %2933 = vmatpush1.bf16.xpose.msra.mxu0 0
  %2934 = vmatprep.subr.bf16.mxu0 0
  %2935 = vmatpush1.bf16.xpose.msra.mxu0 0
  %2936 = vmatprep.subr.bf16.mxu0 0
  %2937 = vmatpush1.bf16.xpose.msra.mxu0 0
  %2938 = vmatprep.subr.bf16.mxu0 0
  %2939 = vmatpush1.bf16.xpose.msra.mxu0 0
  %2940 = vmatprep.subr.bf16.mxu0 0
  %2941 = vmatpush1.bf16.xpose.msra.mxu0 0
  %2942 = vmatprep.subr.bf16.mxu0 0
  %2943 = vmatpush1.bf16.xpose.msra.mxu0 0
  %2944 = vmatprep.subr.bf16.mxu0 0
  %2945 = vmatpush1.bf16.xpose.msra.mxu0 0
  %2946 = vmatprep.subr.bf16.mxu0 0
  %2947 = vmatpush1.bf16.xpose.msra.mxu0 0
  %2948 = vmatprep.subr.bf16.mxu0 0
  %2949 = vmatpush1.bf16.xpose.msra.mxu0 0
  %2950 = vmatprep.subr.bf16.mxu0 0
  %2951 = vmatpush1.bf16.xpose.msra.mxu0 0
  %2952 = vmatprep.subr.bf16.mxu0 0
  %2953 = vmatpush1.bf16.xpose.msra.mxu0 0
  %2954 = vmatprep.subr.bf16.mxu0 0
  %2955 = vmatpush1.bf16.xpose.msra.mxu0 0
  %2956 = vmatprep.mubr.bf16.mxu0 0
  %2957 = vmatmul.mubr.bf16.gmra.mrb[0].mxu0 %v2919
  %v2958 = vpop.f32.mrb[0].mxu0
  %v2959 = vadd.f32 %v529, %v2958
  %v2960 = vpop.f32.mrb[0].mxu0
  %v2961 = vpop.f32.mrb[0].mxu0
  %v2962 = vadd.f32 %v529, %v2961
  %v2963 = vpop.f32.mrb[0].mxu0
  %2964 = vdwg.mxu0
  %v2965 = vsel %vm531, %v2959, -inf
  %2966 = vmax.xlane.f32.xlu0 %v2965
  %v2967 = vpop.xlane.xlu0 %2966
  %v2968 = vsel %vm531, %v2962, -inf
  %2969 = vmax.xlane.f32.xlu0 %v2968
  %v2970 = vpop.xlane.xlu0 %2969
  %v2971 = vsub.f32 %v2959, %v2967
  %v2972 = vsub.f32 %v2962, %v2970
  %v2973 = vmul.f32 %v2971, 1.442695
  %v2974 = vpow.pop %v2973
  %v2975 = vmul.f32 %v2972, 1.442695
  %v2976 = vpow.pop %v2975
  %v2977 = vsel %vm531, %v2974, 0.0
  %2978 = vadd.xlane.f32.xlu0 %v2977
  %v2979 = vpop.xlane.xlu0 %2978
  %v2980 = vsel %vm531, %v2976, 0.0
  %2981 = vadd.xlane.f32.xlu0 %v2980
  %v2982 = vpop.xlane.xlu0 %2981
  %v2983 = vrcp.pop %v2979
  %v2984 = vrcp.pop %v2982
  %v2985 = vmul.f32 %v2974, %v2983
  %v2986 = vmul.f32 %v2976, %v2984
  %v2987 = vpack.c.bf16 %v2986, %v2985
  %v2989 = vsel %vm531, %v2987, 0
  %2991 = vmatprep.subr.bf16.mxu0 0
  %2992 = vmatpush1.bf16.msra.mxu0 %v2917
  %2993 = vmatprep.subr.bf16.mxu0 0
  %2994 = vmatpush1.bf16.msra.mxu0 0
  %2995 = vmatprep.subr.bf16.mxu0 0
  %2996 = vmatpush1.bf16.msra.mxu0 0
  %2997 = vmatprep.subr.bf16.mxu0 0
  %2998 = vmatpush1.bf16.msra.mxu0 0
  %2999 = vmatprep.subr.bf16.mxu0 0
  %3000 = vmatpush1.bf16.msra.mxu0 0
  %3001 = vmatprep.subr.bf16.mxu0 0
  %3002 = vmatpush1.bf16.msra.mxu0 0
  %3003 = vmatprep.subr.bf16.mxu0 0
  %3004 = vmatpush1.bf16.msra.mxu0 0
  %3005 = vmatprep.subr.bf16.mxu0 0
  %3006 = vmatpush1.bf16.msra.mxu0 0
  %3007 = vmatprep.subr.bf16.mxu0 0
  %3008 = vmatpush1.bf16.msra.mxu0 0
  %3009 = vmatprep.subr.bf16.mxu0 0
  %3010 = vmatpush1.bf16.msra.mxu0 0
  %3011 = vmatprep.subr.bf16.mxu0 0
  %3012 = vmatpush1.bf16.msra.mxu0 0
  %3013 = vmatprep.subr.bf16.mxu0 0
  %3014 = vmatpush1.bf16.msra.mxu0 0
  %3015 = vmatprep.subr.bf16.mxu0 0
  %3016 = vmatpush1.bf16.msra.mxu0 0
  %3017 = vmatprep.subr.bf16.mxu0 0
  %3018 = vmatpush1.bf16.msra.mxu0 0
  %3019 = vmatprep.subr.bf16.mxu0 0
  %3020 = vmatpush1.bf16.msra.mxu0 0
  %3021 = vmatprep.subr.bf16.mxu0 0
  %3022 = vmatpush1.bf16.msra.mxu0 0
  %3023 = vmatprep.mubr.bf16.mxu0 0
  %3024 = vmatmul.mubr.bf16.gmra.mrb[0].mxu0 %v2989
  %v3025 = vpop.f32.mrb[0].mxu0
  %v3026 = vadd.f32 0.0, %v3025
  %v3027 = vpop.f32.mrb[0].mxu0
  %v3028 = vpop.f32.mrb[0].mxu0
  %v3029 = vadd.f32 0.0, %v3028
  %v3030 = vpop.f32.mrb[0].mxu0
  %3031 = vdwg.mxu0
  %s3032 = scalar_lea.vmem %s7, 224
  %v3033 = vld [vmem:[%s3032] sm:$0xf]
  %v3034 = vld [vmem:[%s3032 + $0x4] sm:$0xf]
  %v3035 = vld [vmem:[%s3032 + $0x8] sm:$0xf]
  %v3036 = vld [vmem:[%s3032 + $0xc] sm:$0xf]
  %v3037 = vld [vmem:[%s3032 + $0x10] sm:$0xf]
  %v3038 = vld [vmem:[%s3032 + $0x14] sm:$0xf]
  %v3039 = vld [vmem:[%s3032 + $0x18] sm:$0xf]
  %v3040 = vld [vmem:[%s3032 + $0x1c] sm:$0xf]
  %v3049 = vunpack.c.l.b16 %v3033
  %v3050 = vunpack.c.l.b16 %v3034
  %v3051 = vunpack.c.l.b16 %v3035
  %v3052 = vunpack.c.l.b16 %v3036
  %v3053 = vunpack.c.l.b16 %v3037
  %v3054 = vunpack.c.l.b16 %v3038
  %v3055 = vunpack.c.l.b16 %v3039
  %v3056 = vunpack.c.l.b16 %v3040
  %v3057 = vpack.c.b16 %v3050, %v3049
  %v3058 = vpack.c.b16 %v3052, %v3051
  %v3059 = vpack.c.b16 %v3054, %v3053
  %v3060 = vpack.c.b16 %v3056, %v3055
  %3065 = vmatprep.subr.bf16.mxu0 0
  %3066 = vmatpush1.bf16.msra.mxu0 %v3057
  %3067 = vmatprep.subr.bf16.mxu0 0
  %3068 = vmatpush1.bf16.msra.mxu0 %v3058
  %3069 = vmatprep.subr.bf16.mxu0 0
  %3070 = vmatpush1.bf16.msra.mxu0 %v3059
  %3071 = vmatprep.subr.bf16.mxu0 0
  %3072 = vmatpush1.bf16.msra.mxu0 %v3060
  %3073 = vmatprep.subr.bf16.mxu0 0
  %3074 = vmatpush1.bf16.msra.mxu0 0
  %3075 = vmatprep.subr.bf16.mxu0 0
  %3076 = vmatpush1.bf16.msra.mxu0 0
  %3077 = vmatprep.subr.bf16.mxu0 0
  %3078 = vmatpush1.bf16.msra.mxu0 0
  %3079 = vmatprep.subr.bf16.mxu0 0
  %3080 = vmatpush1.bf16.msra.mxu0 0
  %3081 = vmatprep.subr.bf16.mxu0 0
  %3082 = vmatpush1.bf16.msra.mxu0 0
  %3083 = vmatprep.subr.bf16.mxu0 0
  %3084 = vmatpush1.bf16.msra.mxu0 0
  %3085 = vmatprep.subr.bf16.mxu0 0
  %3086 = vmatpush1.bf16.msra.mxu0 0
  %3087 = vmatprep.subr.bf16.mxu0 0
  %3088 = vmatpush1.bf16.msra.mxu0 0
  %3089 = vmatprep.subr.bf16.mxu0 0
  %3090 = vmatpush1.bf16.msra.mxu0 0
  %3091 = vmatprep.subr.bf16.mxu0 0
  %3092 = vmatpush1.bf16.msra.mxu0 0
  %3093 = vmatprep.subr.bf16.mxu0 0
  %3094 = vmatpush1.bf16.msra.mxu0 0
  %3095 = vmatprep.subr.bf16.mxu0 0
  %3096 = vmatpush1.bf16.msra.mxu0 0
  %3097 = vmatprep.mubr.bf16.mxu0 0
  %3098 = vmatmul.mubr.bf16.gmra.mrb[0].mxu0 %v2046
  %v3099 = vpop.f32.mrb[0].mxu0
  %v3100 = vadd.f32 0.0, %v3099
  %v3101 = vpop.f32.mrb[0].mxu0
  %v3102 = vpop.f32.mrb[0].mxu0
  %v3103 = vadd.f32 0.0, %v3102
  %v3104 = vpop.f32.mrb[0].mxu0
  %3105 = vdwg.mxu0
  %v3106 = vpack.c.bf16 %v3103, %v3100
  %s3107 = scalar_lea.vmem %s8, 224
  %v3108 = vld [vmem:[%s3107] sm:$0xf]
  %v3109 = vld [vmem:[%s3107 + $0x4] sm:$0xf]
  %v3110 = vld [vmem:[%s3107 + $0x8] sm:$0xf]
  %v3111 = vld [vmem:[%s3107 + $0xc] sm:$0xf]
  %v3112 = vld [vmem:[%s3107 + $0x10] sm:$0xf]
  %v3113 = vld [vmem:[%s3107 + $0x14] sm:$0xf]
  %v3114 = vld [vmem:[%s3107 + $0x18] sm:$0xf]
  %v3115 = vld [vmem:[%s3107 + $0x1c] sm:$0xf]
  %v3124 = vunpack.c.l.b16 %v3108
  %v3125 = vunpack.c.l.b16 %v3109
  %v3126 = vunpack.c.l.b16 %v3110
  %v3127 = vunpack.c.l.b16 %v3111
  %v3128 = vunpack.c.l.b16 %v3112
  %v3129 = vunpack.c.l.b16 %v3113
  %v3130 = vunpack.c.l.b16 %v3114
  %v3131 = vunpack.c.l.b16 %v3115
  %v3132 = vpack.c.b16 %v3125, %v3124
  %v3133 = vpack.c.b16 %v3127, %v3126
  %v3134 = vpack.c.b16 %v3129, %v3128
  %v3135 = vpack.c.b16 %v3131, %v3130
  %3140 = vmatprep.subr.bf16.mxu0 0
  %3141 = vmatpush1.bf16.msra.mxu0 %v3132
  %3142 = vmatprep.subr.bf16.mxu0 0
  %3143 = vmatpush1.bf16.msra.mxu0 %v3133
  %3144 = vmatprep.subr.bf16.mxu0 0
  %3145 = vmatpush1.bf16.msra.mxu0 %v3134
  %3146 = vmatprep.subr.bf16.mxu0 0
  %3147 = vmatpush1.bf16.msra.mxu0 %v3135
  %3148 = vmatprep.subr.bf16.mxu0 0
  %3149 = vmatpush1.bf16.msra.mxu0 0
  %3150 = vmatprep.subr.bf16.mxu0 0
  %3151 = vmatpush1.bf16.msra.mxu0 0
  %3152 = vmatprep.subr.bf16.mxu0 0
  %3153 = vmatpush1.bf16.msra.mxu0 0
  %3154 = vmatprep.subr.bf16.mxu0 0
  %3155 = vmatpush1.bf16.msra.mxu0 0
  %3156 = vmatprep.subr.bf16.mxu0 0
  %3157 = vmatpush1.bf16.msra.mxu0 0
  %3158 = vmatprep.subr.bf16.mxu0 0
  %3159 = vmatpush1.bf16.msra.mxu0 0
  %3160 = vmatprep.subr.bf16.mxu0 0
  %3161 = vmatpush1.bf16.msra.mxu0 0
  %3162 = vmatprep.subr.bf16.mxu0 0
  %3163 = vmatpush1.bf16.msra.mxu0 0
  %3164 = vmatprep.subr.bf16.mxu0 0
  %3165 = vmatpush1.bf16.msra.mxu0 0
  %3166 = vmatprep.subr.bf16.mxu0 0
  %3167 = vmatpush1.bf16.msra.mxu0 0
  %3168 = vmatprep.subr.bf16.mxu0 0
  %3169 = vmatpush1.bf16.msra.mxu0 0
  %3170 = vmatprep.subr.bf16.mxu0 0
  %3171 = vmatpush1.bf16.msra.mxu0 0
  %3172 = vmatprep.mubr.bf16.mxu0 0
  %3173 = vmatmul.mubr.bf16.gmra.mrb[0].mxu0 %v2046
  %v3174 = vpop.f32.mrb[0].mxu0
  %v3175 = vadd.f32 0.0, %v3174
  %v3176 = vpop.f32.mrb[0].mxu0
  %v3177 = vpop.f32.mrb[0].mxu0
  %v3178 = vadd.f32 0.0, %v3177
  %v3179 = vpop.f32.mrb[0].mxu0
  %3180 = vdwg.mxu0
  %v3181 = vpack.c.bf16 %v3178, %v3175
  %s3182 = scalar_lea.vmem %s9, 224
  %v3183 = vld [vmem:[%s3182] sm:$0xf]
  %v3184 = vld [vmem:[%s3182 + $0x4] sm:$0xf]
  %v3185 = vld [vmem:[%s3182 + $0x8] sm:$0xf]
  %v3186 = vld [vmem:[%s3182 + $0xc] sm:$0xf]
  %v3187 = vld [vmem:[%s3182 + $0x10] sm:$0xf]
  %v3188 = vld [vmem:[%s3182 + $0x14] sm:$0xf]
  %v3189 = vld [vmem:[%s3182 + $0x18] sm:$0xf]
  %v3190 = vld [vmem:[%s3182 + $0x1c] sm:$0xf]
  %v3199 = vunpack.c.l.b16 %v3183
  %v3200 = vunpack.c.l.b16 %v3184
  %v3201 = vunpack.c.l.b16 %v3185
  %v3202 = vunpack.c.l.b16 %v3186
  %v3203 = vunpack.c.l.b16 %v3187
  %v3204 = vunpack.c.l.b16 %v3188
  %v3205 = vunpack.c.l.b16 %v3189
  %v3206 = vunpack.c.l.b16 %v3190
  %v3207 = vpack.c.b16 %v3200, %v3199
  %v3208 = vpack.c.b16 %v3202, %v3201
  %v3209 = vpack.c.b16 %v3204, %v3203
  %v3210 = vpack.c.b16 %v3206, %v3205
  %3215 = vmatprep.subr.bf16.mxu0 0
  %3216 = vmatpush1.bf16.msra.mxu0 %v3207
  %3217 = vmatprep.subr.bf16.mxu0 0
  %3218 = vmatpush1.bf16.msra.mxu0 %v3208
  %3219 = vmatprep.subr.bf16.mxu0 0
  %3220 = vmatpush1.bf16.msra.mxu0 %v3209
  %3221 = vmatprep.subr.bf16.mxu0 0
  %3222 = vmatpush1.bf16.msra.mxu0 %v3210
  %3223 = vmatprep.subr.bf16.mxu0 0
  %3224 = vmatpush1.bf16.msra.mxu0 0
  %3225 = vmatprep.subr.bf16.mxu0 0
  %3226 = vmatpush1.bf16.msra.mxu0 0
  %3227 = vmatprep.subr.bf16.mxu0 0
  %3228 = vmatpush1.bf16.msra.mxu0 0
  %3229 = vmatprep.subr.bf16.mxu0 0
  %3230 = vmatpush1.bf16.msra.mxu0 0
  %3231 = vmatprep.subr.bf16.mxu0 0
  %3232 = vmatpush1.bf16.msra.mxu0 0
  %3233 = vmatprep.subr.bf16.mxu0 0
  %3234 = vmatpush1.bf16.msra.mxu0 0
  %3235 = vmatprep.subr.bf16.mxu0 0
  %3236 = vmatpush1.bf16.msra.mxu0 0
  %3237 = vmatprep.subr.bf16.mxu0 0
  %3238 = vmatpush1.bf16.msra.mxu0 0
  %3239 = vmatprep.subr.bf16.mxu0 0
  %3240 = vmatpush1.bf16.msra.mxu0 0
  %3241 = vmatprep.subr.bf16.mxu0 0
  %3242 = vmatpush1.bf16.msra.mxu0 0
  %3243 = vmatprep.subr.bf16.mxu0 0
  %3244 = vmatpush1.bf16.msra.mxu0 0
  %3245 = vmatprep.subr.bf16.mxu0 0
  %3246 = vmatpush1.bf16.msra.mxu0 0
  %3247 = vmatprep.mubr.bf16.mxu0 0
  %3248 = vmatmul.mubr.bf16.gmra.mrb[0].mxu0 %v2046
  %v3249 = vpop.f32.mrb[0].mxu0
  %v3250 = vadd.f32 0.0, %v3249
  %v3251 = vpop.f32.mrb[0].mxu0
  %v3252 = vpop.f32.mrb[0].mxu0
  %v3253 = vadd.f32 0.0, %v3252
  %v3254 = vpop.f32.mrb[0].mxu0
  %3255 = vdwg.mxu0
  %v3256 = vpack.c.bf16 %v3253, %v3250
  %v3258 = vsel %vm531, %v3106, 0
  %v3261 = vsel %vm531, %v3181, 0
  %3263 = vmatprep.subr.bf16.mxu0 0
  %3264 = vmatpush1.bf16.xpose.msra.mxu0 %v3261
  %3265 = vmatprep.subr.bf16.mxu0 0
  %3266 = vmatpush1.bf16.xpose.msra.mxu0 0
  %3267 = vmatprep.subr.bf16.mxu0 0
  %3268 = vmatpush1.bf16.xpose.msra.mxu0 0
  %3269 = vmatprep.subr.bf16.mxu0 0
  %3270 = vmatpush1.bf16.xpose.msra.mxu0 0
  %3271 = vmatprep.subr.bf16.mxu0 0
  %3272 = vmatpush1.bf16.xpose.msra.mxu0 0
  %3273 = vmatprep.subr.bf16.mxu0 0
  %3274 = vmatpush1.bf16.xpose.msra.mxu0 0
  %3275 = vmatprep.subr.bf16.mxu0 0
  %3276 = vmatpush1.bf16.xpose.msra.mxu0 0
  %3277 = vmatprep.subr.bf16.mxu0 0
  %3278 = vmatpush1.bf16.xpose.msra.mxu0 0
  %3279 = vmatprep.subr.bf16.mxu0 0
  %3280 = vmatpush1.bf16.xpose.msra.mxu0 0
  %3281 = vmatprep.subr.bf16.mxu0 0
  %3282 = vmatpush1.bf16.xpose.msra.mxu0 0
  %3283 = vmatprep.subr.bf16.mxu0 0
  %3284 = vmatpush1.bf16.xpose.msra.mxu0 0
  %3285 = vmatprep.subr.bf16.mxu0 0
  %3286 = vmatpush1.bf16.xpose.msra.mxu0 0
  %3287 = vmatprep.subr.bf16.mxu0 0
  %3288 = vmatpush1.bf16.xpose.msra.mxu0 0
  %3289 = vmatprep.subr.bf16.mxu0 0
  %3290 = vmatpush1.bf16.xpose.msra.mxu0 0
  %3291 = vmatprep.subr.bf16.mxu0 0
  %3292 = vmatpush1.bf16.xpose.msra.mxu0 0
  %3293 = vmatprep.subr.bf16.mxu0 0
  %3294 = vmatpush1.bf16.xpose.msra.mxu0 0
  %3295 = vmatprep.mubr.bf16.mxu0 0
  %3296 = vmatmul.mubr.bf16.gmra.mrb[0].mxu0 %v3258
  %v3297 = vpop.f32.mrb[0].mxu0
  %v3298 = vadd.f32 %v529, %v3297
  %v3299 = vpop.f32.mrb[0].mxu0
  %v3300 = vpop.f32.mrb[0].mxu0
  %v3301 = vadd.f32 %v529, %v3300
  %v3302 = vpop.f32.mrb[0].mxu0
  %3303 = vdwg.mxu0
  %v3304 = vsel %vm531, %v3298, -inf
  %3305 = vmax.xlane.f32.xlu0 %v3304
  %v3306 = vpop.xlane.xlu0 %3305
  %v3307 = vsel %vm531, %v3301, -inf
  %3308 = vmax.xlane.f32.xlu0 %v3307
  %v3309 = vpop.xlane.xlu0 %3308
  %v3310 = vsub.f32 %v3298, %v3306
  %v3311 = vsub.f32 %v3301, %v3309
  %v3312 = vmul.f32 %v3310, 1.442695
  %v3313 = vpow.pop %v3312
  %v3314 = vmul.f32 %v3311, 1.442695
  %v3315 = vpow.pop %v3314
  %v3316 = vsel %vm531, %v3313, 0.0
  %3317 = vadd.xlane.f32.xlu0 %v3316
  %v3318 = vpop.xlane.xlu0 %3317
  %v3319 = vsel %vm531, %v3315, 0.0
  %3320 = vadd.xlane.f32.xlu0 %v3319
  %v3321 = vpop.xlane.xlu0 %3320
  %v3322 = vrcp.pop %v3318
  %v3323 = vrcp.pop %v3321
  %v3324 = vmul.f32 %v3313, %v3322
  %v3325 = vmul.f32 %v3315, %v3323
  %v3326 = vpack.c.bf16 %v3325, %v3324
  %v3328 = vsel %vm531, %v3326, 0
  %3330 = vmatprep.subr.bf16.mxu0 0
  %3331 = vmatpush1.bf16.msra.mxu0 %v3256
  %3332 = vmatprep.subr.bf16.mxu0 0
  %3333 = vmatpush1.bf16.msra.mxu0 0
  %3334 = vmatprep.subr.bf16.mxu0 0
  %3335 = vmatpush1.bf16.msra.mxu0 0
  %3336 = vmatprep.subr.bf16.mxu0 0
  %3337 = vmatpush1.bf16.msra.mxu0 0
  %3338 = vmatprep.subr.bf16.mxu0 0
  %3339 = vmatpush1.bf16.msra.mxu0 0
  %3340 = vmatprep.subr.bf16.mxu0 0
  %3341 = vmatpush1.bf16.msra.mxu0 0
  %3342 = vmatprep.subr.bf16.mxu0 0
  %3343 = vmatpush1.bf16.msra.mxu0 0
  %3344 = vmatprep.subr.bf16.mxu0 0
  %3345 = vmatpush1.bf16.msra.mxu0 0
  %3346 = vmatprep.subr.bf16.mxu0 0
  %3347 = vmatpush1.bf16.msra.mxu0 0
  %3348 = vmatprep.subr.bf16.mxu0 0
  %3349 = vmatpush1.bf16.msra.mxu0 0
  %3350 = vmatprep.subr.bf16.mxu0 0
  %3351 = vmatpush1.bf16.msra.mxu0 0
  %3352 = vmatprep.subr.bf16.mxu0 0
  %3353 = vmatpush1.bf16.msra.mxu0 0
  %3354 = vmatprep.subr.bf16.mxu0 0
  %3355 = vmatpush1.bf16.msra.mxu0 0
  %3356 = vmatprep.subr.bf16.mxu0 0
  %3357 = vmatpush1.bf16.msra.mxu0 0
  %3358 = vmatprep.subr.bf16.mxu0 0
  %3359 = vmatpush1.bf16.msra.mxu0 0
  %3360 = vmatprep.subr.bf16.mxu0 0
  %3361 = vmatpush1.bf16.msra.mxu0 0
  %3362 = vmatprep.mubr.bf16.mxu0 0
  %3363 = vmatmul.mubr.bf16.gmra.mrb[0].mxu0 %v3328
  %v3364 = vpop.f32.mrb[0].mxu0
  %v3365 = vadd.f32 0.0, %v3364
  %v3366 = vpop.f32.mrb[0].mxu0
  %v3367 = vpop.f32.mrb[0].mxu0
  %v3368 = vadd.f32 0.0, %v3367
  %v3369 = vpop.f32.mrb[0].mxu0
  %3370 = vdwg.mxu0
  %3373 = vrot.lane.b32.xlu0 %v2687, 16
  %v3374 = vpop.permute.xlu0 %3373
  %3375 = vrot.lane.b32.xlu0 %v2690, 16
  %v3376 = vpop.permute.xlu0 %3375
  %3381 = vrot.lane.b32.xlu0 %v3026, 32
  %v3382 = vpop.permute.xlu0 %3381
  %3383 = vrot.lane.b32.xlu0 %v3029, 32
  %v3384 = vpop.permute.xlu0 %3383
  %3389 = vrot.lane.b32.xlu0 %v3365, 48
  %v3390 = vpop.permute.xlu0 %3389
  %3391 = vrot.lane.b32.xlu0 %v3368, 48
  %v3392 = vpop.permute.xlu0 %3391
  %v3395 = vsel %vm531, %v2348, %v3374
  %v3396 = vsel %vm531, %v2351, %v3376
  %v3397 = vsel %vm216, %v3395, %v3382
  %v3398 = vsel %vm216, %v3396, %v3384
  %v3399 = vsel %vm1691, %v3397, %v3390
  %v3400 = vsel %vm1691, %v3398, %v3392
  %v3401 = vpack.c.bf16 %v3400, %v3399
  %s3402 = scalar_lea.vmem %s10, 32
  %v3403 = vld [vmem:[%s3402] sm:$0xf]
  %v3404 = vld [vmem:[%s3402 + $0x4] sm:$0xf]
  %v3405 = vld [vmem:[%s3402 + $0x8] sm:$0xf]
  %v3406 = vld [vmem:[%s3402 + $0xc] sm:$0xf]
  %v3407 = vld [vmem:[%s3402 + $0x10] sm:$0xf]
  %v3408 = vld [vmem:[%s3402 + $0x14] sm:$0xf]
  %v3409 = vld [vmem:[%s3402 + $0x18] sm:$0xf]
  %v3410 = vld [vmem:[%s3402 + $0x1c] sm:$0xf]
  %v3419 = vunpack.c.l.b16 %v3403
  %v3420 = vunpack.c.l.b16 %v3404
  %v3421 = vunpack.c.l.b16 %v3405
  %v3422 = vunpack.c.l.b16 %v3406
  %v3423 = vunpack.c.l.b16 %v3407
  %v3424 = vunpack.c.l.b16 %v3408
  %v3425 = vunpack.c.l.b16 %v3409
  %v3426 = vunpack.c.l.b16 %v3410
  %v3427 = vpack.c.b16 %v3420, %v3419
  %v3428 = vpack.c.b16 %v3422, %v3421
  %v3429 = vpack.c.b16 %v3424, %v3423
  %v3430 = vpack.c.b16 %v3426, %v3425
  %v3436 = vsel %vm275, %v3401, 0
  %3438 = vmatprep.subr.bf16.mxu0 0
  %3439 = vmatpush1.bf16.msra.mxu0 %v3427
  %3440 = vmatprep.subr.bf16.mxu0 0
  %3441 = vmatpush1.bf16.msra.mxu0 %v3428
  %3442 = vmatprep.subr.bf16.mxu0 0
  %3443 = vmatpush1.bf16.msra.mxu0 %v3429
  %3444 = vmatprep.subr.bf16.mxu0 0
  %3445 = vmatpush1.bf16.msra.mxu0 %v3430
  %3446 = vmatprep.subr.bf16.mxu0 0
  %3447 = vmatpush1.bf16.msra.mxu0 0
  %3448 = vmatprep.subr.bf16.mxu0 0
  %3449 = vmatpush1.bf16.msra.mxu0 0
  %3450 = vmatprep.subr.bf16.mxu0 0
  %3451 = vmatpush1.bf16.msra.mxu0 0
  %3452 = vmatprep.subr.bf16.mxu0 0
  %3453 = vmatpush1.bf16.msra.mxu0 0
  %3454 = vmatprep.subr.bf16.mxu0 0
  %3455 = vmatpush1.bf16.msra.mxu0 0
  %3456 = vmatprep.subr.bf16.mxu0 0
  %3457 = vmatpush1.bf16.msra.mxu0 0
  %3458 = vmatprep.subr.bf16.mxu0 0
  %3459 = vmatpush1.bf16.msra.mxu0 0
  %3460 = vmatprep.subr.bf16.mxu0 0
  %3461 = vmatpush1.bf16.msra.mxu0 0
  %3462 = vmatprep.subr.bf16.mxu0 0
  %3463 = vmatpush1.bf16.msra.mxu0 0
  %3464 = vmatprep.subr.bf16.mxu0 0
  %3465 = vmatpush1.bf16.msra.mxu0 0
  %3466 = vmatprep.subr.bf16.mxu0 0
  %3467 = vmatpush1.bf16.msra.mxu0 0
  %3468 = vmatprep.subr.bf16.mxu0 0
  %3469 = vmatpush1.bf16.msra.mxu0 0
  %3470 = vmatprep.mubr.bf16.mxu0 0
  %3471 = vmatmul.mubr.bf16.gmra.mrb[0].mxu0 %v3436
  %v3472 = vpop.f32.mrb[0].mxu0
  %v3473 = vadd.f32 0.0, %v3472
  %v3474 = vpop.f32.mrb[0].mxu0
  %v3475 = vpop.f32.mrb[0].mxu0
  %v3476 = vadd.f32 0.0, %v3475
  %v3477 = vpop.f32.mrb[0].mxu0
  %3478 = vdwg.mxu0
  %v3479 = vadd.f32 %v1983, %v3473
  %v3480 = vadd.f32 %v1984, %v3476
  %s3481 = scalar_lea.vmem %s12, 1
  %v3482 = vld [vmem:[%s3481] sm:$0x1]
  %v3483 = vmul.f32 %v3479, %v3479
  %v3484 = vmul.f32 %v3480, %v3480
  %v3485 = vsel %vm275, %v3483, 0.0
  %3486 = vadd.xlane.f32.xlu0 %v3485
  %v3487 = vpop.xlane.xlu0 %3486
  %v3488 = vsel %vm275, %v3484, 0.0
  %3489 = vadd.xlane.f32.xlu0 %v3488
  %v3490 = vpop.xlane.xlu0 %3489
  %v3491 = vmul.f32 %v3487, %v282
  %v3492 = vmul.f32 %v3490, %v282
  %v3493 = vadd.f32 %v3491, 1e-06
  %v3494 = vadd.f32 %v3492, 1e-06
  %v3495 = vrsqrt.pop %v3493
  %v3496 = vrsqrt.pop %v3494
  %v3497 = vmul.f32 %v3479, %v3495
  %v3498 = vmul.f32 %v3480, %v3496
  %v3500 = vlaneseq
  %v3501 = vshrl.u32 %v3500, 7
  %v3502 = vsub.s32 0, %v3501
  %v3503 = vrot.slane %v3482, %v3502
  %v3505 = vmul.f32 %v3497, %v3503
  %v3506 = vmul.f32 %v3498, %v3503
  %v3507 = vpack.c.bf16 %v3506, %v3505
  %s3508 = scalar_lea.vmem %s13, 32
  %v3509 = vld [vmem:[%s3508] sm:$0xf]
  %v3510 = vld [vmem:[%s3508 + $0x4] sm:$0xf]
  %v3511 = vld [vmem:[%s3508 + $0x8] sm:$0xf]
  %v3512 = vld [vmem:[%s3508 + $0xc] sm:$0xf]
  %v3513 = vld [vmem:[%s3508 + $0x10] sm:$0xf]
  %v3514 = vld [vmem:[%s3508 + $0x14] sm:$0xf]
  %v3515 = vld [vmem:[%s3508 + $0x18] sm:$0xf]
  %v3516 = vld [vmem:[%s3508 + $0x1c] sm:$0xf]
  %v3525 = vunpack.c.l.b16 %v3509
  %v3526 = vunpack.c.l.b16 %v3510
  %v3527 = vunpack.c.l.b16 %v3511
  %v3528 = vunpack.c.l.b16 %v3512
  %v3529 = vunpack.c.l.b16 %v3513
  %v3530 = vunpack.c.l.b16 %v3514
  %v3531 = vunpack.c.l.b16 %v3515
  %v3532 = vunpack.c.l.b16 %v3516
  %v3533 = vpack.c.b16 %v3526, %v3525
  %v3534 = vpack.c.b16 %v3528, %v3527
  %v3535 = vpack.c.b16 %v3530, %v3529
  %v3536 = vpack.c.b16 %v3532, %v3531
  %v3542 = vsel %vm275, %v3507, 0
  %3544 = vmatprep.subr.bf16.mxu0 0
  %3545 = vmatpush1.bf16.msra.mxu0 %v3533
  %3546 = vmatprep.subr.bf16.mxu0 0
  %3547 = vmatpush1.bf16.msra.mxu0 %v3534
  %3548 = vmatprep.subr.bf16.mxu0 0
  %3549 = vmatpush1.bf16.msra.mxu0 %v3535
  %3550 = vmatprep.subr.bf16.mxu0 0
  %3551 = vmatpush1.bf16.msra.mxu0 %v3536
  %3552 = vmatprep.subr.bf16.mxu0 0
  %3553 = vmatpush1.bf16.msra.mxu0 0
  %3554 = vmatprep.subr.bf16.mxu0 0
  %3555 = vmatpush1.bf16.msra.mxu0 0
  %3556 = vmatprep.subr.bf16.mxu0 0
  %3557 = vmatpush1.bf16.msra.mxu0 0
  %3558 = vmatprep.subr.bf16.mxu0 0
  %3559 = vmatpush1.bf16.msra.mxu0 0
  %3560 = vmatprep.subr.bf16.mxu0 0
  %3561 = vmatpush1.bf16.msra.mxu0 0
  %3562 = vmatprep.subr.bf16.mxu0 0
  %3563 = vmatpush1.bf16.msra.mxu0 0
  %3564 = vmatprep.subr.bf16.mxu0 0
  %3565 = vmatpush1.bf16.msra.mxu0 0
  %3566 = vmatprep.subr.bf16.mxu0 0
  %3567 = vmatpush1.bf16.msra.mxu0 0
  %3568 = vmatprep.subr.bf16.mxu0 0
  %3569 = vmatpush1.bf16.msra.mxu0 0
  %3570 = vmatprep.subr.bf16.mxu0 0
  %3571 = vmatpush1.bf16.msra.mxu0 0
  %3572 = vmatprep.subr.bf16.mxu0 0
  %3573 = vmatpush1.bf16.msra.mxu0 0
  %3574 = vmatprep.subr.bf16.mxu0 0
  %3575 = vmatpush1.bf16.msra.mxu0 0
  %3576 = vmatprep.mubr.bf16.mxu0 0
  %3577 = vmatmul.mubr.bf16.gmra.mrb[0].mxu0 %v3542
  %v3578 = vpop.f32.mrb[0].mxu0
  %v3579 = vadd.f32 0.0, %v3578
  %v3580 = vpop.f32.mrb[0].mxu0
  %v3581 = vpop.f32.mrb[0].mxu0
  %v3582 = vadd.f32 0.0, %v3581
  %v3583 = vpop.f32.mrb[0].mxu0
  %3584 = vdwg.mxu0
  %v3585 = vmax.f32 %v3579, 0.0
  %v3586 = vmax.f32 %v3582, 0.0
  %v3587 = vpack.c.bf16 %v3586, %v3585
  %s3588 = scalar_lea.vmem %s14, 64
  %v3589 = vld [vmem:[%s3588] sm:$0xf]
  %v3590 = vld [vmem:[%s3588 + $0x4] sm:$0xf]
  %v3591 = vld [vmem:[%s3588 + $0x8] sm:$0xf]
  %v3592 = vld [vmem:[%s3588 + $0xc] sm:$0xf]
  %v3593 = vld [vmem:[%s3588 + $0x10] sm:$0xf]
  %v3594 = vld [vmem:[%s3588 + $0x14] sm:$0xf]
  %v3595 = vld [vmem:[%s3588 + $0x18] sm:$0xf]
  %v3596 = vld [vmem:[%s3588 + $0x1c] sm:$0xf]
  %v3597 = vld [vmem:[%s3588 + $0x20] sm:$0xf]
  %v3598 = vld [vmem:[%s3588 + $0x24] sm:$0xf]
  %v3599 = vld [vmem:[%s3588 + $0x28] sm:$0xf]
  %v3600 = vld [vmem:[%s3588 + $0x2c] sm:$0xf]
  %v3601 = vld [vmem:[%s3588 + $0x30] sm:$0xf]
  %v3602 = vld [vmem:[%s3588 + $0x34] sm:$0xf]
  %v3603 = vld [vmem:[%s3588 + $0x38] sm:$0xf]
  %v3604 = vld [vmem:[%s3588 + $0x3c] sm:$0xf]
  %v3621 = vunpack.c.l.b16 %v3589
  %v3622 = vunpack.c.l.b16 %v3590
  %v3623 = vunpack.c.l.b16 %v3591
  %v3624 = vunpack.c.l.b16 %v3592
  %v3625 = vunpack.c.l.b16 %v3593
  %v3626 = vunpack.c.l.b16 %v3594
  %v3627 = vunpack.c.l.b16 %v3595
  %v3628 = vunpack.c.l.b16 %v3596
  %v3629 = vunpack.c.l.b16 %v3597
  %v3630 = vunpack.c.l.b16 %v3598
  %v3631 = vunpack.c.l.b16 %v3599
  %v3632 = vunpack.c.l.b16 %v3600
  %v3633 = vunpack.c.l.b16 %v3601
  %v3634 = vunpack.c.l.b16 %v3602
  %v3635 = vunpack.c.l.b16 %v3603
  %v3636 = vunpack.c.l.b16 %v3604
  %v3637 = vpack.c.b16 %v3622, %v3621
  %v3638 = vpack.c.b16 %v3624, %v3623
  %v3639 = vpack.c.b16 %v3626, %v3625
  %v3640 = vpack.c.b16 %v3628, %v3627
  %v3641 = vpack.c.b16 %v3630, %v3629
  %v3642 = vpack.c.b16 %v3632, %v3631
  %v3643 = vpack.c.b16 %v3634, %v3633
  %v3644 = vpack.c.b16 %v3636, %v3635
  %3653 = vmatprep.subr.bf16.mxu0 0
  %3654 = vmatpush1.bf16.msra.mxu0 %v3637
  %3655 = vmatprep.subr.bf16.mxu0 0
  %3656 = vmatpush1.bf16.msra.mxu0 %v3638
  %3657 = vmatprep.subr.bf16.mxu0 0
  %3658 = vmatpush1.bf16.msra.mxu0 %v3639
  %3659 = vmatprep.subr.bf16.mxu0 0
  %3660 = vmatpush1.bf16.msra.mxu0 %v3640
  %3661 = vmatprep.subr.bf16.mxu0 0
  %3662 = vmatpush1.bf16.msra.mxu0 %v3641
  %3663 = vmatprep.subr.bf16.mxu0 0
  %3664 = vmatpush1.bf16.msra.mxu0 %v3642
  %3665 = vmatprep.subr.bf16.mxu0 0
  %3666 = vmatpush1.bf16.msra.mxu0 %v3643
  %3667 = vmatprep.subr.bf16.mxu0 0
  %3668 = vmatpush1.bf16.msra.mxu0 %v3644
  %3669 = vmatprep.subr.bf16.mxu0 0
  %3670 = vmatpush1.bf16.msra.mxu0 0
  %3671 = vmatprep.subr.bf16.mxu0 0
  %3672 = vmatpush1.bf16.msra.mxu0 0
  %3673 = vmatprep.subr.bf16.mxu0 0
  %3674 = vmatpush1.bf16.msra.mxu0 0
  %3675 = vmatprep.subr.bf16.mxu0 0
  %3676 = vmatpush1.bf16.msra.mxu0 0
  %3677 = vmatprep.subr.bf16.mxu0 0
  %3678 = vmatpush1.bf16.msra.mxu0 0
  %3679 = vmatprep.subr.bf16.mxu0 0
  %3680 = vmatpush1.bf16.msra.mxu0 0
  %3681 = vmatprep.subr.bf16.mxu0 0
  %3682 = vmatpush1.bf16.msra.mxu0 0
  %3683 = vmatprep.subr.bf16.mxu0 0
  %3684 = vmatpush1.bf16.msra.mxu0 0
  %3685 = vmatprep.mubr.bf16.mxu0 0
  %3686 = vmatmul.mubr.bf16.gmra.mrb[0].mxu0 %v3587
  %v3687 = vpop.f32.mrb[0].mxu0
  %v3688 = vadd.f32 0.0, %v3687
  %v3689 = vpop.f32.mrb[0].mxu0
  %v3690 = vpop.f32.mrb[0].mxu0
  %v3691 = vadd.f32 0.0, %v3690
  %v3692 = vpop.f32.mrb[0].mxu0
  %3693 = vdwg.mxu0
  %v3694 = vadd.f32 %v3479, %v3688
  %v3695 = vadd.f32 %v3480, %v3691
  %v3696 = vmul.f32 %v3694, %v3694
  %v3697 = vmul.f32 %v3695, %v3695
  %v3698 = vsel %vm275, %v3696, 0.0
  %3699 = vadd.xlane.f32.xlu0 %v3698
  %v3700 = vpop.xlane.xlu0 %3699
  %v3701 = vsel %vm275, %v3697, 0.0
  %3702 = vadd.xlane.f32.xlu0 %v3701
  %v3703 = vpop.xlane.xlu0 %3702
  %v3704 = vmul.f32 %v3700, %v282
  %v3705 = vmul.f32 %v3703, %v282
  %v3706 = vadd.f32 %v3704, 1e-06
  %v3707 = vadd.f32 %v3705, 1e-06
  %v3708 = vrsqrt.pop %v3706
  %v3709 = vrsqrt.pop %v3707
  %v3710 = vmul.f32 %v3694, %v3708
  %v3711 = vmul.f32 %v3695, %v3709
  %v3713 = vlaneseq
  %v3714 = vshrl.u32 %v3713, 7
  %v3715 = vsub.s32 0, %v3714
  %v3716 = vrot.slane %v95, %v3715
  %v3718 = vmul.f32 %v3710, %v3716
  %v3719 = vmul.f32 %v3711, %v3716
  %3720 = vst.msk [vmem:[%s22] sm:$0xff] %vm275, %v3718
  %3721 = vst.msk [vmem:[%s22 + $0x8] sm:$0xff] %vm275, %v3719
  %v3722 = vld [vmem:[%s3] sm:$0xff]
  %v3723 = vld [vmem:[%s3 + $0x8] sm:$0xff]
  %3725 = vset.pattern.permute.xlu0 0
  %3726 = vperm.xlu0 %3725, %v3722
  %v3727 = vpop.permute.xlu0 %3726
  %3730 = vset.pattern.permute.xlu0 0
  %3731 = vperm.xlu0 %3730, %v3723
  %v3732 = vpop.permute.xlu0 %3731
  %v3734 = vmul.f32 %v3718, %v3727
  %v3735 = vmul.f32 %v3719, %v3732
  %vm3736 = vcmp.eq.s32.totalorder %v262, 0
  %vm3737 = vcmp.eq.s32.totalorder %v263, 0
  %v3738 = vrot.slane %v3734, 7
  %v3739 = vrot.slane %v3735, 7
  %vm3740 = vcmp.lt.s32.totalorder %v262, 1
  %v3741 = vsel %vm3740, %v3738, %v3739
  %v3742 = vsel %vm3740, %v3739, %v3738
  %v3743 = vsel %vm3736, 0.0, %v3742
  %v3744 = vsel %vm3737, 0.0, %v3741
  %vm3745 = vcmp.eq.s32.totalorder %v262, 15
  %vm3746 = vcmp.eq.s32.totalorder %v263, 15
  %v3747 = vrot.slane %v3734, 1
  %v3748 = vrot.slane %v3735, 1
  %vm3749 = vcmp.lt.s32.totalorder %v262, 7
  %v3750 = vsel %vm3749, %v3747, %v3748
  %v3751 = vsel %vm3749, %v3748, %v3747
  %v3752 = vsel %vm3745, 0.0, %v3750
  %v3753 = vsel %vm3746, 0.0, %v3751
  %v3754 = vpack.c.bf16 %v3744, %v3743
  %v3755 = vld [vmem:[%s16] sm:$0xf]
  %v3756 = vld [vmem:[%s16 + $0x4] sm:$0xf]
  %v3757 = vld [vmem:[%s16 + $0x8] sm:$0xf]
  %v3758 = vld [vmem:[%s16 + $0xc] sm:$0xf]
  %v3759 = vld [vmem:[%s16 + $0x10] sm:$0xf]
  %v3760 = vld [vmem:[%s16 + $0x14] sm:$0xf]
  %v3761 = vld [vmem:[%s16 + $0x18] sm:$0xf]
  %v3762 = vld [vmem:[%s16 + $0x1c] sm:$0xf]
  %v3763 = vpack.c.bf16 %v3735, %v3734
  %s3764 = scalar_lea.vmem %s16, 32
  %v3765 = vld [vmem:[%s3764] sm:$0xf]
  %v3766 = vld [vmem:[%s3764 + $0x4] sm:$0xf]
  %v3767 = vld [vmem:[%s3764 + $0x8] sm:$0xf]
  %v3768 = vld [vmem:[%s3764 + $0xc] sm:$0xf]
  %v3769 = vld [vmem:[%s3764 + $0x10] sm:$0xf]
  %v3770 = vld [vmem:[%s3764 + $0x14] sm:$0xf]
  %v3771 = vld [vmem:[%s3764 + $0x18] sm:$0xf]
  %v3772 = vld [vmem:[%s3764 + $0x1c] sm:$0xf]
  %v3781 = vunpack.c.l.b16 %v3765
  %v3782 = vunpack.c.l.b16 %v3766
  %v3783 = vunpack.c.l.b16 %v3767
  %v3784 = vunpack.c.l.b16 %v3768
  %v3785 = vunpack.c.l.b16 %v3769
  %v3786 = vunpack.c.l.b16 %v3770
  %v3787 = vunpack.c.l.b16 %v3771
  %v3788 = vunpack.c.l.b16 %v3772
  %v3789 = vpack.c.b16 %v3782, %v3781
  %v3790 = vpack.c.b16 %v3784, %v3783
  %v3791 = vpack.c.b16 %v3786, %v3785
  %v3792 = vpack.c.b16 %v3788, %v3787
  %v3798 = vsel %vm275, %v3763, 0
  %3800 = vmatprep.subr.bf16.mxu0 0
  %3801 = vmatpush1.bf16.msra.mxu0 %v3789
  %3802 = vmatprep.subr.bf16.mxu0 0
  %3803 = vmatpush1.bf16.msra.mxu0 %v3790
  %3804 = vmatprep.subr.bf16.mxu0 0
  %3805 = vmatpush1.bf16.msra.mxu0 %v3791
  %3806 = vmatprep.subr.bf16.mxu0 0
  %3807 = vmatpush1.bf16.msra.mxu0 %v3792
  %3808 = vmatprep.subr.bf16.mxu0 0
  %3809 = vmatpush1.bf16.msra.mxu0 0
  %3810 = vmatprep.subr.bf16.mxu0 0
  %3811 = vmatpush1.bf16.msra.mxu0 0
  %3812 = vmatprep.subr.bf16.mxu0 0
  %3813 = vmatpush1.bf16.msra.mxu0 0
  %3814 = vmatprep.subr.bf16.mxu0 0
  %3815 = vmatpush1.bf16.msra.mxu0 0
  %3816 = vmatprep.subr.bf16.mxu0 0
  %3817 = vmatpush1.bf16.msra.mxu0 0
  %3818 = vmatprep.subr.bf16.mxu0 0
  %3819 = vmatpush1.bf16.msra.mxu0 0
  %3820 = vmatprep.subr.bf16.mxu0 0
  %3821 = vmatpush1.bf16.msra.mxu0 0
  %3822 = vmatprep.subr.bf16.mxu0 0
  %3823 = vmatpush1.bf16.msra.mxu0 0
  %3824 = vmatprep.subr.bf16.mxu0 0
  %3825 = vmatpush1.bf16.msra.mxu0 0
  %3826 = vmatprep.subr.bf16.mxu0 0
  %3827 = vmatpush1.bf16.msra.mxu0 0
  %3828 = vmatprep.subr.bf16.mxu0 0
  %3829 = vmatpush1.bf16.msra.mxu0 0
  %3830 = vmatprep.subr.bf16.mxu0 0
  %3831 = vmatpush1.bf16.msra.mxu0 0
  %3832 = vmatprep.mubr.bf16.mxu0 0
  %3833 = vmatmul.mubr.bf16.gmra.mrb[0].mxu0 %v3798
  %v3834 = vpop.f32.mrb[0].mxu0
  %v3835 = vadd.f32 0.0, %v3834
  %v3836 = vpop.f32.mrb[0].mxu0
  %v3837 = vpop.f32.mrb[0].mxu0
  %v3838 = vadd.f32 0.0, %v3837
  %v3839 = vpop.f32.mrb[0].mxu0
  %3840 = vdwg.mxu0
  %v3849 = vunpack.c.l.b16 %v3755
  %v3850 = vunpack.c.l.b16 %v3756
  %v3851 = vunpack.c.l.b16 %v3757
  %v3852 = vunpack.c.l.b16 %v3758
  %v3853 = vunpack.c.l.b16 %v3759
  %v3854 = vunpack.c.l.b16 %v3760
  %v3855 = vunpack.c.l.b16 %v3761
  %v3856 = vunpack.c.l.b16 %v3762
  %v3857 = vpack.c.b16 %v3850, %v3849
  %v3858 = vpack.c.b16 %v3852, %v3851
  %v3859 = vpack.c.b16 %v3854, %v3853
  %v3860 = vpack.c.b16 %v3856, %v3855
  %v3866 = vsel %vm275, %v3754, 0
  %3868 = vmatprep.subr.bf16.mxu0 0
  %3869 = vmatpush1.bf16.msra.mxu0 %v3857
  %3870 = vmatprep.subr.bf16.mxu0 0
  %3871 = vmatpush1.bf16.msra.mxu0 %v3858
  %3872 = vmatprep.subr.bf16.mxu0 0
  %3873 = vmatpush1.bf16.msra.mxu0 %v3859
  %3874 = vmatprep.subr.bf16.mxu0 0
  %3875 = vmatpush1.bf16.msra.mxu0 %v3860
  %3876 = vmatprep.subr.bf16.mxu0 0
  %3877 = vmatpush1.bf16.msra.mxu0 0
  %3878 = vmatprep.subr.bf16.mxu0 0
  %3879 = vmatpush1.bf16.msra.mxu0 0
  %3880 = vmatprep.subr.bf16.mxu0 0
  %3881 = vmatpush1.bf16.msra.mxu0 0
  %3882 = vmatprep.subr.bf16.mxu0 0
  %3883 = vmatpush1.bf16.msra.mxu0 0
  %3884 = vmatprep.subr.bf16.mxu0 0
  %3885 = vmatpush1.bf16.msra.mxu0 0
  %3886 = vmatprep.subr.bf16.mxu0 0
  %3887 = vmatpush1.bf16.msra.mxu0 0
  %3888 = vmatprep.subr.bf16.mxu0 0
  %3889 = vmatpush1.bf16.msra.mxu0 0
  %3890 = vmatprep.subr.bf16.mxu0 0
  %3891 = vmatpush1.bf16.msra.mxu0 0
  %3892 = vmatprep.subr.bf16.mxu0 0
  %3893 = vmatpush1.bf16.msra.mxu0 0
  %3894 = vmatprep.subr.bf16.mxu0 0
  %3895 = vmatpush1.bf16.msra.mxu0 0
  %3896 = vmatprep.subr.bf16.mxu0 0
  %3897 = vmatpush1.bf16.msra.mxu0 0
  %3898 = vmatprep.subr.bf16.mxu0 0
  %3899 = vmatpush1.bf16.msra.mxu0 0
  %3900 = vmatprep.mubr.bf16.mxu0 0
  %3901 = vmatmul.mubr.bf16.gmra.mrb[0].mxu0 %v3866
  %v3902 = vpop.f32.mrb[0].mxu0
  %v3903 = vadd.f32 %v3835, %v3902
  %v3904 = vpop.f32.mrb[0].mxu0
  %v3905 = vpop.f32.mrb[0].mxu0
  %v3906 = vadd.f32 %v3838, %v3905
  %v3907 = vpop.f32.mrb[0].mxu0
  %3908 = vdwg.mxu0
  %v3909 = vpack.c.bf16 %v3753, %v3752
  %s3910 = scalar_lea.vmem %s16, 64
  %v3911 = vld [vmem:[%s3910] sm:$0xf]
  %v3912 = vld [vmem:[%s3910 + $0x4] sm:$0xf]
  %v3913 = vld [vmem:[%s3910 + $0x8] sm:$0xf]
  %v3914 = vld [vmem:[%s3910 + $0xc] sm:$0xf]
  %v3915 = vld [vmem:[%s3910 + $0x10] sm:$0xf]
  %v3916 = vld [vmem:[%s3910 + $0x14] sm:$0xf]
  %v3917 = vld [vmem:[%s3910 + $0x18] sm:$0xf]
  %v3918 = vld [vmem:[%s3910 + $0x1c] sm:$0xf]
  %v3927 = vunpack.c.l.b16 %v3911
  %v3928 = vunpack.c.l.b16 %v3912
  %v3929 = vunpack.c.l.b16 %v3913
  %v3930 = vunpack.c.l.b16 %v3914
  %v3931 = vunpack.c.l.b16 %v3915
  %v3932 = vunpack.c.l.b16 %v3916
  %v3933 = vunpack.c.l.b16 %v3917
  %v3934 = vunpack.c.l.b16 %v3918
  %v3935 = vpack.c.b16 %v3928, %v3927
  %v3936 = vpack.c.b16 %v3930, %v3929
  %v3937 = vpack.c.b16 %v3932, %v3931
  %v3938 = vpack.c.b16 %v3934, %v3933
  %v3944 = vsel %vm275, %v3909, 0
  %3946 = vmatprep.subr.bf16.mxu0 0
  %3947 = vmatpush1.bf16.msra.mxu0 %v3935
  %3948 = vmatprep.subr.bf16.mxu0 0
  %3949 = vmatpush1.bf16.msra.mxu0 %v3936
  %3950 = vmatprep.subr.bf16.mxu0 0
  %3951 = vmatpush1.bf16.msra.mxu0 %v3937
  %3952 = vmatprep.subr.bf16.mxu0 0
  %3953 = vmatpush1.bf16.msra.mxu0 %v3938
  %3954 = vmatprep.subr.bf16.mxu0 0
  %3955 = vmatpush1.bf16.msra.mxu0 0
  %3956 = vmatprep.subr.bf16.mxu0 0
  %3957 = vmatpush1.bf16.msra.mxu0 0
  %3958 = vmatprep.subr.bf16.mxu0 0
  %3959 = vmatpush1.bf16.msra.mxu0 0
  %3960 = vmatprep.subr.bf16.mxu0 0
  %3961 = vmatpush1.bf16.msra.mxu0 0
  %3962 = vmatprep.subr.bf16.mxu0 0
  %3963 = vmatpush1.bf16.msra.mxu0 0
  %3964 = vmatprep.subr.bf16.mxu0 0
  %3965 = vmatpush1.bf16.msra.mxu0 0
  %3966 = vmatprep.subr.bf16.mxu0 0
  %3967 = vmatpush1.bf16.msra.mxu0 0
  %3968 = vmatprep.subr.bf16.mxu0 0
  %3969 = vmatpush1.bf16.msra.mxu0 0
  %3970 = vmatprep.subr.bf16.mxu0 0
  %3971 = vmatpush1.bf16.msra.mxu0 0
  %3972 = vmatprep.subr.bf16.mxu0 0
  %3973 = vmatpush1.bf16.msra.mxu0 0
  %3974 = vmatprep.subr.bf16.mxu0 0
  %3975 = vmatpush1.bf16.msra.mxu0 0
  %3976 = vmatprep.subr.bf16.mxu0 0
  %3977 = vmatpush1.bf16.msra.mxu0 0
  %3978 = vmatprep.mubr.bf16.mxu0 0
  %3979 = vmatmul.mubr.bf16.gmra.mrb[0].mxu0 %v3944
  %v3980 = vpop.f32.mrb[0].mxu0
  %v3981 = vadd.f32 0.0, %v3980
  %v3982 = vpop.f32.mrb[0].mxu0
  %v3983 = vpop.f32.mrb[0].mxu0
  %v3984 = vadd.f32 0.0, %v3983
  %v3985 = vpop.f32.mrb[0].mxu0
  %3986 = vdwg.mxu0
  %v3987 = vadd.f32 %v3903, %v3981
  %v3988 = vadd.f32 %v3906, %v3984
  %v3990 = vlaneseq
  %v3991 = vshrl.u32 %v3990, 7
  %v3992 = vsub.s32 0, %v3991
  %v3993 = vrot.slane %v96, %v3992
  %v3995 = vadd.f32 %v3987, %v3993
  %v3996 = vadd.f32 %v3988, %v3993
  %v3997 = vmax.f32 %v3995, 0.0
  %v3998 = vmax.f32 %v3996, 0.0
  %v3999 = vmul.f32 %v3997, %v3727
  %v4000 = vmul.f32 %v3998, %v3732
  %v4001 = vrot.slane %v3999, 7
  %v4002 = vrot.slane %v4000, 7
  %v4003 = vsel %vm3740, %v4001, %v4002
  %v4004 = vsel %vm3740, %v4002, %v4001
  %v4005 = vsel %vm3736, 0.0, %v4004
  %v4006 = vsel %vm3737, 0.0, %v4003
  %v4007 = vrot.slane %v3999, 1
  %v4008 = vrot.slane %v4000, 1
  %v4009 = vsel %vm3749, %v4007, %v4008
  %v4010 = vsel %vm3749, %v4008, %v4007
  %v4011 = vsel %vm3745, 0.0, %v4009
  %v4012 = vsel %vm3746, 0.0, %v4010
  %v4013 = vpack.c.bf16 %v4006, %v4005
  %v4014 = vld [vmem:[%s18] sm:$0xf]
  %v4015 = vld [vmem:[%s18 + $0x4] sm:$0xf]
  %v4016 = vld [vmem:[%s18 + $0x8] sm:$0xf]
  %v4017 = vld [vmem:[%s18 + $0xc] sm:$0xf]
  %v4018 = vld [vmem:[%s18 + $0x10] sm:$0xf]
  %v4019 = vld [vmem:[%s18 + $0x14] sm:$0xf]
  %v4020 = vld [vmem:[%s18 + $0x18] sm:$0xf]
  %v4021 = vld [vmem:[%s18 + $0x1c] sm:$0xf]
  %v4022 = vpack.c.bf16 %v4000, %v3999
  %s4023 = scalar_lea.vmem %s18, 32
  %v4024 = vld [vmem:[%s4023] sm:$0xf]
  %v4025 = vld [vmem:[%s4023 + $0x4] sm:$0xf]
  %v4026 = vld [vmem:[%s4023 + $0x8] sm:$0xf]
  %v4027 = vld [vmem:[%s4023 + $0xc] sm:$0xf]
  %v4028 = vld [vmem:[%s4023 + $0x10] sm:$0xf]
  %v4029 = vld [vmem:[%s4023 + $0x14] sm:$0xf]
  %v4030 = vld [vmem:[%s4023 + $0x18] sm:$0xf]
  %v4031 = vld [vmem:[%s4023 + $0x1c] sm:$0xf]
  %v4040 = vunpack.c.l.b16 %v4024
  %v4041 = vunpack.c.l.b16 %v4025
  %v4042 = vunpack.c.l.b16 %v4026
  %v4043 = vunpack.c.l.b16 %v4027
  %v4044 = vunpack.c.l.b16 %v4028
  %v4045 = vunpack.c.l.b16 %v4029
  %v4046 = vunpack.c.l.b16 %v4030
  %v4047 = vunpack.c.l.b16 %v4031
  %v4048 = vpack.c.b16 %v4041, %v4040
  %v4049 = vpack.c.b16 %v4043, %v4042
  %v4050 = vpack.c.b16 %v4045, %v4044
  %v4051 = vpack.c.b16 %v4047, %v4046
  %v4057 = vsel %vm275, %v4022, 0
  %4059 = vmatprep.subr.bf16.mxu0 0
  %4060 = vmatpush1.bf16.msra.mxu0 %v4048
  %4061 = vmatprep.subr.bf16.mxu0 0
  %4062 = vmatpush1.bf16.msra.mxu0 %v4049
  %4063 = vmatprep.subr.bf16.mxu0 0
  %4064 = vmatpush1.bf16.msra.mxu0 %v4050
  %4065 = vmatprep.subr.bf16.mxu0 0
  %4066 = vmatpush1.bf16.msra.mxu0 %v4051
  %4067 = vmatprep.subr.bf16.mxu0 0
  %4068 = vmatpush1.bf16.msra.mxu0 0
  %4069 = vmatprep.subr.bf16.mxu0 0
  %4070 = vmatpush1.bf16.msra.mxu0 0
  %4071 = vmatprep.subr.bf16.mxu0 0
  %4072 = vmatpush1.bf16.msra.mxu0 0
  %4073 = vmatprep.subr.bf16.mxu0 0
  %4074 = vmatpush1.bf16.msra.mxu0 0
  %4075 = vmatprep.subr.bf16.mxu0 0
  %4076 = vmatpush1.bf16.msra.mxu0 0
  %4077 = vmatprep.subr.bf16.mxu0 0
  %4078 = vmatpush1.bf16.msra.mxu0 0
  %4079 = vmatprep.subr.bf16.mxu0 0
  %4080 = vmatpush1.bf16.msra.mxu0 0
  %4081 = vmatprep.subr.bf16.mxu0 0
  %4082 = vmatpush1.bf16.msra.mxu0 0
  %4083 = vmatprep.subr.bf16.mxu0 0
  %4084 = vmatpush1.bf16.msra.mxu0 0
  %4085 = vmatprep.subr.bf16.mxu0 0
  %4086 = vmatpush1.bf16.msra.mxu0 0
  %4087 = vmatprep.subr.bf16.mxu0 0
  %4088 = vmatpush1.bf16.msra.mxu0 0
  %4089 = vmatprep.subr.bf16.mxu0 0
  %4090 = vmatpush1.bf16.msra.mxu0 0
  %4091 = vmatprep.mubr.bf16.mxu0 0
  %4092 = vmatmul.mubr.bf16.gmra.mrb[0].mxu0 %v4057
  %v4093 = vpop.f32.mrb[0].mxu0
  %v4094 = vadd.f32 0.0, %v4093
  %v4095 = vpop.f32.mrb[0].mxu0
  %v4096 = vpop.f32.mrb[0].mxu0
  %v4097 = vadd.f32 0.0, %v4096
  %v4098 = vpop.f32.mrb[0].mxu0
  %4099 = vdwg.mxu0
  %v4108 = vunpack.c.l.b16 %v4014
  %v4109 = vunpack.c.l.b16 %v4015
  %v4110 = vunpack.c.l.b16 %v4016
  %v4111 = vunpack.c.l.b16 %v4017
  %v4112 = vunpack.c.l.b16 %v4018
  %v4113 = vunpack.c.l.b16 %v4019
  %v4114 = vunpack.c.l.b16 %v4020
  %v4115 = vunpack.c.l.b16 %v4021
  %v4116 = vpack.c.b16 %v4109, %v4108
  %v4117 = vpack.c.b16 %v4111, %v4110
  %v4118 = vpack.c.b16 %v4113, %v4112
  %v4119 = vpack.c.b16 %v4115, %v4114
  %v4125 = vsel %vm275, %v4013, 0
  %4127 = vmatprep.subr.bf16.mxu0 0
  %4128 = vmatpush1.bf16.msra.mxu0 %v4116
  %4129 = vmatprep.subr.bf16.mxu0 0
  %4130 = vmatpush1.bf16.msra.mxu0 %v4117
  %4131 = vmatprep.subr.bf16.mxu0 0
  %4132 = vmatpush1.bf16.msra.mxu0 %v4118
  %4133 = vmatprep.subr.bf16.mxu0 0
  %4134 = vmatpush1.bf16.msra.mxu0 %v4119
  %4135 = vmatprep.subr.bf16.mxu0 0
  %4136 = vmatpush1.bf16.msra.mxu0 0
  %4137 = vmatprep.subr.bf16.mxu0 0
  %4138 = vmatpush1.bf16.msra.mxu0 0
  %4139 = vmatprep.subr.bf16.mxu0 0
  %4140 = vmatpush1.bf16.msra.mxu0 0
  %4141 = vmatprep.subr.bf16.mxu0 0
  %4142 = vmatpush1.bf16.msra.mxu0 0
  %4143 = vmatprep.subr.bf16.mxu0 0
  %4144 = vmatpush1.bf16.msra.mxu0 0
  %4145 = vmatprep.subr.bf16.mxu0 0
  %4146 = vmatpush1.bf16.msra.mxu0 0
  %4147 = vmatprep.subr.bf16.mxu0 0
  %4148 = vmatpush1.bf16.msra.mxu0 0
  %4149 = vmatprep.subr.bf16.mxu0 0
  %4150 = vmatpush1.bf16.msra.mxu0 0
  %4151 = vmatprep.subr.bf16.mxu0 0
  %4152 = vmatpush1.bf16.msra.mxu0 0
  %4153 = vmatprep.subr.bf16.mxu0 0
  %4154 = vmatpush1.bf16.msra.mxu0 0
  %4155 = vmatprep.subr.bf16.mxu0 0
  %4156 = vmatpush1.bf16.msra.mxu0 0
  %4157 = vmatprep.subr.bf16.mxu0 0
  %4158 = vmatpush1.bf16.msra.mxu0 0
  %4159 = vmatprep.mubr.bf16.mxu0 0
  %4160 = vmatmul.mubr.bf16.gmra.mrb[0].mxu0 %v4125
  %v4161 = vpop.f32.mrb[0].mxu0
  %v4162 = vadd.f32 %v4094, %v4161
  %v4163 = vpop.f32.mrb[0].mxu0
  %v4164 = vpop.f32.mrb[0].mxu0
  %v4165 = vadd.f32 %v4097, %v4164
  %v4166 = vpop.f32.mrb[0].mxu0
  %4167 = vdwg.mxu0
  %v4168 = vpack.c.bf16 %v4012, %v4011
  %s4169 = scalar_lea.vmem %s18, 64
  %v4170 = vld [vmem:[%s4169] sm:$0xf]
  %v4171 = vld [vmem:[%s4169 + $0x4] sm:$0xf]
  %v4172 = vld [vmem:[%s4169 + $0x8] sm:$0xf]
  %v4173 = vld [vmem:[%s4169 + $0xc] sm:$0xf]
  %v4174 = vld [vmem:[%s4169 + $0x10] sm:$0xf]
  %v4175 = vld [vmem:[%s4169 + $0x14] sm:$0xf]
  %v4176 = vld [vmem:[%s4169 + $0x18] sm:$0xf]
  %v4177 = vld [vmem:[%s4169 + $0x1c] sm:$0xf]
  %v4186 = vunpack.c.l.b16 %v4170
  %v4187 = vunpack.c.l.b16 %v4171
  %v4188 = vunpack.c.l.b16 %v4172
  %v4189 = vunpack.c.l.b16 %v4173
  %v4190 = vunpack.c.l.b16 %v4174
  %v4191 = vunpack.c.l.b16 %v4175
  %v4192 = vunpack.c.l.b16 %v4176
  %v4193 = vunpack.c.l.b16 %v4177
  %v4194 = vpack.c.b16 %v4187, %v4186
  %v4195 = vpack.c.b16 %v4189, %v4188
  %v4196 = vpack.c.b16 %v4191, %v4190
  %v4197 = vpack.c.b16 %v4193, %v4192
  %v4203 = vsel %vm275, %v4168, 0
  %4205 = vmatprep.subr.bf16.mxu0 0
  %4206 = vmatpush1.bf16.msra.mxu0 %v4194
  %4207 = vmatprep.subr.bf16.mxu0 0
  %4208 = vmatpush1.bf16.msra.mxu0 %v4195
  %4209 = vmatprep.subr.bf16.mxu0 0
  %4210 = vmatpush1.bf16.msra.mxu0 %v4196
  %4211 = vmatprep.subr.bf16.mxu0 0
  %4212 = vmatpush1.bf16.msra.mxu0 %v4197
  %4213 = vmatprep.subr.bf16.mxu0 0
  %4214 = vmatpush1.bf16.msra.mxu0 0
  %4215 = vmatprep.subr.bf16.mxu0 0
  %4216 = vmatpush1.bf16.msra.mxu0 0
  %4217 = vmatprep.subr.bf16.mxu0 0
  %4218 = vmatpush1.bf16.msra.mxu0 0
  %4219 = vmatprep.subr.bf16.mxu0 0
  %4220 = vmatpush1.bf16.msra.mxu0 0
  %4221 = vmatprep.subr.bf16.mxu0 0
  %4222 = vmatpush1.bf16.msra.mxu0 0
  %4223 = vmatprep.subr.bf16.mxu0 0
  %4224 = vmatpush1.bf16.msra.mxu0 0
  %4225 = vmatprep.subr.bf16.mxu0 0
  %4226 = vmatpush1.bf16.msra.mxu0 0
  %4227 = vmatprep.subr.bf16.mxu0 0
  %4228 = vmatpush1.bf16.msra.mxu0 0
  %4229 = vmatprep.subr.bf16.mxu0 0
  %4230 = vmatpush1.bf16.msra.mxu0 0
  %4231 = vmatprep.subr.bf16.mxu0 0
  %4232 = vmatpush1.bf16.msra.mxu0 0
  %4233 = vmatprep.subr.bf16.mxu0 0
  %4234 = vmatpush1.bf16.msra.mxu0 0
  %4235 = vmatprep.subr.bf16.mxu0 0
  %4236 = vmatpush1.bf16.msra.mxu0 0
  %4237 = vmatprep.mubr.bf16.mxu0 0
  %4238 = vmatmul.mubr.bf16.gmra.mrb[0].mxu0 %v4203
  %v4239 = vpop.f32.mrb[0].mxu0
  %v4240 = vadd.f32 0.0, %v4239
  %v4241 = vpop.f32.mrb[0].mxu0
  %v4242 = vpop.f32.mrb[0].mxu0
  %v4243 = vadd.f32 0.0, %v4242
  %v4244 = vpop.f32.mrb[0].mxu0
  %4245 = vdwg.mxu0
  %v4246 = vadd.f32 %v4162, %v4240
  %v4247 = vadd.f32 %v4165, %v4243
  %v4249 = vlaneseq
  %v4250 = vshrl.u32 %v4249, 7
  %v4251 = vsub.s32 0, %v4250
  %v4252 = vrot.slane %v97, %v4251
  %v4254 = vadd.f32 %v4246, %v4252
  %v4255 = vadd.f32 %v4247, %v4252
  %v4256 = vmax.f32 %v4254, 0.0
  %v4257 = vmax.f32 %v4255, 0.0
  %v4258 = vmul.f32 %v4256, %v3727
  %v4259 = vmul.f32 %v4257, %v3732
  %v4260 = vrot.slane %v4258, 7
  %v4261 = vrot.slane %v4259, 7
  %v4262 = vsel %vm3740, %v4260, %v4261
  %v4263 = vsel %vm3740, %v4261, %v4260
  %v4264 = vsel %vm3736, 0.0, %v4263
  %v4265 = vsel %vm3737, 0.0, %v4262
  %v4266 = vrot.slane %v4258, 1
  %v4267 = vrot.slane %v4259, 1
  %v4268 = vsel %vm3749, %v4266, %v4267
  %v4269 = vsel %vm3749, %v4267, %v4266
  %v4270 = vsel %vm3745, 0.0, %v4268
  %v4271 = vsel %vm3746, 0.0, %v4269
  %v4272 = vpack.c.bf16 %v4265, %v4264
  %v4273 = vld [vmem:[%s20] sm:$0xf]
  %v4274 = vld [vmem:[%s20 + $0x4] sm:$0xf]
  %v4275 = vld [vmem:[%s20 + $0x8] sm:$0xf]
  %v4276 = vld [vmem:[%s20 + $0xc] sm:$0xf]
  %v4277 = vld [vmem:[%s20 + $0x10] sm:$0xf]
  %v4278 = vld [vmem:[%s20 + $0x14] sm:$0xf]
  %v4279 = vld [vmem:[%s20 + $0x18] sm:$0xf]
  %v4280 = vld [vmem:[%s20 + $0x1c] sm:$0xf]
  %v4281 = vpack.c.bf16 %v4259, %v4258
  %s4282 = scalar_lea.vmem %s20, 32
  %v4283 = vld [vmem:[%s4282] sm:$0xf]
  %v4284 = vld [vmem:[%s4282 + $0x4] sm:$0xf]
  %v4285 = vld [vmem:[%s4282 + $0x8] sm:$0xf]
  %v4286 = vld [vmem:[%s4282 + $0xc] sm:$0xf]
  %v4287 = vld [vmem:[%s4282 + $0x10] sm:$0xf]
  %v4288 = vld [vmem:[%s4282 + $0x14] sm:$0xf]
  %v4289 = vld [vmem:[%s4282 + $0x18] sm:$0xf]
  %v4290 = vld [vmem:[%s4282 + $0x1c] sm:$0xf]
  %v4299 = vunpack.c.l.b16 %v4283
  %v4300 = vunpack.c.l.b16 %v4284
  %v4301 = vunpack.c.l.b16 %v4285
  %v4302 = vunpack.c.l.b16 %v4286
  %v4303 = vunpack.c.l.b16 %v4287
  %v4304 = vunpack.c.l.b16 %v4288
  %v4305 = vunpack.c.l.b16 %v4289
  %v4306 = vunpack.c.l.b16 %v4290
  %v4307 = vpack.c.b16 %v4300, %v4299
  %v4308 = vpack.c.b16 %v4302, %v4301
  %v4309 = vpack.c.b16 %v4304, %v4303
  %v4310 = vpack.c.b16 %v4306, %v4305
  %v4316 = vsel %vm275, %v4281, 0
  %4318 = vmatprep.subr.bf16.mxu0 0
  %4319 = vmatpush1.bf16.msra.mxu0 %v4307
  %4320 = vmatprep.subr.bf16.mxu0 0
  %4321 = vmatpush1.bf16.msra.mxu0 %v4308
  %4322 = vmatprep.subr.bf16.mxu0 0
  %4323 = vmatpush1.bf16.msra.mxu0 %v4309
  %4324 = vmatprep.subr.bf16.mxu0 0
  %4325 = vmatpush1.bf16.msra.mxu0 %v4310
  %4326 = vmatprep.subr.bf16.mxu0 0
  %4327 = vmatpush1.bf16.msra.mxu0 0
  %4328 = vmatprep.subr.bf16.mxu0 0
  %4329 = vmatpush1.bf16.msra.mxu0 0
  %4330 = vmatprep.subr.bf16.mxu0 0
  %4331 = vmatpush1.bf16.msra.mxu0 0
  %4332 = vmatprep.subr.bf16.mxu0 0
  %4333 = vmatpush1.bf16.msra.mxu0 0
  %4334 = vmatprep.subr.bf16.mxu0 0
  %4335 = vmatpush1.bf16.msra.mxu0 0
  %4336 = vmatprep.subr.bf16.mxu0 0
  %4337 = vmatpush1.bf16.msra.mxu0 0
  %4338 = vmatprep.subr.bf16.mxu0 0
  %4339 = vmatpush1.bf16.msra.mxu0 0
  %4340 = vmatprep.subr.bf16.mxu0 0
  %4341 = vmatpush1.bf16.msra.mxu0 0
  %4342 = vmatprep.subr.bf16.mxu0 0
  %4343 = vmatpush1.bf16.msra.mxu0 0
  %4344 = vmatprep.subr.bf16.mxu0 0
  %4345 = vmatpush1.bf16.msra.mxu0 0
  %4346 = vmatprep.subr.bf16.mxu0 0
  %4347 = vmatpush1.bf16.msra.mxu0 0
  %4348 = vmatprep.subr.bf16.mxu0 0
  %4349 = vmatpush1.bf16.msra.mxu0 0
  %4350 = vmatprep.mubr.bf16.mxu0 0
  %4351 = vmatmul.mubr.bf16.gmra.mrb[0].mxu0 %v4316
  %v4352 = vpop.f32.mrb[0].mxu0
  %v4353 = vadd.f32 0.0, %v4352
  %v4354 = vpop.f32.mrb[0].mxu0
  %v4355 = vpop.f32.mrb[0].mxu0
  %v4356 = vadd.f32 0.0, %v4355
  %v4357 = vpop.f32.mrb[0].mxu0
  %4358 = vdwg.mxu0
  %v4367 = vunpack.c.l.b16 %v4273
  %v4368 = vunpack.c.l.b16 %v4274
  %v4369 = vunpack.c.l.b16 %v4275
  %v4370 = vunpack.c.l.b16 %v4276
  %v4371 = vunpack.c.l.b16 %v4277
  %v4372 = vunpack.c.l.b16 %v4278
  %v4373 = vunpack.c.l.b16 %v4279
  %v4374 = vunpack.c.l.b16 %v4280
  %v4375 = vpack.c.b16 %v4368, %v4367
  %v4376 = vpack.c.b16 %v4370, %v4369
  %v4377 = vpack.c.b16 %v4372, %v4371
  %v4378 = vpack.c.b16 %v4374, %v4373
  %v4384 = vsel %vm275, %v4272, 0
  %4386 = vmatprep.subr.bf16.mxu0 0
  %4387 = vmatpush1.bf16.msra.mxu0 %v4375
  %4388 = vmatprep.subr.bf16.mxu0 0
  %4389 = vmatpush1.bf16.msra.mxu0 %v4376
  %4390 = vmatprep.subr.bf16.mxu0 0
  %4391 = vmatpush1.bf16.msra.mxu0 %v4377
  %4392 = vmatprep.subr.bf16.mxu0 0
  %4393 = vmatpush1.bf16.msra.mxu0 %v4378
  %4394 = vmatprep.subr.bf16.mxu0 0
  %4395 = vmatpush1.bf16.msra.mxu0 0
  %4396 = vmatprep.subr.bf16.mxu0 0
  %4397 = vmatpush1.bf16.msra.mxu0 0
  %4398 = vmatprep.subr.bf16.mxu0 0
  %4399 = vmatpush1.bf16.msra.mxu0 0
  %4400 = vmatprep.subr.bf16.mxu0 0
  %4401 = vmatpush1.bf16.msra.mxu0 0
  %4402 = vmatprep.subr.bf16.mxu0 0
  %4403 = vmatpush1.bf16.msra.mxu0 0
  %4404 = vmatprep.subr.bf16.mxu0 0
  %4405 = vmatpush1.bf16.msra.mxu0 0
  %4406 = vmatprep.subr.bf16.mxu0 0
  %4407 = vmatpush1.bf16.msra.mxu0 0
  %4408 = vmatprep.subr.bf16.mxu0 0
  %4409 = vmatpush1.bf16.msra.mxu0 0
  %4410 = vmatprep.subr.bf16.mxu0 0
  %4411 = vmatpush1.bf16.msra.mxu0 0
  %4412 = vmatprep.subr.bf16.mxu0 0
  %4413 = vmatpush1.bf16.msra.mxu0 0
  %4414 = vmatprep.subr.bf16.mxu0 0
  %4415 = vmatpush1.bf16.msra.mxu0 0
  %4416 = vmatprep.subr.bf16.mxu0 0
  %4417 = vmatpush1.bf16.msra.mxu0 0
  %4418 = vmatprep.mubr.bf16.mxu0 0
  %4419 = vmatmul.mubr.bf16.gmra.mrb[0].mxu0 %v4384
  %v4420 = vpop.f32.mrb[0].mxu0
  %v4421 = vadd.f32 %v4353, %v4420
  %v4422 = vpop.f32.mrb[0].mxu0
  %v4423 = vpop.f32.mrb[0].mxu0
  %v4424 = vadd.f32 %v4356, %v4423
  %v4425 = vpop.f32.mrb[0].mxu0
  %4426 = vdwg.mxu0
  %v4427 = vpack.c.bf16 %v4271, %v4270
  %s4428 = scalar_lea.vmem %s20, 64
  %v4429 = vld [vmem:[%s4428] sm:$0xf]
  %v4430 = vld [vmem:[%s4428 + $0x4] sm:$0xf]
  %v4431 = vld [vmem:[%s4428 + $0x8] sm:$0xf]
  %v4432 = vld [vmem:[%s4428 + $0xc] sm:$0xf]
  %v4433 = vld [vmem:[%s4428 + $0x10] sm:$0xf]
  %v4434 = vld [vmem:[%s4428 + $0x14] sm:$0xf]
  %v4435 = vld [vmem:[%s4428 + $0x18] sm:$0xf]
  %v4436 = vld [vmem:[%s4428 + $0x1c] sm:$0xf]
  %v4445 = vunpack.c.l.b16 %v4429
  %v4446 = vunpack.c.l.b16 %v4430
  %v4447 = vunpack.c.l.b16 %v4431
  %v4448 = vunpack.c.l.b16 %v4432
  %v4449 = vunpack.c.l.b16 %v4433
  %v4450 = vunpack.c.l.b16 %v4434
  %v4451 = vunpack.c.l.b16 %v4435
  %v4452 = vunpack.c.l.b16 %v4436
  %v4453 = vpack.c.b16 %v4446, %v4445
  %v4454 = vpack.c.b16 %v4448, %v4447
  %v4455 = vpack.c.b16 %v4450, %v4449
  %v4456 = vpack.c.b16 %v4452, %v4451
  %v4462 = vsel %vm275, %v4427, 0
  %4464 = vmatprep.subr.bf16.mxu0 0
  %4465 = vmatpush1.bf16.msra.mxu0 %v4453
  %4466 = vmatprep.subr.bf16.mxu0 0
  %4467 = vmatpush1.bf16.msra.mxu0 %v4454
  %4468 = vmatprep.subr.bf16.mxu0 0
  %4469 = vmatpush1.bf16.msra.mxu0 %v4455
  %4470 = vmatprep.subr.bf16.mxu0 0
  %4471 = vmatpush1.bf16.msra.mxu0 %v4456
  %4472 = vmatprep.subr.bf16.mxu0 0
  %4473 = vmatpush1.bf16.msra.mxu0 0
  %4474 = vmatprep.subr.bf16.mxu0 0
  %4475 = vmatpush1.bf16.msra.mxu0 0
  %4476 = vmatprep.subr.bf16.mxu0 0
  %4477 = vmatpush1.bf16.msra.mxu0 0
  %4478 = vmatprep.subr.bf16.mxu0 0
  %4479 = vmatpush1.bf16.msra.mxu0 0
  %4480 = vmatprep.subr.bf16.mxu0 0
  %4481 = vmatpush1.bf16.msra.mxu0 0
  %4482 = vmatprep.subr.bf16.mxu0 0
  %4483 = vmatpush1.bf16.msra.mxu0 0
  %4484 = vmatprep.subr.bf16.mxu0 0
  %4485 = vmatpush1.bf16.msra.mxu0 0
  %4486 = vmatprep.subr.bf16.mxu0 0
  %4487 = vmatpush1.bf16.msra.mxu0 0
  %4488 = vmatprep.subr.bf16.mxu0 0
  %4489 = vmatpush1.bf16.msra.mxu0 0
  %4490 = vmatprep.subr.bf16.mxu0 0
  %4491 = vmatpush1.bf16.msra.mxu0 0
  %4492 = vmatprep.subr.bf16.mxu0 0
  %4493 = vmatpush1.bf16.msra.mxu0 0
  %4494 = vmatprep.subr.bf16.mxu0 0
  %4495 = vmatpush1.bf16.msra.mxu0 0
  %4496 = vmatprep.mubr.bf16.mxu0 0
  %4497 = vmatmul.mubr.bf16.gmra.mrb[0].mxu0 %v4462
  %v4498 = vpop.f32.mrb[0].mxu0
  %v4499 = vadd.f32 0.0, %v4498
  %v4500 = vpop.f32.mrb[0].mxu0
  %v4501 = vpop.f32.mrb[0].mxu0
  %v4502 = vadd.f32 0.0, %v4501
  %v4503 = vpop.f32.mrb[0].mxu0
  %4504 = vdwg.mxu0
  %v4505 = vadd.f32 %v4421, %v4499
  %v4506 = vadd.f32 %v4424, %v4502
  %v4508 = vlaneseq
  %v4509 = vshrl.u32 %v4508, 7
  %v4510 = vsub.s32 0, %v4509
  %v4511 = vrot.slane %v98, %v4510
  %v4513 = vadd.f32 %v4505, %v4511
  %v4514 = vadd.f32 %v4506, %v4511
  %vm4515 = vcmp.ge.s32.totalorder %v103, 1
  %vm4516 = vcmp.lt.s32.totalorder %v103, 3
  %vm4517 = vmand %vm4515, %vm4516
  %v4518 = vmax.f32 %v4513, 0.0
  %v4519 = vmax.f32 %v4514, 0.0
  %v4520 = vsel %vm4517, %v4518, %v4513
  %v4521 = vsel %vm4517, %v4519, %v4514
  %v4522 = vmul.f32 %v4520, %v3727
  %v4523 = vmul.f32 %v4521, %v3732
  %4524 = vst [vmem:[%s23] sm:$0xff] %v4522
  %4525 = vst [vmem:[%s23 + $0x8] sm:$0xff] %v4523
  %s4526 = scalar_lea.vmem %s2, 1
  %v4527 = vld [vmem:[%s4526] sm:$0x1]
  %s4528 = scalar_lea.vmem %s0, 16
  %v4529 = vld [vmem:[%s4528] sm:$0xff]
  %v4530 = vld [vmem:[%s4528 + $0x8] sm:$0xff]
  %4531 = vset.pattern.permute.xlu0 0
  %4532 = vperm.xlu0 %4531, %v4529
  %v4533 = vpop.permute.xlu0 %4532
  %4534 = vset.pattern.permute.xlu0 0
  %4535 = vperm.xlu0 %4534, %v4530
  %v4536 = vpop.permute.xlu0 %4535
  %vm4537 = vcmp.eq.s32.totalorder %v103, %v4533
  %vm4538 = vcmp.eq.s32.totalorder %v103, %v4536
  %v4539 = vsel %vm4537, 1, 0
  %v4540 = vsel %vm4538, 1, 0
  %v4541 = vcvt.s32.f32 %v4539
  %v4542 = vcvt.s32.f32 %v4540
  %4543 = vmatprep.subr.mxu0 0.0
  %4544 = vmatpush1.msra.mxu0 %v74
  %4545 = vmatprep.subr.mxu0 0.0
  %4546 = vmatpush1.msra.mxu0 %v75
  %4547 = vmatprep.subr.mxu0 0.0
  %4548 = vmatpush1.msra.mxu0 %v76
  %4549 = vmatprep.subr.mxu0 0.0
  %4550 = vmatpush1.msra.mxu0 %v77
  %4551 = vmatprep.subr.mxu0 0.0
  %4552 = vmatpush1.msra.mxu0 %v78
  %4553 = vmatprep.subr.mxu0 0.0
  %4554 = vmatpush1.msra.mxu0 %v79
  %4555 = vmatprep.subr.mxu0 0.0
  %4556 = vmatpush1.msra.mxu0 %v80
  %4557 = vmatprep.subr.mxu0 0.0
  %4558 = vmatpush1.msra.mxu0 %v81
  %4559 = vmatprep.subr.mxu0 0.0
  %4560 = vmatpush1.msra.mxu0 %v82
  %4561 = vmatprep.subr.mxu0 0.0
  %4562 = vmatpush1.msra.mxu0 %v83
  %4563 = vmatprep.subr.mxu0 0.0
  %4564 = vmatpush1.msra.mxu0 %v84
  %4565 = vmatprep.subr.mxu0 0.0
  %4566 = vmatpush1.msra.mxu0 %v85
  %4567 = vmatprep.subr.mxu0 0.0
  %4568 = vmatpush1.msra.mxu0 %v86
  %4569 = vmatprep.subr.mxu0 0.0
  %4570 = vmatpush1.msra.mxu0 %v87
  %4571 = vmatprep.subr.mxu0 0.0
  %4572 = vmatpush1.msra.mxu0 %v88
  %4573 = vmatprep.subr.mxu0 0.0
  %4574 = vmatpush1.msra.mxu0 %v89
  %4575 = vmatprep.subr.mxu0 0.0
  %4576 = vmatpush1.msra.mxu0 0.0
  %4577 = vmatprep.subr.mxu0 0.0
  %4578 = vmatpush1.msra.mxu0 0.0
  %4579 = vmatprep.subr.mxu0 0.0
  %4580 = vmatpush1.msra.mxu0 0.0
  %4581 = vmatprep.subr.mxu0 0.0
  %4582 = vmatpush1.msra.mxu0 0.0
  %4583 = vmatprep.subr.mxu0 0.0
  %4584 = vmatpush1.msra.mxu0 0.0
  %4585 = vmatprep.subr.mxu0 0.0
  %4586 = vmatpush1.msra.mxu0 0.0
  %4587 = vmatprep.subr.mxu0 0.0
  %4588 = vmatpush1.msra.mxu0 0.0
  %4589 = vmatprep.subr.mxu0 0.0
  %4590 = vmatpush1.msra.mxu0 0.0
  %4591 = vmatprep.subr.mxu0 0.0
  %4592 = vmatpush1.msra.mxu0 0.0
  %4593 = vmatprep.subr.mxu0 0.0
  %4594 = vmatpush1.msra.mxu0 0.0
  %4595 = vmatprep.subr.mxu0 0.0
  %4596 = vmatpush1.msra.mxu0 0.0
  %4597 = vmatprep.subr.mxu0 0.0
  %4598 = vmatpush1.msra.mxu0 0.0
  %4599 = vmatprep.subr.mxu0 0.0
  %4600 = vmatpush1.msra.mxu0 0.0
  %4601 = vmatprep.subr.mxu0 0.0
  %4602 = vmatpush1.msra.mxu0 0.0
  %4603 = vmatprep.subr.mxu0 0.0
  %4604 = vmatpush1.msra.mxu0 0.0
  %4605 = vmatprep.subr.mxu0 0.0
  %4606 = vmatpush1.msra.mxu0 0.0
  %4607 = vmatprep.mubr.f32.mxu0 0.0
  %4608 = vmatmul.mubr.f32.gmra.mrb[0].mxu0 %v4541
  %v4609 = vpop.f32.mrb[0].mxu0
  %v4610 = vadd.f32 0.0, %v4609
  %v4611 = vpop.f32.mrb[0].mxu0
  %4612 = vmatprep.mubr.f32.mxu0 0.0
  %4613 = vmatmul.mubr.f32.gmra.mrb[0].mxu0 %v4542
  %v4614 = vpop.f32.mrb[0].mxu0
  %v4615 = vadd.f32 0.0, %v4614
  %v4616 = vpop.f32.mrb[0].mxu0
  %4617 = vdwg.mxu0
  %s4618 = scalar_lea.vmem %s1, 8
  %v4619 = vld [vmem:[%s4618] sm:$0xf]
  %v4620 = vld [vmem:[%s4618 + $0x4] sm:$0xf]
  %v4623 = vunpack.c.l.b16 %v4619
  %v4624 = vunpack.c.l.b16 %v4620
  %v4625 = vpack.c.b16 %v4624, %v4623
  %v4627 = vsel %vm216, %v4625, 0
  %4629 = vmatprep.subr.bf16.mxu0 0
  %4630 = vmatpush1.bf16.msra.mxu0 %v212
  %4631 = vmatprep.subr.bf16.mxu0 0
  %4632 = vmatpush1.bf16.msra.mxu0 %v213
  %4633 = vmatprep.subr.bf16.mxu0 0
  %4634 = vmatpush1.bf16.msra.mxu0 0
  %4635 = vmatprep.subr.bf16.mxu0 0
  %4636 = vmatpush1.bf16.msra.mxu0 0
  %4637 = vmatprep.subr.bf16.mxu0 0
  %4638 = vmatpush1.bf16.msra.mxu0 0
  %4639 = vmatprep.subr.bf16.mxu0 0
  %4640 = vmatpush1.bf16.msra.mxu0 0
  %4641 = vmatprep.subr.bf16.mxu0 0
  %4642 = vmatpush1.bf16.msra.mxu0 0
  %4643 = vmatprep.subr.bf16.mxu0 0
  %4644 = vmatpush1.bf16.msra.mxu0 0
  %4645 = vmatprep.subr.bf16.mxu0 0
  %4646 = vmatpush1.bf16.msra.mxu0 0
  %4647 = vmatprep.subr.bf16.mxu0 0
  %4648 = vmatpush1.bf16.msra.mxu0 0
  %4649 = vmatprep.subr.bf16.mxu0 0
  %4650 = vmatpush1.bf16.msra.mxu0 0
  %4651 = vmatprep.subr.bf16.mxu0 0
  %4652 = vmatpush1.bf16.msra.mxu0 0
  %4653 = vmatprep.subr.bf16.mxu0 0
  %4654 = vmatpush1.bf16.msra.mxu0 0
  %4655 = vmatprep.subr.bf16.mxu0 0
  %4656 = vmatpush1.bf16.msra.mxu0 0
  %4657 = vmatprep.subr.bf16.mxu0 0
  %4658 = vmatpush1.bf16.msra.mxu0 0
  %4659 = vmatprep.subr.bf16.mxu0 0
  %4660 = vmatpush1.bf16.msra.mxu0 0
  %4661 = vmatprep.mubr.bf16.mxu0 0
  %4662 = vmatmul.mubr.bf16.gmra.mrb[0].mxu0 %v4627
  %v4663 = vpop.f32.mrb[0].mxu0
  %v4664 = vadd.f32 %v197, %v4663
  %v4665 = vpop.f32.mrb[0].mxu0
  %v4666 = vpop.f32.mrb[0].mxu0
  %v4667 = vadd.f32 %v197, %v4666
  %v4668 = vpop.f32.mrb[0].mxu0
  %4669 = vdwg.mxu0
  %v4670 = vsel %vm266, %v4664, 0.0
  %v4671 = vsel %vm267, %v4667, 0.0
  %v4672 = vsel %vm264, %v4610, %v4670
  %v4673 = vsel %vm265, %v4615, %v4671
  %v4674 = vld [vmem:[%s11] sm:$0x1]
  %v4675 = vmul.f32 %v4672, %v4672
  %v4676 = vmul.f32 %v4673, %v4673
  %v4677 = vsel %vm275, %v4675, 0.0
  %4678 = vadd.xlane.f32.xlu0 %v4677
  %v4679 = vpop.xlane.xlu0 %4678
  %v4680 = vsel %vm275, %v4676, 0.0
  %4681 = vadd.xlane.f32.xlu0 %v4680
  %v4682 = vpop.xlane.xlu0 %4681
  %v4683 = vmul.f32 %v4679, %v282
  %v4684 = vmul.f32 %v4682, %v282
  %v4685 = vadd.f32 %v4683, 1e-06
  %v4686 = vadd.f32 %v4684, 1e-06
  %v4687 = vrsqrt.pop %v4685
  %v4688 = vrsqrt.pop %v4686
  %v4689 = vmul.f32 %v4672, %v4687
  %v4690 = vmul.f32 %v4673, %v4688
  %v4692 = vlaneseq
  %v4693 = vshrl.u32 %v4692, 7
  %v4694 = vsub.s32 0, %v4693
  %v4695 = vrot.slane %v4674, %v4694
  %v4697 = vmul.f32 %v4689, %v4695
  %v4698 = vmul.f32 %v4690, %v4695
  %v4699 = vpack.c.bf16 %v4698, %v4697
  %v4700 = vld [vmem:[%s7] sm:$0xf]
  %v4701 = vld [vmem:[%s7 + $0x4] sm:$0xf]
  %v4702 = vld [vmem:[%s7 + $0x8] sm:$0xf]
  %v4703 = vld [vmem:[%s7 + $0xc] sm:$0xf]
  %v4704 = vld [vmem:[%s7 + $0x10] sm:$0xf]
  %v4705 = vld [vmem:[%s7 + $0x14] sm:$0xf]
  %v4706 = vld [vmem:[%s7 + $0x18] sm:$0xf]
  %v4707 = vld [vmem:[%s7 + $0x1c] sm:$0xf]
  %v4716 = vunpack.c.l.b16 %v4700
  %v4717 = vunpack.c.l.b16 %v4701
  %v4718 = vunpack.c.l.b16 %v4702
  %v4719 = vunpack.c.l.b16 %v4703
  %v4720 = vunpack.c.l.b16 %v4704
  %v4721 = vunpack.c.l.b16 %v4705
  %v4722 = vunpack.c.l.b16 %v4706
  %v4723 = vunpack.c.l.b16 %v4707
  %v4724 = vpack.c.b16 %v4717, %v4716
  %v4725 = vpack.c.b16 %v4719, %v4718
  %v4726 = vpack.c.b16 %v4721, %v4720
  %v4727 = vpack.c.b16 %v4723, %v4722
  %v4733 = vsel %vm275, %v4699, 0
  %4735 = vmatprep.subr.bf16.mxu0 0
  %4736 = vmatpush1.bf16.msra.mxu0 %v4724
  %4737 = vmatprep.subr.bf16.mxu0 0
  %4738 = vmatpush1.bf16.msra.mxu0 %v4725
  %4739 = vmatprep.subr.bf16.mxu0 0
  %4740 = vmatpush1.bf16.msra.mxu0 %v4726
  %4741 = vmatprep.subr.bf16.mxu0 0
  %4742 = vmatpush1.bf16.msra.mxu0 %v4727
  %4743 = vmatprep.subr.bf16.mxu0 0
  %4744 = vmatpush1.bf16.msra.mxu0 0
  %4745 = vmatprep.subr.bf16.mxu0 0
  %4746 = vmatpush1.bf16.msra.mxu0 0
  %4747 = vmatprep.subr.bf16.mxu0 0
  %4748 = vmatpush1.bf16.msra.mxu0 0
  %4749 = vmatprep.subr.bf16.mxu0 0
  %4750 = vmatpush1.bf16.msra.mxu0 0
  %4751 = vmatprep.subr.bf16.mxu0 0
  %4752 = vmatpush1.bf16.msra.mxu0 0
  %4753 = vmatprep.subr.bf16.mxu0 0
  %4754 = vmatpush1.bf16.msra.mxu0 0
  %4755 = vmatprep.subr.bf16.mxu0 0
  %4756 = vmatpush1.bf16.msra.mxu0 0
  %4757 = vmatprep.subr.bf16.mxu0 0
  %4758 = vmatpush1.bf16.msra.mxu0 0
  %4759 = vmatprep.subr.bf16.mxu0 0
  %4760 = vmatpush1.bf16.msra.mxu0 0
  %4761 = vmatprep.subr.bf16.mxu0 0
  %4762 = vmatpush1.bf16.msra.mxu0 0
  %4763 = vmatprep.subr.bf16.mxu0 0
  %4764 = vmatpush1.bf16.msra.mxu0 0
  %4765 = vmatprep.subr.bf16.mxu0 0
  %4766 = vmatpush1.bf16.msra.mxu0 0
  %4767 = vmatprep.mubr.bf16.mxu0 0
  %4768 = vmatmul.mubr.bf16.gmra.mrb[0].mxu0 %v4733
  %v4769 = vpop.f32.mrb[0].mxu0
  %v4770 = vadd.f32 0.0, %v4769
  %v4771 = vpop.f32.mrb[0].mxu0
  %v4772 = vpop.f32.mrb[0].mxu0
  %v4773 = vadd.f32 0.0, %v4772
  %v4774 = vpop.f32.mrb[0].mxu0
  %4775 = vdwg.mxu0
  %v4776 = vpack.c.bf16 %v4773, %v4770
  %v4777 = vld [vmem:[%s8] sm:$0xf]
  %v4778 = vld [vmem:[%s8 + $0x4] sm:$0xf]
  %v4779 = vld [vmem:[%s8 + $0x8] sm:$0xf]
  %v4780 = vld [vmem:[%s8 + $0xc] sm:$0xf]
  %v4781 = vld [vmem:[%s8 + $0x10] sm:$0xf]
  %v4782 = vld [vmem:[%s8 + $0x14] sm:$0xf]
  %v4783 = vld [vmem:[%s8 + $0x18] sm:$0xf]
  %v4784 = vld [vmem:[%s8 + $0x1c] sm:$0xf]
  %v4793 = vunpack.c.l.b16 %v4777
  %v4794 = vunpack.c.l.b16 %v4778
  %v4795 = vunpack.c.l.b16 %v4779
  %v4796 = vunpack.c.l.b16 %v4780
  %v4797 = vunpack.c.l.b16 %v4781
  %v4798 = vunpack.c.l.b16 %v4782
  %v4799 = vunpack.c.l.b16 %v4783
  %v4800 = vunpack.c.l.b16 %v4784
  %v4801 = vpack.c.b16 %v4794, %v4793
  %v4802 = vpack.c.b16 %v4796, %v4795
  %v4803 = vpack.c.b16 %v4798, %v4797
  %v4804 = vpack.c.b16 %v4800, %v4799
  %4809 = vmatprep.subr.bf16.mxu0 0
  %4810 = vmatpush1.bf16.msra.mxu0 %v4801
  %4811 = vmatprep.subr.bf16.mxu0 0
  %4812 = vmatpush1.bf16.msra.mxu0 %v4802
  %4813 = vmatprep.subr.bf16.mxu0 0
  %4814 = vmatpush1.bf16.msra.mxu0 %v4803
  %4815 = vmatprep.subr.bf16.mxu0 0
  %4816 = vmatpush1.bf16.msra.mxu0 %v4804
  %4817 = vmatprep.subr.bf16.mxu0 0
  %4818 = vmatpush1.bf16.msra.mxu0 0
  %4819 = vmatprep.subr.bf16.mxu0 0
  %4820 = vmatpush1.bf16.msra.mxu0 0
  %4821 = vmatprep.subr.bf16.mxu0 0
  %4822 = vmatpush1.bf16.msra.mxu0 0
  %4823 = vmatprep.subr.bf16.mxu0 0
  %4824 = vmatpush1.bf16.msra.mxu0 0
  %4825 = vmatprep.subr.bf16.mxu0 0
  %4826 = vmatpush1.bf16.msra.mxu0 0
  %4827 = vmatprep.subr.bf16.mxu0 0
  %4828 = vmatpush1.bf16.msra.mxu0 0
  %4829 = vmatprep.subr.bf16.mxu0 0
  %4830 = vmatpush1.bf16.msra.mxu0 0
  %4831 = vmatprep.subr.bf16.mxu0 0
  %4832 = vmatpush1.bf16.msra.mxu0 0
  %4833 = vmatprep.subr.bf16.mxu0 0
  %4834 = vmatpush1.bf16.msra.mxu0 0
  %4835 = vmatprep.subr.bf16.mxu0 0
  %4836 = vmatpush1.bf16.msra.mxu0 0
  %4837 = vmatprep.subr.bf16.mxu0 0
  %4838 = vmatpush1.bf16.msra.mxu0 0
  %4839 = vmatprep.subr.bf16.mxu0 0
  %4840 = vmatpush1.bf16.msra.mxu0 0
  %4841 = vmatprep.mubr.bf16.mxu0 0
  %4842 = vmatmul.mubr.bf16.gmra.mrb[0].mxu0 %v4733
  %v4843 = vpop.f32.mrb[0].mxu0
  %v4844 = vadd.f32 0.0, %v4843
  %v4845 = vpop.f32.mrb[0].mxu0
  %v4846 = vpop.f32.mrb[0].mxu0
  %v4847 = vadd.f32 0.0, %v4846
  %v4848 = vpop.f32.mrb[0].mxu0
  %4849 = vdwg.mxu0
  %v4850 = vpack.c.bf16 %v4847, %v4844
  %v4851 = vld [vmem:[%s9] sm:$0xf]
  %v4852 = vld [vmem:[%s9 + $0x4] sm:$0xf]
  %v4853 = vld [vmem:[%s9 + $0x8] sm:$0xf]
  %v4854 = vld [vmem:[%s9 + $0xc] sm:$0xf]
  %v4855 = vld [vmem:[%s9 + $0x10] sm:$0xf]
  %v4856 = vld [vmem:[%s9 + $0x14] sm:$0xf]
  %v4857 = vld [vmem:[%s9 + $0x18] sm:$0xf]
  %v4858 = vld [vmem:[%s9 + $0x1c] sm:$0xf]
  %v4867 = vunpack.c.l.b16 %v4851
  %v4868 = vunpack.c.l.b16 %v4852
  %v4869 = vunpack.c.l.b16 %v4853
  %v4870 = vunpack.c.l.b16 %v4854
  %v4871 = vunpack.c.l.b16 %v4855
  %v4872 = vunpack.c.l.b16 %v4856
  %v4873 = vunpack.c.l.b16 %v4857
  %v4874 = vunpack.c.l.b16 %v4858
  %v4875 = vpack.c.b16 %v4868, %v4867
  %v4876 = vpack.c.b16 %v4870, %v4869
  %v4877 = vpack.c.b16 %v4872, %v4871
  %v4878 = vpack.c.b16 %v4874, %v4873
  %4883 = vmatprep.subr.bf16.mxu0 0
  %4884 = vmatpush1.bf16.msra.mxu0 %v4875
  %4885 = vmatprep.subr.bf16.mxu0 0
  %4886 = vmatpush1.bf16.msra.mxu0 %v4876
  %4887 = vmatprep.subr.bf16.mxu0 0
  %4888 = vmatpush1.bf16.msra.mxu0 %v4877
  %4889 = vmatprep.subr.bf16.mxu0 0
  %4890 = vmatpush1.bf16.msra.mxu0 %v4878
  %4891 = vmatprep.subr.bf16.mxu0 0
  %4892 = vmatpush1.bf16.msra.mxu0 0
  %4893 = vmatprep.subr.bf16.mxu0 0
  %4894 = vmatpush1.bf16.msra.mxu0 0
  %4895 = vmatprep.subr.bf16.mxu0 0
  %4896 = vmatpush1.bf16.msra.mxu0 0
  %4897 = vmatprep.subr.bf16.mxu0 0
  %4898 = vmatpush1.bf16.msra.mxu0 0
  %4899 = vmatprep.subr.bf16.mxu0 0
  %4900 = vmatpush1.bf16.msra.mxu0 0
  %4901 = vmatprep.subr.bf16.mxu0 0
  %4902 = vmatpush1.bf16.msra.mxu0 0
  %4903 = vmatprep.subr.bf16.mxu0 0
  %4904 = vmatpush1.bf16.msra.mxu0 0
  %4905 = vmatprep.subr.bf16.mxu0 0
  %4906 = vmatpush1.bf16.msra.mxu0 0
  %4907 = vmatprep.subr.bf16.mxu0 0
  %4908 = vmatpush1.bf16.msra.mxu0 0
  %4909 = vmatprep.subr.bf16.mxu0 0
  %4910 = vmatpush1.bf16.msra.mxu0 0
  %4911 = vmatprep.subr.bf16.mxu0 0
  %4912 = vmatpush1.bf16.msra.mxu0 0
  %4913 = vmatprep.subr.bf16.mxu0 0
  %4914 = vmatpush1.bf16.msra.mxu0 0
  %4915 = vmatprep.mubr.bf16.mxu0 0
  %4916 = vmatmul.mubr.bf16.gmra.mrb[0].mxu0 %v4733
  %v4917 = vpop.f32.mrb[0].mxu0
  %v4918 = vadd.f32 0.0, %v4917
  %v4919 = vpop.f32.mrb[0].mxu0
  %v4920 = vpop.f32.mrb[0].mxu0
  %v4921 = vadd.f32 0.0, %v4920
  %v4922 = vpop.f32.mrb[0].mxu0
  %4923 = vdwg.mxu0
  %v4924 = vpack.c.bf16 %v4921, %v4918
  %v4926 = vlaneseq
  %v4927 = vshrl.u32 %v4926, 7
  %v4928 = vsub.s32 0, %v4927
  %v4929 = vrot.slane %v4527, %v4928
  %v4932 = vsel %vm531, %v4776, 0
  %v4935 = vsel %vm531, %v4850, 0
  %4937 = vmatprep.subr.bf16.mxu0 0
  %4938 = vmatpush1.bf16.xpose.msra.mxu0 %v4935
  %4939 = vmatprep.subr.bf16.mxu0 0
  %4940 = vmatpush1.bf16.xpose.msra.mxu0 0
  %4941 = vmatprep.subr.bf16.mxu0 0
  %4942 = vmatpush1.bf16.xpose.msra.mxu0 0
  %4943 = vmatprep.subr.bf16.mxu0 0
  %4944 = vmatpush1.bf16.xpose.msra.mxu0 0
  %4945 = vmatprep.subr.bf16.mxu0 0
  %4946 = vmatpush1.bf16.xpose.msra.mxu0 0
  %4947 = vmatprep.subr.bf16.mxu0 0
  %4948 = vmatpush1.bf16.xpose.msra.mxu0 0
  %4949 = vmatprep.subr.bf16.mxu0 0
  %4950 = vmatpush1.bf16.xpose.msra.mxu0 0
  %4951 = vmatprep.subr.bf16.mxu0 0
  %4952 = vmatpush1.bf16.xpose.msra.mxu0 0
  %4953 = vmatprep.subr.bf16.mxu0 0
  %4954 = vmatpush1.bf16.xpose.msra.mxu0 0
  %4955 = vmatprep.subr.bf16.mxu0 0
  %4956 = vmatpush1.bf16.xpose.msra.mxu0 0
  %4957 = vmatprep.subr.bf16.mxu0 0
  %4958 = vmatpush1.bf16.xpose.msra.mxu0 0
  %4959 = vmatprep.subr.bf16.mxu0 0
  %4960 = vmatpush1.bf16.xpose.msra.mxu0 0
  %4961 = vmatprep.subr.bf16.mxu0 0
  %4962 = vmatpush1.bf16.xpose.msra.mxu0 0
  %4963 = vmatprep.subr.bf16.mxu0 0
  %4964 = vmatpush1.bf16.xpose.msra.mxu0 0
  %4965 = vmatprep.subr.bf16.mxu0 0
  %4966 = vmatpush1.bf16.xpose.msra.mxu0 0
  %4967 = vmatprep.subr.bf16.mxu0 0
  %4968 = vmatpush1.bf16.xpose.msra.mxu0 0
  %4969 = vmatprep.mubr.bf16.mxu0 0
  %4970 = vmatmul.mubr.bf16.gmra.mrb[0].mxu0 %v4932
  %v4971 = vpop.f32.mrb[0].mxu0
  %v4972 = vadd.f32 %v4929, %v4971
  %v4973 = vpop.f32.mrb[0].mxu0
  %v4974 = vpop.f32.mrb[0].mxu0
  %v4975 = vadd.f32 %v4929, %v4974
  %v4976 = vpop.f32.mrb[0].mxu0
  %4977 = vdwg.mxu0
  %v4978 = vsel %vm531, %v4972, -inf
  %4979 = vmax.xlane.f32.xlu0 %v4978
  %v4980 = vpop.xlane.xlu0 %4979
  %v4981 = vsel %vm531, %v4975, -inf
  %4982 = vmax.xlane.f32.xlu0 %v4981
  %v4983 = vpop.xlane.xlu0 %4982
  %v4984 = vsub.f32 %v4972, %v4980
  %v4985 = vsub.f32 %v4975, %v4983
  %v4986 = vmul.f32 %v4984, 1.442695
  %v4987 = vpow.pop %v4986
  %v4988 = vmul.f32 %v4985, 1.442695
  %v4989 = vpow.pop %v4988
  %v4990 = vsel %vm531, %v4987, 0.0
  %4991 = vadd.xlane.f32.xlu0 %v4990
  %v4992 = vpop.xlane.xlu0 %4991
  %v4993 = vsel %vm531, %v4989, 0.0
  %4994 = vadd.xlane.f32.xlu0 %v4993
  %v4995 = vpop.xlane.xlu0 %4994
  %v4996 = vrcp.pop %v4992
  %v4997 = vrcp.pop %v4995
  %v4998 = vmul.f32 %v4987, %v4996
  %v4999 = vmul.f32 %v4989, %v4997
  %v5000 = vpack.c.bf16 %v4999, %v4998
  %v5002 = vsel %vm531, %v5000, 0
  %5004 = vmatprep.subr.bf16.mxu0 0
  %5005 = vmatpush1.bf16.msra.mxu0 %v4924
  %5006 = vmatprep.subr.bf16.mxu0 0
  %5007 = vmatpush1.bf16.msra.mxu0 0
  %5008 = vmatprep.subr.bf16.mxu0 0
  %5009 = vmatpush1.bf16.msra.mxu0 0
  %5010 = vmatprep.subr.bf16.mxu0 0
  %5011 = vmatpush1.bf16.msra.mxu0 0
  %5012 = vmatprep.subr.bf16.mxu0 0
  %5013 = vmatpush1.bf16.msra.mxu0 0
  %5014 = vmatprep.subr.bf16.mxu0 0
  %5015 = vmatpush1.bf16.msra.mxu0 0
  %5016 = vmatprep.subr.bf16.mxu0 0
  %5017 = vmatpush1.bf16.msra.mxu0 0
  %5018 = vmatprep.subr.bf16.mxu0 0
  %5019 = vmatpush1.bf16.msra.mxu0 0
  %5020 = vmatprep.subr.bf16.mxu0 0
  %5021 = vmatpush1.bf16.msra.mxu0 0
  %5022 = vmatprep.subr.bf16.mxu0 0
  %5023 = vmatpush1.bf16.msra.mxu0 0
  %5024 = vmatprep.subr.bf16.mxu0 0
  %5025 = vmatpush1.bf16.msra.mxu0 0
  %5026 = vmatprep.subr.bf16.mxu0 0
  %5027 = vmatpush1.bf16.msra.mxu0 0
  %5028 = vmatprep.subr.bf16.mxu0 0
  %5029 = vmatpush1.bf16.msra.mxu0 0
  %5030 = vmatprep.subr.bf16.mxu0 0
  %5031 = vmatpush1.bf16.msra.mxu0 0
  %5032 = vmatprep.subr.bf16.mxu0 0
  %5033 = vmatpush1.bf16.msra.mxu0 0
  %5034 = vmatprep.subr.bf16.mxu0 0
  %5035 = vmatpush1.bf16.msra.mxu0 0
  %5036 = vmatprep.mubr.bf16.mxu0 0
  %5037 = vmatmul.mubr.bf16.gmra.mrb[0].mxu0 %v5002
  %v5038 = vpop.f32.mrb[0].mxu0
  %v5039 = vadd.f32 0.0, %v5038
  %v5040 = vpop.f32.mrb[0].mxu0
  %v5041 = vpop.f32.mrb[0].mxu0
  %v5042 = vadd.f32 0.0, %v5041
  %v5043 = vpop.f32.mrb[0].mxu0
  %5044 = vdwg.mxu0
  %v5045 = vld [vmem:[%s646] sm:$0xf]
  %v5046 = vld [vmem:[%s646 + $0x4] sm:$0xf]
  %v5047 = vld [vmem:[%s646 + $0x8] sm:$0xf]
  %v5048 = vld [vmem:[%s646 + $0xc] sm:$0xf]
  %v5049 = vld [vmem:[%s646 + $0x10] sm:$0xf]
  %v5050 = vld [vmem:[%s646 + $0x14] sm:$0xf]
  %v5051 = vld [vmem:[%s646 + $0x18] sm:$0xf]
  %v5052 = vld [vmem:[%s646 + $0x1c] sm:$0xf]
  %v5061 = vunpack.c.l.b16 %v5045
  %v5062 = vunpack.c.l.b16 %v5046
  %v5063 = vunpack.c.l.b16 %v5047
  %v5064 = vunpack.c.l.b16 %v5048
  %v5065 = vunpack.c.l.b16 %v5049
  %v5066 = vunpack.c.l.b16 %v5050
  %v5067 = vunpack.c.l.b16 %v5051
  %v5068 = vunpack.c.l.b16 %v5052
  %v5069 = vpack.c.b16 %v5062, %v5061
  %v5070 = vpack.c.b16 %v5064, %v5063
  %v5071 = vpack.c.b16 %v5066, %v5065
  %v5072 = vpack.c.b16 %v5068, %v5067
  %5077 = vmatprep.subr.bf16.mxu0 0
  %5078 = vmatpush1.bf16.msra.mxu0 %v5069
  %5079 = vmatprep.subr.bf16.mxu0 0
  %5080 = vmatpush1.bf16.msra.mxu0 %v5070
  %5081 = vmatprep.subr.bf16.mxu0 0
  %5082 = vmatpush1.bf16.msra.mxu0 %v5071
  %5083 = vmatprep.subr.bf16.mxu0 0
  %5084 = vmatpush1.bf16.msra.mxu0 %v5072
  %5085 = vmatprep.subr.bf16.mxu0 0
  %5086 = vmatpush1.bf16.msra.mxu0 0
  %5087 = vmatprep.subr.bf16.mxu0 0
  %5088 = vmatpush1.bf16.msra.mxu0 0
  %5089 = vmatprep.subr.bf16.mxu0 0
  %5090 = vmatpush1.bf16.msra.mxu0 0
  %5091 = vmatprep.subr.bf16.mxu0 0
  %5092 = vmatpush1.bf16.msra.mxu0 0
  %5093 = vmatprep.subr.bf16.mxu0 0
  %5094 = vmatpush1.bf16.msra.mxu0 0
  %5095 = vmatprep.subr.bf16.mxu0 0
  %5096 = vmatpush1.bf16.msra.mxu0 0
  %5097 = vmatprep.subr.bf16.mxu0 0
  %5098 = vmatpush1.bf16.msra.mxu0 0
  %5099 = vmatprep.subr.bf16.mxu0 0
  %5100 = vmatpush1.bf16.msra.mxu0 0
  %5101 = vmatprep.subr.bf16.mxu0 0
  %5102 = vmatpush1.bf16.msra.mxu0 0
  %5103 = vmatprep.subr.bf16.mxu0 0
  %5104 = vmatpush1.bf16.msra.mxu0 0
  %5105 = vmatprep.subr.bf16.mxu0 0
  %5106 = vmatpush1.bf16.msra.mxu0 0
  %5107 = vmatprep.subr.bf16.mxu0 0
  %5108 = vmatpush1.bf16.msra.mxu0 0
  %5109 = vmatprep.mubr.bf16.mxu0 0
  %5110 = vmatmul.mubr.bf16.gmra.mrb[0].mxu0 %v4733
  %v5111 = vpop.f32.mrb[0].mxu0
  %v5112 = vadd.f32 0.0, %v5111
  %v5113 = vpop.f32.mrb[0].mxu0
  %v5114 = vpop.f32.mrb[0].mxu0
  %v5115 = vadd.f32 0.0, %v5114
  %v5116 = vpop.f32.mrb[0].mxu0
  %5117 = vdwg.mxu0
  %v5118 = vpack.c.bf16 %v5115, %v5112
  %v5119 = vld [vmem:[%s721] sm:$0xf]
  %v5120 = vld [vmem:[%s721 + $0x4] sm:$0xf]
  %v5121 = vld [vmem:[%s721 + $0x8] sm:$0xf]
  %v5122 = vld [vmem:[%s721 + $0xc] sm:$0xf]
  %v5123 = vld [vmem:[%s721 + $0x10] sm:$0xf]
  %v5124 = vld [vmem:[%s721 + $0x14] sm:$0xf]
  %v5125 = vld [vmem:[%s721 + $0x18] sm:$0xf]
  %v5126 = vld [vmem:[%s721 + $0x1c] sm:$0xf]
  %v5135 = vunpack.c.l.b16 %v5119
  %v5136 = vunpack.c.l.b16 %v5120
  %v5137 = vunpack.c.l.b16 %v5121
  %v5138 = vunpack.c.l.b16 %v5122
  %v5139 = vunpack.c.l.b16 %v5123
  %v5140 = vunpack.c.l.b16 %v5124
  %v5141 = vunpack.c.l.b16 %v5125
  %v5142 = vunpack.c.l.b16 %v5126
  %v5143 = vpack.c.b16 %v5136, %v5135
  %v5144 = vpack.c.b16 %v5138, %v5137
  %v5145 = vpack.c.b16 %v5140, %v5139
  %v5146 = vpack.c.b16 %v5142, %v5141
  %5151 = vmatprep.subr.bf16.mxu0 0
  %5152 = vmatpush1.bf16.msra.mxu0 %v5143
  %5153 = vmatprep.subr.bf16.mxu0 0
  %5154 = vmatpush1.bf16.msra.mxu0 %v5144
  %5155 = vmatprep.subr.bf16.mxu0 0
  %5156 = vmatpush1.bf16.msra.mxu0 %v5145
  %5157 = vmatprep.subr.bf16.mxu0 0
  %5158 = vmatpush1.bf16.msra.mxu0 %v5146
  %5159 = vmatprep.subr.bf16.mxu0 0
  %5160 = vmatpush1.bf16.msra.mxu0 0
  %5161 = vmatprep.subr.bf16.mxu0 0
  %5162 = vmatpush1.bf16.msra.mxu0 0
  %5163 = vmatprep.subr.bf16.mxu0 0
  %5164 = vmatpush1.bf16.msra.mxu0 0
  %5165 = vmatprep.subr.bf16.mxu0 0
  %5166 = vmatpush1.bf16.msra.mxu0 0
  %5167 = vmatprep.subr.bf16.mxu0 0
  %5168 = vmatpush1.bf16.msra.mxu0 0
  %5169 = vmatprep.subr.bf16.mxu0 0
  %5170 = vmatpush1.bf16.msra.mxu0 0
  %5171 = vmatprep.subr.bf16.mxu0 0
  %5172 = vmatpush1.bf16.msra.mxu0 0
  %5173 = vmatprep.subr.bf16.mxu0 0
  %5174 = vmatpush1.bf16.msra.mxu0 0
  %5175 = vmatprep.subr.bf16.mxu0 0
  %5176 = vmatpush1.bf16.msra.mxu0 0
  %5177 = vmatprep.subr.bf16.mxu0 0
  %5178 = vmatpush1.bf16.msra.mxu0 0
  %5179 = vmatprep.subr.bf16.mxu0 0
  %5180 = vmatpush1.bf16.msra.mxu0 0
  %5181 = vmatprep.subr.bf16.mxu0 0
  %5182 = vmatpush1.bf16.msra.mxu0 0
  %5183 = vmatprep.mubr.bf16.mxu0 0
  %5184 = vmatmul.mubr.bf16.gmra.mrb[0].mxu0 %v4733
  %v5185 = vpop.f32.mrb[0].mxu0
  %v5186 = vadd.f32 0.0, %v5185
  %v5187 = vpop.f32.mrb[0].mxu0
  %v5188 = vpop.f32.mrb[0].mxu0
  %v5189 = vadd.f32 0.0, %v5188
  %v5190 = vpop.f32.mrb[0].mxu0
  %5191 = vdwg.mxu0
  %v5192 = vpack.c.bf16 %v5189, %v5186
  %v5193 = vld [vmem:[%s796] sm:$0xf]
  %v5194 = vld [vmem:[%s796 + $0x4] sm:$0xf]
  %v5195 = vld [vmem:[%s796 + $0x8] sm:$0xf]
  %v5196 = vld [vmem:[%s796 + $0xc] sm:$0xf]
  %v5197 = vld [vmem:[%s796 + $0x10] sm:$0xf]
  %v5198 = vld [vmem:[%s796 + $0x14] sm:$0xf]
  %v5199 = vld [vmem:[%s796 + $0x18] sm:$0xf]
  %v5200 = vld [vmem:[%s796 + $0x1c] sm:$0xf]
  %v5209 = vunpack.c.l.b16 %v5193
  %v5210 = vunpack.c.l.b16 %v5194
  %v5211 = vunpack.c.l.b16 %v5195
  %v5212 = vunpack.c.l.b16 %v5196
  %v5213 = vunpack.c.l.b16 %v5197
  %v5214 = vunpack.c.l.b16 %v5198
  %v5215 = vunpack.c.l.b16 %v5199
  %v5216 = vunpack.c.l.b16 %v5200
  %v5217 = vpack.c.b16 %v5210, %v5209
  %v5218 = vpack.c.b16 %v5212, %v5211
  %v5219 = vpack.c.b16 %v5214, %v5213
  %v5220 = vpack.c.b16 %v5216, %v5215
  %5225 = vmatprep.subr.bf16.mxu0 0
  %5226 = vmatpush1.bf16.msra.mxu0 %v5217
  %5227 = vmatprep.subr.bf16.mxu0 0
  %5228 = vmatpush1.bf16.msra.mxu0 %v5218
  %5229 = vmatprep.subr.bf16.mxu0 0
  %5230 = vmatpush1.bf16.msra.mxu0 %v5219
  %5231 = vmatprep.subr.bf16.mxu0 0
  %5232 = vmatpush1.bf16.msra.mxu0 %v5220
  %5233 = vmatprep.subr.bf16.mxu0 0
  %5234 = vmatpush1.bf16.msra.mxu0 0
  %5235 = vmatprep.subr.bf16.mxu0 0
  %5236 = vmatpush1.bf16.msra.mxu0 0
  %5237 = vmatprep.subr.bf16.mxu0 0
  %5238 = vmatpush1.bf16.msra.mxu0 0
  %5239 = vmatprep.subr.bf16.mxu0 0
  %5240 = vmatpush1.bf16.msra.mxu0 0
  %5241 = vmatprep.subr.bf16.mxu0 0
  %5242 = vmatpush1.bf16.msra.mxu0 0
  %5243 = vmatprep.subr.bf16.mxu0 0
  %5244 = vmatpush1.bf16.msra.mxu0 0
  %5245 = vmatprep.subr.bf16.mxu0 0
  %5246 = vmatpush1.bf16.msra.mxu0 0
  %5247 = vmatprep.subr.bf16.mxu0 0
  %5248 = vmatpush1.bf16.msra.mxu0 0
  %5249 = vmatprep.subr.bf16.mxu0 0
  %5250 = vmatpush1.bf16.msra.mxu0 0
  %5251 = vmatprep.subr.bf16.mxu0 0
  %5252 = vmatpush1.bf16.msra.mxu0 0
  %5253 = vmatprep.subr.bf16.mxu0 0
  %5254 = vmatpush1.bf16.msra.mxu0 0
  %5255 = vmatprep.subr.bf16.mxu0 0
  %5256 = vmatpush1.bf16.msra.mxu0 0
  %5257 = vmatprep.mubr.bf16.mxu0 0
  %5258 = vmatmul.mubr.bf16.gmra.mrb[0].mxu0 %v4733
  %v5259 = vpop.f32.mrb[0].mxu0
  %v5260 = vadd.f32 0.0, %v5259
  %v5261 = vpop.f32.mrb[0].mxu0
  %v5262 = vpop.f32.mrb[0].mxu0
  %v5263 = vadd.f32 0.0, %v5262
  %v5264 = vpop.f32.mrb[0].mxu0
  %5265 = vdwg.mxu0
  %v5266 = vpack.c.bf16 %v5263, %v5260
  %v5268 = vsel %vm531, %v5118, 0
  %v5271 = vsel %vm531, %v5192, 0
  %5273 = vmatprep.subr.bf16.mxu0 0
  %5274 = vmatpush1.bf16.xpose.msra.mxu0 %v5271
  %5275 = vmatprep.subr.bf16.mxu0 0
  %5276 = vmatpush1.bf16.xpose.msra.mxu0 0
  %5277 = vmatprep.subr.bf16.mxu0 0
  %5278 = vmatpush1.bf16.xpose.msra.mxu0 0
  %5279 = vmatprep.subr.bf16.mxu0 0
  %5280 = vmatpush1.bf16.xpose.msra.mxu0 0
  %5281 = vmatprep.subr.bf16.mxu0 0
  %5282 = vmatpush1.bf16.xpose.msra.mxu0 0
  %5283 = vmatprep.subr.bf16.mxu0 0
  %5284 = vmatpush1.bf16.xpose.msra.mxu0 0
  %5285 = vmatprep.subr.bf16.mxu0 0
  %5286 = vmatpush1.bf16.xpose.msra.mxu0 0
  %5287 = vmatprep.subr.bf16.mxu0 0
  %5288 = vmatpush1.bf16.xpose.msra.mxu0 0
  %5289 = vmatprep.subr.bf16.mxu0 0
  %5290 = vmatpush1.bf16.xpose.msra.mxu0 0
  %5291 = vmatprep.subr.bf16.mxu0 0
  %5292 = vmatpush1.bf16.xpose.msra.mxu0 0
  %5293 = vmatprep.subr.bf16.mxu0 0
  %5294 = vmatpush1.bf16.xpose.msra.mxu0 0
  %5295 = vmatprep.subr.bf16.mxu0 0
  %5296 = vmatpush1.bf16.xpose.msra.mxu0 0
  %5297 = vmatprep.subr.bf16.mxu0 0
  %5298 = vmatpush1.bf16.xpose.msra.mxu0 0
  %5299 = vmatprep.subr.bf16.mxu0 0
  %5300 = vmatpush1.bf16.xpose.msra.mxu0 0
  %5301 = vmatprep.subr.bf16.mxu0 0
  %5302 = vmatpush1.bf16.xpose.msra.mxu0 0
  %5303 = vmatprep.subr.bf16.mxu0 0
  %5304 = vmatpush1.bf16.xpose.msra.mxu0 0
  %5305 = vmatprep.mubr.bf16.mxu0 0
  %5306 = vmatmul.mubr.bf16.gmra.mrb[0].mxu0 %v5268
  %v5307 = vpop.f32.mrb[0].mxu0
  %v5308 = vadd.f32 %v4929, %v5307
  %v5309 = vpop.f32.mrb[0].mxu0
  %v5310 = vpop.f32.mrb[0].mxu0
  %v5311 = vadd.f32 %v4929, %v5310
  %v5312 = vpop.f32.mrb[0].mxu0
  %5313 = vdwg.mxu0
  %v5314 = vsel %vm531, %v5308, -inf
  %5315 = vmax.xlane.f32.xlu0 %v5314
  %v5316 = vpop.xlane.xlu0 %5315
  %v5317 = vsel %vm531, %v5311, -inf
  %5318 = vmax.xlane.f32.xlu0 %v5317
  %v5319 = vpop.xlane.xlu0 %5318
  %v5320 = vsub.f32 %v5308, %v5316
  %v5321 = vsub.f32 %v5311, %v5319
  %v5322 = vmul.f32 %v5320, 1.442695
  %v5323 = vpow.pop %v5322
  %v5324 = vmul.f32 %v5321, 1.442695
  %v5325 = vpow.pop %v5324
  %v5326 = vsel %vm531, %v5323, 0.0
  %5327 = vadd.xlane.f32.xlu0 %v5326
  %v5328 = vpop.xlane.xlu0 %5327
  %v5329 = vsel %vm531, %v5325, 0.0
  %5330 = vadd.xlane.f32.xlu0 %v5329
  %v5331 = vpop.xlane.xlu0 %5330
  %v5332 = vrcp.pop %v5328
  %v5333 = vrcp.pop %v5331
  %v5334 = vmul.f32 %v5323, %v5332
  %v5335 = vmul.f32 %v5325, %v5333
  %v5336 = vpack.c.bf16 %v5335, %v5334
  %v5338 = vsel %vm531, %v5336, 0
  %5340 = vmatprep.subr.bf16.mxu0 0
  %5341 = vmatpush1.bf16.msra.mxu0 %v5266
  %5342 = vmatprep.subr.bf16.mxu0 0
  %5343 = vmatpush1.bf16.msra.mxu0 0
  %5344 = vmatprep.subr.bf16.mxu0 0
  %5345 = vmatpush1.bf16.msra.mxu0 0
  %5346 = vmatprep.subr.bf16.mxu0 0
  %5347 = vmatpush1.bf16.msra.mxu0 0
  %5348 = vmatprep.subr.bf16.mxu0 0
  %5349 = vmatpush1.bf16.msra.mxu0 0
  %5350 = vmatprep.subr.bf16.mxu0 0
  %5351 = vmatpush1.bf16.msra.mxu0 0
  %5352 = vmatprep.subr.bf16.mxu0 0
  %5353 = vmatpush1.bf16.msra.mxu0 0
  %5354 = vmatprep.subr.bf16.mxu0 0
  %5355 = vmatpush1.bf16.msra.mxu0 0
  %5356 = vmatprep.subr.bf16.mxu0 0
  %5357 = vmatpush1.bf16.msra.mxu0 0
  %5358 = vmatprep.subr.bf16.mxu0 0
  %5359 = vmatpush1.bf16.msra.mxu0 0
  %5360 = vmatprep.subr.bf16.mxu0 0
  %5361 = vmatpush1.bf16.msra.mxu0 0
  %5362 = vmatprep.subr.bf16.mxu0 0
  %5363 = vmatpush1.bf16.msra.mxu0 0
  %5364 = vmatprep.subr.bf16.mxu0 0
  %5365 = vmatpush1.bf16.msra.mxu0 0
  %5366 = vmatprep.subr.bf16.mxu0 0
  %5367 = vmatpush1.bf16.msra.mxu0 0
  %5368 = vmatprep.subr.bf16.mxu0 0
  %5369 = vmatpush1.bf16.msra.mxu0 0
  %5370 = vmatprep.subr.bf16.mxu0 0
  %5371 = vmatpush1.bf16.msra.mxu0 0
  %5372 = vmatprep.mubr.bf16.mxu0 0
  %5373 = vmatmul.mubr.bf16.gmra.mrb[0].mxu0 %v5338
  %v5374 = vpop.f32.mrb[0].mxu0
  %v5375 = vadd.f32 0.0, %v5374
  %v5376 = vpop.f32.mrb[0].mxu0
  %v5377 = vpop.f32.mrb[0].mxu0
  %v5378 = vadd.f32 0.0, %v5377
  %v5379 = vpop.f32.mrb[0].mxu0
  %5380 = vdwg.mxu0
  %v5381 = vld [vmem:[%s985] sm:$0xf]
  %v5382 = vld [vmem:[%s985 + $0x4] sm:$0xf]
  %v5383 = vld [vmem:[%s985 + $0x8] sm:$0xf]
  %v5384 = vld [vmem:[%s985 + $0xc] sm:$0xf]
  %v5385 = vld [vmem:[%s985 + $0x10] sm:$0xf]
  %v5386 = vld [vmem:[%s985 + $0x14] sm:$0xf]
  %v5387 = vld [vmem:[%s985 + $0x18] sm:$0xf]
  %v5388 = vld [vmem:[%s985 + $0x1c] sm:$0xf]
  %v5397 = vunpack.c.l.b16 %v5381
  %v5398 = vunpack.c.l.b16 %v5382
  %v5399 = vunpack.c.l.b16 %v5383
  %v5400 = vunpack.c.l.b16 %v5384
  %v5401 = vunpack.c.l.b16 %v5385
  %v5402 = vunpack.c.l.b16 %v5386
  %v5403 = vunpack.c.l.b16 %v5387
  %v5404 = vunpack.c.l.b16 %v5388
  %v5405 = vpack.c.b16 %v5398, %v5397
  %v5406 = vpack.c.b16 %v5400, %v5399
  %v5407 = vpack.c.b16 %v5402, %v5401
  %v5408 = vpack.c.b16 %v5404, %v5403
  %5413 = vmatprep.subr.bf16.mxu0 0
  %5414 = vmatpush1.bf16.msra.mxu0 %v5405
  %5415 = vmatprep.subr.bf16.mxu0 0
  %5416 = vmatpush1.bf16.msra.mxu0 %v5406
  %5417 = vmatprep.subr.bf16.mxu0 0
  %5418 = vmatpush1.bf16.msra.mxu0 %v5407
  %5419 = vmatprep.subr.bf16.mxu0 0
  %5420 = vmatpush1.bf16.msra.mxu0 %v5408
  %5421 = vmatprep.subr.bf16.mxu0 0
  %5422 = vmatpush1.bf16.msra.mxu0 0
  %5423 = vmatprep.subr.bf16.mxu0 0
  %5424 = vmatpush1.bf16.msra.mxu0 0
  %5425 = vmatprep.subr.bf16.mxu0 0
  %5426 = vmatpush1.bf16.msra.mxu0 0
  %5427 = vmatprep.subr.bf16.mxu0 0
  %5428 = vmatpush1.bf16.msra.mxu0 0
  %5429 = vmatprep.subr.bf16.mxu0 0
  %5430 = vmatpush1.bf16.msra.mxu0 0
  %5431 = vmatprep.subr.bf16.mxu0 0
  %5432 = vmatpush1.bf16.msra.mxu0 0
  %5433 = vmatprep.subr.bf16.mxu0 0
  %5434 = vmatpush1.bf16.msra.mxu0 0
  %5435 = vmatprep.subr.bf16.mxu0 0
  %5436 = vmatpush1.bf16.msra.mxu0 0
  %5437 = vmatprep.subr.bf16.mxu0 0
  %5438 = vmatpush1.bf16.msra.mxu0 0
  %5439 = vmatprep.subr.bf16.mxu0 0
  %5440 = vmatpush1.bf16.msra.mxu0 0
  %5441 = vmatprep.subr.bf16.mxu0 0
  %5442 = vmatpush1.bf16.msra.mxu0 0
  %5443 = vmatprep.subr.bf16.mxu0 0
  %5444 = vmatpush1.bf16.msra.mxu0 0
  %5445 = vmatprep.mubr.bf16.mxu0 0
  %5446 = vmatmul.mubr.bf16.gmra.mrb[0].mxu0 %v4733
  %v5447 = vpop.f32.mrb[0].mxu0
  %v5448 = vadd.f32 0.0, %v5447
  %v5449 = vpop.f32.mrb[0].mxu0
  %v5450 = vpop.f32.mrb[0].mxu0
  %v5451 = vadd.f32 0.0, %v5450
  %v5452 = vpop.f32.mrb[0].mxu0
  %5453 = vdwg.mxu0
  %v5454 = vpack.c.bf16 %v5451, %v5448
  %v5455 = vld [vmem:[%s1060] sm:$0xf]
  %v5456 = vld [vmem:[%s1060 + $0x4] sm:$0xf]
  %v5457 = vld [vmem:[%s1060 + $0x8] sm:$0xf]
  %v5458 = vld [vmem:[%s1060 + $0xc] sm:$0xf]
  %v5459 = vld [vmem:[%s1060 + $0x10] sm:$0xf]
  %v5460 = vld [vmem:[%s1060 + $0x14] sm:$0xf]
  %v5461 = vld [vmem:[%s1060 + $0x18] sm:$0xf]
  %v5462 = vld [vmem:[%s1060 + $0x1c] sm:$0xf]
  %v5471 = vunpack.c.l.b16 %v5455
  %v5472 = vunpack.c.l.b16 %v5456
  %v5473 = vunpack.c.l.b16 %v5457
  %v5474 = vunpack.c.l.b16 %v5458
  %v5475 = vunpack.c.l.b16 %v5459
  %v5476 = vunpack.c.l.b16 %v5460
  %v5477 = vunpack.c.l.b16 %v5461
  %v5478 = vunpack.c.l.b16 %v5462
  %v5479 = vpack.c.b16 %v5472, %v5471
  %v5480 = vpack.c.b16 %v5474, %v5473
  %v5481 = vpack.c.b16 %v5476, %v5475
  %v5482 = vpack.c.b16 %v5478, %v5477
  %5487 = vmatprep.subr.bf16.mxu0 0
  %5488 = vmatpush1.bf16.msra.mxu0 %v5479
  %5489 = vmatprep.subr.bf16.mxu0 0
  %5490 = vmatpush1.bf16.msra.mxu0 %v5480
  %5491 = vmatprep.subr.bf16.mxu0 0
  %5492 = vmatpush1.bf16.msra.mxu0 %v5481
  %5493 = vmatprep.subr.bf16.mxu0 0
  %5494 = vmatpush1.bf16.msra.mxu0 %v5482
  %5495 = vmatprep.subr.bf16.mxu0 0
  %5496 = vmatpush1.bf16.msra.mxu0 0
  %5497 = vmatprep.subr.bf16.mxu0 0
  %5498 = vmatpush1.bf16.msra.mxu0 0
  %5499 = vmatprep.subr.bf16.mxu0 0
  %5500 = vmatpush1.bf16.msra.mxu0 0
  %5501 = vmatprep.subr.bf16.mxu0 0
  %5502 = vmatpush1.bf16.msra.mxu0 0
  %5503 = vmatprep.subr.bf16.mxu0 0
  %5504 = vmatpush1.bf16.msra.mxu0 0
  %5505 = vmatprep.subr.bf16.mxu0 0
  %5506 = vmatpush1.bf16.msra.mxu0 0
  %5507 = vmatprep.subr.bf16.mxu0 0
  %5508 = vmatpush1.bf16.msra.mxu0 0
  %5509 = vmatprep.subr.bf16.mxu0 0
  %5510 = vmatpush1.bf16.msra.mxu0 0
  %5511 = vmatprep.subr.bf16.mxu0 0
  %5512 = vmatpush1.bf16.msra.mxu0 0
  %5513 = vmatprep.subr.bf16.mxu0 0
  %5514 = vmatpush1.bf16.msra.mxu0 0
  %5515 = vmatprep.subr.bf16.mxu0 0
  %5516 = vmatpush1.bf16.msra.mxu0 0
  %5517 = vmatprep.subr.bf16.mxu0 0
  %5518 = vmatpush1.bf16.msra.mxu0 0
  %5519 = vmatprep.mubr.bf16.mxu0 0
  %5520 = vmatmul.mubr.bf16.gmra.mrb[0].mxu0 %v4733
  %v5521 = vpop.f32.mrb[0].mxu0
  %v5522 = vadd.f32 0.0, %v5521
  %v5523 = vpop.f32.mrb[0].mxu0
  %v5524 = vpop.f32.mrb[0].mxu0
  %v5525 = vadd.f32 0.0, %v5524
  %v5526 = vpop.f32.mrb[0].mxu0
  %5527 = vdwg.mxu0
  %v5528 = vpack.c.bf16 %v5525, %v5522
  %v5529 = vld [vmem:[%s1135] sm:$0xf]
  %v5530 = vld [vmem:[%s1135 + $0x4] sm:$0xf]
  %v5531 = vld [vmem:[%s1135 + $0x8] sm:$0xf]
  %v5532 = vld [vmem:[%s1135 + $0xc] sm:$0xf]
  %v5533 = vld [vmem:[%s1135 + $0x10] sm:$0xf]
  %v5534 = vld [vmem:[%s1135 + $0x14] sm:$0xf]
  %v5535 = vld [vmem:[%s1135 + $0x18] sm:$0xf]
  %v5536 = vld [vmem:[%s1135 + $0x1c] sm:$0xf]
  %v5545 = vunpack.c.l.b16 %v5529
  %v5546 = vunpack.c.l.b16 %v5530
  %v5547 = vunpack.c.l.b16 %v5531
  %v5548 = vunpack.c.l.b16 %v5532
  %v5549 = vunpack.c.l.b16 %v5533
  %v5550 = vunpack.c.l.b16 %v5534
  %v5551 = vunpack.c.l.b16 %v5535
  %v5552 = vunpack.c.l.b16 %v5536
  %v5553 = vpack.c.b16 %v5546, %v5545
  %v5554 = vpack.c.b16 %v5548, %v5547
  %v5555 = vpack.c.b16 %v5550, %v5549
  %v5556 = vpack.c.b16 %v5552, %v5551
  %5561 = vmatprep.subr.bf16.mxu0 0
  %5562 = vmatpush1.bf16.msra.mxu0 %v5553
  %5563 = vmatprep.subr.bf16.mxu0 0
  %5564 = vmatpush1.bf16.msra.mxu0 %v5554
  %5565 = vmatprep.subr.bf16.mxu0 0
  %5566 = vmatpush1.bf16.msra.mxu0 %v5555
  %5567 = vmatprep.subr.bf16.mxu0 0
  %5568 = vmatpush1.bf16.msra.mxu0 %v5556
  %5569 = vmatprep.subr.bf16.mxu0 0
  %5570 = vmatpush1.bf16.msra.mxu0 0
  %5571 = vmatprep.subr.bf16.mxu0 0
  %5572 = vmatpush1.bf16.msra.mxu0 0
  %5573 = vmatprep.subr.bf16.mxu0 0
  %5574 = vmatpush1.bf16.msra.mxu0 0
  %5575 = vmatprep.subr.bf16.mxu0 0
  %5576 = vmatpush1.bf16.msra.mxu0 0
  %5577 = vmatprep.subr.bf16.mxu0 0
  %5578 = vmatpush1.bf16.msra.mxu0 0
  %5579 = vmatprep.subr.bf16.mxu0 0
  %5580 = vmatpush1.bf16.msra.mxu0 0
  %5581 = vmatprep.subr.bf16.mxu0 0
  %5582 = vmatpush1.bf16.msra.mxu0 0
  %5583 = vmatprep.subr.bf16.mxu0 0
  %5584 = vmatpush1.bf16.msra.mxu0 0
  %5585 = vmatprep.subr.bf16.mxu0 0
  %5586 = vmatpush1.bf16.msra.mxu0 0
  %5587 = vmatprep.subr.bf16.mxu0 0
  %5588 = vmatpush1.bf16.msra.mxu0 0
  %5589 = vmatprep.subr.bf16.mxu0 0
  %5590 = vmatpush1.bf16.msra.mxu0 0
  %5591 = vmatprep.subr.bf16.mxu0 0
  %5592 = vmatpush1.bf16.msra.mxu0 0
  %5593 = vmatprep.mubr.bf16.mxu0 0
  %5594 = vmatmul.mubr.bf16.gmra.mrb[0].mxu0 %v4733
  %v5595 = vpop.f32.mrb[0].mxu0
  %v5596 = vadd.f32 0.0, %v5595
  %v5597 = vpop.f32.mrb[0].mxu0
  %v5598 = vpop.f32.mrb[0].mxu0
  %v5599 = vadd.f32 0.0, %v5598
  %v5600 = vpop.f32.mrb[0].mxu0
  %5601 = vdwg.mxu0
  %v5602 = vpack.c.bf16 %v5599, %v5596
  %v5604 = vsel %vm531, %v5454, 0
  %v5607 = vsel %vm531, %v5528, 0
  %5609 = vmatprep.subr.bf16.mxu0 0
  %5610 = vmatpush1.bf16.xpose.msra.mxu0 %v5607
  %5611 = vmatprep.subr.bf16.mxu0 0
  %5612 = vmatpush1.bf16.xpose.msra.mxu0 0
  %5613 = vmatprep.subr.bf16.mxu0 0
  %5614 = vmatpush1.bf16.xpose.msra.mxu0 0
  %5615 = vmatprep.subr.bf16.mxu0 0
  %5616 = vmatpush1.bf16.xpose.msra.mxu0 0
  %5617 = vmatprep.subr.bf16.mxu0 0
  %5618 = vmatpush1.bf16.xpose.msra.mxu0 0
  %5619 = vmatprep.subr.bf16.mxu0 0
  %5620 = vmatpush1.bf16.xpose.msra.mxu0 0
  %5621 = vmatprep.subr.bf16.mxu0 0
  %5622 = vmatpush1.bf16.xpose.msra.mxu0 0
  %5623 = vmatprep.subr.bf16.mxu0 0
  %5624 = vmatpush1.bf16.xpose.msra.mxu0 0
  %5625 = vmatprep.subr.bf16.mxu0 0
  %5626 = vmatpush1.bf16.xpose.msra.mxu0 0
  %5627 = vmatprep.subr.bf16.mxu0 0
  %5628 = vmatpush1.bf16.xpose.msra.mxu0 0
  %5629 = vmatprep.subr.bf16.mxu0 0
  %5630 = vmatpush1.bf16.xpose.msra.mxu0 0
  %5631 = vmatprep.subr.bf16.mxu0 0
  %5632 = vmatpush1.bf16.xpose.msra.mxu0 0
  %5633 = vmatprep.subr.bf16.mxu0 0
  %5634 = vmatpush1.bf16.xpose.msra.mxu0 0
  %5635 = vmatprep.subr.bf16.mxu0 0
  %5636 = vmatpush1.bf16.xpose.msra.mxu0 0
  %5637 = vmatprep.subr.bf16.mxu0 0
  %5638 = vmatpush1.bf16.xpose.msra.mxu0 0
  %5639 = vmatprep.subr.bf16.mxu0 0
  %5640 = vmatpush1.bf16.xpose.msra.mxu0 0
  %5641 = vmatprep.mubr.bf16.mxu0 0
  %5642 = vmatmul.mubr.bf16.gmra.mrb[0].mxu0 %v5604
  %v5643 = vpop.f32.mrb[0].mxu0
  %v5644 = vadd.f32 %v4929, %v5643
  %v5645 = vpop.f32.mrb[0].mxu0
  %v5646 = vpop.f32.mrb[0].mxu0
  %v5647 = vadd.f32 %v4929, %v5646
  %v5648 = vpop.f32.mrb[0].mxu0
  %5649 = vdwg.mxu0
  %v5650 = vsel %vm531, %v5644, -inf
  %5651 = vmax.xlane.f32.xlu0 %v5650
  %v5652 = vpop.xlane.xlu0 %5651
  %v5653 = vsel %vm531, %v5647, -inf
  %5654 = vmax.xlane.f32.xlu0 %v5653
  %v5655 = vpop.xlane.xlu0 %5654
  %v5656 = vsub.f32 %v5644, %v5652
  %v5657 = vsub.f32 %v5647, %v5655
  %v5658 = vmul.f32 %v5656, 1.442695
  %v5659 = vpow.pop %v5658
  %v5660 = vmul.f32 %v5657, 1.442695
  %v5661 = vpow.pop %v5660
  %v5662 = vsel %vm531, %v5659, 0.0
  %5663 = vadd.xlane.f32.xlu0 %v5662
  %v5664 = vpop.xlane.xlu0 %5663
  %v5665 = vsel %vm531, %v5661, 0.0
  %5666 = vadd.xlane.f32.xlu0 %v5665
  %v5667 = vpop.xlane.xlu0 %5666
  %v5668 = vrcp.pop %v5664
  %v5669 = vrcp.pop %v5667
  %v5670 = vmul.f32 %v5659, %v5668
  %v5671 = vmul.f32 %v5661, %v5669
  %v5672 = vpack.c.bf16 %v5671, %v5670
  %v5674 = vsel %vm531, %v5672, 0
  %5676 = vmatprep.subr.bf16.mxu0 0
  %5677 = vmatpush1.bf16.msra.mxu0 %v5602
  %5678 = vmatprep.subr.bf16.mxu0 0
  %5679 = vmatpush1.bf16.msra.mxu0 0
  %5680 = vmatprep.subr.bf16.mxu0 0
  %5681 = vmatpush1.bf16.msra.mxu0 0
  %5682 = vmatprep.subr.bf16.mxu0 0
  %5683 = vmatpush1.bf16.msra.mxu0 0
  %5684 = vmatprep.subr.bf16.mxu0 0
  %5685 = vmatpush1.bf16.msra.mxu0 0
  %5686 = vmatprep.subr.bf16.mxu0 0
  %5687 = vmatpush1.bf16.msra.mxu0 0
  %5688 = vmatprep.subr.bf16.mxu0 0
  %5689 = vmatpush1.bf16.msra.mxu0 0
  %5690 = vmatprep.subr.bf16.mxu0 0
  %5691 = vmatpush1.bf16.msra.mxu0 0
  %5692 = vmatprep.subr.bf16.mxu0 0
  %5693 = vmatpush1.bf16.msra.mxu0 0
  %5694 = vmatprep.subr.bf16.mxu0 0
  %5695 = vmatpush1.bf16.msra.mxu0 0
  %5696 = vmatprep.subr.bf16.mxu0 0
  %5697 = vmatpush1.bf16.msra.mxu0 0
  %5698 = vmatprep.subr.bf16.mxu0 0
  %5699 = vmatpush1.bf16.msra.mxu0 0
  %5700 = vmatprep.subr.bf16.mxu0 0
  %5701 = vmatpush1.bf16.msra.mxu0 0
  %5702 = vmatprep.subr.bf16.mxu0 0
  %5703 = vmatpush1.bf16.msra.mxu0 0
  %5704 = vmatprep.subr.bf16.mxu0 0
  %5705 = vmatpush1.bf16.msra.mxu0 0
  %5706 = vmatprep.subr.bf16.mxu0 0
  %5707 = vmatpush1.bf16.msra.mxu0 0
  %5708 = vmatprep.mubr.bf16.mxu0 0
  %5709 = vmatmul.mubr.bf16.gmra.mrb[0].mxu0 %v5674
  %v5710 = vpop.f32.mrb[0].mxu0
  %v5711 = vadd.f32 0.0, %v5710
  %v5712 = vpop.f32.mrb[0].mxu0
  %v5713 = vpop.f32.mrb[0].mxu0
  %v5714 = vadd.f32 0.0, %v5713
  %v5715 = vpop.f32.mrb[0].mxu0
  %5716 = vdwg.mxu0
  %v5717 = vld [vmem:[%s1324] sm:$0xf]
  %v5718 = vld [vmem:[%s1324 + $0x4] sm:$0xf]
  %v5719 = vld [vmem:[%s1324 + $0x8] sm:$0xf]
  %v5720 = vld [vmem:[%s1324 + $0xc] sm:$0xf]
  %v5721 = vld [vmem:[%s1324 + $0x10] sm:$0xf]
  %v5722 = vld [vmem:[%s1324 + $0x14] sm:$0xf]
  %v5723 = vld [vmem:[%s1324 + $0x18] sm:$0xf]
  %v5724 = vld [vmem:[%s1324 + $0x1c] sm:$0xf]
  %v5733 = vunpack.c.l.b16 %v5717
  %v5734 = vunpack.c.l.b16 %v5718
  %v5735 = vunpack.c.l.b16 %v5719
  %v5736 = vunpack.c.l.b16 %v5720
  %v5737 = vunpack.c.l.b16 %v5721
  %v5738 = vunpack.c.l.b16 %v5722
  %v5739 = vunpack.c.l.b16 %v5723
  %v5740 = vunpack.c.l.b16 %v5724
  %v5741 = vpack.c.b16 %v5734, %v5733
  %v5742 = vpack.c.b16 %v5736, %v5735
  %v5743 = vpack.c.b16 %v5738, %v5737
  %v5744 = vpack.c.b16 %v5740, %v5739
  %5749 = vmatprep.subr.bf16.mxu0 0
  %5750 = vmatpush1.bf16.msra.mxu0 %v5741
  %5751 = vmatprep.subr.bf16.mxu0 0
  %5752 = vmatpush1.bf16.msra.mxu0 %v5742
  %5753 = vmatprep.subr.bf16.mxu0 0
  %5754 = vmatpush1.bf16.msra.mxu0 %v5743
  %5755 = vmatprep.subr.bf16.mxu0 0
  %5756 = vmatpush1.bf16.msra.mxu0 %v5744
  %5757 = vmatprep.subr.bf16.mxu0 0
  %5758 = vmatpush1.bf16.msra.mxu0 0
  %5759 = vmatprep.subr.bf16.mxu0 0
  %5760 = vmatpush1.bf16.msra.mxu0 0
  %5761 = vmatprep.subr.bf16.mxu0 0
  %5762 = vmatpush1.bf16.msra.mxu0 0
  %5763 = vmatprep.subr.bf16.mxu0 0
  %5764 = vmatpush1.bf16.msra.mxu0 0
  %5765 = vmatprep.subr.bf16.mxu0 0
  %5766 = vmatpush1.bf16.msra.mxu0 0
  %5767 = vmatprep.subr.bf16.mxu0 0
  %5768 = vmatpush1.bf16.msra.mxu0 0
  %5769 = vmatprep.subr.bf16.mxu0 0
  %5770 = vmatpush1.bf16.msra.mxu0 0
  %5771 = vmatprep.subr.bf16.mxu0 0
  %5772 = vmatpush1.bf16.msra.mxu0 0
  %5773 = vmatprep.subr.bf16.mxu0 0
  %5774 = vmatpush1.bf16.msra.mxu0 0
  %5775 = vmatprep.subr.bf16.mxu0 0
  %5776 = vmatpush1.bf16.msra.mxu0 0
  %5777 = vmatprep.subr.bf16.mxu0 0
  %5778 = vmatpush1.bf16.msra.mxu0 0
  %5779 = vmatprep.subr.bf16.mxu0 0
  %5780 = vmatpush1.bf16.msra.mxu0 0
  %5781 = vmatprep.mubr.bf16.mxu0 0
  %5782 = vmatmul.mubr.bf16.gmra.mrb[0].mxu0 %v4733
  %v5783 = vpop.f32.mrb[0].mxu0
  %v5784 = vadd.f32 0.0, %v5783
  %v5785 = vpop.f32.mrb[0].mxu0
  %v5786 = vpop.f32.mrb[0].mxu0
  %v5787 = vadd.f32 0.0, %v5786
  %v5788 = vpop.f32.mrb[0].mxu0
  %5789 = vdwg.mxu0
  %v5790 = vpack.c.bf16 %v5787, %v5784
  %v5791 = vld [vmem:[%s1399] sm:$0xf]
  %v5792 = vld [vmem:[%s1399 + $0x4] sm:$0xf]
  %v5793 = vld [vmem:[%s1399 + $0x8] sm:$0xf]
  %v5794 = vld [vmem:[%s1399 + $0xc] sm:$0xf]
  %v5795 = vld [vmem:[%s1399 + $0x10] sm:$0xf]
  %v5796 = vld [vmem:[%s1399 + $0x14] sm:$0xf]
  %v5797 = vld [vmem:[%s1399 + $0x18] sm:$0xf]
  %v5798 = vld [vmem:[%s1399 + $0x1c] sm:$0xf]
  %v5807 = vunpack.c.l.b16 %v5791
  %v5808 = vunpack.c.l.b16 %v5792
  %v5809 = vunpack.c.l.b16 %v5793
  %v5810 = vunpack.c.l.b16 %v5794
  %v5811 = vunpack.c.l.b16 %v5795
  %v5812 = vunpack.c.l.b16 %v5796
  %v5813 = vunpack.c.l.b16 %v5797
  %v5814 = vunpack.c.l.b16 %v5798
  %v5815 = vpack.c.b16 %v5808, %v5807
  %v5816 = vpack.c.b16 %v5810, %v5809
  %v5817 = vpack.c.b16 %v5812, %v5811
  %v5818 = vpack.c.b16 %v5814, %v5813
  %5823 = vmatprep.subr.bf16.mxu0 0
  %5824 = vmatpush1.bf16.msra.mxu0 %v5815
  %5825 = vmatprep.subr.bf16.mxu0 0
  %5826 = vmatpush1.bf16.msra.mxu0 %v5816
  %5827 = vmatprep.subr.bf16.mxu0 0
  %5828 = vmatpush1.bf16.msra.mxu0 %v5817
  %5829 = vmatprep.subr.bf16.mxu0 0
  %5830 = vmatpush1.bf16.msra.mxu0 %v5818
  %5831 = vmatprep.subr.bf16.mxu0 0
  %5832 = vmatpush1.bf16.msra.mxu0 0
  %5833 = vmatprep.subr.bf16.mxu0 0
  %5834 = vmatpush1.bf16.msra.mxu0 0
  %5835 = vmatprep.subr.bf16.mxu0 0
  %5836 = vmatpush1.bf16.msra.mxu0 0
  %5837 = vmatprep.subr.bf16.mxu0 0
  %5838 = vmatpush1.bf16.msra.mxu0 0
  %5839 = vmatprep.subr.bf16.mxu0 0
  %5840 = vmatpush1.bf16.msra.mxu0 0
  %5841 = vmatprep.subr.bf16.mxu0 0
  %5842 = vmatpush1.bf16.msra.mxu0 0
  %5843 = vmatprep.subr.bf16.mxu0 0
  %5844 = vmatpush1.bf16.msra.mxu0 0
  %5845 = vmatprep.subr.bf16.mxu0 0
  %5846 = vmatpush1.bf16.msra.mxu0 0
  %5847 = vmatprep.subr.bf16.mxu0 0
  %5848 = vmatpush1.bf16.msra.mxu0 0
  %5849 = vmatprep.subr.bf16.mxu0 0
  %5850 = vmatpush1.bf16.msra.mxu0 0
  %5851 = vmatprep.subr.bf16.mxu0 0
  %5852 = vmatpush1.bf16.msra.mxu0 0
  %5853 = vmatprep.subr.bf16.mxu0 0
  %5854 = vmatpush1.bf16.msra.mxu0 0
  %5855 = vmatprep.mubr.bf16.mxu0 0
  %5856 = vmatmul.mubr.bf16.gmra.mrb[0].mxu0 %v4733
  %v5857 = vpop.f32.mrb[0].mxu0
  %v5858 = vadd.f32 0.0, %v5857
  %v5859 = vpop.f32.mrb[0].mxu0
  %v5860 = vpop.f32.mrb[0].mxu0
  %v5861 = vadd.f32 0.0, %v5860
  %v5862 = vpop.f32.mrb[0].mxu0
  %5863 = vdwg.mxu0
  %v5864 = vpack.c.bf16 %v5861, %v5858
  %v5865 = vld [vmem:[%s1474] sm:$0xf]
  %v5866 = vld [vmem:[%s1474 + $0x4] sm:$0xf]
  %v5867 = vld [vmem:[%s1474 + $0x8] sm:$0xf]
  %v5868 = vld [vmem:[%s1474 + $0xc] sm:$0xf]
  %v5869 = vld [vmem:[%s1474 + $0x10] sm:$0xf]
  %v5870 = vld [vmem:[%s1474 + $0x14] sm:$0xf]
  %v5871 = vld [vmem:[%s1474 + $0x18] sm:$0xf]
  %v5872 = vld [vmem:[%s1474 + $0x1c] sm:$0xf]
  %v5881 = vunpack.c.l.b16 %v5865
  %v5882 = vunpack.c.l.b16 %v5866
  %v5883 = vunpack.c.l.b16 %v5867
  %v5884 = vunpack.c.l.b16 %v5868
  %v5885 = vunpack.c.l.b16 %v5869
  %v5886 = vunpack.c.l.b16 %v5870
  %v5887 = vunpack.c.l.b16 %v5871
  %v5888 = vunpack.c.l.b16 %v5872
  %v5889 = vpack.c.b16 %v5882, %v5881
  %v5890 = vpack.c.b16 %v5884, %v5883
  %v5891 = vpack.c.b16 %v5886, %v5885
  %v5892 = vpack.c.b16 %v5888, %v5887
  %5897 = vmatprep.subr.bf16.mxu0 0
  %5898 = vmatpush1.bf16.msra.mxu0 %v5889
  %5899 = vmatprep.subr.bf16.mxu0 0
  %5900 = vmatpush1.bf16.msra.mxu0 %v5890
  %5901 = vmatprep.subr.bf16.mxu0 0
  %5902 = vmatpush1.bf16.msra.mxu0 %v5891
  %5903 = vmatprep.subr.bf16.mxu0 0
  %5904 = vmatpush1.bf16.msra.mxu0 %v5892
  %5905 = vmatprep.subr.bf16.mxu0 0
  %5906 = vmatpush1.bf16.msra.mxu0 0
  %5907 = vmatprep.subr.bf16.mxu0 0
  %5908 = vmatpush1.bf16.msra.mxu0 0
  %5909 = vmatprep.subr.bf16.mxu0 0
  %5910 = vmatpush1.bf16.msra.mxu0 0
  %5911 = vmatprep.subr.bf16.mxu0 0
  %5912 = vmatpush1.bf16.msra.mxu0 0
  %5913 = vmatprep.subr.bf16.mxu0 0
  %5914 = vmatpush1.bf16.msra.mxu0 0
  %5915 = vmatprep.subr.bf16.mxu0 0
  %5916 = vmatpush1.bf16.msra.mxu0 0
  %5917 = vmatprep.subr.bf16.mxu0 0
  %5918 = vmatpush1.bf16.msra.mxu0 0
  %5919 = vmatprep.subr.bf16.mxu0 0
  %5920 = vmatpush1.bf16.msra.mxu0 0
  %5921 = vmatprep.subr.bf16.mxu0 0
  %5922 = vmatpush1.bf16.msra.mxu0 0
  %5923 = vmatprep.subr.bf16.mxu0 0
  %5924 = vmatpush1.bf16.msra.mxu0 0
  %5925 = vmatprep.subr.bf16.mxu0 0
  %5926 = vmatpush1.bf16.msra.mxu0 0
  %5927 = vmatprep.subr.bf16.mxu0 0
  %5928 = vmatpush1.bf16.msra.mxu0 0
  %5929 = vmatprep.mubr.bf16.mxu0 0
  %5930 = vmatmul.mubr.bf16.gmra.mrb[0].mxu0 %v4733
  %v5931 = vpop.f32.mrb[0].mxu0
  %v5932 = vadd.f32 0.0, %v5931
  %v5933 = vpop.f32.mrb[0].mxu0
  %v5934 = vpop.f32.mrb[0].mxu0
  %v5935 = vadd.f32 0.0, %v5934
  %v5936 = vpop.f32.mrb[0].mxu0
  %5937 = vdwg.mxu0
  %v5938 = vpack.c.bf16 %v5935, %v5932
  %v5940 = vsel %vm531, %v5790, 0
  %v5943 = vsel %vm531, %v5864, 0
  %5945 = vmatprep.subr.bf16.mxu0 0
  %5946 = vmatpush1.bf16.xpose.msra.mxu0 %v5943
  %5947 = vmatprep.subr.bf16.mxu0 0
  %5948 = vmatpush1.bf16.xpose.msra.mxu0 0
  %5949 = vmatprep.subr.bf16.mxu0 0
  %5950 = vmatpush1.bf16.xpose.msra.mxu0 0
  %5951 = vmatprep.subr.bf16.mxu0 0
  %5952 = vmatpush1.bf16.xpose.msra.mxu0 0
  %5953 = vmatprep.subr.bf16.mxu0 0
  %5954 = vmatpush1.bf16.xpose.msra.mxu0 0
  %5955 = vmatprep.subr.bf16.mxu0 0
  %5956 = vmatpush1.bf16.xpose.msra.mxu0 0
  %5957 = vmatprep.subr.bf16.mxu0 0
  %5958 = vmatpush1.bf16.xpose.msra.mxu0 0
  %5959 = vmatprep.subr.bf16.mxu0 0
  %5960 = vmatpush1.bf16.xpose.msra.mxu0 0
  %5961 = vmatprep.subr.bf16.mxu0 0
  %5962 = vmatpush1.bf16.xpose.msra.mxu0 0
  %5963 = vmatprep.subr.bf16.mxu0 0
  %5964 = vmatpush1.bf16.xpose.msra.mxu0 0
  %5965 = vmatprep.subr.bf16.mxu0 0
  %5966 = vmatpush1.bf16.xpose.msra.mxu0 0
  %5967 = vmatprep.subr.bf16.mxu0 0
  %5968 = vmatpush1.bf16.xpose.msra.mxu0 0
  %5969 = vmatprep.subr.bf16.mxu0 0
  %5970 = vmatpush1.bf16.xpose.msra.mxu0 0
  %5971 = vmatprep.subr.bf16.mxu0 0
  %5972 = vmatpush1.bf16.xpose.msra.mxu0 0
  %5973 = vmatprep.subr.bf16.mxu0 0
  %5974 = vmatpush1.bf16.xpose.msra.mxu0 0
  %5975 = vmatprep.subr.bf16.mxu0 0
  %5976 = vmatpush1.bf16.xpose.msra.mxu0 0
  %5977 = vmatprep.mubr.bf16.mxu0 0
  %5978 = vmatmul.mubr.bf16.gmra.mrb[0].mxu0 %v5940
  %v5979 = vpop.f32.mrb[0].mxu0
  %v5980 = vadd.f32 %v4929, %v5979
  %v5981 = vpop.f32.mrb[0].mxu0
  %v5982 = vpop.f32.mrb[0].mxu0
  %v5983 = vadd.f32 %v4929, %v5982
  %v5984 = vpop.f32.mrb[0].mxu0
  %5985 = vdwg.mxu0
  %v5986 = vsel %vm531, %v5980, -inf
  %5987 = vmax.xlane.f32.xlu0 %v5986
  %v5988 = vpop.xlane.xlu0 %5987
  %v5989 = vsel %vm531, %v5983, -inf
  %5990 = vmax.xlane.f32.xlu0 %v5989
  %v5991 = vpop.xlane.xlu0 %5990
  %v5992 = vsub.f32 %v5980, %v5988
  %v5993 = vsub.f32 %v5983, %v5991
  %v5994 = vmul.f32 %v5992, 1.442695
  %v5995 = vpow.pop %v5994
  %v5996 = vmul.f32 %v5993, 1.442695
  %v5997 = vpow.pop %v5996
  %v5998 = vsel %vm531, %v5995, 0.0
  %5999 = vadd.xlane.f32.xlu0 %v5998
  %v6000 = vpop.xlane.xlu0 %5999
  %v6001 = vsel %vm531, %v5997, 0.0
  %6002 = vadd.xlane.f32.xlu0 %v6001
  %v6003 = vpop.xlane.xlu0 %6002
  %v6004 = vrcp.pop %v6000
  %v6005 = vrcp.pop %v6003
  %v6006 = vmul.f32 %v5995, %v6004
  %v6007 = vmul.f32 %v5997, %v6005
  %v6008 = vpack.c.bf16 %v6007, %v6006
  %v6010 = vsel %vm531, %v6008, 0
  %6012 = vmatprep.subr.bf16.mxu0 0
  %6013 = vmatpush1.bf16.msra.mxu0 %v5938
  %6014 = vmatprep.subr.bf16.mxu0 0
  %6015 = vmatpush1.bf16.msra.mxu0 0
  %6016 = vmatprep.subr.bf16.mxu0 0
  %6017 = vmatpush1.bf16.msra.mxu0 0
  %6018 = vmatprep.subr.bf16.mxu0 0
  %6019 = vmatpush1.bf16.msra.mxu0 0
  %6020 = vmatprep.subr.bf16.mxu0 0
  %6021 = vmatpush1.bf16.msra.mxu0 0
  %6022 = vmatprep.subr.bf16.mxu0 0
  %6023 = vmatpush1.bf16.msra.mxu0 0
  %6024 = vmatprep.subr.bf16.mxu0 0
  %6025 = vmatpush1.bf16.msra.mxu0 0
  %6026 = vmatprep.subr.bf16.mxu0 0
  %6027 = vmatpush1.bf16.msra.mxu0 0
  %6028 = vmatprep.subr.bf16.mxu0 0
  %6029 = vmatpush1.bf16.msra.mxu0 0
  %6030 = vmatprep.subr.bf16.mxu0 0
  %6031 = vmatpush1.bf16.msra.mxu0 0
  %6032 = vmatprep.subr.bf16.mxu0 0
  %6033 = vmatpush1.bf16.msra.mxu0 0
  %6034 = vmatprep.subr.bf16.mxu0 0
  %6035 = vmatpush1.bf16.msra.mxu0 0
  %6036 = vmatprep.subr.bf16.mxu0 0
  %6037 = vmatpush1.bf16.msra.mxu0 0
  %6038 = vmatprep.subr.bf16.mxu0 0
  %6039 = vmatpush1.bf16.msra.mxu0 0
  %6040 = vmatprep.subr.bf16.mxu0 0
  %6041 = vmatpush1.bf16.msra.mxu0 0
  %6042 = vmatprep.subr.bf16.mxu0 0
  %6043 = vmatpush1.bf16.msra.mxu0 0
  %6044 = vmatprep.mubr.bf16.mxu0 0
  %6045 = vmatmul.mubr.bf16.gmra.mrb[0].mxu0 %v6010
  %v6046 = vpop.f32.mrb[0].mxu0
  %v6047 = vadd.f32 0.0, %v6046
  %v6048 = vpop.f32.mrb[0].mxu0
  %v6049 = vpop.f32.mrb[0].mxu0
  %v6050 = vadd.f32 0.0, %v6049
  %v6051 = vpop.f32.mrb[0].mxu0
  %6052 = vdwg.mxu0
  %6055 = vrot.lane.b32.xlu0 %v5375, 16
  %v6056 = vpop.permute.xlu0 %6055
  %6057 = vrot.lane.b32.xlu0 %v5378, 16
  %v6058 = vpop.permute.xlu0 %6057
  %6063 = vrot.lane.b32.xlu0 %v5711, 32
  %v6064 = vpop.permute.xlu0 %6063
  %6065 = vrot.lane.b32.xlu0 %v5714, 32
  %v6066 = vpop.permute.xlu0 %6065
  %6071 = vrot.lane.b32.xlu0 %v6047, 48
  %v6072 = vpop.permute.xlu0 %6071
  %6073 = vrot.lane.b32.xlu0 %v6050, 48
  %v6074 = vpop.permute.xlu0 %6073
  %v6077 = vsel %vm531, %v5039, %v6056
  %v6078 = vsel %vm531, %v5042, %v6058
  %v6079 = vsel %vm216, %v6077, %v6064
  %v6080 = vsel %vm216, %v6078, %v6066
  %v6081 = vsel %vm1691, %v6079, %v6072
  %v6082 = vsel %vm1691, %v6080, %v6074
  %v6083 = vpack.c.bf16 %v6082, %v6081
  %v6084 = vld [vmem:[%s10] sm:$0xf]
  %v6085 = vld [vmem:[%s10 + $0x4] sm:$0xf]
  %v6086 = vld [vmem:[%s10 + $0x8] sm:$0xf]
  %v6087 = vld [vmem:[%s10 + $0xc] sm:$0xf]
  %v6088 = vld [vmem:[%s10 + $0x10] sm:$0xf]
  %v6089 = vld [vmem:[%s10 + $0x14] sm:$0xf]
  %v6090 = vld [vmem:[%s10 + $0x18] sm:$0xf]
  %v6091 = vld [vmem:[%s10 + $0x1c] sm:$0xf]
  %v6100 = vunpack.c.l.b16 %v6084
  %v6101 = vunpack.c.l.b16 %v6085
  %v6102 = vunpack.c.l.b16 %v6086
  %v6103 = vunpack.c.l.b16 %v6087
  %v6104 = vunpack.c.l.b16 %v6088
  %v6105 = vunpack.c.l.b16 %v6089
  %v6106 = vunpack.c.l.b16 %v6090
  %v6107 = vunpack.c.l.b16 %v6091
  %v6108 = vpack.c.b16 %v6101, %v6100
  %v6109 = vpack.c.b16 %v6103, %v6102
  %v6110 = vpack.c.b16 %v6105, %v6104
  %v6111 = vpack.c.b16 %v6107, %v6106
  %v6117 = vsel %vm275, %v6083, 0
  %6119 = vmatprep.subr.bf16.mxu0 0
  %6120 = vmatpush1.bf16.msra.mxu0 %v6108
  %6121 = vmatprep.subr.bf16.mxu0 0
  %6122 = vmatpush1.bf16.msra.mxu0 %v6109
  %6123 = vmatprep.subr.bf16.mxu0 0
  %6124 = vmatpush1.bf16.msra.mxu0 %v6110
  %6125 = vmatprep.subr.bf16.mxu0 0
  %6126 = vmatpush1.bf16.msra.mxu0 %v6111
  %6127 = vmatprep.subr.bf16.mxu0 0
  %6128 = vmatpush1.bf16.msra.mxu0 0
  %6129 = vmatprep.subr.bf16.mxu0 0
  %6130 = vmatpush1.bf16.msra.mxu0 0
  %6131 = vmatprep.subr.bf16.mxu0 0
  %6132 = vmatpush1.bf16.msra.mxu0 0
  %6133 = vmatprep.subr.bf16.mxu0 0
  %6134 = vmatpush1.bf16.msra.mxu0 0
  %6135 = vmatprep.subr.bf16.mxu0 0
  %6136 = vmatpush1.bf16.msra.mxu0 0
  %6137 = vmatprep.subr.bf16.mxu0 0
  %6138 = vmatpush1.bf16.msra.mxu0 0
  %6139 = vmatprep.subr.bf16.mxu0 0
  %6140 = vmatpush1.bf16.msra.mxu0 0
  %6141 = vmatprep.subr.bf16.mxu0 0
  %6142 = vmatpush1.bf16.msra.mxu0 0
  %6143 = vmatprep.subr.bf16.mxu0 0
  %6144 = vmatpush1.bf16.msra.mxu0 0
  %6145 = vmatprep.subr.bf16.mxu0 0
  %6146 = vmatpush1.bf16.msra.mxu0 0
  %6147 = vmatprep.subr.bf16.mxu0 0
  %6148 = vmatpush1.bf16.msra.mxu0 0
  %6149 = vmatprep.subr.bf16.mxu0 0
  %6150 = vmatpush1.bf16.msra.mxu0 0
  %6151 = vmatprep.mubr.bf16.mxu0 0
  %6152 = vmatmul.mubr.bf16.gmra.mrb[0].mxu0 %v6117
  %v6153 = vpop.f32.mrb[0].mxu0
  %v6154 = vadd.f32 0.0, %v6153
  %v6155 = vpop.f32.mrb[0].mxu0
  %v6156 = vpop.f32.mrb[0].mxu0
  %v6157 = vadd.f32 0.0, %v6156
  %v6158 = vpop.f32.mrb[0].mxu0
  %6159 = vdwg.mxu0
  %v6160 = vadd.f32 %v4672, %v6154
  %v6161 = vadd.f32 %v4673, %v6157
  %v6162 = vld [vmem:[%s12] sm:$0x1]
  %v6163 = vmul.f32 %v6160, %v6160
  %v6164 = vmul.f32 %v6161, %v6161
  %v6165 = vsel %vm275, %v6163, 0.0
  %6166 = vadd.xlane.f32.xlu0 %v6165
  %v6167 = vpop.xlane.xlu0 %6166
  %v6168 = vsel %vm275, %v6164, 0.0
  %6169 = vadd.xlane.f32.xlu0 %v6168
  %v6170 = vpop.xlane.xlu0 %6169
  %v6171 = vmul.f32 %v6167, %v282
  %v6172 = vmul.f32 %v6170, %v282
  %v6173 = vadd.f32 %v6171, 1e-06
  %v6174 = vadd.f32 %v6172, 1e-06
  %v6175 = vrsqrt.pop %v6173
  %v6176 = vrsqrt.pop %v6174
  %v6177 = vmul.f32 %v6160, %v6175
  %v6178 = vmul.f32 %v6161, %v6176
  %v6180 = vlaneseq
  %v6181 = vshrl.u32 %v6180, 7
  %v6182 = vsub.s32 0, %v6181
  %v6183 = vrot.slane %v6162, %v6182
  %v6185 = vmul.f32 %v6177, %v6183
  %v6186 = vmul.f32 %v6178, %v6183
  %v6187 = vpack.c.bf16 %v6186, %v6185
  %v6188 = vld [vmem:[%s13] sm:$0xf]
  %v6189 = vld [vmem:[%s13 + $0x4] sm:$0xf]
  %v6190 = vld [vmem:[%s13 + $0x8] sm:$0xf]
  %v6191 = vld [vmem:[%s13 + $0xc] sm:$0xf]
  %v6192 = vld [vmem:[%s13 + $0x10] sm:$0xf]
  %v6193 = vld [vmem:[%s13 + $0x14] sm:$0xf]
  %v6194 = vld [vmem:[%s13 + $0x18] sm:$0xf]
  %v6195 = vld [vmem:[%s13 + $0x1c] sm:$0xf]
  %v6204 = vunpack.c.l.b16 %v6188
  %v6205 = vunpack.c.l.b16 %v6189
  %v6206 = vunpack.c.l.b16 %v6190
  %v6207 = vunpack.c.l.b16 %v6191
  %v6208 = vunpack.c.l.b16 %v6192
  %v6209 = vunpack.c.l.b16 %v6193
  %v6210 = vunpack.c.l.b16 %v6194
  %v6211 = vunpack.c.l.b16 %v6195
  %v6212 = vpack.c.b16 %v6205, %v6204
  %v6213 = vpack.c.b16 %v6207, %v6206
  %v6214 = vpack.c.b16 %v6209, %v6208
  %v6215 = vpack.c.b16 %v6211, %v6210
  %v6221 = vsel %vm275, %v6187, 0
  %6223 = vmatprep.subr.bf16.mxu0 0
  %6224 = vmatpush1.bf16.msra.mxu0 %v6212
  %6225 = vmatprep.subr.bf16.mxu0 0
  %6226 = vmatpush1.bf16.msra.mxu0 %v6213
  %6227 = vmatprep.subr.bf16.mxu0 0
  %6228 = vmatpush1.bf16.msra.mxu0 %v6214
  %6229 = vmatprep.subr.bf16.mxu0 0
  %6230 = vmatpush1.bf16.msra.mxu0 %v6215
  %6231 = vmatprep.subr.bf16.mxu0 0
  %6232 = vmatpush1.bf16.msra.mxu0 0
  %6233 = vmatprep.subr.bf16.mxu0 0
  %6234 = vmatpush1.bf16.msra.mxu0 0
  %6235 = vmatprep.subr.bf16.mxu0 0
  %6236 = vmatpush1.bf16.msra.mxu0 0
  %6237 = vmatprep.subr.bf16.mxu0 0
  %6238 = vmatpush1.bf16.msra.mxu0 0
  %6239 = vmatprep.subr.bf16.mxu0 0
  %6240 = vmatpush1.bf16.msra.mxu0 0
  %6241 = vmatprep.subr.bf16.mxu0 0
  %6242 = vmatpush1.bf16.msra.mxu0 0
  %6243 = vmatprep.subr.bf16.mxu0 0
  %6244 = vmatpush1.bf16.msra.mxu0 0
  %6245 = vmatprep.subr.bf16.mxu0 0
  %6246 = vmatpush1.bf16.msra.mxu0 0
  %6247 = vmatprep.subr.bf16.mxu0 0
  %6248 = vmatpush1.bf16.msra.mxu0 0
  %6249 = vmatprep.subr.bf16.mxu0 0
  %6250 = vmatpush1.bf16.msra.mxu0 0
  %6251 = vmatprep.subr.bf16.mxu0 0
  %6252 = vmatpush1.bf16.msra.mxu0 0
  %6253 = vmatprep.subr.bf16.mxu0 0
  %6254 = vmatpush1.bf16.msra.mxu0 0
  %6255 = vmatprep.mubr.bf16.mxu0 0
  %6256 = vmatmul.mubr.bf16.gmra.mrb[0].mxu0 %v6221
  %v6257 = vpop.f32.mrb[0].mxu0
  %v6258 = vadd.f32 0.0, %v6257
  %v6259 = vpop.f32.mrb[0].mxu0
  %v6260 = vpop.f32.mrb[0].mxu0
  %v6261 = vadd.f32 0.0, %v6260
  %v6262 = vpop.f32.mrb[0].mxu0
  %6263 = vdwg.mxu0
  %v6264 = vmax.f32 %v6258, 0.0
  %v6265 = vmax.f32 %v6261, 0.0
  %v6266 = vpack.c.bf16 %v6265, %v6264
  %v6267 = vld [vmem:[%s14] sm:$0xf]
  %v6268 = vld [vmem:[%s14 + $0x4] sm:$0xf]
  %v6269 = vld [vmem:[%s14 + $0x8] sm:$0xf]
  %v6270 = vld [vmem:[%s14 + $0xc] sm:$0xf]
  %v6271 = vld [vmem:[%s14 + $0x10] sm:$0xf]
  %v6272 = vld [vmem:[%s14 + $0x14] sm:$0xf]
  %v6273 = vld [vmem:[%s14 + $0x18] sm:$0xf]
  %v6274 = vld [vmem:[%s14 + $0x1c] sm:$0xf]
  %v6275 = vld [vmem:[%s14 + $0x20] sm:$0xf]
  %v6276 = vld [vmem:[%s14 + $0x24] sm:$0xf]
  %v6277 = vld [vmem:[%s14 + $0x28] sm:$0xf]
  %v6278 = vld [vmem:[%s14 + $0x2c] sm:$0xf]
  %v6279 = vld [vmem:[%s14 + $0x30] sm:$0xf]
  %v6280 = vld [vmem:[%s14 + $0x34] sm:$0xf]
  %v6281 = vld [vmem:[%s14 + $0x38] sm:$0xf]
  %v6282 = vld [vmem:[%s14 + $0x3c] sm:$0xf]
  %v6299 = vunpack.c.l.b16 %v6267
  %v6300 = vunpack.c.l.b16 %v6268
  %v6301 = vunpack.c.l.b16 %v6269
  %v6302 = vunpack.c.l.b16 %v6270
  %v6303 = vunpack.c.l.b16 %v6271
  %v6304 = vunpack.c.l.b16 %v6272
  %v6305 = vunpack.c.l.b16 %v6273
  %v6306 = vunpack.c.l.b16 %v6274
  %v6307 = vunpack.c.l.b16 %v6275
  %v6308 = vunpack.c.l.b16 %v6276
  %v6309 = vunpack.c.l.b16 %v6277
  %v6310 = vunpack.c.l.b16 %v6278
  %v6311 = vunpack.c.l.b16 %v6279
  %v6312 = vunpack.c.l.b16 %v6280
  %v6313 = vunpack.c.l.b16 %v6281
  %v6314 = vunpack.c.l.b16 %v6282
  %v6315 = vpack.c.b16 %v6300, %v6299
  %v6316 = vpack.c.b16 %v6302, %v6301
  %v6317 = vpack.c.b16 %v6304, %v6303
  %v6318 = vpack.c.b16 %v6306, %v6305
  %v6319 = vpack.c.b16 %v6308, %v6307
  %v6320 = vpack.c.b16 %v6310, %v6309
  %v6321 = vpack.c.b16 %v6312, %v6311
  %v6322 = vpack.c.b16 %v6314, %v6313
  %6331 = vmatprep.subr.bf16.mxu0 0
  %6332 = vmatpush1.bf16.msra.mxu0 %v6315
  %6333 = vmatprep.subr.bf16.mxu0 0
  %6334 = vmatpush1.bf16.msra.mxu0 %v6316
  %6335 = vmatprep.subr.bf16.mxu0 0
  %6336 = vmatpush1.bf16.msra.mxu0 %v6317
  %6337 = vmatprep.subr.bf16.mxu0 0
  %6338 = vmatpush1.bf16.msra.mxu0 %v6318
  %6339 = vmatprep.subr.bf16.mxu0 0
  %6340 = vmatpush1.bf16.msra.mxu0 %v6319
  %6341 = vmatprep.subr.bf16.mxu0 0
  %6342 = vmatpush1.bf16.msra.mxu0 %v6320
  %6343 = vmatprep.subr.bf16.mxu0 0
  %6344 = vmatpush1.bf16.msra.mxu0 %v6321
  %6345 = vmatprep.subr.bf16.mxu0 0
  %6346 = vmatpush1.bf16.msra.mxu0 %v6322
  %6347 = vmatprep.subr.bf16.mxu0 0
  %6348 = vmatpush1.bf16.msra.mxu0 0
  %6349 = vmatprep.subr.bf16.mxu0 0
  %6350 = vmatpush1.bf16.msra.mxu0 0
  %6351 = vmatprep.subr.bf16.mxu0 0
  %6352 = vmatpush1.bf16.msra.mxu0 0
  %6353 = vmatprep.subr.bf16.mxu0 0
  %6354 = vmatpush1.bf16.msra.mxu0 0
  %6355 = vmatprep.subr.bf16.mxu0 0
  %6356 = vmatpush1.bf16.msra.mxu0 0
  %6357 = vmatprep.subr.bf16.mxu0 0
  %6358 = vmatpush1.bf16.msra.mxu0 0
  %6359 = vmatprep.subr.bf16.mxu0 0
  %6360 = vmatpush1.bf16.msra.mxu0 0
  %6361 = vmatprep.subr.bf16.mxu0 0
  %6362 = vmatpush1.bf16.msra.mxu0 0
  %6363 = vmatprep.mubr.bf16.mxu0 0
  %6364 = vmatmul.mubr.bf16.gmra.mrb[0].mxu0 %v6266
  %v6365 = vpop.f32.mrb[0].mxu0
  %v6366 = vadd.f32 0.0, %v6365
  %v6367 = vpop.f32.mrb[0].mxu0
  %v6368 = vpop.f32.mrb[0].mxu0
  %v6369 = vadd.f32 0.0, %v6368
  %v6370 = vpop.f32.mrb[0].mxu0
  %6371 = vdwg.mxu0
  %v6372 = vadd.f32 %v6160, %v6366
  %v6373 = vadd.f32 %v6161, %v6369
  %v6374 = vld [vmem:[%s1985] sm:$0x1]
  %v6375 = vmul.f32 %v6372, %v6372
  %v6376 = vmul.f32 %v6373, %v6373
  %v6377 = vsel %vm275, %v6375, 0.0
  %6378 = vadd.xlane.f32.xlu0 %v6377
  %v6379 = vpop.xlane.xlu0 %6378
  %v6380 = vsel %vm275, %v6376, 0.0
  %6381 = vadd.xlane.f32.xlu0 %v6380
  %v6382 = vpop.xlane.xlu0 %6381
  %v6383 = vmul.f32 %v6379, %v282
  %v6384 = vmul.f32 %v6382, %v282
  %v6385 = vadd.f32 %v6383, 1e-06
  %v6386 = vadd.f32 %v6384, 1e-06
  %v6387 = vrsqrt.pop %v6385
  %v6388 = vrsqrt.pop %v6386
  %v6389 = vmul.f32 %v6372, %v6387
  %v6390 = vmul.f32 %v6373, %v6388
  %v6392 = vlaneseq
  %v6393 = vshrl.u32 %v6392, 7
  %v6394 = vsub.s32 0, %v6393
  %v6395 = vrot.slane %v6374, %v6394
  %v6397 = vmul.f32 %v6389, %v6395
  %v6398 = vmul.f32 %v6390, %v6395
  %v6399 = vpack.c.bf16 %v6398, %v6397
  %v6400 = vld [vmem:[%s2012] sm:$0xf]
  %v6401 = vld [vmem:[%s2012 + $0x4] sm:$0xf]
  %v6402 = vld [vmem:[%s2012 + $0x8] sm:$0xf]
  %v6403 = vld [vmem:[%s2012 + $0xc] sm:$0xf]
  %v6404 = vld [vmem:[%s2012 + $0x10] sm:$0xf]
  %v6405 = vld [vmem:[%s2012 + $0x14] sm:$0xf]
  %v6406 = vld [vmem:[%s2012 + $0x18] sm:$0xf]
  %v6407 = vld [vmem:[%s2012 + $0x1c] sm:$0xf]
  %v6416 = vunpack.c.l.b16 %v6400
  %v6417 = vunpack.c.l.b16 %v6401
  %v6418 = vunpack.c.l.b16 %v6402
  %v6419 = vunpack.c.l.b16 %v6403
  %v6420 = vunpack.c.l.b16 %v6404
  %v6421 = vunpack.c.l.b16 %v6405
  %v6422 = vunpack.c.l.b16 %v6406
  %v6423 = vunpack.c.l.b16 %v6407
  %v6424 = vpack.c.b16 %v6417, %v6416
  %v6425 = vpack.c.b16 %v6419, %v6418
  %v6426 = vpack.c.b16 %v6421, %v6420
  %v6427 = vpack.c.b16 %v6423, %v6422
  %v6433 = vsel %vm275, %v6399, 0
  %6435 = vmatprep.subr.bf16.mxu0 0
  %6436 = vmatpush1.bf16.msra.mxu0 %v6424
  %6437 = vmatprep.subr.bf16.mxu0 0
  %6438 = vmatpush1.bf16.msra.mxu0 %v6425
  %6439 = vmatprep.subr.bf16.mxu0 0
  %6440 = vmatpush1.bf16.msra.mxu0 %v6426
  %6441 = vmatprep.subr.bf16.mxu0 0
  %6442 = vmatpush1.bf16.msra.mxu0 %v6427
  %6443 = vmatprep.subr.bf16.mxu0 0
  %6444 = vmatpush1.bf16.msra.mxu0 0
  %6445 = vmatprep.subr.bf16.mxu0 0
  %6446 = vmatpush1.bf16.msra.mxu0 0
  %6447 = vmatprep.subr.bf16.mxu0 0
  %6448 = vmatpush1.bf16.msra.mxu0 0
  %6449 = vmatprep.subr.bf16.mxu0 0
  %6450 = vmatpush1.bf16.msra.mxu0 0
  %6451 = vmatprep.subr.bf16.mxu0 0
  %6452 = vmatpush1.bf16.msra.mxu0 0
  %6453 = vmatprep.subr.bf16.mxu0 0
  %6454 = vmatpush1.bf16.msra.mxu0 0
  %6455 = vmatprep.subr.bf16.mxu0 0
  %6456 = vmatpush1.bf16.msra.mxu0 0
  %6457 = vmatprep.subr.bf16.mxu0 0
  %6458 = vmatpush1.bf16.msra.mxu0 0
  %6459 = vmatprep.subr.bf16.mxu0 0
  %6460 = vmatpush1.bf16.msra.mxu0 0
  %6461 = vmatprep.subr.bf16.mxu0 0
  %6462 = vmatpush1.bf16.msra.mxu0 0
  %6463 = vmatprep.subr.bf16.mxu0 0
  %6464 = vmatpush1.bf16.msra.mxu0 0
  %6465 = vmatprep.subr.bf16.mxu0 0
  %6466 = vmatpush1.bf16.msra.mxu0 0
  %6467 = vmatprep.mubr.bf16.mxu0 0
  %6468 = vmatmul.mubr.bf16.gmra.mrb[0].mxu0 %v6433
  %v6469 = vpop.f32.mrb[0].mxu0
  %v6470 = vadd.f32 0.0, %v6469
  %v6471 = vpop.f32.mrb[0].mxu0
  %v6472 = vpop.f32.mrb[0].mxu0
  %v6473 = vadd.f32 0.0, %v6472
  %v6474 = vpop.f32.mrb[0].mxu0
  %6475 = vdwg.mxu0
  %v6476 = vpack.c.bf16 %v6473, %v6470
  %v6477 = vld [vmem:[%s2090] sm:$0xf]
  %v6478 = vld [vmem:[%s2090 + $0x4] sm:$0xf]
  %v6479 = vld [vmem:[%s2090 + $0x8] sm:$0xf]
  %v6480 = vld [vmem:[%s2090 + $0xc] sm:$0xf]
  %v6481 = vld [vmem:[%s2090 + $0x10] sm:$0xf]
  %v6482 = vld [vmem:[%s2090 + $0x14] sm:$0xf]
  %v6483 = vld [vmem:[%s2090 + $0x18] sm:$0xf]
  %v6484 = vld [vmem:[%s2090 + $0x1c] sm:$0xf]
  %v6493 = vunpack.c.l.b16 %v6477
  %v6494 = vunpack.c.l.b16 %v6478
  %v6495 = vunpack.c.l.b16 %v6479
  %v6496 = vunpack.c.l.b16 %v6480
  %v6497 = vunpack.c.l.b16 %v6481
  %v6498 = vunpack.c.l.b16 %v6482
  %v6499 = vunpack.c.l.b16 %v6483
  %v6500 = vunpack.c.l.b16 %v6484
  %v6501 = vpack.c.b16 %v6494, %v6493
  %v6502 = vpack.c.b16 %v6496, %v6495
  %v6503 = vpack.c.b16 %v6498, %v6497
  %v6504 = vpack.c.b16 %v6500, %v6499
  %6509 = vmatprep.subr.bf16.mxu0 0
  %6510 = vmatpush1.bf16.msra.mxu0 %v6501
  %6511 = vmatprep.subr.bf16.mxu0 0
  %6512 = vmatpush1.bf16.msra.mxu0 %v6502
  %6513 = vmatprep.subr.bf16.mxu0 0
  %6514 = vmatpush1.bf16.msra.mxu0 %v6503
  %6515 = vmatprep.subr.bf16.mxu0 0
  %6516 = vmatpush1.bf16.msra.mxu0 %v6504
  %6517 = vmatprep.subr.bf16.mxu0 0
  %6518 = vmatpush1.bf16.msra.mxu0 0
  %6519 = vmatprep.subr.bf16.mxu0 0
  %6520 = vmatpush1.bf16.msra.mxu0 0
  %6521 = vmatprep.subr.bf16.mxu0 0
  %6522 = vmatpush1.bf16.msra.mxu0 0
  %6523 = vmatprep.subr.bf16.mxu0 0
  %6524 = vmatpush1.bf16.msra.mxu0 0
  %6525 = vmatprep.subr.bf16.mxu0 0
  %6526 = vmatpush1.bf16.msra.mxu0 0
  %6527 = vmatprep.subr.bf16.mxu0 0
  %6528 = vmatpush1.bf16.msra.mxu0 0
  %6529 = vmatprep.subr.bf16.mxu0 0
  %6530 = vmatpush1.bf16.msra.mxu0 0
  %6531 = vmatprep.subr.bf16.mxu0 0
  %6532 = vmatpush1.bf16.msra.mxu0 0
  %6533 = vmatprep.subr.bf16.mxu0 0
  %6534 = vmatpush1.bf16.msra.mxu0 0
  %6535 = vmatprep.subr.bf16.mxu0 0
  %6536 = vmatpush1.bf16.msra.mxu0 0
  %6537 = vmatprep.subr.bf16.mxu0 0
  %6538 = vmatpush1.bf16.msra.mxu0 0
  %6539 = vmatprep.subr.bf16.mxu0 0
  %6540 = vmatpush1.bf16.msra.mxu0 0
  %6541 = vmatprep.mubr.bf16.mxu0 0
  %6542 = vmatmul.mubr.bf16.gmra.mrb[0].mxu0 %v6433
  %v6543 = vpop.f32.mrb[0].mxu0
  %v6544 = vadd.f32 0.0, %v6543
  %v6545 = vpop.f32.mrb[0].mxu0
  %v6546 = vpop.f32.mrb[0].mxu0
  %v6547 = vadd.f32 0.0, %v6546
  %v6548 = vpop.f32.mrb[0].mxu0
  %6549 = vdwg.mxu0
  %v6550 = vpack.c.bf16 %v6547, %v6544
  %v6551 = vld [vmem:[%s2165] sm:$0xf]
  %v6552 = vld [vmem:[%s2165 + $0x4] sm:$0xf]
  %v6553 = vld [vmem:[%s2165 + $0x8] sm:$0xf]
  %v6554 = vld [vmem:[%s2165 + $0xc] sm:$0xf]
  %v6555 = vld [vmem:[%s2165 + $0x10] sm:$0xf]
  %v6556 = vld [vmem:[%s2165 + $0x14] sm:$0xf]
  %v6557 = vld [vmem:[%s2165 + $0x18] sm:$0xf]
  %v6558 = vld [vmem:[%s2165 + $0x1c] sm:$0xf]
  %v6567 = vunpack.c.l.b16 %v6551
  %v6568 = vunpack.c.l.b16 %v6552
  %v6569 = vunpack.c.l.b16 %v6553
  %v6570 = vunpack.c.l.b16 %v6554
  %v6571 = vunpack.c.l.b16 %v6555
  %v6572 = vunpack.c.l.b16 %v6556
  %v6573 = vunpack.c.l.b16 %v6557
  %v6574 = vunpack.c.l.b16 %v6558
  %v6575 = vpack.c.b16 %v6568, %v6567
  %v6576 = vpack.c.b16 %v6570, %v6569
  %v6577 = vpack.c.b16 %v6572, %v6571
  %v6578 = vpack.c.b16 %v6574, %v6573
  %6583 = vmatprep.subr.bf16.mxu0 0
  %6584 = vmatpush1.bf16.msra.mxu0 %v6575
  %6585 = vmatprep.subr.bf16.mxu0 0
  %6586 = vmatpush1.bf16.msra.mxu0 %v6576
  %6587 = vmatprep.subr.bf16.mxu0 0
  %6588 = vmatpush1.bf16.msra.mxu0 %v6577
  %6589 = vmatprep.subr.bf16.mxu0 0
  %6590 = vmatpush1.bf16.msra.mxu0 %v6578
  %6591 = vmatprep.subr.bf16.mxu0 0
  %6592 = vmatpush1.bf16.msra.mxu0 0
  %6593 = vmatprep.subr.bf16.mxu0 0
  %6594 = vmatpush1.bf16.msra.mxu0 0
  %6595 = vmatprep.subr.bf16.mxu0 0
  %6596 = vmatpush1.bf16.msra.mxu0 0
  %6597 = vmatprep.subr.bf16.mxu0 0
  %6598 = vmatpush1.bf16.msra.mxu0 0
  %6599 = vmatprep.subr.bf16.mxu0 0
  %6600 = vmatpush1.bf16.msra.mxu0 0
  %6601 = vmatprep.subr.bf16.mxu0 0
  %6602 = vmatpush1.bf16.msra.mxu0 0
  %6603 = vmatprep.subr.bf16.mxu0 0
  %6604 = vmatpush1.bf16.msra.mxu0 0
  %6605 = vmatprep.subr.bf16.mxu0 0
  %6606 = vmatpush1.bf16.msra.mxu0 0
  %6607 = vmatprep.subr.bf16.mxu0 0
  %6608 = vmatpush1.bf16.msra.mxu0 0
  %6609 = vmatprep.subr.bf16.mxu0 0
  %6610 = vmatpush1.bf16.msra.mxu0 0
  %6611 = vmatprep.subr.bf16.mxu0 0
  %6612 = vmatpush1.bf16.msra.mxu0 0
  %6613 = vmatprep.subr.bf16.mxu0 0
  %6614 = vmatpush1.bf16.msra.mxu0 0
  %6615 = vmatprep.mubr.bf16.mxu0 0
  %6616 = vmatmul.mubr.bf16.gmra.mrb[0].mxu0 %v6433
  %v6617 = vpop.f32.mrb[0].mxu0
  %v6618 = vadd.f32 0.0, %v6617
  %v6619 = vpop.f32.mrb[0].mxu0
  %v6620 = vpop.f32.mrb[0].mxu0
  %v6621 = vadd.f32 0.0, %v6620
  %v6622 = vpop.f32.mrb[0].mxu0
  %6623 = vdwg.mxu0
  %v6624 = vpack.c.bf16 %v6621, %v6618
  %v6626 = vsel %vm531, %v6476, 0
  %v6629 = vsel %vm531, %v6550, 0
  %6631 = vmatprep.subr.bf16.mxu0 0
  %6632 = vmatpush1.bf16.xpose.msra.mxu0 %v6629
  %6633 = vmatprep.subr.bf16.mxu0 0
  %6634 = vmatpush1.bf16.xpose.msra.mxu0 0
  %6635 = vmatprep.subr.bf16.mxu0 0
  %6636 = vmatpush1.bf16.xpose.msra.mxu0 0
  %6637 = vmatprep.subr.bf16.mxu0 0
  %6638 = vmatpush1.bf16.xpose.msra.mxu0 0
  %6639 = vmatprep.subr.bf16.mxu0 0
  %6640 = vmatpush1.bf16.xpose.msra.mxu0 0
  %6641 = vmatprep.subr.bf16.mxu0 0
  %6642 = vmatpush1.bf16.xpose.msra.mxu0 0
  %6643 = vmatprep.subr.bf16.mxu0 0
  %6644 = vmatpush1.bf16.xpose.msra.mxu0 0
  %6645 = vmatprep.subr.bf16.mxu0 0
  %6646 = vmatpush1.bf16.xpose.msra.mxu0 0
  %6647 = vmatprep.subr.bf16.mxu0 0
  %6648 = vmatpush1.bf16.xpose.msra.mxu0 0
  %6649 = vmatprep.subr.bf16.mxu0 0
  %6650 = vmatpush1.bf16.xpose.msra.mxu0 0
  %6651 = vmatprep.subr.bf16.mxu0 0
  %6652 = vmatpush1.bf16.xpose.msra.mxu0 0
  %6653 = vmatprep.subr.bf16.mxu0 0
  %6654 = vmatpush1.bf16.xpose.msra.mxu0 0
  %6655 = vmatprep.subr.bf16.mxu0 0
  %6656 = vmatpush1.bf16.xpose.msra.mxu0 0
  %6657 = vmatprep.subr.bf16.mxu0 0
  %6658 = vmatpush1.bf16.xpose.msra.mxu0 0
  %6659 = vmatprep.subr.bf16.mxu0 0
  %6660 = vmatpush1.bf16.xpose.msra.mxu0 0
  %6661 = vmatprep.subr.bf16.mxu0 0
  %6662 = vmatpush1.bf16.xpose.msra.mxu0 0
  %6663 = vmatprep.mubr.bf16.mxu0 0
  %6664 = vmatmul.mubr.bf16.gmra.mrb[0].mxu0 %v6626
  %v6665 = vpop.f32.mrb[0].mxu0
  %v6666 = vadd.f32 %v4929, %v6665
  %v6667 = vpop.f32.mrb[0].mxu0
  %v6668 = vpop.f32.mrb[0].mxu0
  %v6669 = vadd.f32 %v4929, %v6668
  %v6670 = vpop.f32.mrb[0].mxu0
  %6671 = vdwg.mxu0
  %v6672 = vsel %vm531, %v6666, -inf
  %6673 = vmax.xlane.f32.xlu0 %v6672
  %v6674 = vpop.xlane.xlu0 %6673
  %v6675 = vsel %vm531, %v6669, -inf
  %6676 = vmax.xlane.f32.xlu0 %v6675
  %v6677 = vpop.xlane.xlu0 %6676
  %v6678 = vsub.f32 %v6666, %v6674
  %v6679 = vsub.f32 %v6669, %v6677
  %v6680 = vmul.f32 %v6678, 1.442695
  %v6681 = vpow.pop %v6680
  %v6682 = vmul.f32 %v6679, 1.442695
  %v6683 = vpow.pop %v6682
  %v6684 = vsel %vm531, %v6681, 0.0
  %6685 = vadd.xlane.f32.xlu0 %v6684
  %v6686 = vpop.xlane.xlu0 %6685
  %v6687 = vsel %vm531, %v6683, 0.0
  %6688 = vadd.xlane.f32.xlu0 %v6687
  %v6689 = vpop.xlane.xlu0 %6688
  %v6690 = vrcp.pop %v6686
  %v6691 = vrcp.pop %v6689
  %v6692 = vmul.f32 %v6681, %v6690
  %v6693 = vmul.f32 %v6683, %v6691
  %v6694 = vpack.c.bf16 %v6693, %v6692
  %v6696 = vsel %vm531, %v6694, 0
  %6698 = vmatprep.subr.bf16.mxu0 0
  %6699 = vmatpush1.bf16.msra.mxu0 %v6624
  %6700 = vmatprep.subr.bf16.mxu0 0
  %6701 = vmatpush1.bf16.msra.mxu0 0
  %6702 = vmatprep.subr.bf16.mxu0 0
  %6703 = vmatpush1.bf16.msra.mxu0 0
  %6704 = vmatprep.subr.bf16.mxu0 0
  %6705 = vmatpush1.bf16.msra.mxu0 0
  %6706 = vmatprep.subr.bf16.mxu0 0
  %6707 = vmatpush1.bf16.msra.mxu0 0
  %6708 = vmatprep.subr.bf16.mxu0 0
  %6709 = vmatpush1.bf16.msra.mxu0 0
  %6710 = vmatprep.subr.bf16.mxu0 0
  %6711 = vmatpush1.bf16.msra.mxu0 0
  %6712 = vmatprep.subr.bf16.mxu0 0
  %6713 = vmatpush1.bf16.msra.mxu0 0
  %6714 = vmatprep.subr.bf16.mxu0 0
  %6715 = vmatpush1.bf16.msra.mxu0 0
  %6716 = vmatprep.subr.bf16.mxu0 0
  %6717 = vmatpush1.bf16.msra.mxu0 0
  %6718 = vmatprep.subr.bf16.mxu0 0
  %6719 = vmatpush1.bf16.msra.mxu0 0
  %6720 = vmatprep.subr.bf16.mxu0 0
  %6721 = vmatpush1.bf16.msra.mxu0 0
  %6722 = vmatprep.subr.bf16.mxu0 0
  %6723 = vmatpush1.bf16.msra.mxu0 0
  %6724 = vmatprep.subr.bf16.mxu0 0
  %6725 = vmatpush1.bf16.msra.mxu0 0
  %6726 = vmatprep.subr.bf16.mxu0 0
  %6727 = vmatpush1.bf16.msra.mxu0 0
  %6728 = vmatprep.subr.bf16.mxu0 0
  %6729 = vmatpush1.bf16.msra.mxu0 0
  %6730 = vmatprep.mubr.bf16.mxu0 0
  %6731 = vmatmul.mubr.bf16.gmra.mrb[0].mxu0 %v6696
  %v6732 = vpop.f32.mrb[0].mxu0
  %v6733 = vadd.f32 0.0, %v6732
  %v6734 = vpop.f32.mrb[0].mxu0
  %v6735 = vpop.f32.mrb[0].mxu0
  %v6736 = vadd.f32 0.0, %v6735
  %v6737 = vpop.f32.mrb[0].mxu0
  %6738 = vdwg.mxu0
  %v6739 = vld [vmem:[%s2354] sm:$0xf]
  %v6740 = vld [vmem:[%s2354 + $0x4] sm:$0xf]
  %v6741 = vld [vmem:[%s2354 + $0x8] sm:$0xf]
  %v6742 = vld [vmem:[%s2354 + $0xc] sm:$0xf]
  %v6743 = vld [vmem:[%s2354 + $0x10] sm:$0xf]
  %v6744 = vld [vmem:[%s2354 + $0x14] sm:$0xf]
  %v6745 = vld [vmem:[%s2354 + $0x18] sm:$0xf]
  %v6746 = vld [vmem:[%s2354 + $0x1c] sm:$0xf]
  %v6755 = vunpack.c.l.b16 %v6739
  %v6756 = vunpack.c.l.b16 %v6740
  %v6757 = vunpack.c.l.b16 %v6741
  %v6758 = vunpack.c.l.b16 %v6742
  %v6759 = vunpack.c.l.b16 %v6743
  %v6760 = vunpack.c.l.b16 %v6744
  %v6761 = vunpack.c.l.b16 %v6745
  %v6762 = vunpack.c.l.b16 %v6746
  %v6763 = vpack.c.b16 %v6756, %v6755
  %v6764 = vpack.c.b16 %v6758, %v6757
  %v6765 = vpack.c.b16 %v6760, %v6759
  %v6766 = vpack.c.b16 %v6762, %v6761
  %6771 = vmatprep.subr.bf16.mxu0 0
  %6772 = vmatpush1.bf16.msra.mxu0 %v6763
  %6773 = vmatprep.subr.bf16.mxu0 0
  %6774 = vmatpush1.bf16.msra.mxu0 %v6764
  %6775 = vmatprep.subr.bf16.mxu0 0
  %6776 = vmatpush1.bf16.msra.mxu0 %v6765
  %6777 = vmatprep.subr.bf16.mxu0 0
  %6778 = vmatpush1.bf16.msra.mxu0 %v6766
  %6779 = vmatprep.subr.bf16.mxu0 0
  %6780 = vmatpush1.bf16.msra.mxu0 0
  %6781 = vmatprep.subr.bf16.mxu0 0
  %6782 = vmatpush1.bf16.msra.mxu0 0
  %6783 = vmatprep.subr.bf16.mxu0 0
  %6784 = vmatpush1.bf16.msra.mxu0 0
  %6785 = vmatprep.subr.bf16.mxu0 0
  %6786 = vmatpush1.bf16.msra.mxu0 0
  %6787 = vmatprep.subr.bf16.mxu0 0
  %6788 = vmatpush1.bf16.msra.mxu0 0
  %6789 = vmatprep.subr.bf16.mxu0 0
  %6790 = vmatpush1.bf16.msra.mxu0 0
  %6791 = vmatprep.subr.bf16.mxu0 0
  %6792 = vmatpush1.bf16.msra.mxu0 0
  %6793 = vmatprep.subr.bf16.mxu0 0
  %6794 = vmatpush1.bf16.msra.mxu0 0
  %6795 = vmatprep.subr.bf16.mxu0 0
  %6796 = vmatpush1.bf16.msra.mxu0 0
  %6797 = vmatprep.subr.bf16.mxu0 0
  %6798 = vmatpush1.bf16.msra.mxu0 0
  %6799 = vmatprep.subr.bf16.mxu0 0
  %6800 = vmatpush1.bf16.msra.mxu0 0
  %6801 = vmatprep.subr.bf16.mxu0 0
  %6802 = vmatpush1.bf16.msra.mxu0 0
  %6803 = vmatprep.mubr.bf16.mxu0 0
  %6804 = vmatmul.mubr.bf16.gmra.mrb[0].mxu0 %v6433
  %v6805 = vpop.f32.mrb[0].mxu0
  %v6806 = vadd.f32 0.0, %v6805
  %v6807 = vpop.f32.mrb[0].mxu0
  %v6808 = vpop.f32.mrb[0].mxu0
  %v6809 = vadd.f32 0.0, %v6808
  %v6810 = vpop.f32.mrb[0].mxu0
  %6811 = vdwg.mxu0
  %v6812 = vpack.c.bf16 %v6809, %v6806
  %v6813 = vld [vmem:[%s2429] sm:$0xf]
  %v6814 = vld [vmem:[%s2429 + $0x4] sm:$0xf]
  %v6815 = vld [vmem:[%s2429 + $0x8] sm:$0xf]
  %v6816 = vld [vmem:[%s2429 + $0xc] sm:$0xf]
  %v6817 = vld [vmem:[%s2429 + $0x10] sm:$0xf]
  %v6818 = vld [vmem:[%s2429 + $0x14] sm:$0xf]
  %v6819 = vld [vmem:[%s2429 + $0x18] sm:$0xf]
  %v6820 = vld [vmem:[%s2429 + $0x1c] sm:$0xf]
  %v6829 = vunpack.c.l.b16 %v6813
  %v6830 = vunpack.c.l.b16 %v6814
  %v6831 = vunpack.c.l.b16 %v6815
  %v6832 = vunpack.c.l.b16 %v6816
  %v6833 = vunpack.c.l.b16 %v6817
  %v6834 = vunpack.c.l.b16 %v6818
  %v6835 = vunpack.c.l.b16 %v6819
  %v6836 = vunpack.c.l.b16 %v6820
  %v6837 = vpack.c.b16 %v6830, %v6829
  %v6838 = vpack.c.b16 %v6832, %v6831
  %v6839 = vpack.c.b16 %v6834, %v6833
  %v6840 = vpack.c.b16 %v6836, %v6835
  %6845 = vmatprep.subr.bf16.mxu0 0
  %6846 = vmatpush1.bf16.msra.mxu0 %v6837
  %6847 = vmatprep.subr.bf16.mxu0 0
  %6848 = vmatpush1.bf16.msra.mxu0 %v6838
  %6849 = vmatprep.subr.bf16.mxu0 0
  %6850 = vmatpush1.bf16.msra.mxu0 %v6839
  %6851 = vmatprep.subr.bf16.mxu0 0
  %6852 = vmatpush1.bf16.msra.mxu0 %v6840
  %6853 = vmatprep.subr.bf16.mxu0 0
  %6854 = vmatpush1.bf16.msra.mxu0 0
  %6855 = vmatprep.subr.bf16.mxu0 0
  %6856 = vmatpush1.bf16.msra.mxu0 0
  %6857 = vmatprep.subr.bf16.mxu0 0
  %6858 = vmatpush1.bf16.msra.mxu0 0
  %6859 = vmatprep.subr.bf16.mxu0 0
  %6860 = vmatpush1.bf16.msra.mxu0 0
  %6861 = vmatprep.subr.bf16.mxu0 0
  %6862 = vmatpush1.bf16.msra.mxu0 0
  %6863 = vmatprep.subr.bf16.mxu0 0
  %6864 = vmatpush1.bf16.msra.mxu0 0
  %6865 = vmatprep.subr.bf16.mxu0 0
  %6866 = vmatpush1.bf16.msra.mxu0 0
  %6867 = vmatprep.subr.bf16.mxu0 0
  %6868 = vmatpush1.bf16.msra.mxu0 0
  %6869 = vmatprep.subr.bf16.mxu0 0
  %6870 = vmatpush1.bf16.msra.mxu0 0
  %6871 = vmatprep.subr.bf16.mxu0 0
  %6872 = vmatpush1.bf16.msra.mxu0 0
  %6873 = vmatprep.subr.bf16.mxu0 0
  %6874 = vmatpush1.bf16.msra.mxu0 0
  %6875 = vmatprep.subr.bf16.mxu0 0
  %6876 = vmatpush1.bf16.msra.mxu0 0
  %6877 = vmatprep.mubr.bf16.mxu0 0
  %6878 = vmatmul.mubr.bf16.gmra.mrb[0].mxu0 %v6433
  %v6879 = vpop.f32.mrb[0].mxu0
  %v6880 = vadd.f32 0.0, %v6879
  %v6881 = vpop.f32.mrb[0].mxu0
  %v6882 = vpop.f32.mrb[0].mxu0
  %v6883 = vadd.f32 0.0, %v6882
  %v6884 = vpop.f32.mrb[0].mxu0
  %6885 = vdwg.mxu0
  %v6886 = vpack.c.bf16 %v6883, %v6880
  %v6887 = vld [vmem:[%s2504] sm:$0xf]
  %v6888 = vld [vmem:[%s2504 + $0x4] sm:$0xf]
  %v6889 = vld [vmem:[%s2504 + $0x8] sm:$0xf]
  %v6890 = vld [vmem:[%s2504 + $0xc] sm:$0xf]
  %v6891 = vld [vmem:[%s2504 + $0x10] sm:$0xf]
  %v6892 = vld [vmem:[%s2504 + $0x14] sm:$0xf]
  %v6893 = vld [vmem:[%s2504 + $0x18] sm:$0xf]
  %v6894 = vld [vmem:[%s2504 + $0x1c] sm:$0xf]
  %v6903 = vunpack.c.l.b16 %v6887
  %v6904 = vunpack.c.l.b16 %v6888
  %v6905 = vunpack.c.l.b16 %v6889
  %v6906 = vunpack.c.l.b16 %v6890
  %v6907 = vunpack.c.l.b16 %v6891
  %v6908 = vunpack.c.l.b16 %v6892
  %v6909 = vunpack.c.l.b16 %v6893
  %v6910 = vunpack.c.l.b16 %v6894
  %v6911 = vpack.c.b16 %v6904, %v6903
  %v6912 = vpack.c.b16 %v6906, %v6905
  %v6913 = vpack.c.b16 %v6908, %v6907
  %v6914 = vpack.c.b16 %v6910, %v6909
  %6919 = vmatprep.subr.bf16.mxu0 0
  %6920 = vmatpush1.bf16.msra.mxu0 %v6911
  %6921 = vmatprep.subr.bf16.mxu0 0
  %6922 = vmatpush1.bf16.msra.mxu0 %v6912
  %6923 = vmatprep.subr.bf16.mxu0 0
  %6924 = vmatpush1.bf16.msra.mxu0 %v6913
  %6925 = vmatprep.subr.bf16.mxu0 0
  %6926 = vmatpush1.bf16.msra.mxu0 %v6914
  %6927 = vmatprep.subr.bf16.mxu0 0
  %6928 = vmatpush1.bf16.msra.mxu0 0
  %6929 = vmatprep.subr.bf16.mxu0 0
  %6930 = vmatpush1.bf16.msra.mxu0 0
  %6931 = vmatprep.subr.bf16.mxu0 0
  %6932 = vmatpush1.bf16.msra.mxu0 0
  %6933 = vmatprep.subr.bf16.mxu0 0
  %6934 = vmatpush1.bf16.msra.mxu0 0
  %6935 = vmatprep.subr.bf16.mxu0 0
  %6936 = vmatpush1.bf16.msra.mxu0 0
  %6937 = vmatprep.subr.bf16.mxu0 0
  %6938 = vmatpush1.bf16.msra.mxu0 0
  %6939 = vmatprep.subr.bf16.mxu0 0
  %6940 = vmatpush1.bf16.msra.mxu0 0
  %6941 = vmatprep.subr.bf16.mxu0 0
  %6942 = vmatpush1.bf16.msra.mxu0 0
  %6943 = vmatprep.subr.bf16.mxu0 0
  %6944 = vmatpush1.bf16.msra.mxu0 0
  %6945 = vmatprep.subr.bf16.mxu0 0
  %6946 = vmatpush1.bf16.msra.mxu0 0
  %6947 = vmatprep.subr.bf16.mxu0 0
  %6948 = vmatpush1.bf16.msra.mxu0 0
  %6949 = vmatprep.subr.bf16.mxu0 0
  %6950 = vmatpush1.bf16.msra.mxu0 0
  %6951 = vmatprep.mubr.bf16.mxu0 0
  %6952 = vmatmul.mubr.bf16.gmra.mrb[0].mxu0 %v6433
  %v6953 = vpop.f32.mrb[0].mxu0
  %v6954 = vadd.f32 0.0, %v6953
  %v6955 = vpop.f32.mrb[0].mxu0
  %v6956 = vpop.f32.mrb[0].mxu0
  %v6957 = vadd.f32 0.0, %v6956
  %v6958 = vpop.f32.mrb[0].mxu0
  %6959 = vdwg.mxu0
  %v6960 = vpack.c.bf16 %v6957, %v6954
  %v6962 = vsel %vm531, %v6812, 0
  %v6965 = vsel %vm531, %v6886, 0
  %6967 = vmatprep.subr.bf16.mxu0 0
  %6968 = vmatpush1.bf16.xpose.msra.mxu0 %v6965
  %6969 = vmatprep.subr.bf16.mxu0 0
  %6970 = vmatpush1.bf16.xpose.msra.mxu0 0
  %6971 = vmatprep.subr.bf16.mxu0 0
  %6972 = vmatpush1.bf16.xpose.msra.mxu0 0
  %6973 = vmatprep.subr.bf16.mxu0 0
  %6974 = vmatpush1.bf16.xpose.msra.mxu0 0
  %6975 = vmatprep.subr.bf16.mxu0 0
  %6976 = vmatpush1.bf16.xpose.msra.mxu0 0
  %6977 = vmatprep.subr.bf16.mxu0 0
  %6978 = vmatpush1.bf16.xpose.msra.mxu0 0
  %6979 = vmatprep.subr.bf16.mxu0 0
  %6980 = vmatpush1.bf16.xpose.msra.mxu0 0
  %6981 = vmatprep.subr.bf16.mxu0 0
  %6982 = vmatpush1.bf16.xpose.msra.mxu0 0
  %6983 = vmatprep.subr.bf16.mxu0 0
  %6984 = vmatpush1.bf16.xpose.msra.mxu0 0
  %6985 = vmatprep.subr.bf16.mxu0 0
  %6986 = vmatpush1.bf16.xpose.msra.mxu0 0
  %6987 = vmatprep.subr.bf16.mxu0 0
  %6988 = vmatpush1.bf16.xpose.msra.mxu0 0
  %6989 = vmatprep.subr.bf16.mxu0 0
  %6990 = vmatpush1.bf16.xpose.msra.mxu0 0
  %6991 = vmatprep.subr.bf16.mxu0 0
  %6992 = vmatpush1.bf16.xpose.msra.mxu0 0
  %6993 = vmatprep.subr.bf16.mxu0 0
  %6994 = vmatpush1.bf16.xpose.msra.mxu0 0
  %6995 = vmatprep.subr.bf16.mxu0 0
  %6996 = vmatpush1.bf16.xpose.msra.mxu0 0
  %6997 = vmatprep.subr.bf16.mxu0 0
  %6998 = vmatpush1.bf16.xpose.msra.mxu0 0
  %6999 = vmatprep.mubr.bf16.mxu0 0
  %7000 = vmatmul.mubr.bf16.gmra.mrb[0].mxu0 %v6962
  %v7001 = vpop.f32.mrb[0].mxu0
  %v7002 = vadd.f32 %v4929, %v7001
  %v7003 = vpop.f32.mrb[0].mxu0
  %v7004 = vpop.f32.mrb[0].mxu0
  %v7005 = vadd.f32 %v4929, %v7004
  %v7006 = vpop.f32.mrb[0].mxu0
  %7007 = vdwg.mxu0
  %v7008 = vsel %vm531, %v7002, -inf
  %7009 = vmax.xlane.f32.xlu0 %v7008
  %v7010 = vpop.xlane.xlu0 %7009
  %v7011 = vsel %vm531, %v7005, -inf
  %7012 = vmax.xlane.f32.xlu0 %v7011
  %v7013 = vpop.xlane.xlu0 %7012
  %v7014 = vsub.f32 %v7002, %v7010
  %v7015 = vsub.f32 %v7005, %v7013
  %v7016 = vmul.f32 %v7014, 1.442695
  %v7017 = vpow.pop %v7016
  %v7018 = vmul.f32 %v7015, 1.442695
  %v7019 = vpow.pop %v7018
  %v7020 = vsel %vm531, %v7017, 0.0
  %7021 = vadd.xlane.f32.xlu0 %v7020
  %v7022 = vpop.xlane.xlu0 %7021
  %v7023 = vsel %vm531, %v7019, 0.0
  %7024 = vadd.xlane.f32.xlu0 %v7023
  %v7025 = vpop.xlane.xlu0 %7024
  %v7026 = vrcp.pop %v7022
  %v7027 = vrcp.pop %v7025
  %v7028 = vmul.f32 %v7017, %v7026
  %v7029 = vmul.f32 %v7019, %v7027
  %v7030 = vpack.c.bf16 %v7029, %v7028
  %v7032 = vsel %vm531, %v7030, 0
  %7034 = vmatprep.subr.bf16.mxu0 0
  %7035 = vmatpush1.bf16.msra.mxu0 %v6960
  %7036 = vmatprep.subr.bf16.mxu0 0
  %7037 = vmatpush1.bf16.msra.mxu0 0
  %7038 = vmatprep.subr.bf16.mxu0 0
  %7039 = vmatpush1.bf16.msra.mxu0 0
  %7040 = vmatprep.subr.bf16.mxu0 0
  %7041 = vmatpush1.bf16.msra.mxu0 0
  %7042 = vmatprep.subr.bf16.mxu0 0
  %7043 = vmatpush1.bf16.msra.mxu0 0
  %7044 = vmatprep.subr.bf16.mxu0 0
  %7045 = vmatpush1.bf16.msra.mxu0 0
  %7046 = vmatprep.subr.bf16.mxu0 0
  %7047 = vmatpush1.bf16.msra.mxu0 0
  %7048 = vmatprep.subr.bf16.mxu0 0
  %7049 = vmatpush1.bf16.msra.mxu0 0
  %7050 = vmatprep.subr.bf16.mxu0 0
  %7051 = vmatpush1.bf16.msra.mxu0 0
  %7052 = vmatprep.subr.bf16.mxu0 0
  %7053 = vmatpush1.bf16.msra.mxu0 0
  %7054 = vmatprep.subr.bf16.mxu0 0
  %7055 = vmatpush1.bf16.msra.mxu0 0
  %7056 = vmatprep.subr.bf16.mxu0 0
  %7057 = vmatpush1.bf16.msra.mxu0 0
  %7058 = vmatprep.subr.bf16.mxu0 0
  %7059 = vmatpush1.bf16.msra.mxu0 0
  %7060 = vmatprep.subr.bf16.mxu0 0
  %7061 = vmatpush1.bf16.msra.mxu0 0
  %7062 = vmatprep.subr.bf16.mxu0 0
  %7063 = vmatpush1.bf16.msra.mxu0 0
  %7064 = vmatprep.subr.bf16.mxu0 0
  %7065 = vmatpush1.bf16.msra.mxu0 0
  %7066 = vmatprep.mubr.bf16.mxu0 0
  %7067 = vmatmul.mubr.bf16.gmra.mrb[0].mxu0 %v7032
  %v7068 = vpop.f32.mrb[0].mxu0
  %v7069 = vadd.f32 0.0, %v7068
  %v7070 = vpop.f32.mrb[0].mxu0
  %v7071 = vpop.f32.mrb[0].mxu0
  %v7072 = vadd.f32 0.0, %v7071
  %v7073 = vpop.f32.mrb[0].mxu0
  %7074 = vdwg.mxu0
  %v7075 = vld [vmem:[%s2693] sm:$0xf]
  %v7076 = vld [vmem:[%s2693 + $0x4] sm:$0xf]
  %v7077 = vld [vmem:[%s2693 + $0x8] sm:$0xf]
  %v7078 = vld [vmem:[%s2693 + $0xc] sm:$0xf]
  %v7079 = vld [vmem:[%s2693 + $0x10] sm:$0xf]
  %v7080 = vld [vmem:[%s2693 + $0x14] sm:$0xf]
  %v7081 = vld [vmem:[%s2693 + $0x18] sm:$0xf]
  %v7082 = vld [vmem:[%s2693 + $0x1c] sm:$0xf]
  %v7091 = vunpack.c.l.b16 %v7075
  %v7092 = vunpack.c.l.b16 %v7076
  %v7093 = vunpack.c.l.b16 %v7077
  %v7094 = vunpack.c.l.b16 %v7078
  %v7095 = vunpack.c.l.b16 %v7079
  %v7096 = vunpack.c.l.b16 %v7080
  %v7097 = vunpack.c.l.b16 %v7081
  %v7098 = vunpack.c.l.b16 %v7082
  %v7099 = vpack.c.b16 %v7092, %v7091
  %v7100 = vpack.c.b16 %v7094, %v7093
  %v7101 = vpack.c.b16 %v7096, %v7095
  %v7102 = vpack.c.b16 %v7098, %v7097
  %7107 = vmatprep.subr.bf16.mxu0 0
  %7108 = vmatpush1.bf16.msra.mxu0 %v7099
  %7109 = vmatprep.subr.bf16.mxu0 0
  %7110 = vmatpush1.bf16.msra.mxu0 %v7100
  %7111 = vmatprep.subr.bf16.mxu0 0
  %7112 = vmatpush1.bf16.msra.mxu0 %v7101
  %7113 = vmatprep.subr.bf16.mxu0 0
  %7114 = vmatpush1.bf16.msra.mxu0 %v7102
  %7115 = vmatprep.subr.bf16.mxu0 0
  %7116 = vmatpush1.bf16.msra.mxu0 0
  %7117 = vmatprep.subr.bf16.mxu0 0
  %7118 = vmatpush1.bf16.msra.mxu0 0
  %7119 = vmatprep.subr.bf16.mxu0 0
  %7120 = vmatpush1.bf16.msra.mxu0 0
  %7121 = vmatprep.subr.bf16.mxu0 0
  %7122 = vmatpush1.bf16.msra.mxu0 0
  %7123 = vmatprep.subr.bf16.mxu0 0
  %7124 = vmatpush1.bf16.msra.mxu0 0
  %7125 = vmatprep.subr.bf16.mxu0 0
  %7126 = vmatpush1.bf16.msra.mxu0 0
  %7127 = vmatprep.subr.bf16.mxu0 0
  %7128 = vmatpush1.bf16.msra.mxu0 0
  %7129 = vmatprep.subr.bf16.mxu0 0
  %7130 = vmatpush1.bf16.msra.mxu0 0
  %7131 = vmatprep.subr.bf16.mxu0 0
  %7132 = vmatpush1.bf16.msra.mxu0 0
  %7133 = vmatprep.subr.bf16.mxu0 0
  %7134 = vmatpush1.bf16.msra.mxu0 0
  %7135 = vmatprep.subr.bf16.mxu0 0
  %7136 = vmatpush1.bf16.msra.mxu0 0
  %7137 = vmatprep.subr.bf16.mxu0 0
  %7138 = vmatpush1.bf16.msra.mxu0 0
  %7139 = vmatprep.mubr.bf16.mxu0 0
  %7140 = vmatmul.mubr.bf16.gmra.mrb[0].mxu0 %v6433
  %v7141 = vpop.f32.mrb[0].mxu0
  %v7142 = vadd.f32 0.0, %v7141
  %v7143 = vpop.f32.mrb[0].mxu0
  %v7144 = vpop.f32.mrb[0].mxu0
  %v7145 = vadd.f32 0.0, %v7144
  %v7146 = vpop.f32.mrb[0].mxu0
  %7147 = vdwg.mxu0
  %v7148 = vpack.c.bf16 %v7145, %v7142
  %v7149 = vld [vmem:[%s2768] sm:$0xf]
  %v7150 = vld [vmem:[%s2768 + $0x4] sm:$0xf]
  %v7151 = vld [vmem:[%s2768 + $0x8] sm:$0xf]
  %v7152 = vld [vmem:[%s2768 + $0xc] sm:$0xf]
  %v7153 = vld [vmem:[%s2768 + $0x10] sm:$0xf]
  %v7154 = vld [vmem:[%s2768 + $0x14] sm:$0xf]
  %v7155 = vld [vmem:[%s2768 + $0x18] sm:$0xf]
  %v7156 = vld [vmem:[%s2768 + $0x1c] sm:$0xf]
  %v7165 = vunpack.c.l.b16 %v7149
  %v7166 = vunpack.c.l.b16 %v7150
  %v7167 = vunpack.c.l.b16 %v7151
  %v7168 = vunpack.c.l.b16 %v7152
  %v7169 = vunpack.c.l.b16 %v7153
  %v7170 = vunpack.c.l.b16 %v7154
  %v7171 = vunpack.c.l.b16 %v7155
  %v7172 = vunpack.c.l.b16 %v7156
  %v7173 = vpack.c.b16 %v7166, %v7165
  %v7174 = vpack.c.b16 %v7168, %v7167
  %v7175 = vpack.c.b16 %v7170, %v7169
  %v7176 = vpack.c.b16 %v7172, %v7171
  %7181 = vmatprep.subr.bf16.mxu0 0
  %7182 = vmatpush1.bf16.msra.mxu0 %v7173
  %7183 = vmatprep.subr.bf16.mxu0 0
  %7184 = vmatpush1.bf16.msra.mxu0 %v7174
  %7185 = vmatprep.subr.bf16.mxu0 0
  %7186 = vmatpush1.bf16.msra.mxu0 %v7175
  %7187 = vmatprep.subr.bf16.mxu0 0
  %7188 = vmatpush1.bf16.msra.mxu0 %v7176
  %7189 = vmatprep.subr.bf16.mxu0 0
  %7190 = vmatpush1.bf16.msra.mxu0 0
  %7191 = vmatprep.subr.bf16.mxu0 0
  %7192 = vmatpush1.bf16.msra.mxu0 0
  %7193 = vmatprep.subr.bf16.mxu0 0
  %7194 = vmatpush1.bf16.msra.mxu0 0
  %7195 = vmatprep.subr.bf16.mxu0 0
  %7196 = vmatpush1.bf16.msra.mxu0 0
  %7197 = vmatprep.subr.bf16.mxu0 0
  %7198 = vmatpush1.bf16.msra.mxu0 0
  %7199 = vmatprep.subr.bf16.mxu0 0
  %7200 = vmatpush1.bf16.msra.mxu0 0
  %7201 = vmatprep.subr.bf16.mxu0 0
  %7202 = vmatpush1.bf16.msra.mxu0 0
  %7203 = vmatprep.subr.bf16.mxu0 0
  %7204 = vmatpush1.bf16.msra.mxu0 0
  %7205 = vmatprep.subr.bf16.mxu0 0
  %7206 = vmatpush1.bf16.msra.mxu0 0
  %7207 = vmatprep.subr.bf16.mxu0 0
  %7208 = vmatpush1.bf16.msra.mxu0 0
  %7209 = vmatprep.subr.bf16.mxu0 0
  %7210 = vmatpush1.bf16.msra.mxu0 0
  %7211 = vmatprep.subr.bf16.mxu0 0
  %7212 = vmatpush1.bf16.msra.mxu0 0
  %7213 = vmatprep.mubr.bf16.mxu0 0
  %7214 = vmatmul.mubr.bf16.gmra.mrb[0].mxu0 %v6433
  %v7215 = vpop.f32.mrb[0].mxu0
  %v7216 = vadd.f32 0.0, %v7215
  %v7217 = vpop.f32.mrb[0].mxu0
  %v7218 = vpop.f32.mrb[0].mxu0
  %v7219 = vadd.f32 0.0, %v7218
  %v7220 = vpop.f32.mrb[0].mxu0
  %7221 = vdwg.mxu0
  %v7222 = vpack.c.bf16 %v7219, %v7216
  %v7223 = vld [vmem:[%s2843] sm:$0xf]
  %v7224 = vld [vmem:[%s2843 + $0x4] sm:$0xf]
  %v7225 = vld [vmem:[%s2843 + $0x8] sm:$0xf]
  %v7226 = vld [vmem:[%s2843 + $0xc] sm:$0xf]
  %v7227 = vld [vmem:[%s2843 + $0x10] sm:$0xf]
  %v7228 = vld [vmem:[%s2843 + $0x14] sm:$0xf]
  %v7229 = vld [vmem:[%s2843 + $0x18] sm:$0xf]
  %v7230 = vld [vmem:[%s2843 + $0x1c] sm:$0xf]
  %v7239 = vunpack.c.l.b16 %v7223
  %v7240 = vunpack.c.l.b16 %v7224
  %v7241 = vunpack.c.l.b16 %v7225
  %v7242 = vunpack.c.l.b16 %v7226
  %v7243 = vunpack.c.l.b16 %v7227
  %v7244 = vunpack.c.l.b16 %v7228
  %v7245 = vunpack.c.l.b16 %v7229
  %v7246 = vunpack.c.l.b16 %v7230
  %v7247 = vpack.c.b16 %v7240, %v7239
  %v7248 = vpack.c.b16 %v7242, %v7241
  %v7249 = vpack.c.b16 %v7244, %v7243
  %v7250 = vpack.c.b16 %v7246, %v7245
  %7255 = vmatprep.subr.bf16.mxu0 0
  %7256 = vmatpush1.bf16.msra.mxu0 %v7247
  %7257 = vmatprep.subr.bf16.mxu0 0
  %7258 = vmatpush1.bf16.msra.mxu0 %v7248
  %7259 = vmatprep.subr.bf16.mxu0 0
  %7260 = vmatpush1.bf16.msra.mxu0 %v7249
  %7261 = vmatprep.subr.bf16.mxu0 0
  %7262 = vmatpush1.bf16.msra.mxu0 %v7250
  %7263 = vmatprep.subr.bf16.mxu0 0
  %7264 = vmatpush1.bf16.msra.mxu0 0
  %7265 = vmatprep.subr.bf16.mxu0 0
  %7266 = vmatpush1.bf16.msra.mxu0 0
  %7267 = vmatprep.subr.bf16.mxu0 0
  %7268 = vmatpush1.bf16.msra.mxu0 0
  %7269 = vmatprep.subr.bf16.mxu0 0
  %7270 = vmatpush1.bf16.msra.mxu0 0
  %7271 = vmatprep.subr.bf16.mxu0 0
  %7272 = vmatpush1.bf16.msra.mxu0 0
  %7273 = vmatprep.subr.bf16.mxu0 0
  %7274 = vmatpush1.bf16.msra.mxu0 0
  %7275 = vmatprep.subr.bf16.mxu0 0
  %7276 = vmatpush1.bf16.msra.mxu0 0
  %7277 = vmatprep.subr.bf16.mxu0 0
  %7278 = vmatpush1.bf16.msra.mxu0 0
  %7279 = vmatprep.subr.bf16.mxu0 0
  %7280 = vmatpush1.bf16.msra.mxu0 0
  %7281 = vmatprep.subr.bf16.mxu0 0
  %7282 = vmatpush1.bf16.msra.mxu0 0
  %7283 = vmatprep.subr.bf16.mxu0 0
  %7284 = vmatpush1.bf16.msra.mxu0 0
  %7285 = vmatprep.subr.bf16.mxu0 0
  %7286 = vmatpush1.bf16.msra.mxu0 0
  %7287 = vmatprep.mubr.bf16.mxu0 0
  %7288 = vmatmul.mubr.bf16.gmra.mrb[0].mxu0 %v6433
  %v7289 = vpop.f32.mrb[0].mxu0
  %v7290 = vadd.f32 0.0, %v7289
  %v7291 = vpop.f32.mrb[0].mxu0
  %v7292 = vpop.f32.mrb[0].mxu0
  %v7293 = vadd.f32 0.0, %v7292
  %v7294 = vpop.f32.mrb[0].mxu0
  %7295 = vdwg.mxu0
  %v7296 = vpack.c.bf16 %v7293, %v7290
  %v7298 = vsel %vm531, %v7148, 0
  %v7301 = vsel %vm531, %v7222, 0
  %7303 = vmatprep.subr.bf16.mxu0 0
  %7304 = vmatpush1.bf16.xpose.msra.mxu0 %v7301
  %7305 = vmatprep.subr.bf16.mxu0 0
  %7306 = vmatpush1.bf16.xpose.msra.mxu0 0
  %7307 = vmatprep.subr.bf16.mxu0 0
  %7308 = vmatpush1.bf16.xpose.msra.mxu0 0
  %7309 = vmatprep.subr.bf16.mxu0 0
  %7310 = vmatpush1.bf16.xpose.msra.mxu0 0
  %7311 = vmatprep.subr.bf16.mxu0 0
  %7312 = vmatpush1.bf16.xpose.msra.mxu0 0
  %7313 = vmatprep.subr.bf16.mxu0 0
  %7314 = vmatpush1.bf16.xpose.msra.mxu0 0
  %7315 = vmatprep.subr.bf16.mxu0 0
  %7316 = vmatpush1.bf16.xpose.msra.mxu0 0
  %7317 = vmatprep.subr.bf16.mxu0 0
  %7318 = vmatpush1.bf16.xpose.msra.mxu0 0
  %7319 = vmatprep.subr.bf16.mxu0 0
  %7320 = vmatpush1.bf16.xpose.msra.mxu0 0
  %7321 = vmatprep.subr.bf16.mxu0 0
  %7322 = vmatpush1.bf16.xpose.msra.mxu0 0
  %7323 = vmatprep.subr.bf16.mxu0 0
  %7324 = vmatpush1.bf16.xpose.msra.mxu0 0
  %7325 = vmatprep.subr.bf16.mxu0 0
  %7326 = vmatpush1.bf16.xpose.msra.mxu0 0
  %7327 = vmatprep.subr.bf16.mxu0 0
  %7328 = vmatpush1.bf16.xpose.msra.mxu0 0
  %7329 = vmatprep.subr.bf16.mxu0 0
  %7330 = vmatpush1.bf16.xpose.msra.mxu0 0
  %7331 = vmatprep.subr.bf16.mxu0 0
  %7332 = vmatpush1.bf16.xpose.msra.mxu0 0
  %7333 = vmatprep.subr.bf16.mxu0 0
  %7334 = vmatpush1.bf16.xpose.msra.mxu0 0
  %7335 = vmatprep.mubr.bf16.mxu0 0
  %7336 = vmatmul.mubr.bf16.gmra.mrb[0].mxu0 %v7298
  %v7337 = vpop.f32.mrb[0].mxu0
  %v7338 = vadd.f32 %v4929, %v7337
  %v7339 = vpop.f32.mrb[0].mxu0
  %v7340 = vpop.f32.mrb[0].mxu0
  %v7341 = vadd.f32 %v4929, %v7340
  %v7342 = vpop.f32.mrb[0].mxu0
  %7343 = vdwg.mxu0
  %v7344 = vsel %vm531, %v7338, -inf
  %7345 = vmax.xlane.f32.xlu0 %v7344
  %v7346 = vpop.xlane.xlu0 %7345
  %v7347 = vsel %vm531, %v7341, -inf
  %7348 = vmax.xlane.f32.xlu0 %v7347
  %v7349 = vpop.xlane.xlu0 %7348
  %v7350 = vsub.f32 %v7338, %v7346
  %v7351 = vsub.f32 %v7341, %v7349
  %v7352 = vmul.f32 %v7350, 1.442695
  %v7353 = vpow.pop %v7352
  %v7354 = vmul.f32 %v7351, 1.442695
  %v7355 = vpow.pop %v7354
  %v7356 = vsel %vm531, %v7353, 0.0
  %7357 = vadd.xlane.f32.xlu0 %v7356
  %v7358 = vpop.xlane.xlu0 %7357
  %v7359 = vsel %vm531, %v7355, 0.0
  %7360 = vadd.xlane.f32.xlu0 %v7359
  %v7361 = vpop.xlane.xlu0 %7360
  %v7362 = vrcp.pop %v7358
  %v7363 = vrcp.pop %v7361
  %v7364 = vmul.f32 %v7353, %v7362
  %v7365 = vmul.f32 %v7355, %v7363
  %v7366 = vpack.c.bf16 %v7365, %v7364
  %v7368 = vsel %vm531, %v7366, 0
  %7370 = vmatprep.subr.bf16.mxu0 0
  %7371 = vmatpush1.bf16.msra.mxu0 %v7296
  %7372 = vmatprep.subr.bf16.mxu0 0
  %7373 = vmatpush1.bf16.msra.mxu0 0
  %7374 = vmatprep.subr.bf16.mxu0 0
  %7375 = vmatpush1.bf16.msra.mxu0 0
  %7376 = vmatprep.subr.bf16.mxu0 0
  %7377 = vmatpush1.bf16.msra.mxu0 0
  %7378 = vmatprep.subr.bf16.mxu0 0
  %7379 = vmatpush1.bf16.msra.mxu0 0
  %7380 = vmatprep.subr.bf16.mxu0 0
  %7381 = vmatpush1.bf16.msra.mxu0 0
  %7382 = vmatprep.subr.bf16.mxu0 0
  %7383 = vmatpush1.bf16.msra.mxu0 0
  %7384 = vmatprep.subr.bf16.mxu0 0
  %7385 = vmatpush1.bf16.msra.mxu0 0
  %7386 = vmatprep.subr.bf16.mxu0 0
  %7387 = vmatpush1.bf16.msra.mxu0 0
  %7388 = vmatprep.subr.bf16.mxu0 0
  %7389 = vmatpush1.bf16.msra.mxu0 0
  %7390 = vmatprep.subr.bf16.mxu0 0
  %7391 = vmatpush1.bf16.msra.mxu0 0
  %7392 = vmatprep.subr.bf16.mxu0 0
  %7393 = vmatpush1.bf16.msra.mxu0 0
  %7394 = vmatprep.subr.bf16.mxu0 0
  %7395 = vmatpush1.bf16.msra.mxu0 0
  %7396 = vmatprep.subr.bf16.mxu0 0
  %7397 = vmatpush1.bf16.msra.mxu0 0
  %7398 = vmatprep.subr.bf16.mxu0 0
  %7399 = vmatpush1.bf16.msra.mxu0 0
  %7400 = vmatprep.subr.bf16.mxu0 0
  %7401 = vmatpush1.bf16.msra.mxu0 0
  %7402 = vmatprep.mubr.bf16.mxu0 0
  %7403 = vmatmul.mubr.bf16.gmra.mrb[0].mxu0 %v7368
  %v7404 = vpop.f32.mrb[0].mxu0
  %v7405 = vadd.f32 0.0, %v7404
  %v7406 = vpop.f32.mrb[0].mxu0
  %v7407 = vpop.f32.mrb[0].mxu0
  %v7408 = vadd.f32 0.0, %v7407
  %v7409 = vpop.f32.mrb[0].mxu0
  %7410 = vdwg.mxu0
  %v7411 = vld [vmem:[%s3032] sm:$0xf]
  %v7412 = vld [vmem:[%s3032 + $0x4] sm:$0xf]
  %v7413 = vld [vmem:[%s3032 + $0x8] sm:$0xf]
  %v7414 = vld [vmem:[%s3032 + $0xc] sm:$0xf]
  %v7415 = vld [vmem:[%s3032 + $0x10] sm:$0xf]
  %v7416 = vld [vmem:[%s3032 + $0x14] sm:$0xf]
  %v7417 = vld [vmem:[%s3032 + $0x18] sm:$0xf]
  %v7418 = vld [vmem:[%s3032 + $0x1c] sm:$0xf]
  %v7427 = vunpack.c.l.b16 %v7411
  %v7428 = vunpack.c.l.b16 %v7412
  %v7429 = vunpack.c.l.b16 %v7413
  %v7430 = vunpack.c.l.b16 %v7414
  %v7431 = vunpack.c.l.b16 %v7415
  %v7432 = vunpack.c.l.b16 %v7416
  %v7433 = vunpack.c.l.b16 %v7417
  %v7434 = vunpack.c.l.b16 %v7418
  %v7435 = vpack.c.b16 %v7428, %v7427
  %v7436 = vpack.c.b16 %v7430, %v7429
  %v7437 = vpack.c.b16 %v7432, %v7431
  %v7438 = vpack.c.b16 %v7434, %v7433
  %7443 = vmatprep.subr.bf16.mxu0 0
  %7444 = vmatpush1.bf16.msra.mxu0 %v7435
  %7445 = vmatprep.subr.bf16.mxu0 0
  %7446 = vmatpush1.bf16.msra.mxu0 %v7436
  %7447 = vmatprep.subr.bf16.mxu0 0
  %7448 = vmatpush1.bf16.msra.mxu0 %v7437
  %7449 = vmatprep.subr.bf16.mxu0 0
  %7450 = vmatpush1.bf16.msra.mxu0 %v7438
  %7451 = vmatprep.subr.bf16.mxu0 0
  %7452 = vmatpush1.bf16.msra.mxu0 0
  %7453 = vmatprep.subr.bf16.mxu0 0
  %7454 = vmatpush1.bf16.msra.mxu0 0
  %7455 = vmatprep.subr.bf16.mxu0 0
  %7456 = vmatpush1.bf16.msra.mxu0 0
  %7457 = vmatprep.subr.bf16.mxu0 0
  %7458 = vmatpush1.bf16.msra.mxu0 0
  %7459 = vmatprep.subr.bf16.mxu0 0
  %7460 = vmatpush1.bf16.msra.mxu0 0
  %7461 = vmatprep.subr.bf16.mxu0 0
  %7462 = vmatpush1.bf16.msra.mxu0 0
  %7463 = vmatprep.subr.bf16.mxu0 0
  %7464 = vmatpush1.bf16.msra.mxu0 0
  %7465 = vmatprep.subr.bf16.mxu0 0
  %7466 = vmatpush1.bf16.msra.mxu0 0
  %7467 = vmatprep.subr.bf16.mxu0 0
  %7468 = vmatpush1.bf16.msra.mxu0 0
  %7469 = vmatprep.subr.bf16.mxu0 0
  %7470 = vmatpush1.bf16.msra.mxu0 0
  %7471 = vmatprep.subr.bf16.mxu0 0
  %7472 = vmatpush1.bf16.msra.mxu0 0
  %7473 = vmatprep.subr.bf16.mxu0 0
  %7474 = vmatpush1.bf16.msra.mxu0 0
  %7475 = vmatprep.mubr.bf16.mxu0 0
  %7476 = vmatmul.mubr.bf16.gmra.mrb[0].mxu0 %v6433
  %v7477 = vpop.f32.mrb[0].mxu0
  %v7478 = vadd.f32 0.0, %v7477
  %v7479 = vpop.f32.mrb[0].mxu0
  %v7480 = vpop.f32.mrb[0].mxu0
  %v7481 = vadd.f32 0.0, %v7480
  %v7482 = vpop.f32.mrb[0].mxu0
  %7483 = vdwg.mxu0
  %v7484 = vpack.c.bf16 %v7481, %v7478
  %v7485 = vld [vmem:[%s3107] sm:$0xf]
  %v7486 = vld [vmem:[%s3107 + $0x4] sm:$0xf]
  %v7487 = vld [vmem:[%s3107 + $0x8] sm:$0xf]
  %v7488 = vld [vmem:[%s3107 + $0xc] sm:$0xf]
  %v7489 = vld [vmem:[%s3107 + $0x10] sm:$0xf]
  %v7490 = vld [vmem:[%s3107 + $0x14] sm:$0xf]
  %v7491 = vld [vmem:[%s3107 + $0x18] sm:$0xf]
  %v7492 = vld [vmem:[%s3107 + $0x1c] sm:$0xf]
  %v7501 = vunpack.c.l.b16 %v7485
  %v7502 = vunpack.c.l.b16 %v7486
  %v7503 = vunpack.c.l.b16 %v7487
  %v7504 = vunpack.c.l.b16 %v7488
  %v7505 = vunpack.c.l.b16 %v7489
  %v7506 = vunpack.c.l.b16 %v7490
  %v7507 = vunpack.c.l.b16 %v7491
  %v7508 = vunpack.c.l.b16 %v7492
  %v7509 = vpack.c.b16 %v7502, %v7501
  %v7510 = vpack.c.b16 %v7504, %v7503
  %v7511 = vpack.c.b16 %v7506, %v7505
  %v7512 = vpack.c.b16 %v7508, %v7507
  %7517 = vmatprep.subr.bf16.mxu0 0
  %7518 = vmatpush1.bf16.msra.mxu0 %v7509
  %7519 = vmatprep.subr.bf16.mxu0 0
  %7520 = vmatpush1.bf16.msra.mxu0 %v7510
  %7521 = vmatprep.subr.bf16.mxu0 0
  %7522 = vmatpush1.bf16.msra.mxu0 %v7511
  %7523 = vmatprep.subr.bf16.mxu0 0
  %7524 = vmatpush1.bf16.msra.mxu0 %v7512
  %7525 = vmatprep.subr.bf16.mxu0 0
  %7526 = vmatpush1.bf16.msra.mxu0 0
  %7527 = vmatprep.subr.bf16.mxu0 0
  %7528 = vmatpush1.bf16.msra.mxu0 0
  %7529 = vmatprep.subr.bf16.mxu0 0
  %7530 = vmatpush1.bf16.msra.mxu0 0
  %7531 = vmatprep.subr.bf16.mxu0 0
  %7532 = vmatpush1.bf16.msra.mxu0 0
  %7533 = vmatprep.subr.bf16.mxu0 0
  %7534 = vmatpush1.bf16.msra.mxu0 0
  %7535 = vmatprep.subr.bf16.mxu0 0
  %7536 = vmatpush1.bf16.msra.mxu0 0
  %7537 = vmatprep.subr.bf16.mxu0 0
  %7538 = vmatpush1.bf16.msra.mxu0 0
  %7539 = vmatprep.subr.bf16.mxu0 0
  %7540 = vmatpush1.bf16.msra.mxu0 0
  %7541 = vmatprep.subr.bf16.mxu0 0
  %7542 = vmatpush1.bf16.msra.mxu0 0
  %7543 = vmatprep.subr.bf16.mxu0 0
  %7544 = vmatpush1.bf16.msra.mxu0 0
  %7545 = vmatprep.subr.bf16.mxu0 0
  %7546 = vmatpush1.bf16.msra.mxu0 0
  %7547 = vmatprep.subr.bf16.mxu0 0
  %7548 = vmatpush1.bf16.msra.mxu0 0
  %7549 = vmatprep.mubr.bf16.mxu0 0
  %7550 = vmatmul.mubr.bf16.gmra.mrb[0].mxu0 %v6433
  %v7551 = vpop.f32.mrb[0].mxu0
  %v7552 = vadd.f32 0.0, %v7551
  %v7553 = vpop.f32.mrb[0].mxu0
  %v7554 = vpop.f32.mrb[0].mxu0
  %v7555 = vadd.f32 0.0, %v7554
  %v7556 = vpop.f32.mrb[0].mxu0
  %7557 = vdwg.mxu0
  %v7558 = vpack.c.bf16 %v7555, %v7552
  %v7559 = vld [vmem:[%s3182] sm:$0xf]
  %v7560 = vld [vmem:[%s3182 + $0x4] sm:$0xf]
  %v7561 = vld [vmem:[%s3182 + $0x8] sm:$0xf]
  %v7562 = vld [vmem:[%s3182 + $0xc] sm:$0xf]
  %v7563 = vld [vmem:[%s3182 + $0x10] sm:$0xf]
  %v7564 = vld [vmem:[%s3182 + $0x14] sm:$0xf]
  %v7565 = vld [vmem:[%s3182 + $0x18] sm:$0xf]
  %v7566 = vld [vmem:[%s3182 + $0x1c] sm:$0xf]
  %v7575 = vunpack.c.l.b16 %v7559
  %v7576 = vunpack.c.l.b16 %v7560
  %v7577 = vunpack.c.l.b16 %v7561
  %v7578 = vunpack.c.l.b16 %v7562
  %v7579 = vunpack.c.l.b16 %v7563
  %v7580 = vunpack.c.l.b16 %v7564
  %v7581 = vunpack.c.l.b16 %v7565
  %v7582 = vunpack.c.l.b16 %v7566
  %v7583 = vpack.c.b16 %v7576, %v7575
  %v7584 = vpack.c.b16 %v7578, %v7577
  %v7585 = vpack.c.b16 %v7580, %v7579
  %v7586 = vpack.c.b16 %v7582, %v7581
  %7591 = vmatprep.subr.bf16.mxu0 0
  %7592 = vmatpush1.bf16.msra.mxu0 %v7583
  %7593 = vmatprep.subr.bf16.mxu0 0
  %7594 = vmatpush1.bf16.msra.mxu0 %v7584
  %7595 = vmatprep.subr.bf16.mxu0 0
  %7596 = vmatpush1.bf16.msra.mxu0 %v7585
  %7597 = vmatprep.subr.bf16.mxu0 0
  %7598 = vmatpush1.bf16.msra.mxu0 %v7586
  %7599 = vmatprep.subr.bf16.mxu0 0
  %7600 = vmatpush1.bf16.msra.mxu0 0
  %7601 = vmatprep.subr.bf16.mxu0 0
  %7602 = vmatpush1.bf16.msra.mxu0 0
  %7603 = vmatprep.subr.bf16.mxu0 0
  %7604 = vmatpush1.bf16.msra.mxu0 0
  %7605 = vmatprep.subr.bf16.mxu0 0
  %7606 = vmatpush1.bf16.msra.mxu0 0
  %7607 = vmatprep.subr.bf16.mxu0 0
  %7608 = vmatpush1.bf16.msra.mxu0 0
  %7609 = vmatprep.subr.bf16.mxu0 0
  %7610 = vmatpush1.bf16.msra.mxu0 0
  %7611 = vmatprep.subr.bf16.mxu0 0
  %7612 = vmatpush1.bf16.msra.mxu0 0
  %7613 = vmatprep.subr.bf16.mxu0 0
  %7614 = vmatpush1.bf16.msra.mxu0 0
  %7615 = vmatprep.subr.bf16.mxu0 0
  %7616 = vmatpush1.bf16.msra.mxu0 0
  %7617 = vmatprep.subr.bf16.mxu0 0
  %7618 = vmatpush1.bf16.msra.mxu0 0
  %7619 = vmatprep.subr.bf16.mxu0 0
  %7620 = vmatpush1.bf16.msra.mxu0 0
  %7621 = vmatprep.subr.bf16.mxu0 0
  %7622 = vmatpush1.bf16.msra.mxu0 0
  %7623 = vmatprep.mubr.bf16.mxu0 0
  %7624 = vmatmul.mubr.bf16.gmra.mrb[0].mxu0 %v6433
  %v7625 = vpop.f32.mrb[0].mxu0
  %v7626 = vadd.f32 0.0, %v7625
  %v7627 = vpop.f32.mrb[0].mxu0
  %v7628 = vpop.f32.mrb[0].mxu0
  %v7629 = vadd.f32 0.0, %v7628
  %v7630 = vpop.f32.mrb[0].mxu0
  %7631 = vdwg.mxu0
  %v7632 = vpack.c.bf16 %v7629, %v7626
  %v7634 = vsel %vm531, %v7484, 0
  %v7637 = vsel %vm531, %v7558, 0
  %7639 = vmatprep.subr.bf16.mxu0 0
  %7640 = vmatpush1.bf16.xpose.msra.mxu0 %v7637
  %7641 = vmatprep.subr.bf16.mxu0 0
  %7642 = vmatpush1.bf16.xpose.msra.mxu0 0
  %7643 = vmatprep.subr.bf16.mxu0 0
  %7644 = vmatpush1.bf16.xpose.msra.mxu0 0
  %7645 = vmatprep.subr.bf16.mxu0 0
  %7646 = vmatpush1.bf16.xpose.msra.mxu0 0
  %7647 = vmatprep.subr.bf16.mxu0 0
  %7648 = vmatpush1.bf16.xpose.msra.mxu0 0
  %7649 = vmatprep.subr.bf16.mxu0 0
  %7650 = vmatpush1.bf16.xpose.msra.mxu0 0
  %7651 = vmatprep.subr.bf16.mxu0 0
  %7652 = vmatpush1.bf16.xpose.msra.mxu0 0
  %7653 = vmatprep.subr.bf16.mxu0 0
  %7654 = vmatpush1.bf16.xpose.msra.mxu0 0
  %7655 = vmatprep.subr.bf16.mxu0 0
  %7656 = vmatpush1.bf16.xpose.msra.mxu0 0
  %7657 = vmatprep.subr.bf16.mxu0 0
  %7658 = vmatpush1.bf16.xpose.msra.mxu0 0
  %7659 = vmatprep.subr.bf16.mxu0 0
  %7660 = vmatpush1.bf16.xpose.msra.mxu0 0
  %7661 = vmatprep.subr.bf16.mxu0 0
  %7662 = vmatpush1.bf16.xpose.msra.mxu0 0
  %7663 = vmatprep.subr.bf16.mxu0 0
  %7664 = vmatpush1.bf16.xpose.msra.mxu0 0
  %7665 = vmatprep.subr.bf16.mxu0 0
  %7666 = vmatpush1.bf16.xpose.msra.mxu0 0
  %7667 = vmatprep.subr.bf16.mxu0 0
  %7668 = vmatpush1.bf16.xpose.msra.mxu0 0
  %7669 = vmatprep.subr.bf16.mxu0 0
  %7670 = vmatpush1.bf16.xpose.msra.mxu0 0
  %7671 = vmatprep.mubr.bf16.mxu0 0
  %7672 = vmatmul.mubr.bf16.gmra.mrb[0].mxu0 %v7634
  %v7673 = vpop.f32.mrb[0].mxu0
  %v7674 = vadd.f32 %v4929, %v7673
  %v7675 = vpop.f32.mrb[0].mxu0
  %v7676 = vpop.f32.mrb[0].mxu0
  %v7677 = vadd.f32 %v4929, %v7676
  %v7678 = vpop.f32.mrb[0].mxu0
  %7679 = vdwg.mxu0
  %v7680 = vsel %vm531, %v7674, -inf
  %7681 = vmax.xlane.f32.xlu0 %v7680
  %v7682 = vpop.xlane.xlu0 %7681
  %v7683 = vsel %vm531, %v7677, -inf
  %7684 = vmax.xlane.f32.xlu0 %v7683
  %v7685 = vpop.xlane.xlu0 %7684
  %v7686 = vsub.f32 %v7674, %v7682
  %v7687 = vsub.f32 %v7677, %v7685
  %v7688 = vmul.f32 %v7686, 1.442695
  %v7689 = vpow.pop %v7688
  %v7690 = vmul.f32 %v7687, 1.442695
  %v7691 = vpow.pop %v7690
  %v7692 = vsel %vm531, %v7689, 0.0
  %7693 = vadd.xlane.f32.xlu0 %v7692
  %v7694 = vpop.xlane.xlu0 %7693
  %v7695 = vsel %vm531, %v7691, 0.0
  %7696 = vadd.xlane.f32.xlu0 %v7695
  %v7697 = vpop.xlane.xlu0 %7696
  %v7698 = vrcp.pop %v7694
  %v7699 = vrcp.pop %v7697
  %v7700 = vmul.f32 %v7689, %v7698
  %v7701 = vmul.f32 %v7691, %v7699
  %v7702 = vpack.c.bf16 %v7701, %v7700
  %v7704 = vsel %vm531, %v7702, 0
  %7706 = vmatprep.subr.bf16.mxu0 0
  %7707 = vmatpush1.bf16.msra.mxu0 %v7632
  %7708 = vmatprep.subr.bf16.mxu0 0
  %7709 = vmatpush1.bf16.msra.mxu0 0
  %7710 = vmatprep.subr.bf16.mxu0 0
  %7711 = vmatpush1.bf16.msra.mxu0 0
  %7712 = vmatprep.subr.bf16.mxu0 0
  %7713 = vmatpush1.bf16.msra.mxu0 0
  %7714 = vmatprep.subr.bf16.mxu0 0
  %7715 = vmatpush1.bf16.msra.mxu0 0
  %7716 = vmatprep.subr.bf16.mxu0 0
  %7717 = vmatpush1.bf16.msra.mxu0 0
  %7718 = vmatprep.subr.bf16.mxu0 0
  %7719 = vmatpush1.bf16.msra.mxu0 0
  %7720 = vmatprep.subr.bf16.mxu0 0
  %7721 = vmatpush1.bf16.msra.mxu0 0
  %7722 = vmatprep.subr.bf16.mxu0 0
  %7723 = vmatpush1.bf16.msra.mxu0 0
  %7724 = vmatprep.subr.bf16.mxu0 0
  %7725 = vmatpush1.bf16.msra.mxu0 0
  %7726 = vmatprep.subr.bf16.mxu0 0
  %7727 = vmatpush1.bf16.msra.mxu0 0
  %7728 = vmatprep.subr.bf16.mxu0 0
  %7729 = vmatpush1.bf16.msra.mxu0 0
  %7730 = vmatprep.subr.bf16.mxu0 0
  %7731 = vmatpush1.bf16.msra.mxu0 0
  %7732 = vmatprep.subr.bf16.mxu0 0
  %7733 = vmatpush1.bf16.msra.mxu0 0
  %7734 = vmatprep.subr.bf16.mxu0 0
  %7735 = vmatpush1.bf16.msra.mxu0 0
  %7736 = vmatprep.subr.bf16.mxu0 0
  %7737 = vmatpush1.bf16.msra.mxu0 0
  %7738 = vmatprep.mubr.bf16.mxu0 0
  %7739 = vmatmul.mubr.bf16.gmra.mrb[0].mxu0 %v7704
  %v7740 = vpop.f32.mrb[0].mxu0
  %v7741 = vadd.f32 0.0, %v7740
  %v7742 = vpop.f32.mrb[0].mxu0
  %v7743 = vpop.f32.mrb[0].mxu0
  %v7744 = vadd.f32 0.0, %v7743
  %v7745 = vpop.f32.mrb[0].mxu0
  %7746 = vdwg.mxu0
  %7749 = vrot.lane.b32.xlu0 %v7069, 16
  %v7750 = vpop.permute.xlu0 %7749
  %7751 = vrot.lane.b32.xlu0 %v7072, 16
  %v7752 = vpop.permute.xlu0 %7751
  %7757 = vrot.lane.b32.xlu0 %v7405, 32
  %v7758 = vpop.permute.xlu0 %7757
  %7759 = vrot.lane.b32.xlu0 %v7408, 32
  %v7760 = vpop.permute.xlu0 %7759
  %7765 = vrot.lane.b32.xlu0 %v7741, 48
  %v7766 = vpop.permute.xlu0 %7765
  %7767 = vrot.lane.b32.xlu0 %v7744, 48
  %v7768 = vpop.permute.xlu0 %7767
  %v7771 = vsel %vm531, %v6733, %v7750
  %v7772 = vsel %vm531, %v6736, %v7752
  %v7773 = vsel %vm216, %v7771, %v7758
  %v7774 = vsel %vm216, %v7772, %v7760
  %v7775 = vsel %vm1691, %v7773, %v7766
  %v7776 = vsel %vm1691, %v7774, %v7768
  %v7777 = vpack.c.bf16 %v7776, %v7775
  %v7778 = vld [vmem:[%s3402] sm:$0xf]
  %v7779 = vld [vmem:[%s3402 + $0x4] sm:$0xf]
  %v7780 = vld [vmem:[%s3402 + $0x8] sm:$0xf]
  %v7781 = vld [vmem:[%s3402 + $0xc] sm:$0xf]
  %v7782 = vld [vmem:[%s3402 + $0x10] sm:$0xf]
  %v7783 = vld [vmem:[%s3402 + $0x14] sm:$0xf]
  %v7784 = vld [vmem:[%s3402 + $0x18] sm:$0xf]
  %v7785 = vld [vmem:[%s3402 + $0x1c] sm:$0xf]
  %v7794 = vunpack.c.l.b16 %v7778
  %v7795 = vunpack.c.l.b16 %v7779
  %v7796 = vunpack.c.l.b16 %v7780
  %v7797 = vunpack.c.l.b16 %v7781
  %v7798 = vunpack.c.l.b16 %v7782
  %v7799 = vunpack.c.l.b16 %v7783
  %v7800 = vunpack.c.l.b16 %v7784
  %v7801 = vunpack.c.l.b16 %v7785
  %v7802 = vpack.c.b16 %v7795, %v7794
  %v7803 = vpack.c.b16 %v7797, %v7796
  %v7804 = vpack.c.b16 %v7799, %v7798
  %v7805 = vpack.c.b16 %v7801, %v7800
  %v7811 = vsel %vm275, %v7777, 0
  %7813 = vmatprep.subr.bf16.mxu0 0
  %7814 = vmatpush1.bf16.msra.mxu0 %v7802
  %7815 = vmatprep.subr.bf16.mxu0 0
  %7816 = vmatpush1.bf16.msra.mxu0 %v7803
  %7817 = vmatprep.subr.bf16.mxu0 0
  %7818 = vmatpush1.bf16.msra.mxu0 %v7804
  %7819 = vmatprep.subr.bf16.mxu0 0
  %7820 = vmatpush1.bf16.msra.mxu0 %v7805
  %7821 = vmatprep.subr.bf16.mxu0 0
  %7822 = vmatpush1.bf16.msra.mxu0 0
  %7823 = vmatprep.subr.bf16.mxu0 0
  %7824 = vmatpush1.bf16.msra.mxu0 0
  %7825 = vmatprep.subr.bf16.mxu0 0
  %7826 = vmatpush1.bf16.msra.mxu0 0
  %7827 = vmatprep.subr.bf16.mxu0 0
  %7828 = vmatpush1.bf16.msra.mxu0 0
  %7829 = vmatprep.subr.bf16.mxu0 0
  %7830 = vmatpush1.bf16.msra.mxu0 0
  %7831 = vmatprep.subr.bf16.mxu0 0
  %7832 = vmatpush1.bf16.msra.mxu0 0
  %7833 = vmatprep.subr.bf16.mxu0 0
  %7834 = vmatpush1.bf16.msra.mxu0 0
  %7835 = vmatprep.subr.bf16.mxu0 0
  %7836 = vmatpush1.bf16.msra.mxu0 0
  %7837 = vmatprep.subr.bf16.mxu0 0
  %7838 = vmatpush1.bf16.msra.mxu0 0
  %7839 = vmatprep.subr.bf16.mxu0 0
  %7840 = vmatpush1.bf16.msra.mxu0 0
  %7841 = vmatprep.subr.bf16.mxu0 0
  %7842 = vmatpush1.bf16.msra.mxu0 0
  %7843 = vmatprep.subr.bf16.mxu0 0
  %7844 = vmatpush1.bf16.msra.mxu0 0
  %7845 = vmatprep.mubr.bf16.mxu0 0
  %7846 = vmatmul.mubr.bf16.gmra.mrb[0].mxu0 %v7811
  %v7847 = vpop.f32.mrb[0].mxu0
  %v7848 = vadd.f32 0.0, %v7847
  %v7849 = vpop.f32.mrb[0].mxu0
  %v7850 = vpop.f32.mrb[0].mxu0
  %v7851 = vadd.f32 0.0, %v7850
  %v7852 = vpop.f32.mrb[0].mxu0
  %7853 = vdwg.mxu0
  %v7854 = vadd.f32 %v6372, %v7848
  %v7855 = vadd.f32 %v6373, %v7851
  %v7856 = vld [vmem:[%s3481] sm:$0x1]
  %v7857 = vmul.f32 %v7854, %v7854
  %v7858 = vmul.f32 %v7855, %v7855
  %v7859 = vsel %vm275, %v7857, 0.0
  %7860 = vadd.xlane.f32.xlu0 %v7859
  %v7861 = vpop.xlane.xlu0 %7860
  %v7862 = vsel %vm275, %v7858, 0.0
  %7863 = vadd.xlane.f32.xlu0 %v7862
  %v7864 = vpop.xlane.xlu0 %7863
  %v7865 = vmul.f32 %v7861, %v282
  %v7866 = vmul.f32 %v7864, %v282
  %v7867 = vadd.f32 %v7865, 1e-06
  %v7868 = vadd.f32 %v7866, 1e-06
  %v7869 = vrsqrt.pop %v7867
  %v7870 = vrsqrt.pop %v7868
  %v7871 = vmul.f32 %v7854, %v7869
  %v7872 = vmul.f32 %v7855, %v7870
  %v7874 = vlaneseq
  %v7875 = vshrl.u32 %v7874, 7
  %v7876 = vsub.s32 0, %v7875
  %v7877 = vrot.slane %v7856, %v7876
  %v7879 = vmul.f32 %v7871, %v7877
  %v7880 = vmul.f32 %v7872, %v7877
  %v7881 = vpack.c.bf16 %v7880, %v7879
  %v7882 = vld [vmem:[%s3508] sm:$0xf]
  %v7883 = vld [vmem:[%s3508 + $0x4] sm:$0xf]
  %v7884 = vld [vmem:[%s3508 + $0x8] sm:$0xf]
  %v7885 = vld [vmem:[%s3508 + $0xc] sm:$0xf]
  %v7886 = vld [vmem:[%s3508 + $0x10] sm:$0xf]
  %v7887 = vld [vmem:[%s3508 + $0x14] sm:$0xf]
  %v7888 = vld [vmem:[%s3508 + $0x18] sm:$0xf]
  %v7889 = vld [vmem:[%s3508 + $0x1c] sm:$0xf]
  %v7898 = vunpack.c.l.b16 %v7882
  %v7899 = vunpack.c.l.b16 %v7883
  %v7900 = vunpack.c.l.b16 %v7884
  %v7901 = vunpack.c.l.b16 %v7885
  %v7902 = vunpack.c.l.b16 %v7886
  %v7903 = vunpack.c.l.b16 %v7887
  %v7904 = vunpack.c.l.b16 %v7888
  %v7905 = vunpack.c.l.b16 %v7889
  %v7906 = vpack.c.b16 %v7899, %v7898
  %v7907 = vpack.c.b16 %v7901, %v7900
  %v7908 = vpack.c.b16 %v7903, %v7902
  %v7909 = vpack.c.b16 %v7905, %v7904
  %v7915 = vsel %vm275, %v7881, 0
  %7917 = vmatprep.subr.bf16.mxu0 0
  %7918 = vmatpush1.bf16.msra.mxu0 %v7906
  %7919 = vmatprep.subr.bf16.mxu0 0
  %7920 = vmatpush1.bf16.msra.mxu0 %v7907
  %7921 = vmatprep.subr.bf16.mxu0 0
  %7922 = vmatpush1.bf16.msra.mxu0 %v7908
  %7923 = vmatprep.subr.bf16.mxu0 0
  %7924 = vmatpush1.bf16.msra.mxu0 %v7909
  %7925 = vmatprep.subr.bf16.mxu0 0
  %7926 = vmatpush1.bf16.msra.mxu0 0
  %7927 = vmatprep.subr.bf16.mxu0 0
  %7928 = vmatpush1.bf16.msra.mxu0 0
  %7929 = vmatprep.subr.bf16.mxu0 0
  %7930 = vmatpush1.bf16.msra.mxu0 0
  %7931 = vmatprep.subr.bf16.mxu0 0
  %7932 = vmatpush1.bf16.msra.mxu0 0
  %7933 = vmatprep.subr.bf16.mxu0 0
  %7934 = vmatpush1.bf16.msra.mxu0 0
  %7935 = vmatprep.subr.bf16.mxu0 0
  %7936 = vmatpush1.bf16.msra.mxu0 0
  %7937 = vmatprep.subr.bf16.mxu0 0
  %7938 = vmatpush1.bf16.msra.mxu0 0
  %7939 = vmatprep.subr.bf16.mxu0 0
  %7940 = vmatpush1.bf16.msra.mxu0 0
  %7941 = vmatprep.subr.bf16.mxu0 0
  %7942 = vmatpush1.bf16.msra.mxu0 0
  %7943 = vmatprep.subr.bf16.mxu0 0
  %7944 = vmatpush1.bf16.msra.mxu0 0
  %7945 = vmatprep.subr.bf16.mxu0 0
  %7946 = vmatpush1.bf16.msra.mxu0 0
  %7947 = vmatprep.subr.bf16.mxu0 0
  %7948 = vmatpush1.bf16.msra.mxu0 0
  %7949 = vmatprep.mubr.bf16.mxu0 0
  %7950 = vmatmul.mubr.bf16.gmra.mrb[0].mxu0 %v7915
  %v7951 = vpop.f32.mrb[0].mxu0
  %v7952 = vadd.f32 0.0, %v7951
  %v7953 = vpop.f32.mrb[0].mxu0
  %v7954 = vpop.f32.mrb[0].mxu0
  %v7955 = vadd.f32 0.0, %v7954
  %v7956 = vpop.f32.mrb[0].mxu0
  %7957 = vdwg.mxu0
  %v7958 = vmax.f32 %v7952, 0.0
  %v7959 = vmax.f32 %v7955, 0.0
  %v7960 = vpack.c.bf16 %v7959, %v7958
  %v7961 = vld [vmem:[%s3588] sm:$0xf]
  %v7962 = vld [vmem:[%s3588 + $0x4] sm:$0xf]
  %v7963 = vld [vmem:[%s3588 + $0x8] sm:$0xf]
  %v7964 = vld [vmem:[%s3588 + $0xc] sm:$0xf]
  %v7965 = vld [vmem:[%s3588 + $0x10] sm:$0xf]
  %v7966 = vld [vmem:[%s3588 + $0x14] sm:$0xf]
  %v7967 = vld [vmem:[%s3588 + $0x18] sm:$0xf]
  %v7968 = vld [vmem:[%s3588 + $0x1c] sm:$0xf]
  %v7969 = vld [vmem:[%s3588 + $0x20] sm:$0xf]
  %v7970 = vld [vmem:[%s3588 + $0x24] sm:$0xf]
  %v7971 = vld [vmem:[%s3588 + $0x28] sm:$0xf]
  %v7972 = vld [vmem:[%s3588 + $0x2c] sm:$0xf]
  %v7973 = vld [vmem:[%s3588 + $0x30] sm:$0xf]
  %v7974 = vld [vmem:[%s3588 + $0x34] sm:$0xf]
  %v7975 = vld [vmem:[%s3588 + $0x38] sm:$0xf]
  %v7976 = vld [vmem:[%s3588 + $0x3c] sm:$0xf]
  %v7993 = vunpack.c.l.b16 %v7961
  %v7994 = vunpack.c.l.b16 %v7962
  %v7995 = vunpack.c.l.b16 %v7963
  %v7996 = vunpack.c.l.b16 %v7964
  %v7997 = vunpack.c.l.b16 %v7965
  %v7998 = vunpack.c.l.b16 %v7966
  %v7999 = vunpack.c.l.b16 %v7967
  %v8000 = vunpack.c.l.b16 %v7968
  %v8001 = vunpack.c.l.b16 %v7969
  %v8002 = vunpack.c.l.b16 %v7970
  %v8003 = vunpack.c.l.b16 %v7971
  %v8004 = vunpack.c.l.b16 %v7972
  %v8005 = vunpack.c.l.b16 %v7973
  %v8006 = vunpack.c.l.b16 %v7974
  %v8007 = vunpack.c.l.b16 %v7975
  %v8008 = vunpack.c.l.b16 %v7976
  %v8009 = vpack.c.b16 %v7994, %v7993
  %v8010 = vpack.c.b16 %v7996, %v7995
  %v8011 = vpack.c.b16 %v7998, %v7997
  %v8012 = vpack.c.b16 %v8000, %v7999
  %v8013 = vpack.c.b16 %v8002, %v8001
  %v8014 = vpack.c.b16 %v8004, %v8003
  %v8015 = vpack.c.b16 %v8006, %v8005
  %v8016 = vpack.c.b16 %v8008, %v8007
  %8025 = vmatprep.subr.bf16.mxu0 0
  %8026 = vmatpush1.bf16.msra.mxu0 %v8009
  %8027 = vmatprep.subr.bf16.mxu0 0
  %8028 = vmatpush1.bf16.msra.mxu0 %v8010
  %8029 = vmatprep.subr.bf16.mxu0 0
  %8030 = vmatpush1.bf16.msra.mxu0 %v8011
  %8031 = vmatprep.subr.bf16.mxu0 0
  %8032 = vmatpush1.bf16.msra.mxu0 %v8012
  %8033 = vmatprep.subr.bf16.mxu0 0
  %8034 = vmatpush1.bf16.msra.mxu0 %v8013
  %8035 = vmatprep.subr.bf16.mxu0 0
  %8036 = vmatpush1.bf16.msra.mxu0 %v8014
  %8037 = vmatprep.subr.bf16.mxu0 0
  %8038 = vmatpush1.bf16.msra.mxu0 %v8015
  %8039 = vmatprep.subr.bf16.mxu0 0
  %8040 = vmatpush1.bf16.msra.mxu0 %v8016
  %8041 = vmatprep.subr.bf16.mxu0 0
  %8042 = vmatpush1.bf16.msra.mxu0 0
  %8043 = vmatprep.subr.bf16.mxu0 0
  %8044 = vmatpush1.bf16.msra.mxu0 0
  %8045 = vmatprep.subr.bf16.mxu0 0
  %8046 = vmatpush1.bf16.msra.mxu0 0
  %8047 = vmatprep.subr.bf16.mxu0 0
  %8048 = vmatpush1.bf16.msra.mxu0 0
  %8049 = vmatprep.subr.bf16.mxu0 0
  %8050 = vmatpush1.bf16.msra.mxu0 0
  %8051 = vmatprep.subr.bf16.mxu0 0
  %8052 = vmatpush1.bf16.msra.mxu0 0
  %8053 = vmatprep.subr.bf16.mxu0 0
  %8054 = vmatpush1.bf16.msra.mxu0 0
  %8055 = vmatprep.subr.bf16.mxu0 0
  %8056 = vmatpush1.bf16.msra.mxu0 0
  %8057 = vmatprep.mubr.bf16.mxu0 0
  %8058 = vmatmul.mubr.bf16.gmra.mrb[0].mxu0 %v7960
  %v8059 = vpop.f32.mrb[0].mxu0
  %v8060 = vadd.f32 0.0, %v8059
  %v8061 = vpop.f32.mrb[0].mxu0
  %v8062 = vpop.f32.mrb[0].mxu0
  %v8063 = vadd.f32 0.0, %v8062
  %v8064 = vpop.f32.mrb[0].mxu0
  %8065 = vdwg.mxu0
  %v8066 = vadd.f32 %v7854, %v8060
  %v8067 = vadd.f32 %v7855, %v8063
  %v8068 = vmul.f32 %v8066, %v8066
  %v8069 = vmul.f32 %v8067, %v8067
  %v8070 = vsel %vm275, %v8068, 0.0
  %8071 = vadd.xlane.f32.xlu0 %v8070
  %v8072 = vpop.xlane.xlu0 %8071
  %v8073 = vsel %vm275, %v8069, 0.0
  %8074 = vadd.xlane.f32.xlu0 %v8073
  %v8075 = vpop.xlane.xlu0 %8074
  %v8076 = vmul.f32 %v8072, %v282
  %v8077 = vmul.f32 %v8075, %v282
  %v8078 = vadd.f32 %v8076, 1e-06
  %v8079 = vadd.f32 %v8077, 1e-06
  %v8080 = vrsqrt.pop %v8078
  %v8081 = vrsqrt.pop %v8079
  %v8082 = vmul.f32 %v8066, %v8080
  %v8083 = vmul.f32 %v8067, %v8081
  %v8084 = vmul.f32 %v8082, %v3716
  %v8085 = vmul.f32 %v8083, %v3716
  %s8086 = scalar_lea.vmem %s22, 16
  %8087 = vst.msk [vmem:[%s8086] sm:$0xff] %vm275, %v8084
  %8088 = vst.msk [vmem:[%s8086 + $0x8] sm:$0xff] %vm275, %v8085
  %s8089 = scalar_lea.vmem %s3, 16
  %v8090 = vld [vmem:[%s8089] sm:$0xff]
  %v8091 = vld [vmem:[%s8089 + $0x8] sm:$0xff]
  %8093 = vset.pattern.permute.xlu0 0
  %8094 = vperm.xlu0 %8093, %v8090
  %v8095 = vpop.permute.xlu0 %8094
  %8098 = vset.pattern.permute.xlu0 0
  %8099 = vperm.xlu0 %8098, %v8091
  %v8100 = vpop.permute.xlu0 %8099
  %v8102 = vmul.f32 %v8084, %v8095
  %v8103 = vmul.f32 %v8085, %v8100
  %v8104 = vrot.slane %v8102, 7
  %v8105 = vrot.slane %v8103, 7
  %v8106 = vsel %vm3740, %v8104, %v8105
  %v8107 = vsel %vm3740, %v8105, %v8104
  %v8108 = vsel %vm3736, 0.0, %v8107
  %v8109 = vsel %vm3737, 0.0, %v8106
  %v8110 = vrot.slane %v8102, 1
  %v8111 = vrot.slane %v8103, 1
  %v8112 = vsel %vm3749, %v8110, %v8111
  %v8113 = vsel %vm3749, %v8111, %v8110
  %v8114 = vsel %vm3745, 0.0, %v8112
  %v8115 = vsel %vm3746, 0.0, %v8113
  %v8116 = vpack.c.bf16 %v8109, %v8108
  %v8117 = vld [vmem:[%s16] sm:$0xf]
  %v8118 = vld [vmem:[%s16 + $0x4] sm:$0xf]
  %v8119 = vld [vmem:[%s16 + $0x8] sm:$0xf]
  %v8120 = vld [vmem:[%s16 + $0xc] sm:$0xf]
  %v8121 = vld [vmem:[%s16 + $0x10] sm:$0xf]
  %v8122 = vld [vmem:[%s16 + $0x14] sm:$0xf]
  %v8123 = vld [vmem:[%s16 + $0x18] sm:$0xf]
  %v8124 = vld [vmem:[%s16 + $0x1c] sm:$0xf]
  %v8125 = vpack.c.bf16 %v8103, %v8102
  %v8126 = vld [vmem:[%s3764] sm:$0xf]
  %v8127 = vld [vmem:[%s3764 + $0x4] sm:$0xf]
  %v8128 = vld [vmem:[%s3764 + $0x8] sm:$0xf]
  %v8129 = vld [vmem:[%s3764 + $0xc] sm:$0xf]
  %v8130 = vld [vmem:[%s3764 + $0x10] sm:$0xf]
  %v8131 = vld [vmem:[%s3764 + $0x14] sm:$0xf]
  %v8132 = vld [vmem:[%s3764 + $0x18] sm:$0xf]
  %v8133 = vld [vmem:[%s3764 + $0x1c] sm:$0xf]
  %v8142 = vunpack.c.l.b16 %v8126
  %v8143 = vunpack.c.l.b16 %v8127
  %v8144 = vunpack.c.l.b16 %v8128
  %v8145 = vunpack.c.l.b16 %v8129
  %v8146 = vunpack.c.l.b16 %v8130
  %v8147 = vunpack.c.l.b16 %v8131
  %v8148 = vunpack.c.l.b16 %v8132
  %v8149 = vunpack.c.l.b16 %v8133
  %v8150 = vpack.c.b16 %v8143, %v8142
  %v8151 = vpack.c.b16 %v8145, %v8144
  %v8152 = vpack.c.b16 %v8147, %v8146
  %v8153 = vpack.c.b16 %v8149, %v8148
  %v8159 = vsel %vm275, %v8125, 0
  %8161 = vmatprep.subr.bf16.mxu0 0
  %8162 = vmatpush1.bf16.msra.mxu0 %v8150
  %8163 = vmatprep.subr.bf16.mxu0 0
  %8164 = vmatpush1.bf16.msra.mxu0 %v8151
  %8165 = vmatprep.subr.bf16.mxu0 0
  %8166 = vmatpush1.bf16.msra.mxu0 %v8152
  %8167 = vmatprep.subr.bf16.mxu0 0
  %8168 = vmatpush1.bf16.msra.mxu0 %v8153
  %8169 = vmatprep.subr.bf16.mxu0 0
  %8170 = vmatpush1.bf16.msra.mxu0 0
  %8171 = vmatprep.subr.bf16.mxu0 0
  %8172 = vmatpush1.bf16.msra.mxu0 0
  %8173 = vmatprep.subr.bf16.mxu0 0
  %8174 = vmatpush1.bf16.msra.mxu0 0
  %8175 = vmatprep.subr.bf16.mxu0 0
  %8176 = vmatpush1.bf16.msra.mxu0 0
  %8177 = vmatprep.subr.bf16.mxu0 0
  %8178 = vmatpush1.bf16.msra.mxu0 0
  %8179 = vmatprep.subr.bf16.mxu0 0
  %8180 = vmatpush1.bf16.msra.mxu0 0
  %8181 = vmatprep.subr.bf16.mxu0 0
  %8182 = vmatpush1.bf16.msra.mxu0 0
  %8183 = vmatprep.subr.bf16.mxu0 0
  %8184 = vmatpush1.bf16.msra.mxu0 0
  %8185 = vmatprep.subr.bf16.mxu0 0
  %8186 = vmatpush1.bf16.msra.mxu0 0
  %8187 = vmatprep.subr.bf16.mxu0 0
  %8188 = vmatpush1.bf16.msra.mxu0 0
  %8189 = vmatprep.subr.bf16.mxu0 0
  %8190 = vmatpush1.bf16.msra.mxu0 0
  %8191 = vmatprep.subr.bf16.mxu0 0
  %8192 = vmatpush1.bf16.msra.mxu0 0
  %8193 = vmatprep.mubr.bf16.mxu0 0
  %8194 = vmatmul.mubr.bf16.gmra.mrb[0].mxu0 %v8159
  %v8195 = vpop.f32.mrb[0].mxu0
  %v8196 = vadd.f32 0.0, %v8195
  %v8197 = vpop.f32.mrb[0].mxu0
  %v8198 = vpop.f32.mrb[0].mxu0
  %v8199 = vadd.f32 0.0, %v8198
  %v8200 = vpop.f32.mrb[0].mxu0
  %8201 = vdwg.mxu0
  %v8210 = vunpack.c.l.b16 %v8117
  %v8211 = vunpack.c.l.b16 %v8118
  %v8212 = vunpack.c.l.b16 %v8119
  %v8213 = vunpack.c.l.b16 %v8120
  %v8214 = vunpack.c.l.b16 %v8121
  %v8215 = vunpack.c.l.b16 %v8122
  %v8216 = vunpack.c.l.b16 %v8123
  %v8217 = vunpack.c.l.b16 %v8124
  %v8218 = vpack.c.b16 %v8211, %v8210
  %v8219 = vpack.c.b16 %v8213, %v8212
  %v8220 = vpack.c.b16 %v8215, %v8214
  %v8221 = vpack.c.b16 %v8217, %v8216
  %v8227 = vsel %vm275, %v8116, 0
  %8229 = vmatprep.subr.bf16.mxu0 0
  %8230 = vmatpush1.bf16.msra.mxu0 %v8218
  %8231 = vmatprep.subr.bf16.mxu0 0
  %8232 = vmatpush1.bf16.msra.mxu0 %v8219
  %8233 = vmatprep.subr.bf16.mxu0 0
  %8234 = vmatpush1.bf16.msra.mxu0 %v8220
  %8235 = vmatprep.subr.bf16.mxu0 0
  %8236 = vmatpush1.bf16.msra.mxu0 %v8221
  %8237 = vmatprep.subr.bf16.mxu0 0
  %8238 = vmatpush1.bf16.msra.mxu0 0
  %8239 = vmatprep.subr.bf16.mxu0 0
  %8240 = vmatpush1.bf16.msra.mxu0 0
  %8241 = vmatprep.subr.bf16.mxu0 0
  %8242 = vmatpush1.bf16.msra.mxu0 0
  %8243 = vmatprep.subr.bf16.mxu0 0
  %8244 = vmatpush1.bf16.msra.mxu0 0
  %8245 = vmatprep.subr.bf16.mxu0 0
  %8246 = vmatpush1.bf16.msra.mxu0 0
  %8247 = vmatprep.subr.bf16.mxu0 0
  %8248 = vmatpush1.bf16.msra.mxu0 0
  %8249 = vmatprep.subr.bf16.mxu0 0
  %8250 = vmatpush1.bf16.msra.mxu0 0
  %8251 = vmatprep.subr.bf16.mxu0 0
  %8252 = vmatpush1.bf16.msra.mxu0 0
  %8253 = vmatprep.subr.bf16.mxu0 0
  %8254 = vmatpush1.bf16.msra.mxu0 0
  %8255 = vmatprep.subr.bf16.mxu0 0
  %8256 = vmatpush1.bf16.msra.mxu0 0
  %8257 = vmatprep.subr.bf16.mxu0 0
  %8258 = vmatpush1.bf16.msra.mxu0 0
  %8259 = vmatprep.subr.bf16.mxu0 0
  %8260 = vmatpush1.bf16.msra.mxu0 0
  %8261 = vmatprep.mubr.bf16.mxu0 0
  %8262 = vmatmul.mubr.bf16.gmra.mrb[0].mxu0 %v8227
  %v8263 = vpop.f32.mrb[0].mxu0
  %v8264 = vadd.f32 %v8196, %v8263
  %v8265 = vpop.f32.mrb[0].mxu0
  %v8266 = vpop.f32.mrb[0].mxu0
  %v8267 = vadd.f32 %v8199, %v8266
  %v8268 = vpop.f32.mrb[0].mxu0
  %8269 = vdwg.mxu0
  %v8270 = vpack.c.bf16 %v8115, %v8114
  %v8271 = vld [vmem:[%s3910] sm:$0xf]
  %v8272 = vld [vmem:[%s3910 + $0x4] sm:$0xf]
  %v8273 = vld [vmem:[%s3910 + $0x8] sm:$0xf]
  %v8274 = vld [vmem:[%s3910 + $0xc] sm:$0xf]
  %v8275 = vld [vmem:[%s3910 + $0x10] sm:$0xf]
  %v8276 = vld [vmem:[%s3910 + $0x14] sm:$0xf]
  %v8277 = vld [vmem:[%s3910 + $0x18] sm:$0xf]
  %v8278 = vld [vmem:[%s3910 + $0x1c] sm:$0xf]
  %v8287 = vunpack.c.l.b16 %v8271
  %v8288 = vunpack.c.l.b16 %v8272
  %v8289 = vunpack.c.l.b16 %v8273
  %v8290 = vunpack.c.l.b16 %v8274
  %v8291 = vunpack.c.l.b16 %v8275
  %v8292 = vunpack.c.l.b16 %v8276
  %v8293 = vunpack.c.l.b16 %v8277
  %v8294 = vunpack.c.l.b16 %v8278
  %v8295 = vpack.c.b16 %v8288, %v8287
  %v8296 = vpack.c.b16 %v8290, %v8289
  %v8297 = vpack.c.b16 %v8292, %v8291
  %v8298 = vpack.c.b16 %v8294, %v8293
  %v8304 = vsel %vm275, %v8270, 0
  %8306 = vmatprep.subr.bf16.mxu0 0
  %8307 = vmatpush1.bf16.msra.mxu0 %v8295
  %8308 = vmatprep.subr.bf16.mxu0 0
  %8309 = vmatpush1.bf16.msra.mxu0 %v8296
  %8310 = vmatprep.subr.bf16.mxu0 0
  %8311 = vmatpush1.bf16.msra.mxu0 %v8297
  %8312 = vmatprep.subr.bf16.mxu0 0
  %8313 = vmatpush1.bf16.msra.mxu0 %v8298
  %8314 = vmatprep.subr.bf16.mxu0 0
  %8315 = vmatpush1.bf16.msra.mxu0 0
  %8316 = vmatprep.subr.bf16.mxu0 0
  %8317 = vmatpush1.bf16.msra.mxu0 0
  %8318 = vmatprep.subr.bf16.mxu0 0
  %8319 = vmatpush1.bf16.msra.mxu0 0
  %8320 = vmatprep.subr.bf16.mxu0 0
  %8321 = vmatpush1.bf16.msra.mxu0 0
  %8322 = vmatprep.subr.bf16.mxu0 0
  %8323 = vmatpush1.bf16.msra.mxu0 0
  %8324 = vmatprep.subr.bf16.mxu0 0
  %8325 = vmatpush1.bf16.msra.mxu0 0
  %8326 = vmatprep.subr.bf16.mxu0 0
  %8327 = vmatpush1.bf16.msra.mxu0 0
  %8328 = vmatprep.subr.bf16.mxu0 0
  %8329 = vmatpush1.bf16.msra.mxu0 0
  %8330 = vmatprep.subr.bf16.mxu0 0
  %8331 = vmatpush1.bf16.msra.mxu0 0
  %8332 = vmatprep.subr.bf16.mxu0 0
  %8333 = vmatpush1.bf16.msra.mxu0 0
  %8334 = vmatprep.subr.bf16.mxu0 0
  %8335 = vmatpush1.bf16.msra.mxu0 0
  %8336 = vmatprep.subr.bf16.mxu0 0
  %8337 = vmatpush1.bf16.msra.mxu0 0
  %8338 = vmatprep.mubr.bf16.mxu0 0
  %8339 = vmatmul.mubr.bf16.gmra.mrb[0].mxu0 %v8304
  %v8340 = vpop.f32.mrb[0].mxu0
  %v8341 = vadd.f32 0.0, %v8340
  %v8342 = vpop.f32.mrb[0].mxu0
  %v8343 = vpop.f32.mrb[0].mxu0
  %v8344 = vadd.f32 0.0, %v8343
  %v8345 = vpop.f32.mrb[0].mxu0
  %8346 = vdwg.mxu0
  %v8347 = vadd.f32 %v8264, %v8341
  %v8348 = vadd.f32 %v8267, %v8344
  %v8349 = vadd.f32 %v8347, %v3993
  %v8350 = vadd.f32 %v8348, %v3993
  %v8351 = vmax.f32 %v8349, 0.0
  %v8352 = vmax.f32 %v8350, 0.0
  %v8353 = vmul.f32 %v8351, %v8095
  %v8354 = vmul.f32 %v8352, %v8100
  %v8355 = vrot.slane %v8353, 7
  %v8356 = vrot.slane %v8354, 7
  %v8357 = vsel %vm3740, %v8355, %v8356
  %v8358 = vsel %vm3740, %v8356, %v8355
  %v8359 = vsel %vm3736, 0.0, %v8358
  %v8360 = vsel %vm3737, 0.0, %v8357
  %v8361 = vrot.slane %v8353, 1
  %v8362 = vrot.slane %v8354, 1
  %v8363 = vsel %vm3749, %v8361, %v8362
  %v8364 = vsel %vm3749, %v8362, %v8361
  %v8365 = vsel %vm3745, 0.0, %v8363
  %v8366 = vsel %vm3746, 0.0, %v8364
  %v8367 = vpack.c.bf16 %v8360, %v8359
  %v8368 = vld [vmem:[%s18] sm:$0xf]
  %v8369 = vld [vmem:[%s18 + $0x4] sm:$0xf]
  %v8370 = vld [vmem:[%s18 + $0x8] sm:$0xf]
  %v8371 = vld [vmem:[%s18 + $0xc] sm:$0xf]
  %v8372 = vld [vmem:[%s18 + $0x10] sm:$0xf]
  %v8373 = vld [vmem:[%s18 + $0x14] sm:$0xf]
  %v8374 = vld [vmem:[%s18 + $0x18] sm:$0xf]
  %v8375 = vld [vmem:[%s18 + $0x1c] sm:$0xf]
  %v8376 = vpack.c.bf16 %v8354, %v8353
  %v8377 = vld [vmem:[%s4023] sm:$0xf]
  %v8378 = vld [vmem:[%s4023 + $0x4] sm:$0xf]
  %v8379 = vld [vmem:[%s4023 + $0x8] sm:$0xf]
  %v8380 = vld [vmem:[%s4023 + $0xc] sm:$0xf]
  %v8381 = vld [vmem:[%s4023 + $0x10] sm:$0xf]
  %v8382 = vld [vmem:[%s4023 + $0x14] sm:$0xf]
  %v8383 = vld [vmem:[%s4023 + $0x18] sm:$0xf]
  %v8384 = vld [vmem:[%s4023 + $0x1c] sm:$0xf]
  %v8393 = vunpack.c.l.b16 %v8377
  %v8394 = vunpack.c.l.b16 %v8378
  %v8395 = vunpack.c.l.b16 %v8379
  %v8396 = vunpack.c.l.b16 %v8380
  %v8397 = vunpack.c.l.b16 %v8381
  %v8398 = vunpack.c.l.b16 %v8382
  %v8399 = vunpack.c.l.b16 %v8383
  %v8400 = vunpack.c.l.b16 %v8384
  %v8401 = vpack.c.b16 %v8394, %v8393
  %v8402 = vpack.c.b16 %v8396, %v8395
  %v8403 = vpack.c.b16 %v8398, %v8397
  %v8404 = vpack.c.b16 %v8400, %v8399
  %v8410 = vsel %vm275, %v8376, 0
  %8412 = vmatprep.subr.bf16.mxu0 0
  %8413 = vmatpush1.bf16.msra.mxu0 %v8401
  %8414 = vmatprep.subr.bf16.mxu0 0
  %8415 = vmatpush1.bf16.msra.mxu0 %v8402
  %8416 = vmatprep.subr.bf16.mxu0 0
  %8417 = vmatpush1.bf16.msra.mxu0 %v8403
  %8418 = vmatprep.subr.bf16.mxu0 0
  %8419 = vmatpush1.bf16.msra.mxu0 %v8404
  %8420 = vmatprep.subr.bf16.mxu0 0
  %8421 = vmatpush1.bf16.msra.mxu0 0
  %8422 = vmatprep.subr.bf16.mxu0 0
  %8423 = vmatpush1.bf16.msra.mxu0 0
  %8424 = vmatprep.subr.bf16.mxu0 0
  %8425 = vmatpush1.bf16.msra.mxu0 0
  %8426 = vmatprep.subr.bf16.mxu0 0
  %8427 = vmatpush1.bf16.msra.mxu0 0
  %8428 = vmatprep.subr.bf16.mxu0 0
  %8429 = vmatpush1.bf16.msra.mxu0 0
  %8430 = vmatprep.subr.bf16.mxu0 0
  %8431 = vmatpush1.bf16.msra.mxu0 0
  %8432 = vmatprep.subr.bf16.mxu0 0
  %8433 = vmatpush1.bf16.msra.mxu0 0
  %8434 = vmatprep.subr.bf16.mxu0 0
  %8435 = vmatpush1.bf16.msra.mxu0 0
  %8436 = vmatprep.subr.bf16.mxu0 0
  %8437 = vmatpush1.bf16.msra.mxu0 0
  %8438 = vmatprep.subr.bf16.mxu0 0
  %8439 = vmatpush1.bf16.msra.mxu0 0
  %8440 = vmatprep.subr.bf16.mxu0 0
  %8441 = vmatpush1.bf16.msra.mxu0 0
  %8442 = vmatprep.subr.bf16.mxu0 0
  %8443 = vmatpush1.bf16.msra.mxu0 0
  %8444 = vmatprep.mubr.bf16.mxu0 0
  %8445 = vmatmul.mubr.bf16.gmra.mrb[0].mxu0 %v8410
  %v8446 = vpop.f32.mrb[0].mxu0
  %v8447 = vadd.f32 0.0, %v8446
  %v8448 = vpop.f32.mrb[0].mxu0
  %v8449 = vpop.f32.mrb[0].mxu0
  %v8450 = vadd.f32 0.0, %v8449
  %v8451 = vpop.f32.mrb[0].mxu0
  %8452 = vdwg.mxu0
  %v8461 = vunpack.c.l.b16 %v8368
  %v8462 = vunpack.c.l.b16 %v8369
  %v8463 = vunpack.c.l.b16 %v8370
  %v8464 = vunpack.c.l.b16 %v8371
  %v8465 = vunpack.c.l.b16 %v8372
  %v8466 = vunpack.c.l.b16 %v8373
  %v8467 = vunpack.c.l.b16 %v8374
  %v8468 = vunpack.c.l.b16 %v8375
  %v8469 = vpack.c.b16 %v8462, %v8461
  %v8470 = vpack.c.b16 %v8464, %v8463
  %v8471 = vpack.c.b16 %v8466, %v8465
  %v8472 = vpack.c.b16 %v8468, %v8467
  %v8478 = vsel %vm275, %v8367, 0
  %8480 = vmatprep.subr.bf16.mxu0 0
  %8481 = vmatpush1.bf16.msra.mxu0 %v8469
  %8482 = vmatprep.subr.bf16.mxu0 0
  %8483 = vmatpush1.bf16.msra.mxu0 %v8470
  %8484 = vmatprep.subr.bf16.mxu0 0
  %8485 = vmatpush1.bf16.msra.mxu0 %v8471
  %8486 = vmatprep.subr.bf16.mxu0 0
  %8487 = vmatpush1.bf16.msra.mxu0 %v8472
  %8488 = vmatprep.subr.bf16.mxu0 0
  %8489 = vmatpush1.bf16.msra.mxu0 0
  %8490 = vmatprep.subr.bf16.mxu0 0
  %8491 = vmatpush1.bf16.msra.mxu0 0
  %8492 = vmatprep.subr.bf16.mxu0 0
  %8493 = vmatpush1.bf16.msra.mxu0 0
  %8494 = vmatprep.subr.bf16.mxu0 0
  %8495 = vmatpush1.bf16.msra.mxu0 0
  %8496 = vmatprep.subr.bf16.mxu0 0
  %8497 = vmatpush1.bf16.msra.mxu0 0
  %8498 = vmatprep.subr.bf16.mxu0 0
  %8499 = vmatpush1.bf16.msra.mxu0 0
  %8500 = vmatprep.subr.bf16.mxu0 0
  %8501 = vmatpush1.bf16.msra.mxu0 0
  %8502 = vmatprep.subr.bf16.mxu0 0
  %8503 = vmatpush1.bf16.msra.mxu0 0
  %8504 = vmatprep.subr.bf16.mxu0 0
  %8505 = vmatpush1.bf16.msra.mxu0 0
  %8506 = vmatprep.subr.bf16.mxu0 0
  %8507 = vmatpush1.bf16.msra.mxu0 0
  %8508 = vmatprep.subr.bf16.mxu0 0
  %8509 = vmatpush1.bf16.msra.mxu0 0
  %8510 = vmatprep.subr.bf16.mxu0 0
  %8511 = vmatpush1.bf16.msra.mxu0 0
  %8512 = vmatprep.mubr.bf16.mxu0 0
  %8513 = vmatmul.mubr.bf16.gmra.mrb[0].mxu0 %v8478
  %v8514 = vpop.f32.mrb[0].mxu0
  %v8515 = vadd.f32 %v8447, %v8514
  %v8516 = vpop.f32.mrb[0].mxu0
  %v8517 = vpop.f32.mrb[0].mxu0
  %v8518 = vadd.f32 %v8450, %v8517
  %v8519 = vpop.f32.mrb[0].mxu0
  %8520 = vdwg.mxu0
  %v8521 = vpack.c.bf16 %v8366, %v8365
  %v8522 = vld [vmem:[%s4169] sm:$0xf]
  %v8523 = vld [vmem:[%s4169 + $0x4] sm:$0xf]
  %v8524 = vld [vmem:[%s4169 + $0x8] sm:$0xf]
  %v8525 = vld [vmem:[%s4169 + $0xc] sm:$0xf]
  %v8526 = vld [vmem:[%s4169 + $0x10] sm:$0xf]
  %v8527 = vld [vmem:[%s4169 + $0x14] sm:$0xf]
  %v8528 = vld [vmem:[%s4169 + $0x18] sm:$0xf]
  %v8529 = vld [vmem:[%s4169 + $0x1c] sm:$0xf]
  %v8538 = vunpack.c.l.b16 %v8522
  %v8539 = vunpack.c.l.b16 %v8523
  %v8540 = vunpack.c.l.b16 %v8524
  %v8541 = vunpack.c.l.b16 %v8525
  %v8542 = vunpack.c.l.b16 %v8526
  %v8543 = vunpack.c.l.b16 %v8527
  %v8544 = vunpack.c.l.b16 %v8528
  %v8545 = vunpack.c.l.b16 %v8529
  %v8546 = vpack.c.b16 %v8539, %v8538
  %v8547 = vpack.c.b16 %v8541, %v8540
  %v8548 = vpack.c.b16 %v8543, %v8542
  %v8549 = vpack.c.b16 %v8545, %v8544
  %v8555 = vsel %vm275, %v8521, 0
  %8557 = vmatprep.subr.bf16.mxu0 0
  %8558 = vmatpush1.bf16.msra.mxu0 %v8546
  %8559 = vmatprep.subr.bf16.mxu0 0
  %8560 = vmatpush1.bf16.msra.mxu0 %v8547
  %8561 = vmatprep.subr.bf16.mxu0 0
  %8562 = vmatpush1.bf16.msra.mxu0 %v8548
  %8563 = vmatprep.subr.bf16.mxu0 0
  %8564 = vmatpush1.bf16.msra.mxu0 %v8549
  %8565 = vmatprep.subr.bf16.mxu0 0
  %8566 = vmatpush1.bf16.msra.mxu0 0
  %8567 = vmatprep.subr.bf16.mxu0 0
  %8568 = vmatpush1.bf16.msra.mxu0 0
  %8569 = vmatprep.subr.bf16.mxu0 0
  %8570 = vmatpush1.bf16.msra.mxu0 0
  %8571 = vmatprep.subr.bf16.mxu0 0
  %8572 = vmatpush1.bf16.msra.mxu0 0
  %8573 = vmatprep.subr.bf16.mxu0 0
  %8574 = vmatpush1.bf16.msra.mxu0 0
  %8575 = vmatprep.subr.bf16.mxu0 0
  %8576 = vmatpush1.bf16.msra.mxu0 0
  %8577 = vmatprep.subr.bf16.mxu0 0
  %8578 = vmatpush1.bf16.msra.mxu0 0
  %8579 = vmatprep.subr.bf16.mxu0 0
  %8580 = vmatpush1.bf16.msra.mxu0 0
  %8581 = vmatprep.subr.bf16.mxu0 0
  %8582 = vmatpush1.bf16.msra.mxu0 0
  %8583 = vmatprep.subr.bf16.mxu0 0
  %8584 = vmatpush1.bf16.msra.mxu0 0
  %8585 = vmatprep.subr.bf16.mxu0 0
  %8586 = vmatpush1.bf16.msra.mxu0 0
  %8587 = vmatprep.subr.bf16.mxu0 0
  %8588 = vmatpush1.bf16.msra.mxu0 0
  %8589 = vmatprep.mubr.bf16.mxu0 0
  %8590 = vmatmul.mubr.bf16.gmra.mrb[0].mxu0 %v8555
  %v8591 = vpop.f32.mrb[0].mxu0
  %v8592 = vadd.f32 0.0, %v8591
  %v8593 = vpop.f32.mrb[0].mxu0
  %v8594 = vpop.f32.mrb[0].mxu0
  %v8595 = vadd.f32 0.0, %v8594
  %v8596 = vpop.f32.mrb[0].mxu0
  %8597 = vdwg.mxu0
  %v8598 = vadd.f32 %v8515, %v8592
  %v8599 = vadd.f32 %v8518, %v8595
  %v8600 = vadd.f32 %v8598, %v4252
  %v8601 = vadd.f32 %v8599, %v4252
  %v8602 = vmax.f32 %v8600, 0.0
  %v8603 = vmax.f32 %v8601, 0.0
  %v8604 = vmul.f32 %v8602, %v8095
  %v8605 = vmul.f32 %v8603, %v8100
  %v8606 = vrot.slane %v8604, 7
  %v8607 = vrot.slane %v8605, 7
  %v8608 = vsel %vm3740, %v8606, %v8607
  %v8609 = vsel %vm3740, %v8607, %v8606
  %v8610 = vsel %vm3736, 0.0, %v8609
  %v8611 = vsel %vm3737, 0.0, %v8608
  %v8612 = vrot.slane %v8604, 1
  %v8613 = vrot.slane %v8605, 1
  %v8614 = vsel %vm3749, %v8612, %v8613
  %v8615 = vsel %vm3749, %v8613, %v8612
  %v8616 = vsel %vm3745, 0.0, %v8614
  %v8617 = vsel %vm3746, 0.0, %v8615
  %v8618 = vpack.c.bf16 %v8611, %v8610
  %v8619 = vld [vmem:[%s20] sm:$0xf]
  %v8620 = vld [vmem:[%s20 + $0x4] sm:$0xf]
  %v8621 = vld [vmem:[%s20 + $0x8] sm:$0xf]
  %v8622 = vld [vmem:[%s20 + $0xc] sm:$0xf]
  %v8623 = vld [vmem:[%s20 + $0x10] sm:$0xf]
  %v8624 = vld [vmem:[%s20 + $0x14] sm:$0xf]
  %v8625 = vld [vmem:[%s20 + $0x18] sm:$0xf]
  %v8626 = vld [vmem:[%s20 + $0x1c] sm:$0xf]
  %v8627 = vpack.c.bf16 %v8605, %v8604
  %v8628 = vld [vmem:[%s4282] sm:$0xf]
  %v8629 = vld [vmem:[%s4282 + $0x4] sm:$0xf]
  %v8630 = vld [vmem:[%s4282 + $0x8] sm:$0xf]
  %v8631 = vld [vmem:[%s4282 + $0xc] sm:$0xf]
  %v8632 = vld [vmem:[%s4282 + $0x10] sm:$0xf]
  %v8633 = vld [vmem:[%s4282 + $0x14] sm:$0xf]
  %v8634 = vld [vmem:[%s4282 + $0x18] sm:$0xf]
  %v8635 = vld [vmem:[%s4282 + $0x1c] sm:$0xf]
  %v8644 = vunpack.c.l.b16 %v8628
  %v8645 = vunpack.c.l.b16 %v8629
  %v8646 = vunpack.c.l.b16 %v8630
  %v8647 = vunpack.c.l.b16 %v8631
  %v8648 = vunpack.c.l.b16 %v8632
  %v8649 = vunpack.c.l.b16 %v8633
  %v8650 = vunpack.c.l.b16 %v8634
  %v8651 = vunpack.c.l.b16 %v8635
  %v8652 = vpack.c.b16 %v8645, %v8644
  %v8653 = vpack.c.b16 %v8647, %v8646
  %v8654 = vpack.c.b16 %v8649, %v8648
  %v8655 = vpack.c.b16 %v8651, %v8650
  %v8661 = vsel %vm275, %v8627, 0
  %8663 = vmatprep.subr.bf16.mxu0 0
  %8664 = vmatpush1.bf16.msra.mxu0 %v8652
  %8665 = vmatprep.subr.bf16.mxu0 0
  %8666 = vmatpush1.bf16.msra.mxu0 %v8653
  %8667 = vmatprep.subr.bf16.mxu0 0
  %8668 = vmatpush1.bf16.msra.mxu0 %v8654
  %8669 = vmatprep.subr.bf16.mxu0 0
  %8670 = vmatpush1.bf16.msra.mxu0 %v8655
  %8671 = vmatprep.subr.bf16.mxu0 0
  %8672 = vmatpush1.bf16.msra.mxu0 0
  %8673 = vmatprep.subr.bf16.mxu0 0
  %8674 = vmatpush1.bf16.msra.mxu0 0
  %8675 = vmatprep.subr.bf16.mxu0 0
  %8676 = vmatpush1.bf16.msra.mxu0 0
  %8677 = vmatprep.subr.bf16.mxu0 0
  %8678 = vmatpush1.bf16.msra.mxu0 0
  %8679 = vmatprep.subr.bf16.mxu0 0
  %8680 = vmatpush1.bf16.msra.mxu0 0
  %8681 = vmatprep.subr.bf16.mxu0 0
  %8682 = vmatpush1.bf16.msra.mxu0 0
  %8683 = vmatprep.subr.bf16.mxu0 0
  %8684 = vmatpush1.bf16.msra.mxu0 0
  %8685 = vmatprep.subr.bf16.mxu0 0
  %8686 = vmatpush1.bf16.msra.mxu0 0
  %8687 = vmatprep.subr.bf16.mxu0 0
  %8688 = vmatpush1.bf16.msra.mxu0 0
  %8689 = vmatprep.subr.bf16.mxu0 0
  %8690 = vmatpush1.bf16.msra.mxu0 0
  %8691 = vmatprep.subr.bf16.mxu0 0
  %8692 = vmatpush1.bf16.msra.mxu0 0
  %8693 = vmatprep.subr.bf16.mxu0 0
  %8694 = vmatpush1.bf16.msra.mxu0 0
  %8695 = vmatprep.mubr.bf16.mxu0 0
  %8696 = vmatmul.mubr.bf16.gmra.mrb[0].mxu0 %v8661
  %v8697 = vpop.f32.mrb[0].mxu0
  %v8698 = vadd.f32 0.0, %v8697
  %v8699 = vpop.f32.mrb[0].mxu0
  %v8700 = vpop.f32.mrb[0].mxu0
  %v8701 = vadd.f32 0.0, %v8700
  %v8702 = vpop.f32.mrb[0].mxu0
  %8703 = vdwg.mxu0
  %v8712 = vunpack.c.l.b16 %v8619
  %v8713 = vunpack.c.l.b16 %v8620
  %v8714 = vunpack.c.l.b16 %v8621
  %v8715 = vunpack.c.l.b16 %v8622
  %v8716 = vunpack.c.l.b16 %v8623
  %v8717 = vunpack.c.l.b16 %v8624
  %v8718 = vunpack.c.l.b16 %v8625
  %v8719 = vunpack.c.l.b16 %v8626
  %v8720 = vpack.c.b16 %v8713, %v8712
  %v8721 = vpack.c.b16 %v8715, %v8714
  %v8722 = vpack.c.b16 %v8717, %v8716
  %v8723 = vpack.c.b16 %v8719, %v8718
  %v8729 = vsel %vm275, %v8618, 0
  %8731 = vmatprep.subr.bf16.mxu0 0
  %8732 = vmatpush1.bf16.msra.mxu0 %v8720
  %8733 = vmatprep.subr.bf16.mxu0 0
  %8734 = vmatpush1.bf16.msra.mxu0 %v8721
  %8735 = vmatprep.subr.bf16.mxu0 0
  %8736 = vmatpush1.bf16.msra.mxu0 %v8722
  %8737 = vmatprep.subr.bf16.mxu0 0
  %8738 = vmatpush1.bf16.msra.mxu0 %v8723
  %8739 = vmatprep.subr.bf16.mxu0 0
  %8740 = vmatpush1.bf16.msra.mxu0 0
  %8741 = vmatprep.subr.bf16.mxu0 0
  %8742 = vmatpush1.bf16.msra.mxu0 0
  %8743 = vmatprep.subr.bf16.mxu0 0
  %8744 = vmatpush1.bf16.msra.mxu0 0
  %8745 = vmatprep.subr.bf16.mxu0 0
  %8746 = vmatpush1.bf16.msra.mxu0 0
  %8747 = vmatprep.subr.bf16.mxu0 0
  %8748 = vmatpush1.bf16.msra.mxu0 0
  %8749 = vmatprep.subr.bf16.mxu0 0
  %8750 = vmatpush1.bf16.msra.mxu0 0
  %8751 = vmatprep.subr.bf16.mxu0 0
  %8752 = vmatpush1.bf16.msra.mxu0 0
  %8753 = vmatprep.subr.bf16.mxu0 0
  %8754 = vmatpush1.bf16.msra.mxu0 0
  %8755 = vmatprep.subr.bf16.mxu0 0
  %8756 = vmatpush1.bf16.msra.mxu0 0
  %8757 = vmatprep.subr.bf16.mxu0 0
  %8758 = vmatpush1.bf16.msra.mxu0 0
  %8759 = vmatprep.subr.bf16.mxu0 0
  %8760 = vmatpush1.bf16.msra.mxu0 0
  %8761 = vmatprep.subr.bf16.mxu0 0
  %8762 = vmatpush1.bf16.msra.mxu0 0
  %8763 = vmatprep.mubr.bf16.mxu0 0
  %8764 = vmatmul.mubr.bf16.gmra.mrb[0].mxu0 %v8729
  %v8765 = vpop.f32.mrb[0].mxu0
  %v8766 = vadd.f32 %v8698, %v8765
  %v8767 = vpop.f32.mrb[0].mxu0
  %v8768 = vpop.f32.mrb[0].mxu0
  %v8769 = vadd.f32 %v8701, %v8768
  %v8770 = vpop.f32.mrb[0].mxu0
  %8771 = vdwg.mxu0
  %v8772 = vpack.c.bf16 %v8617, %v8616
  %v8773 = vld [vmem:[%s4428] sm:$0xf]
  %v8774 = vld [vmem:[%s4428 + $0x4] sm:$0xf]
  %v8775 = vld [vmem:[%s4428 + $0x8] sm:$0xf]
  %v8776 = vld [vmem:[%s4428 + $0xc] sm:$0xf]
  %v8777 = vld [vmem:[%s4428 + $0x10] sm:$0xf]
  %v8778 = vld [vmem:[%s4428 + $0x14] sm:$0xf]
  %v8779 = vld [vmem:[%s4428 + $0x18] sm:$0xf]
  %v8780 = vld [vmem:[%s4428 + $0x1c] sm:$0xf]
  %v8789 = vunpack.c.l.b16 %v8773
  %v8790 = vunpack.c.l.b16 %v8774
  %v8791 = vunpack.c.l.b16 %v8775
  %v8792 = vunpack.c.l.b16 %v8776
  %v8793 = vunpack.c.l.b16 %v8777
  %v8794 = vunpack.c.l.b16 %v8778
  %v8795 = vunpack.c.l.b16 %v8779
  %v8796 = vunpack.c.l.b16 %v8780
  %v8797 = vpack.c.b16 %v8790, %v8789
  %v8798 = vpack.c.b16 %v8792, %v8791
  %v8799 = vpack.c.b16 %v8794, %v8793
  %v8800 = vpack.c.b16 %v8796, %v8795
  %v8806 = vsel %vm275, %v8772, 0
  %8808 = vmatprep.subr.bf16.mxu0 0
  %8809 = vmatpush1.bf16.msra.mxu0 %v8797
  %8810 = vmatprep.subr.bf16.mxu0 0
  %8811 = vmatpush1.bf16.msra.mxu0 %v8798
  %8812 = vmatprep.subr.bf16.mxu0 0
  %8813 = vmatpush1.bf16.msra.mxu0 %v8799
  %8814 = vmatprep.subr.bf16.mxu0 0
  %8815 = vmatpush1.bf16.msra.mxu0 %v8800
  %8816 = vmatprep.subr.bf16.mxu0 0
  %8817 = vmatpush1.bf16.msra.mxu0 0
  %8818 = vmatprep.subr.bf16.mxu0 0
  %8819 = vmatpush1.bf16.msra.mxu0 0
  %8820 = vmatprep.subr.bf16.mxu0 0
  %8821 = vmatpush1.bf16.msra.mxu0 0
  %8822 = vmatprep.subr.bf16.mxu0 0
  %8823 = vmatpush1.bf16.msra.mxu0 0
  %8824 = vmatprep.subr.bf16.mxu0 0
  %8825 = vmatpush1.bf16.msra.mxu0 0
  %8826 = vmatprep.subr.bf16.mxu0 0
  %8827 = vmatpush1.bf16.msra.mxu0 0
  %8828 = vmatprep.subr.bf16.mxu0 0
  %8829 = vmatpush1.bf16.msra.mxu0 0
  %8830 = vmatprep.subr.bf16.mxu0 0
  %8831 = vmatpush1.bf16.msra.mxu0 0
  %8832 = vmatprep.subr.bf16.mxu0 0
  %8833 = vmatpush1.bf16.msra.mxu0 0
  %8834 = vmatprep.subr.bf16.mxu0 0
  %8835 = vmatpush1.bf16.msra.mxu0 0
  %8836 = vmatprep.subr.bf16.mxu0 0
  %8837 = vmatpush1.bf16.msra.mxu0 0
  %8838 = vmatprep.subr.bf16.mxu0 0
  %8839 = vmatpush1.bf16.msra.mxu0 0
  %8840 = vmatprep.mubr.bf16.mxu0 0
  %8841 = vmatmul.mubr.bf16.gmra.mrb[0].mxu0 %v8806
  %v8842 = vpop.f32.mrb[0].mxu0
  %v8843 = vadd.f32 0.0, %v8842
  %v8844 = vpop.f32.mrb[0].mxu0
  %v8845 = vpop.f32.mrb[0].mxu0
  %v8846 = vadd.f32 0.0, %v8845
  %v8847 = vpop.f32.mrb[0].mxu0
  %8848 = vdwg.mxu0
  %v8849 = vadd.f32 %v8766, %v8843
  %v8850 = vadd.f32 %v8769, %v8846
  %v8851 = vadd.f32 %v8849, %v4511
  %v8852 = vadd.f32 %v8850, %v4511
  %v8853 = vmax.f32 %v8851, 0.0
  %v8854 = vmax.f32 %v8852, 0.0
  %v8855 = vsel %vm4517, %v8853, %v8851
  %v8856 = vsel %vm4517, %v8854, %v8852
  %v8857 = vmul.f32 %v8855, %v8095
  %v8858 = vmul.f32 %v8856, %v8100
  %s8859 = scalar_lea.vmem %s23, 16
  %8860 = vst [vmem:[%s8859] sm:$0xff] %v8857
  %8861 = vst [vmem:[%s8859 + $0x8] sm:$0xff] %v8858
  // Predicated region
  $region90: #{ground_vqa_forward.1} parent=0 // pred_check
    _
  $region91: #{ground_vqa_forward.1} parent=0 // pred_check_branch
    %8863 = sbr.rel (0) target = $region93
  $region92: #{ground_vqa_forward.1} parent=0 // pred_region
    _
  $region93: #{ground_vqa_forward.1} parent=0 // pred_fallthru
    _
  // Predicated region
  $region94: #{ground_vqa_forward.1} parent=0 // pred_check
    _
  $region95: #{ground_vqa_forward.1} parent=0 // pred_check_branch
    %8865 = sbr.rel (0) target = $region97
  $region96: #{ground_vqa_forward.1} parent=0 // pred_region
    _
  $region97: #{ground_vqa_forward.1} parent=0 // pred_fallthru
    _
  // Predicated region
  $region98: #{ground_vqa_forward.1} parent=0 // pred_check
    _
  $region99: #{ground_vqa_forward.1} parent=0 // pred_check_branch
    %8867 = sbr.rel (0) target = $region101
  $region100: #{ground_vqa_forward.1} parent=0 // pred_region
    _
  $region101: #{ground_vqa_forward.1} parent=0 // pred_fallthru
    _
  // Predicated region
  $region102: #{ground_vqa_forward.1} parent=0 // pred_check
    _
  $region103: #{ground_vqa_forward.1} parent=0 // pred_check_branch
    %8869 = sbr.rel (0) target = $region105
  $region104: #{ground_vqa_forward.1} parent=0 // pred_region
    _
  $region105: #{ground_vqa_forward.1} parent=0 // pred_fallthru
    _

</llo_original>
